<compile_context>
chip_gen: v7x
topology: tpu7x:2x2x1
jax: 0.10.0
libtpu: 0.0.40
codegen_flags: <defaults>
</compile_context>

<pallas_src>
import jax
import jax.numpy as jnp
from jax import lax
from jax.experimental import pallas as pl
from jax.experimental.pallas import tpu as pltpu

EPS = 1e-5                      # nn.BatchNorm2d default eps
_LANES = 128
MATMUL_DTYPE = jnp.bfloat16     # MXU operand dtype (accumulation stays f32)
_VMEM = pl.BlockSpec(memory_space=pltpu.MemorySpace.VMEM)


def _round_up(x, m):
    return ((x + m - 1) // m) * m


# -----------------------------------------------------------------------------
# Fused kernel: (conv3x3 + bias + ReLU + BatchNorm2d[train-stats]) x 2
# -----------------------------------------------------------------------------
def double_conv_kernel(x_ref, w1_ref, b1_ref, g1_ref, be1_ref,
                       w2_ref, b2_ref, g2_ref, be2_ref,
                       o_ref, xp1_ref, xp2_ref):
    """x_ref  : (N, H, W, Cin)   f32 NHWC input
       w1_ref : (9, Cin, Cmid)   bf16 conv1 weights, tap-major (t = kh*3 + kw)
       b1/g1/be1_ref : (1, Cmid) f32  conv1 bias, BN1 gamma/beta
       w2_ref : (9, Cmid, Cp)    bf16 conv2 weights, out channels 0-padded to Cp
       b2/g2/be2_ref : (1, Cp)   f32  conv2 bias, BN2 gamma/beta (pad lanes MUST
                                      be zero -- see invariant in the wrapper)
       o_ref  : (N, H, W, Cp)    f32  lane-dense output
       xp1_ref: VMEM (N, H+2, W+2, Cin)  f32 halo scratch, stage 1
       xp2_ref: VMEM (N, H+2, W+2, Cmid) f32 halo scratch, stage 2
    """
    N, H, W, _ = x_ref.shape
    Cmid = w1_ref.shape[-1]
    Cp = o_ref.shape[-1]
    R = N * H * W
    inv_cnt = 1.0 / R

    def fill_halo(xp_ref, interior):
        # Zero only the 4 edge strips, then write the interior exactly once.
        n, hp, wp, c = xp_ref.shape
        h, w = hp - 2, wp - 2
        xp_ref[:, 0:1, :, :] = jnp.zeros((n, 1, wp, c), xp_ref.dtype)
        xp_ref[:, hp - 1:hp, :, :] = jnp.zeros((n, 1, wp, c), xp_ref.dtype)
        xp_ref[:, 1:h + 1, 0:1, :] = jnp.zeros((n, h, 1, c), xp_ref.dtype)
        xp_ref[:, 1:h + 1, wp - 1:wp, :] = jnp.zeros((n, h, 1, c), xp_ref.dtype)
        xp_ref[:, 1:h + 1, 1:w + 1, :] = interior

    def conv3x3_bias_relu_bn(xp_ref, w, b, g, be):
        # xp_ref : (N, H+2, W+2, C) halo'd input (f32 VMEM scratch)
        # w      : (9, C, Co) bf16 ;  b / g / be : (1, Co) f32
        C = xp_ref.shape[-1]
        Co = w.shape[-1]
        # 3x3 conv as 9 shifted slabs over exactly R = N*H*W rows: no wide
        # columns, no result rolls, no boundary masks.  bf16 MXU operands,
        # f32 accumulation.
        acc = jnp.zeros((R, Co), jnp.float32)
        for t in range(9):
            kh, kw = divmod(t, 3)
            slab = xp_ref[:, kh:kh + H, kw:kw + W, :].reshape(R, C)
            acc = acc + jnp.dot(slab.astype(MATMUL_DTYPE), w[t],
                                preferred_element_type=jnp.float32)
        # bias + ReLU (f32, VPU)
        acc = jnp.maximum(acc + b, 0.0)
        # BatchNorm2d training-mode batch stats, two-pass (numerically safe),
        # biased variance, all in f32.  rsqrt runs on the EUP slot.
        mean = jnp.sum(acc, axis=0, keepdims=True) * inv_cnt
        d = acc - mean
        var = jnp.sum(d * d, axis=0, keepdims=True) * inv_cnt
        scale = g * lax.rsqrt(var + EPS)
        return d * scale + be                                    # (R, Co) f32

    # ---- stage 1: input -> intermediate (stays in VMEM, true channel count) --
    fill_halo(xp1_ref, x_ref[...])
    h1 = conv3x3_bias_relu_bn(xp1_ref, w1_ref[...], b1_ref[...],
                              g1_ref[...], be1_ref[...])

    # ---- stage 2: intermediate -> lane-dense output ---------------------------
    fill_halo(xp2_ref, h1.reshape(N, H, W, Cmid))
    h2 = conv3x3_bias_relu_bn(xp2_ref, w2_ref[...], b2_ref[...],
                              g2_ref[...], be2_ref[...])

    o_ref[...] = h2.reshape(N, H, W, Cp)


# -----------------------------------------------------------------------------
# Wrapper
# -----------------------------------------------------------------------------
def double_conv_forward(x_nchw, params):
    """Equivalent of double_conv.forward on NCHW f32 input."""
    N, Cin, H, W = x_nchw.shape
    Cmid = params["b1"].shape[0]           # = out_channels
    Cout = params["b2"].shape[0]           # = out_channels
    Cp = _round_up(Cout, _LANES)           # lane padding for the final store only

    # NCHW -> NHWC glue (tiny at these shapes; see TODO(synk) above).
    x = jnp.transpose(x_nchw, (0, 2, 3, 1))

    # Conv1 params at the TRUE channel count: no 128-padding in the contraction.
    w1 = params["w1"].reshape(9, Cin, Cmid).astype(MATMUL_DTYPE)   # (kh*3+kw, ci, co)
    b1 = params["b1"].reshape(1, Cmid)
    g1 = params["g1"].reshape(1, Cmid)
    be1 = params["be1"].reshape(1, Cmid)

    # Conv2 output channels zero-padded to Cp for a lane-dense final store.
    # INVARIANT: pad lanes of w2/b2/g2/be2 must be ZERO.  Zero weights+bias give
    # activation 0 and var 0; gamma 0 keeps scale = 0 * rsqrt(eps) = 0, so pad
    # lanes stay exactly 0 (padding gamma with 1 would propagate garbage).
    pc = Cp - Cout
    w2 = jnp.pad(params["w2"], ((0, 0), (0, 0), (0, 0), (0, pc)))
    w2 = w2.reshape(9, Cmid, Cp).astype(MATMUL_DTYPE)
    b2 = jnp.pad(params["b2"], (0, pc)).reshape(1, Cp)
    g2 = jnp.pad(params["g2"], (0, pc)).reshape(1, Cp)
    be2 = jnp.pad(params["be2"], (0, pc)).reshape(1, Cp)

    out = pl.pallas_call(
        double_conv_kernel,
        out_shape=jax.ShapeDtypeStruct((N, H, W, Cp), jnp.float32),
        in_specs=[_VMEM] * 9,
        out_specs=_VMEM,
        scratch_shapes=[
            pltpu.VMEM((N, H + 2, W + 2, Cin), jnp.float32),
            pltpu.VMEM((N, H + 2, W + 2, Cmid), jnp.float32),
        ],
    )(x, w1, b1, g1, be1, w2, b2, g2, be2)

    out = out[..., :Cout]                       # drop lane padding once
    return jnp.transpose(out, (0, 3, 1, 2))     # NHWC -> NCHW


# -----------------------------------------------------------------------------
# Pure-JAX reference (correctness check)
# -----------------------------------------------------------------------------
def _ref_forward(x_nchw, params, operand_dtype=jnp.float32):
    """With operand_dtype=bf16 this applies the SAME MXU operand rounding as the
    kernel (f32 accumulation, f32 BN), enabling a tight numerical comparison."""
    def conv_relu(x, w_hwio, b):
        w_oihw = jnp.transpose(w_hwio, (3, 2, 0, 1)).astype(operand_dtype)
        y = lax.conv_general_dilated(
            x.astype(operand_dtype), w_oihw, window_strides=(1, 1),
            padding="SAME", dimension_numbers=("NCHW", "OIHW", "NCHW"),
            preferred_element_type=jnp.float32)
        return jnp.maximum(y + b[None, :, None, None], 0.0)

    def bn(x, g, be):
        mean = jnp.mean(x, axis=(0, 2, 3), keepdims=True)
        var = jnp.mean((x - mean) ** 2, axis=(0, 2, 3), keepdims=True)
        xn = (x - mean) * lax.rsqrt(var + EPS)
        return xn * g[None, :, None, None] + be[None, :, None, None]

    x = bn(conv_relu(x_nchw, params["w1"], params["b1"]), params["g1"], params["be1"])
    x = bn(conv_relu(x, params["w2"], params["b2"]), params["g2"], params["be2"])
    return x


# -----------------------------------------------------------------------------
# Main
# -----------------------------------------------------------------------------
if __name__ == "__main__":
    key = jax.random.PRNGKey(0)
    N, Cin, Cout, H, W = 2, 4, 8, 16, 16

    ks = jax.random.split(key, 9)
    x = jax.random.normal(ks[0], (N, Cin, H, W), jnp.float32)

    # weights stored HWIO: (3, 3, Cin, Cout)
    params = {
        "w1": 0.1 * jax.random.normal(ks[1], (3, 3, Cin, Cout), jnp.float32),
        "b1": 0.1 * jax.random.normal(ks[2], (Cout,), jnp.float32),
        "g1": 1.0 + 0.1 * jax.random.normal(ks[3], (Cout,), jnp.float32),
        "be1": 0.1 * jax.random.normal(ks[4], (Cout,), jnp.float32),
        "w2": 0.1 * jax.random.normal(ks[5], (3, 3, Cout, Cout), jnp.float32),
        "b2": 0.1 * jax.random.normal(ks[6], (Cout,), jnp.float32),
        "g2": 1.0 + 0.1 * jax.random.normal(ks[7], (Cout,), jnp.float32),
        "be2": 0.1 * jax.random.normal(ks[8], (Cout,), jnp.float32),
    }

    out = jax.jit(double_conv_forward)(x, params)
    out = jax.block_until_ready(out)
    assert out.shape == (N, Cout, H, W), out.shape

    # Tight check: reference with identical operand rounding (bf16 MXU operands,
    # f32 accumulation / BN) -- validates halo, tap alignment and BN math.
    ref_same = _ref_forward(x, params, MATMUL_DTYPE)
    assert jnp.allclose(out, ref_same, atol=1e-2, rtol=1e-2), (
        float(jnp.max(jnp.abs(out - ref_same))))

    # Loose sanity check vs the pure-f32 reference: bounds the bf16 operand
    # quantization error accumulated across the two conv+BN stages (structural
    # bugs produce O(1) errors and would trip this).
    ref_f32 = _ref_forward(x, params, jnp.float32)
    assert jnp.allclose(out, ref_f32, atol=1.5e-1, rtol=5e-2), (
        float(jnp.max(jnp.abs(out - ref_f32))))

    print("KERNEL_OK")
</pallas_src>

<mosaic_0001>
module attributes {stable_mosaic.version = 11 : i64} {
  func.func @double_conv_kernel(%arg0: memref<2x16x16x4xf32, #tpu.memory_space<vmem>>, %arg1: memref<9x4x8xbf16, #tpu.memory_space<vmem>>, %arg2: memref<1x8xf32, #tpu.memory_space<vmem>>, %arg3: memref<1x8xf32, #tpu.memory_space<vmem>>, %arg4: memref<1x8xf32, #tpu.memory_space<vmem>>, %arg5: memref<9x8x128xbf16, #tpu.memory_space<vmem>>, %arg6: memref<1x128xf32, #tpu.memory_space<vmem>>, %arg7: memref<1x128xf32, #tpu.memory_space<vmem>>, %arg8: memref<1x128xf32, #tpu.memory_space<vmem>>, %arg9: memref<2x16x16x128xf32, #tpu.memory_space<vmem>>, %arg10: memref<2x18x18x4xf32, #tpu.memory_space<vmem>>, %arg11: memref<2x18x18x8xf32, #tpu.memory_space<vmem>>) attributes {dimension_semantics = [], scalar_prefetch = 0 : i64, scratch_operands = 2 : i64, tpu.core_type = #tpu.core_type<tc>} {
    %c0 = arith.constant 0 : index
    %c0_0 = arith.constant 0 : index
    %c0_1 = arith.constant 0 : index
    %c0_2 = arith.constant 0 : index
    %0 = vector.load %arg0[%c0, %c0_0, %c0_1, %c0_2] : memref<2x16x16x4xf32, #tpu.memory_space<vmem>>, vector<2x16x16x4xf32>
    %cst = arith.constant 0.000000e+00 : f32
    %1 = vector.broadcast %cst : f32 to vector<2x1x18x4xf32>
    %c0_3 = arith.constant 0 : index
    %c0_4 = arith.constant 0 : index
    %c0_5 = arith.constant 0 : index
    %c0_6 = arith.constant 0 : index
    %2 = vector.load %arg10[%c0_3, %c0_4, %c0_5, %c0_6] : memref<2x18x18x4xf32, #tpu.memory_space<vmem>>, vector<2x1x18x4xf32>
    tpu.vector_store %arg10[%c0_3, %c0_4, %c0_5, %c0_6], %1 {strides = array<i32>} : memref<2x18x18x4xf32, #tpu.memory_space<vmem>>, vector<2x1x18x4xf32>,
    %cst_7 = arith.constant 0.000000e+00 : f32
    %3 = vector.broadcast %cst_7 : f32 to vector<2x1x18x4xf32>
    %c0_8 = arith.constant 0 : index
    %c17 = arith.constant 17 : index
    %c0_9 = arith.constant 0 : index
    %c0_10 = arith.constant 0 : index
    %4 = vector.load %arg10[%c0_8, %c17, %c0_9, %c0_10] : memref<2x18x18x4xf32, #tpu.memory_space<vmem>>, vector<2x1x18x4xf32>
    tpu.vector_store %arg10[%c0_8, %c17, %c0_9, %c0_10], %3 {strides = array<i32>} : memref<2x18x18x4xf32, #tpu.memory_space<vmem>>, vector<2x1x18x4xf32>,
    %cst_11 = arith.constant 0.000000e+00 : f32
    %5 = vector.broadcast %cst_11 : f32 to vector<2x16x1x4xf32>
    %c0_12 = arith.constant 0 : index
    %c1 = arith.constant 1 : index
    %c0_13 = arith.constant 0 : index
    %c0_14 = arith.constant 0 : index
    %6 = vector.load %arg10[%c0_12, %c1, %c0_13, %c0_14] : memref<2x18x18x4xf32, #tpu.memory_space<vmem>>, vector<2x16x1x4xf32>
    tpu.vector_store %arg10[%c0_12, %c1, %c0_13, %c0_14], %5 {strides = array<i32>} : memref<2x18x18x4xf32, #tpu.memory_space<vmem>>, vector<2x16x1x4xf32>,
    %cst_15 = arith.constant 0.000000e+00 : f32
    %7 = vector.broadcast %cst_15 : f32 to vector<2x16x1x4xf32>
    %c0_16 = arith.constant 0 : index
    %c1_17 = arith.constant 1 : index
    %c17_18 = arith.constant 17 : index
    %c0_19 = arith.constant 0 : index
    %8 = vector.load %arg10[%c0_16, %c1_17, %c17_18, %c0_19] : memref<2x18x18x4xf32, #tpu.memory_space<vmem>>, vector<2x16x1x4xf32>
    tpu.vector_store %arg10[%c0_16, %c1_17, %c17_18, %c0_19], %7 {strides = array<i32>} : memref<2x18x18x4xf32, #tpu.memory_space<vmem>>, vector<2x16x1x4xf32>,
    %c0_20 = arith.constant 0 : index
    %c1_21 = arith.constant 1 : index
    %c1_22 = arith.constant 1 : index
    %c0_23 = arith.constant 0 : index
    %9 = vector.load %arg10[%c0_20, %c1_21, %c1_22, %c0_23] : memref<2x18x18x4xf32, #tpu.memory_space<vmem>>, vector<2x16x16x4xf32>
    tpu.vector_store %arg10[%c0_20, %c1_21, %c1_22, %c0_23], %0 {strides = array<i32>} : memref<2x18x18x4xf32, #tpu.memory_space<vmem>>, vector<2x16x16x4xf32>,
    %c0_24 = arith.constant 0 : index
    %c0_25 = arith.constant 0 : index
    %c0_26 = arith.constant 0 : index
    %10 = vector.load %arg1[%c0_24, %c0_25, %c0_26] : memref<9x4x8xbf16, #tpu.memory_space<vmem>>, vector<9x4x8xbf16>
    %c0_27 = arith.constant 0 : index
    %c0_28 = arith.constant 0 : index
    %11 = vector.load %arg2[%c0_27, %c0_28] : memref<1x8xf32, #tpu.memory_space<vmem>>, vector<1x8xf32>
    %c0_29 = arith.constant 0 : index
    %c0_30 = arith.constant 0 : index
    %12 = vector.load %arg3[%c0_29, %c0_30] : memref<1x8xf32, #tpu.memory_space<vmem>>, vector<1x8xf32>
    %c0_31 = arith.constant 0 : index
    %c0_32 = arith.constant 0 : index
    %13 = vector.load %arg4[%c0_31, %c0_32] : memref<1x8xf32, #tpu.memory_space<vmem>>, vector<1x8xf32>
    %cst_33 = arith.constant 0.000000e+00 : f32
    %14 = vector.broadcast %cst_33 : f32 to vector<512x8xf32>
    %c0_34 = arith.constant 0 : index
    %c0_35 = arith.constant 0 : index
    %c0_36 = arith.constant 0 : index
    %c0_37 = arith.constant 0 : index
    %15 = vector.load %arg10[%c0_34, %c0_35, %c0_36, %c0_37] : memref<2x18x18x4xf32, #tpu.memory_space<vmem>>, vector<2x16x16x4xf32>
    %16 = vector.shape_cast %15 : vector<2x16x16x4xf32> to vector<512x4xf32>
    %17 = arith.truncf %16 : vector<512x4xf32> to vector<512x4xbf16>
    %18 = vector.extract_strided_slice %10 {offsets = [0, 0, 0], sizes = [1, 4, 8], strides = [1, 1, 1]} : vector<9x4x8xbf16> to vector<1x4x8xbf16>
    %19 = vector.shape_cast %18 : vector<1x4x8xbf16> to vector<4x8xbf16>
    %cst_38 = arith.constant dense<0.000000e+00> : vector<512x8xf32>
    %20 = tpu.matmul %17, %19, %cst_38 {dimension_numbers = #tpu.dot_dimension_numbers<[1], [0], [0], [1], [0, 0, 1, 1], [], []>} : vector<512x4xbf16>, vector<4x8xbf16>, vector<512x8xf32> -> vector<512x8xf32>
    %21 = arith.addf %14, %20 : vector<512x8xf32>
    %c0_39 = arith.constant 0 : index
    %c0_40 = arith.constant 0 : index
    %c1_41 = arith.constant 1 : index
    %c0_42 = arith.constant 0 : index
    %22 = vector.load %arg10[%c0_39, %c0_40, %c1_41, %c0_42] : memref<2x18x18x4xf32, #tpu.memory_space<vmem>>, vector<2x16x16x4xf32>
    %23 = vector.shape_cast %22 : vector<2x16x16x4xf32> to vector<512x4xf32>
    %24 = arith.truncf %23 : vector<512x4xf32> to vector<512x4xbf16>
    %25 = vector.extract_strided_slice %10 {offsets = [1, 0, 0], sizes = [1, 4, 8], strides = [1, 1, 1]} : vector<9x4x8xbf16> to vector<1x4x8xbf16>
    %26 = vector.shape_cast %25 : vector<1x4x8xbf16> to vector<4x8xbf16>
    %cst_43 = arith.constant dense<0.000000e+00> : vector<512x8xf32>
    %27 = tpu.matmul %24, %26, %cst_43 {dimension_numbers = #tpu.dot_dimension_numbers<[1], [0], [0], [1], [0, 0, 1, 1], [], []>} : vector<512x4xbf16>, vector<4x8xbf16>, vector<512x8xf32> -> vector<512x8xf32>
    %28 = arith.addf %21, %27 : vector<512x8xf32>
    %c0_44 = arith.constant 0 : index
    %c0_45 = arith.constant 0 : index
    %c2 = arith.constant 2 : index
    %c0_46 = arith.constant 0 : index
    %29 = vector.load %arg10[%c0_44, %c0_45, %c2, %c0_46] : memref<2x18x18x4xf32, #tpu.memory_space<vmem>>, vector<2x16x16x4xf32>
    %30 = vector.shape_cast %29 : vector<2x16x16x4xf32> to vector<512x4xf32>
    %31 = arith.truncf %30 : vector<512x4xf32> to vector<512x4xbf16>
    %32 = vector.extract_strided_slice %10 {offsets = [2, 0, 0], sizes = [1, 4, 8], strides = [1, 1, 1]} : vector<9x4x8xbf16> to vector<1x4x8xbf16>
    %33 = vector.shape_cast %32 : vector<1x4x8xbf16> to vector<4x8xbf16>
    %cst_47 = arith.constant dense<0.000000e+00> : vector<512x8xf32>
    %34 = tpu.matmul %31, %33, %cst_47 {dimension_numbers = #tpu.dot_dimension_numbers<[1], [0], [0], [1], [0, 0, 1, 1], [], []>} : vector<512x4xbf16>, vector<4x8xbf16>, vector<512x8xf32> -> vector<512x8xf32>
    %35 = arith.addf %28, %34 : vector<512x8xf32>
    %c0_48 = arith.constant 0 : index
    %c1_49 = arith.constant 1 : index
    %c0_50 = arith.constant 0 : index
    %c0_51 = arith.constant 0 : index
    %36 = vector.load %arg10[%c0_48, %c1_49, %c0_50, %c0_51] : memref<2x18x18x4xf32, #tpu.memory_space<vmem>>, vector<2x16x16x4xf32>
    %37 = vector.shape_cast %36 : vector<2x16x16x4xf32> to vector<512x4xf32>
    %38 = arith.truncf %37 : vector<512x4xf32> to vector<512x4xbf16>
    %39 = vector.extract_strided_slice %10 {offsets = [3, 0, 0], sizes = [1, 4, 8], strides = [1, 1, 1]} : vector<9x4x8xbf16> to vector<1x4x8xbf16>
    %40 = vector.shape_cast %39 : vector<1x4x8xbf16> to vector<4x8xbf16>
    %cst_52 = arith.constant dense<0.000000e+00> : vector<512x8xf32>
    %41 = tpu.matmul %38, %40, %cst_52 {dimension_numbers = #tpu.dot_dimension_numbers<[1], [0], [0], [1], [0, 0, 1, 1], [], []>} : vector<512x4xbf16>, vector<4x8xbf16>, vector<512x8xf32> -> vector<512x8xf32>
    %42 = arith.addf %35, %41 : vector<512x8xf32>
    %c0_53 = arith.constant 0 : index
    %c1_54 = arith.constant 1 : index
    %c1_55 = arith.constant 1 : index
    %c0_56 = arith.constant 0 : index
    %43 = vector.load %arg10[%c0_53, %c1_54, %c1_55, %c0_56] : memref<2x18x18x4xf32, #tpu.memory_space<vmem>>, vector<2x16x16x4xf32>
    %44 = vector.shape_cast %43 : vector<2x16x16x4xf32> to vector<512x4xf32>
    %45 = arith.truncf %44 : vector<512x4xf32> to vector<512x4xbf16>
    %46 = vector.extract_strided_slice %10 {offsets = [4, 0, 0], sizes = [1, 4, 8], strides = [1, 1, 1]} : vector<9x4x8xbf16> to vector<1x4x8xbf16>
    %47 = vector.shape_cast %46 : vector<1x4x8xbf16> to vector<4x8xbf16>
    %cst_57 = arith.constant dense<0.000000e+00> : vector<512x8xf32>
    %48 = tpu.matmul %45, %47, %cst_57 {dimension_numbers = #tpu.dot_dimension_numbers<[1], [0], [0], [1], [0, 0, 1, 1], [], []>} : vector<512x4xbf16>, vector<4x8xbf16>, vector<512x8xf32> -> vector<512x8xf32>
    %49 = arith.addf %42, %48 : vector<512x8xf32>
    %c0_58 = arith.constant 0 : index
    %c1_59 = arith.constant 1 : index
    %c2_60 = arith.constant 2 : index
    %c0_61 = arith.constant 0 : index
    %50 = vector.load %arg10[%c0_58, %c1_59, %c2_60, %c0_61] : memref<2x18x18x4xf32, #tpu.memory_space<vmem>>, vector<2x16x16x4xf32>
    %51 = vector.shape_cast %50 : vector<2x16x16x4xf32> to vector<512x4xf32>
    %52 = arith.truncf %51 : vector<512x4xf32> to vector<512x4xbf16>
    %53 = vector.extract_strided_slice %10 {offsets = [5, 0, 0], sizes = [1, 4, 8], strides = [1, 1, 1]} : vector<9x4x8xbf16> to vector<1x4x8xbf16>
    %54 = vector.shape_cast %53 : vector<1x4x8xbf16> to vector<4x8xbf16>
    %cst_62 = arith.constant dense<0.000000e+00> : vector<512x8xf32>
    %55 = tpu.matmul %52, %54, %cst_62 {dimension_numbers = #tpu.dot_dimension_numbers<[1], [0], [0], [1], [0, 0, 1, 1], [], []>} : vector<512x4xbf16>, vector<4x8xbf16>, vector<512x8xf32> -> vector<512x8xf32>
    %56 = arith.addf %49, %55 : vector<512x8xf32>
    %c0_63 = arith.constant 0 : index
    %c2_64 = arith.constant 2 : index
    %c0_65 = arith.constant 0 : index
    %c0_66 = arith.constant 0 : index
    %57 = vector.load %arg10[%c0_63, %c2_64, %c0_65, %c0_66] : memref<2x18x18x4xf32, #tpu.memory_space<vmem>>, vector<2x16x16x4xf32>
    %58 = vector.shape_cast %57 : vector<2x16x16x4xf32> to vector<512x4xf32>
    %59 = arith.truncf %58 : vector<512x4xf32> to vector<512x4xbf16>
    %60 = vector.extract_strided_slice %10 {offsets = [6, 0, 0], sizes = [1, 4, 8], strides = [1, 1, 1]} : vector<9x4x8xbf16> to vector<1x4x8xbf16>
    %61 = vector.shape_cast %60 : vector<1x4x8xbf16> to vector<4x8xbf16>
    %cst_67 = arith.constant dense<0.000000e+00> : vector<512x8xf32>
    %62 = tpu.matmul %59, %61, %cst_67 {dimension_numbers = #tpu.dot_dimension_numbers<[1], [0], [0], [1], [0, 0, 1, 1], [], []>} : vector<512x4xbf16>, vector<4x8xbf16>, vector<512x8xf32> -> vector<512x8xf32>
    %63 = arith.addf %56, %62 : vector<512x8xf32>
    %c0_68 = arith.constant 0 : index
    %c2_69 = arith.constant 2 : index
    %c1_70 = arith.constant 1 : index
    %c0_71 = arith.constant 0 : index
    %64 = vector.load %arg10[%c0_68, %c2_69, %c1_70, %c0_71] : memref<2x18x18x4xf32, #tpu.memory_space<vmem>>, vector<2x16x16x4xf32>
    %65 = vector.shape_cast %64 : vector<2x16x16x4xf32> to vector<512x4xf32>
    %66 = arith.truncf %65 : vector<512x4xf32> to vector<512x4xbf16>
    %67 = vector.extract_strided_slice %10 {offsets = [7, 0, 0], sizes = [1, 4, 8], strides = [1, 1, 1]} : vector<9x4x8xbf16> to vector<1x4x8xbf16>
    %68 = vector.shape_cast %67 : vector<1x4x8xbf16> to vector<4x8xbf16>
    %cst_72 = arith.constant dense<0.000000e+00> : vector<512x8xf32>
    %69 = tpu.matmul %66, %68, %cst_72 {dimension_numbers = #tpu.dot_dimension_numbers<[1], [0], [0], [1], [0, 0, 1, 1], [], []>} : vector<512x4xbf16>, vector<4x8xbf16>, vector<512x8xf32> -> vector<512x8xf32>
    %70 = arith.addf %63, %69 : vector<512x8xf32>
    %c0_73 = arith.constant 0 : index
    %c2_74 = arith.constant 2 : index
    %c2_75 = arith.constant 2 : index
    %c0_76 = arith.constant 0 : index
    %71 = vector.load %arg10[%c0_73, %c2_74, %c2_75, %c0_76] : memref<2x18x18x4xf32, #tpu.memory_space<vmem>>, vector<2x16x16x4xf32>
    %72 = vector.shape_cast %71 : vector<2x16x16x4xf32> to vector<512x4xf32>
    %73 = arith.truncf %72 : vector<512x4xf32> to vector<512x4xbf16>
    %74 = vector.extract_strided_slice %10 {offsets = [8, 0, 0], sizes = [1, 4, 8], strides = [1, 1, 1]} : vector<9x4x8xbf16> to vector<1x4x8xbf16>
    %75 = vector.shape_cast %74 : vector<1x4x8xbf16> to vector<4x8xbf16>
    %cst_77 = arith.constant dense<0.000000e+00> : vector<512x8xf32>
    %76 = tpu.matmul %73, %75, %cst_77 {dimension_numbers = #tpu.dot_dimension_numbers<[1], [0], [0], [1], [0, 0, 1, 1], [], []>} : vector<512x4xbf16>, vector<4x8xbf16>, vector<512x8xf32> -> vector<512x8xf32>
    %77 = arith.addf %70, %76 : vector<512x8xf32>
    %78 = vector.broadcast %11 : vector<1x8xf32> to vector<512x8xf32>
    %79 = arith.addf %77, %78 : vector<512x8xf32>
    %cst_78 = arith.constant 0.000000e+00 : f32
    %80 = vector.broadcast %cst_78 : f32 to vector<512x8xf32>
    %81 = arith.maximumf %79, %80 : vector<512x8xf32>
    %cst_79 = arith.constant dense<0.000000e+00> : vector<8xf32>
    %82 = vector.multi_reduction <add>, %81, %cst_79 [0] : vector<512x8xf32> to vector<8xf32>
    %83 = vector.shape_cast %82 : vector<8xf32> to vector<1x8xf32>
    %cst_80 = arith.constant 0.001953125 : f32
    %84 = vector.broadcast %cst_80 : f32 to vector<1x8xf32>
    %85 = arith.mulf %83, %84 : vector<1x8xf32>
    %86 = vector.broadcast %85 : vector<1x8xf32> to vector<512x8xf32>
    %87 = arith.subf %81, %86 : vector<512x8xf32>
    %88 = arith.mulf %87, %87 : vector<512x8xf32>
    %cst_81 = arith.constant dense<0.000000e+00> : vector<8xf32>
    %89 = vector.multi_reduction <add>, %88, %cst_81 [0] : vector<512x8xf32> to vector<8xf32>
    %90 = vector.shape_cast %89 : vector<8xf32> to vector<1x8xf32>
    %cst_82 = arith.constant 0.001953125 : f32
    %91 = vector.broadcast %cst_82 : f32 to vector<1x8xf32>
    %92 = arith.mulf %90, %91 : vector<1x8xf32>
    %cst_83 = arith.constant 9.99999974E-6 : f32
    %93 = vector.broadcast %cst_83 : f32 to vector<1x8xf32>
    %94 = arith.addf %92, %93 : vector<1x8xf32>
    %95 = math.rsqrt %94 : vector<1x8xf32>
    %96 = arith.mulf %12, %95 : vector<1x8xf32>
    %97 = vector.broadcast %96 : vector<1x8xf32> to vector<512x8xf32>
    %98 = arith.mulf %87, %97 : vector<512x8xf32>
    %99 = vector.broadcast %13 : vector<1x8xf32> to vector<512x8xf32>
    %100 = arith.addf %98, %99 : vector<512x8xf32>
    %101 = vector.shape_cast %100 : vector<512x8xf32> to vector<2x16x16x8xf32>
    %cst_84 = arith.constant 0.000000e+00 : f32
    %102 = vector.broadcast %cst_84 : f32 to vector<2x1x18x8xf32>
    %c0_85 = arith.constant 0 : index
    %c0_86 = arith.constant 0 : index
    %c0_87 = arith.constant 0 : index
    %c0_88 = arith.constant 0 : index
    %103 = vector.load %arg11[%c0_85, %c0_86, %c0_87, %c0_88] : memref<2x18x18x8xf32, #tpu.memory_space<vmem>>, vector<2x1x18x8xf32>
    tpu.vector_store %arg11[%c0_85, %c0_86, %c0_87, %c0_88], %102 {strides = array<i32>} : memref<2x18x18x8xf32, #tpu.memory_space<vmem>>, vector<2x1x18x8xf32>,
    %cst_89 = arith.constant 0.000000e+00 : f32
    %104 = vector.broadcast %cst_89 : f32 to vector<2x1x18x8xf32>
    %c0_90 = arith.constant 0 : index
    %c17_91 = arith.constant 17 : index
    %c0_92 = arith.constant 0 : index
    %c0_93 = arith.constant 0 : index
    %105 = vector.load %arg11[%c0_90, %c17_91, %c0_92, %c0_93] : memref<2x18x18x8xf32, #tpu.memory_space<vmem>>, vector<2x1x18x8xf32>
    tpu.vector_store %arg11[%c0_90, %c17_91, %c0_92, %c0_93], %104 {strides = array<i32>} : memref<2x18x18x8xf32, #tpu.memory_space<vmem>>, vector<2x1x18x8xf32>,
    %cst_94 = arith.constant 0.000000e+00 : f32
    %106 = vector.broadcast %cst_94 : f32 to vector<2x16x1x8xf32>
    %c0_95 = arith.constant 0 : index
    %c1_96 = arith.constant 1 : index
    %c0_97 = arith.constant 0 : index
    %c0_98 = arith.constant 0 : index
    %107 = vector.load %arg11[%c0_95, %c1_96, %c0_97, %c0_98] : memref<2x18x18x8xf32, #tpu.memory_space<vmem>>, vector<2x16x1x8xf32>
    tpu.vector_store %arg11[%c0_95, %c1_96, %c0_97, %c0_98], %106 {strides = array<i32>} : memref<2x18x18x8xf32, #tpu.memory_space<vmem>>, vector<2x16x1x8xf32>,
    %cst_99 = arith.constant 0.000000e+00 : f32
    %108 = vector.broadcast %cst_99 : f32 to vector<2x16x1x8xf32>
    %c0_100 = arith.constant 0 : index
    %c1_101 = arith.constant 1 : index
    %c17_102 = arith.constant 17 : index
    %c0_103 = arith.constant 0 : index
    %109 = vector.load %arg11[%c0_100, %c1_101, %c17_102, %c0_103] : memref<2x18x18x8xf32, #tpu.memory_space<vmem>>, vector<2x16x1x8xf32>
    tpu.vector_store %arg11[%c0_100, %c1_101, %c17_102, %c0_103], %108 {strides = array<i32>} : memref<2x18x18x8xf32, #tpu.memory_space<vmem>>, vector<2x16x1x8xf32>,
    %c0_104 = arith.constant 0 : index
    %c1_105 = arith.constant 1 : index
    %c1_106 = arith.constant 1 : index
    %c0_107 = arith.constant 0 : index
    %110 = vector.load %arg11[%c0_104, %c1_105, %c1_106, %c0_107] : memref<2x18x18x8xf32, #tpu.memory_space<vmem>>, vector<2x16x16x8xf32>
    tpu.vector_store %arg11[%c0_104, %c1_105, %c1_106, %c0_107], %101 {strides = array<i32>} : memref<2x18x18x8xf32, #tpu.memory_space<vmem>>, vector<2x16x16x8xf32>,
    %c0_108 = arith.constant 0 : index
    %c0_109 = arith.constant 0 : index
    %c0_110 = arith.constant 0 : index
    %111 = vector.load %arg5[%c0_108, %c0_109, %c0_110] : memref<9x8x128xbf16, #tpu.memory_space<vmem>>, vector<9x8x128xbf16>
    %c0_111 = arith.constant 0 : index
    %c0_112 = arith.constant 0 : index
    %112 = vector.load %arg6[%c0_111, %c0_112] : memref<1x128xf32, #tpu.memory_space<vmem>>, vector<1x128xf32>
    %c0_113 = arith.constant 0 : index
    %c0_114 = arith.constant 0 : index
    %113 = vector.load %arg7[%c0_113, %c0_114] : memref<1x128xf32, #tpu.memory_space<vmem>>, vector<1x128xf32>
    %c0_115 = arith.constant 0 : index
    %c0_116 = arith.constant 0 : index
    %114 = vector.load %arg8[%c0_115, %c0_116] : memref<1x128xf32, #tpu.memory_space<vmem>>, vector<1x128xf32>
    %cst_117 = arith.constant 0.000000e+00 : f32
    %115 = vector.broadcast %cst_117 : f32 to vector<512x128xf32>
    %c0_118 = arith.constant 0 : index
    %c0_119 = arith.constant 0 : index
    %c0_120 = arith.constant 0 : index
    %c0_121 = arith.constant 0 : index
    %116 = vector.load %arg11[%c0_118, %c0_119, %c0_120, %c0_121] : memref<2x18x18x8xf32, #tpu.memory_space<vmem>>, vector<2x16x16x8xf32>
    %117 = vector.shape_cast %116 : vector<2x16x16x8xf32> to vector<512x8xf32>
    %118 = arith.truncf %117 : vector<512x8xf32> to vector<512x8xbf16>
    %119 = vector.extract_strided_slice %111 {offsets = [0, 0, 0], sizes = [1, 8, 128], strides = [1, 1, 1]} : vector<9x8x128xbf16> to vector<1x8x128xbf16>
    %120 = vector.shape_cast %119 : vector<1x8x128xbf16> to vector<8x128xbf16>
    %cst_122 = arith.constant dense<0.000000e+00> : vector<512x128xf32>
    %121 = tpu.matmul %118, %120, %cst_122 {dimension_numbers = #tpu.dot_dimension_numbers<[1], [0], [0], [1], [0, 0, 1, 1], [], []>} : vector<512x8xbf16>, vector<8x128xbf16>, vector<512x128xf32> -> vector<512x128xf32>
    %122 = arith.addf %115, %121 : vector<512x128xf32>
    %c0_123 = arith.constant 0 : index
    %c0_124 = arith.constant 0 : index
    %c1_125 = arith.constant 1 : index
    %c0_126 = arith.constant 0 : index
    %123 = vector.load %arg11[%c0_123, %c0_124, %c1_125, %c0_126] : memref<2x18x18x8xf32, #tpu.memory_space<vmem>>, vector<2x16x16x8xf32>
    %124 = vector.shape_cast %123 : vector<2x16x16x8xf32> to vector<512x8xf32>
    %125 = arith.truncf %124 : vector<512x8xf32> to vector<512x8xbf16>
    %126 = vector.extract_strided_slice %111 {offsets = [1, 0, 0], sizes = [1, 8, 128], strides = [1, 1, 1]} : vector<9x8x128xbf16> to vector<1x8x128xbf16>
    %127 = vector.shape_cast %126 : vector<1x8x128xbf16> to vector<8x128xbf16>
    %cst_127 = arith.constant dense<0.000000e+00> : vector<512x128xf32>
    %128 = tpu.matmul %125, %127, %cst_127 {dimension_numbers = #tpu.dot_dimension_numbers<[1], [0], [0], [1], [0, 0, 1, 1], [], []>} : vector<512x8xbf16>, vector<8x128xbf16>, vector<512x128xf32> -> vector<512x128xf32>
    %129 = arith.addf %122, %128 : vector<512x128xf32>
    %c0_128 = arith.constant 0 : index
    %c0_129 = arith.constant 0 : index
    %c2_130 = arith.constant 2 : index
    %c0_131 = arith.constant 0 : index
    %130 = vector.load %arg11[%c0_128, %c0_129, %c2_130, %c0_131] : memref<2x18x18x8xf32, #tpu.memory_space<vmem>>, vector<2x16x16x8xf32>
    %131 = vector.shape_cast %130 : vector<2x16x16x8xf32> to vector<512x8xf32>
    %132 = arith.truncf %131 : vector<512x8xf32> to vector<512x8xbf16>
    %133 = vector.extract_strided_slice %111 {offsets = [2, 0, 0], sizes = [1, 8, 128], strides = [1, 1, 1]} : vector<9x8x128xbf16> to vector<1x8x128xbf16>
    %134 = vector.shape_cast %133 : vector<1x8x128xbf16> to vector<8x128xbf16>
    %cst_132 = arith.constant dense<0.000000e+00> : vector<512x128xf32>
    %135 = tpu.matmul %132, %134, %cst_132 {dimension_numbers = #tpu.dot_dimension_numbers<[1], [0], [0], [1], [0, 0, 1, 1], [], []>} : vector<512x8xbf16>, vector<8x128xbf16>, vector<512x128xf32> -> vector<512x128xf32>
    %136 = arith.addf %129, %135 : vector<512x128xf32>
    %c0_133 = arith.constant 0 : index
    %c1_134 = arith.constant 1 : index
    %c0_135 = arith.constant 0 : index
    %c0_136 = arith.constant 0 : index
    %137 = vector.load %arg11[%c0_133, %c1_134, %c0_135, %c0_136] : memref<2x18x18x8xf32, #tpu.memory_space<vmem>>, vector<2x16x16x8xf32>
    %138 = vector.shape_cast %137 : vector<2x16x16x8xf32> to vector<512x8xf32>
    %139 = arith.truncf %138 : vector<512x8xf32> to vector<512x8xbf16>
    %140 = vector.extract_strided_slice %111 {offsets = [3, 0, 0], sizes = [1, 8, 128], strides = [1, 1, 1]} : vector<9x8x128xbf16> to vector<1x8x128xbf16>
    %141 = vector.shape_cast %140 : vector<1x8x128xbf16> to vector<8x128xbf16>
    %cst_137 = arith.constant dense<0.000000e+00> : vector<512x128xf32>
    %142 = tpu.matmul %139, %141, %cst_137 {dimension_numbers = #tpu.dot_dimension_numbers<[1], [0], [0], [1], [0, 0, 1, 1], [], []>} : vector<512x8xbf16>, vector<8x128xbf16>, vector<512x128xf32> -> vector<512x128xf32>
    %143 = arith.addf %136, %142 : vector<512x128xf32>
    %c0_138 = arith.constant 0 : index
    %c1_139 = arith.constant 1 : index
    %c1_140 = arith.constant 1 : index
    %c0_141 = arith.constant 0 : index
    %144 = vector.load %arg11[%c0_138, %c1_139, %c1_140, %c0_141] : memref<2x18x18x8xf32, #tpu.memory_space<vmem>>, vector<2x16x16x8xf32>
    %145 = vector.shape_cast %144 : vector<2x16x16x8xf32> to vector<512x8xf32>
    %146 = arith.truncf %145 : vector<512x8xf32> to vector<512x8xbf16>
    %147 = vector.extract_strided_slice %111 {offsets = [4, 0, 0], sizes = [1, 8, 128], strides = [1, 1, 1]} : vector<9x8x128xbf16> to vector<1x8x128xbf16>
    %148 = vector.shape_cast %147 : vector<1x8x128xbf16> to vector<8x128xbf16>
    %cst_142 = arith.constant dense<0.000000e+00> : vector<512x128xf32>
    %149 = tpu.matmul %146, %148, %cst_142 {dimension_numbers = #tpu.dot_dimension_numbers<[1], [0], [0], [1], [0, 0, 1, 1], [], []>} : vector<512x8xbf16>, vector<8x128xbf16>, vector<512x128xf32> -> vector<512x128xf32>
    %150 = arith.addf %143, %149 : vector<512x128xf32>
    %c0_143 = arith.constant 0 : index
    %c1_144 = arith.constant 1 : index
    %c2_145 = arith.constant 2 : index
    %c0_146 = arith.constant 0 : index
    %151 = vector.load %arg11[%c0_143, %c1_144, %c2_145, %c0_146] : memref<2x18x18x8xf32, #tpu.memory_space<vmem>>, vector<2x16x16x8xf32>
    %152 = vector.shape_cast %151 : vector<2x16x16x8xf32> to vector<512x8xf32>
    %153 = arith.truncf %152 : vector<512x8xf32> to vector<512x8xbf16>
    %154 = vector.extract_strided_slice %111 {offsets = [5, 0, 0], sizes = [1, 8, 128], strides = [1, 1, 1]} : vector<9x8x128xbf16> to vector<1x8x128xbf16>
    %155 = vector.shape_cast %154 : vector<1x8x128xbf16> to vector<8x128xbf16>
    %cst_147 = arith.constant dense<0.000000e+00> : vector<512x128xf32>
    %156 = tpu.matmul %153, %155, %cst_147 {dimension_numbers = #tpu.dot_dimension_numbers<[1], [0], [0], [1], [0, 0, 1, 1], [], []>} : vector<512x8xbf16>, vector<8x128xbf16>, vector<512x128xf32> -> vector<512x128xf32>
    %157 = arith.addf %150, %156 : vector<512x128xf32>
    %c0_148 = arith.constant 0 : index
    %c2_149 = arith.constant 2 : index
    %c0_150 = arith.constant 0 : index
    %c0_151 = arith.constant 0 : index
    %158 = vector.load %arg11[%c0_148, %c2_149, %c0_150, %c0_151] : memref<2x18x18x8xf32, #tpu.memory_space<vmem>>, vector<2x16x16x8xf32>
    %159 = vector.shape_cast %158 : vector<2x16x16x8xf32> to vector<512x8xf32>
    %160 = arith.truncf %159 : vector<512x8xf32> to vector<512x8xbf16>
    %161 = vector.extract_strided_slice %111 {offsets = [6, 0, 0], sizes = [1, 8, 128], strides = [1, 1, 1]} : vector<9x8x128xbf16> to vector<1x8x128xbf16>
    %162 = vector.shape_cast %161 : vector<1x8x128xbf16> to vector<8x128xbf16>
    %cst_152 = arith.constant dense<0.000000e+00> : vector<512x128xf32>
    %163 = tpu.matmul %160, %162, %cst_152 {dimension_numbers = #tpu.dot_dimension_numbers<[1], [0], [0], [1], [0, 0, 1, 1], [], []>} : vector<512x8xbf16>, vector<8x128xbf16>, vector<512x128xf32> -> vector<512x128xf32>
    %164 = arith.addf %157, %163 : vector<512x128xf32>
    %c0_153 = arith.constant 0 : index
    %c2_154 = arith.constant 2 : index
    %c1_155 = arith.constant 1 : index
    %c0_156 = arith.constant 0 : index
    %165 = vector.load %arg11[%c0_153, %c2_154, %c1_155, %c0_156] : memref<2x18x18x8xf32, #tpu.memory_space<vmem>>, vector<2x16x16x8xf32>
    %166 = vector.shape_cast %165 : vector<2x16x16x8xf32> to vector<512x8xf32>
    %167 = arith.truncf %166 : vector<512x8xf32> to vector<512x8xbf16>
    %168 = vector.extract_strided_slice %111 {offsets = [7, 0, 0], sizes = [1, 8, 128], strides = [1, 1, 1]} : vector<9x8x128xbf16> to vector<1x8x128xbf16>
    %169 = vector.shape_cast %168 : vector<1x8x128xbf16> to vector<8x128xbf16>
    %cst_157 = arith.constant dense<0.000000e+00> : vector<512x128xf32>
    %170 = tpu.matmul %167, %169, %cst_157 {dimension_numbers = #tpu.dot_dimension_numbers<[1], [0], [0], [1], [0, 0, 1, 1], [], []>} : vector<512x8xbf16>, vector<8x128xbf16>, vector<512x128xf32> -> vector<512x128xf32>
    %171 = arith.addf %164, %170 : vector<512x128xf32>
    %c0_158 = arith.constant 0 : index
    %c2_159 = arith.constant 2 : index
    %c2_160 = arith.constant 2 : index
    %c0_161 = arith.constant 0 : index
    %172 = vector.load %arg11[%c0_158, %c2_159, %c2_160, %c0_161] : memref<2x18x18x8xf32, #tpu.memory_space<vmem>>, vector<2x16x16x8xf32>
    %173 = vector.shape_cast %172 : vector<2x16x16x8xf32> to vector<512x8xf32>
    %174 = arith.truncf %173 : vector<512x8xf32> to vector<512x8xbf16>
    %175 = vector.extract_strided_slice %111 {offsets = [8, 0, 0], sizes = [1, 8, 128], strides = [1, 1, 1]} : vector<9x8x128xbf16> to vector<1x8x128xbf16>
    %176 = vector.shape_cast %175 : vector<1x8x128xbf16> to vector<8x128xbf16>
    %cst_162 = arith.constant dense<0.000000e+00> : vector<512x128xf32>
    %177 = tpu.matmul %174, %176, %cst_162 {dimension_numbers = #tpu.dot_dimension_numbers<[1], [0], [0], [1], [0, 0, 1, 1], [], []>} : vector<512x8xbf16>, vector<8x128xbf16>, vector<512x128xf32> -> vector<512x128xf32>
    %178 = arith.addf %171, %177 : vector<512x128xf32>
    %179 = vector.broadcast %112 : vector<1x128xf32> to vector<512x128xf32>
    %180 = arith.addf %178, %179 : vector<512x128xf32>
    %cst_163 = arith.constant 0.000000e+00 : f32
    %181 = vector.broadcast %cst_163 : f32 to vector<512x128xf32>
    %182 = arith.maximumf %180, %181 : vector<512x128xf32>
    %cst_164 = arith.constant dense<0.000000e+00> : vector<128xf32>
    %183 = vector.multi_reduction <add>, %182, %cst_164 [0] : vector<512x128xf32> to vector<128xf32>
    %184 = vector.shape_cast %183 : vector<128xf32> to vector<1x128xf32>
    %cst_165 = arith.constant 0.001953125 : f32
    %185 = vector.broadcast %cst_165 : f32 to vector<1x128xf32>
    %186 = arith.mulf %184, %185 : vector<1x128xf32>
    %187 = vector.broadcast %186 : vector<1x128xf32> to vector<512x128xf32>
    %188 = arith.subf %182, %187 : vector<512x128xf32>
    %189 = arith.mulf %188, %188 : vector<512x128xf32>
    %cst_166 = arith.constant dense<0.000000e+00> : vector<128xf32>
    %190 = vector.multi_reduction <add>, %189, %cst_166 [0] : vector<512x128xf32> to vector<128xf32>
    %191 = vector.shape_cast %190 : vector<128xf32> to vector<1x128xf32>
    %cst_167 = arith.constant 0.001953125 : f32
    %192 = vector.broadcast %cst_167 : f32 to vector<1x128xf32>
    %193 = arith.mulf %191, %192 : vector<1x128xf32>
    %cst_168 = arith.constant 9.99999974E-6 : f32
    %194 = vector.broadcast %cst_168 : f32 to vector<1x128xf32>
    %195 = arith.addf %193, %194 : vector<1x128xf32>
    %196 = math.rsqrt %195 : vector<1x128xf32>
    %197 = arith.mulf %113, %196 : vector<1x128xf32>
    %198 = vector.broadcast %197 : vector<1x128xf32> to vector<512x128xf32>
    %199 = arith.mulf %188, %198 : vector<512x128xf32>
    %200 = vector.broadcast %114 : vector<1x128xf32> to vector<512x128xf32>
    %201 = arith.addf %199, %200 : vector<512x128xf32>
    %202 = vector.shape_cast %201 : vector<512x128xf32> to vector<2x16x16x128xf32>
    %c0_169 = arith.constant 0 : index
    %c0_170 = arith.constant 0 : index
    %c0_171 = arith.constant 0 : index
    %c0_172 = arith.constant 0 : index
    %203 = vector.load %arg9[%c0_169, %c0_170, %c0_171, %c0_172] : memref<2x16x16x128xf32, #tpu.memory_space<vmem>>, vector<2x16x16x128xf32>
    tpu.vector_store %arg9[%c0_169, %c0_170, %c0_171, %c0_172], %202 {strides = array<i32>} : memref<2x16x16x128xf32, #tpu.memory_space<vmem>>, vector<2x16x16x128xf32>,
    return
  }
}

</mosaic_0001>

<llo_original>
// kernel: double_conv_forward.1
$region0: #{double_conv_forward.1}
  #allocation0 [shape = 'u32[]', space=smem, size = 0x4, offset = 0x4, fixed_abs, tag = 'smem constant byte address 0x4 - core index']
  #allocation1 [shape = 'u32[144,128]{1,0:T(1,128)}', space=vmem, size = 0x12000, scoped, tag = 'internal scratch']
  #allocation2 [shape = 'f32[2,18,18,4]{3,2,1,0:T(8,128)}', space=vmem, size = 0x6c000, scoped, tag = 'scratch operand']
  #allocation3 [shape = 'f32[2,18,18,8]{3,2,1,0:T(8,128)}', space=vmem, size = 0x6c000, scoped, tag = 'scratch operand']
  %s0 = inlined_call_operand.vmem [shape: f32[2,16,16,4], index: 0, kind: input, shape index: {}]
  %s1 = inlined_call_operand.vmem [shape: bf16[9,4,8], index: 1, kind: input, shape index: {}]
  %s2 = inlined_call_operand.vmem [shape: f32[1,8], index: 2, kind: input, shape index: {}]
  %s3 = inlined_call_operand.vmem [shape: f32[1,8], index: 3, kind: input, shape index: {}]
  %s4 = inlined_call_operand.vmem [shape: f32[1,8], index: 4, kind: input, shape index: {}]
  %s5 = inlined_call_operand.vmem [shape: bf16[9,8,128], index: 5, kind: input, shape index: {}]
  %s6 = inlined_call_operand.vmem [shape: f32[1,128], index: 6, kind: input, shape index: {}]
  %s7 = inlined_call_operand.vmem [shape: f32[1,128], index: 7, kind: input, shape index: {}]
  %s8 = inlined_call_operand.vmem [shape: f32[1,128], index: 8, kind: input, shape index: {}]
  %s9 = inlined_call_operand.vmem [shape: f32[2,16,16,128], index: 9, kind: output, shape index: {}]
  %s10 = sld [smem:[#allocation0]]
  $region46: #{double_conv_forward.1} parent=0
    _
  %s12 = ssub.s32 1, %s10
  %s13 = scalar_select 0, %s12, %s10
  // Predicated region
  $region2: #{double_conv_forward.1} parent=0 // pred_check
    _
  $region3: #{double_conv_forward.1} parent=0 // pred_check_branch
    %15 = sbr.rel (0) target = $region5
  $region4: #{double_conv_forward.1} parent=0 // pred_region
    _
  $region5: #{double_conv_forward.1} parent=0 // pred_fallthru
    _
  // Predicated region
  $region6: #{double_conv_forward.1} parent=0 // pred_check
    _
  $region7: #{double_conv_forward.1} parent=0 // pred_check_branch
    %17 = sbr.rel (0) target = $region9
  $region8: #{double_conv_forward.1} parent=0 // pred_region
    _
  $region9: #{double_conv_forward.1} parent=0 // pred_fallthru
    _
  // Predicated region
  $region10: #{double_conv_forward.1} parent=0 // pred_check
    _
  $region11: #{double_conv_forward.1} parent=0 // pred_check_branch
    %19 = sbr.rel (0) target = $region13
  $region12: #{double_conv_forward.1} parent=0 // pred_region
    _
  $region13: #{double_conv_forward.1} parent=0 // pred_fallthru
    _
  // Predicated region
  $region14: #{double_conv_forward.1} parent=0 // pred_check
    _
  $region15: #{double_conv_forward.1} parent=0 // pred_check_branch
    %21 = sbr.rel (0) target = $region17
  $region16: #{double_conv_forward.1} parent=0 // pred_region
    _
  $region17: #{double_conv_forward.1} parent=0 // pred_fallthru
    _
  // Predicated region
  $region18: #{double_conv_forward.1} parent=0 // pred_check
    _
  $region19: #{double_conv_forward.1} parent=0 // pred_check_branch
    %23 = sbr.rel (0) target = $region21
  $region20: #{double_conv_forward.1} parent=0 // pred_region
    _
  $region21: #{double_conv_forward.1} parent=0 // pred_fallthru
    _
  // Predicated region
  $region22: #{double_conv_forward.1} parent=0 // pred_check
    _
  $region23: #{double_conv_forward.1} parent=0 // pred_check_branch
    %25 = sbr.rel (0) target = $region25
  $region24: #{double_conv_forward.1} parent=0 // pred_region
    _
  $region25: #{double_conv_forward.1} parent=0 // pred_fallthru
    _
  // Predicated region
  $region26: #{double_conv_forward.1} parent=0 // pred_check
    _
  $region27: #{double_conv_forward.1} parent=0 // pred_check_branch
    %27 = sbr.rel (0) target = $region29
  $region28: #{double_conv_forward.1} parent=0 // pred_region
    _
  $region29: #{double_conv_forward.1} parent=0 // pred_fallthru
    _
  // Predicated region
  $region30: #{double_conv_forward.1} parent=0 // pred_check
    _
  $region31: #{double_conv_forward.1} parent=0 // pred_check_branch
    %29 = sbr.rel (0) target = $region33
  $region32: #{double_conv_forward.1} parent=0 // pred_region
    _
  $region33: #{double_conv_forward.1} parent=0 // pred_fallthru
    _
  // Predicated region
  $region34: #{double_conv_forward.1} parent=0 // pred_check
    _
  $region35: #{double_conv_forward.1} parent=0 // pred_check_branch
    %31 = sbr.rel (0) target = $region37
  $region36: #{double_conv_forward.1} parent=0 // pred_region
    _
  $region37: #{double_conv_forward.1} parent=0 // pred_fallthru
    _
  %v33 = vld [vmem:[%s0] sm:$0xff]
  %v34 = vld [vmem:[%s0 + $0x8] sm:$0xff]
  %v35 = vld [vmem:[%s0 + $0x10] sm:$0xff]
  %v36 = vld [vmem:[%s0 + $0x18] sm:$0xff]
  %v37 = vld [vmem:[%s0 + $0x20] sm:$0xff]
  %v38 = vld [vmem:[%s0 + $0x28] sm:$0xff]
  %v39 = vld [vmem:[%s0 + $0x30] sm:$0xff]
  %v40 = vld [vmem:[%s0 + $0x38] sm:$0xff]
  %v41 = vld [vmem:[%s0 + $0x40] sm:$0xff]
  %v42 = vld [vmem:[%s0 + $0x48] sm:$0xff]
  %v43 = vld [vmem:[%s0 + $0x50] sm:$0xff]
  %v44 = vld [vmem:[%s0 + $0x58] sm:$0xff]
  %v45 = vld [vmem:[%s0 + $0x60] sm:$0xff]
  %v46 = vld [vmem:[%s0 + $0x68] sm:$0xff]
  %v47 = vld [vmem:[%s0 + $0x70] sm:$0xff]
  %v48 = vld [vmem:[%s0 + $0x78] sm:$0xff]
  %v49 = vld [vmem:[%s0 + $0x80] sm:$0xff]
  %v50 = vld [vmem:[%s0 + $0x88] sm:$0xff]
  %v51 = vld [vmem:[%s0 + $0x90] sm:$0xff]
  %v52 = vld [vmem:[%s0 + $0x98] sm:$0xff]
  %v53 = vld [vmem:[%s0 + $0xa0] sm:$0xff]
  %v54 = vld [vmem:[%s0 + $0xa8] sm:$0xff]
  %v55 = vld [vmem:[%s0 + $0xb0] sm:$0xff]
  %v56 = vld [vmem:[%s0 + $0xb8] sm:$0xff]
  %v57 = vld [vmem:[%s0 + $0xc0] sm:$0xff]
  %v58 = vld [vmem:[%s0 + $0xc8] sm:$0xff]
  %v59 = vld [vmem:[%s0 + $0xd0] sm:$0xff]
  %v60 = vld [vmem:[%s0 + $0xd8] sm:$0xff]
  %v61 = vld [vmem:[%s0 + $0xe0] sm:$0xff]
  %v62 = vld [vmem:[%s0 + $0xe8] sm:$0xff]
  %v63 = vld [vmem:[%s0 + $0xf0] sm:$0xff]
  %v64 = vld [vmem:[%s0 + $0xf8] sm:$0xff]
  %v65 = vld [vmem:[%s0 + $0x100] sm:$0xff]
  %v66 = vld [vmem:[%s0 + $0x108] sm:$0xff]
  %v67 = vld [vmem:[%s0 + $0x110] sm:$0xff]
  %v68 = vld [vmem:[%s0 + $0x118] sm:$0xff]
  %v69 = vld [vmem:[%s0 + $0x120] sm:$0xff]
  %v70 = vld [vmem:[%s0 + $0x128] sm:$0xff]
  %v71 = vld [vmem:[%s0 + $0x130] sm:$0xff]
  %v72 = vld [vmem:[%s0 + $0x138] sm:$0xff]
  %v73 = vld [vmem:[%s0 + $0x140] sm:$0xff]
  %v74 = vld [vmem:[%s0 + $0x148] sm:$0xff]
  %v75 = vld [vmem:[%s0 + $0x150] sm:$0xff]
  %v76 = vld [vmem:[%s0 + $0x158] sm:$0xff]
  %v77 = vld [vmem:[%s0 + $0x160] sm:$0xff]
  %v78 = vld [vmem:[%s0 + $0x168] sm:$0xff]
  %v79 = vld [vmem:[%s0 + $0x170] sm:$0xff]
  %v80 = vld [vmem:[%s0 + $0x178] sm:$0xff]
  %v81 = vld [vmem:[%s0 + $0x180] sm:$0xff]
  %v82 = vld [vmem:[%s0 + $0x188] sm:$0xff]
  %v83 = vld [vmem:[%s0 + $0x190] sm:$0xff]
  %v84 = vld [vmem:[%s0 + $0x198] sm:$0xff]
  %v85 = vld [vmem:[%s0 + $0x1a0] sm:$0xff]
  %v86 = vld [vmem:[%s0 + $0x1a8] sm:$0xff]
  %v87 = vld [vmem:[%s0 + $0x1b0] sm:$0xff]
  %v88 = vld [vmem:[%s0 + $0x1b8] sm:$0xff]
  %v89 = vld [vmem:[%s0 + $0x1c0] sm:$0xff]
  %v90 = vld [vmem:[%s0 + $0x1c8] sm:$0xff]
  %v91 = vld [vmem:[%s0 + $0x1d0] sm:$0xff]
  %v92 = vld [vmem:[%s0 + $0x1d8] sm:$0xff]
  %v93 = vld [vmem:[%s0 + $0x1e0] sm:$0xff]
  %v94 = vld [vmem:[%s0 + $0x1e8] sm:$0xff]
  %v95 = vld [vmem:[%s0 + $0x1f0] sm:$0xff]
  %v96 = vld [vmem:[%s0 + $0x1f8] sm:$0xff]
  %vm97 = vcmask 31744
  %98 = vst.msk [vmem:[#allocation2] sm:$0xff] %vm97, 0.0
  %99 = vst.msk [vmem:[#allocation2 + $0x8] sm:$0xff] %vm97, 0.0
  %vm100 = vcmask 25600
  %101 = vst.msk [vmem:[#allocation2 + $0x10] sm:$0x3] %vm100, 0.0
  %102 = vst.msk [vmem:[#allocation2 + $0x1b0] sm:$0xff] %vm97, 0.0
  %103 = vst.msk [vmem:[#allocation2 + $0x1b8] sm:$0xff] %vm97, 0.0
  %104 = vst.msk [vmem:[#allocation2 + $0x1c0] sm:$0x3] %vm100, 0.0
  %s105 = scalar_lea.vmem [#allocation2], 408
  %106 = vst.msk [vmem:[%s105] sm:$0xff] %vm97, 0.0
  %107 = vst.msk [vmem:[%s105 + $0x8] sm:$0xff] %vm97, 0.0
  %108 = vst.msk [vmem:[%s105 + $0x10] sm:$0x3] %vm100, 0.0
  %109 = vst.msk [vmem:[%s105 + $0x1b0] sm:$0xff] %vm97, 0.0
  %110 = vst.msk [vmem:[%s105 + $0x1b8] sm:$0xff] %vm97, 0.0
  %111 = vst.msk [vmem:[%s105 + $0x1c0] sm:$0x3] %vm100, 0.0
  %s112 = scalar_lea.vmem [#allocation2], 24
  %vm113 = vcmask 24576
  %114 = vst.msk [vmem:[%s112] sm:$0x1] %vm113, 0.0
  %115 = vst.msk [vmem:[%s112 + $0x18] sm:$0x1] %vm113, 0.0
  %116 = vst.msk [vmem:[%s112 + $0x30] sm:$0x1] %vm113, 0.0
  %117 = vst.msk [vmem:[%s112 + $0x48] sm:$0x1] %vm113, 0.0
  %118 = vst.msk [vmem:[%s112 + $0x60] sm:$0x1] %vm113, 0.0
  %119 = vst.msk [vmem:[%s112 + $0x78] sm:$0x1] %vm113, 0.0
  %120 = vst.msk [vmem:[%s112 + $0x90] sm:$0x1] %vm113, 0.0
  %121 = vst.msk [vmem:[%s112 + $0xa8] sm:$0x1] %vm113, 0.0
  %122 = vst.msk [vmem:[%s112 + $0xc0] sm:$0x1] %vm113, 0.0
  %123 = vst.msk [vmem:[%s112 + $0xd8] sm:$0x1] %vm113, 0.0
  %124 = vst.msk [vmem:[%s112 + $0xf0] sm:$0x1] %vm113, 0.0
  %125 = vst.msk [vmem:[%s112 + $0x108] sm:$0x1] %vm113, 0.0
  %126 = vst.msk [vmem:[%s112 + $0x120] sm:$0x1] %vm113, 0.0
  %127 = vst.msk [vmem:[%s112 + $0x138] sm:$0x1] %vm113, 0.0
  %128 = vst.msk [vmem:[%s112 + $0x150] sm:$0x1] %vm113, 0.0
  %129 = vst.msk [vmem:[%s112 + $0x168] sm:$0x1] %vm113, 0.0
  %130 = vst.msk [vmem:[%s112 + $0x1b0] sm:$0x1] %vm113, 0.0
  %131 = vst.msk [vmem:[%s112 + $0x1c8] sm:$0x1] %vm113, 0.0
  %132 = vst.msk [vmem:[%s112 + $0x1e0] sm:$0x1] %vm113, 0.0
  %133 = vst.msk [vmem:[%s112 + $0x1f8] sm:$0x1] %vm113, 0.0
  %134 = vst.msk [vmem:[%s112 + $0x210] sm:$0x1] %vm113, 0.0
  %135 = vst.msk [vmem:[%s112 + $0x228] sm:$0x1] %vm113, 0.0
  %136 = vst.msk [vmem:[%s112 + $0x240] sm:$0x1] %vm113, 0.0
  %137 = vst.msk [vmem:[%s112 + $0x258] sm:$0x1] %vm113, 0.0
  %138 = vst.msk [vmem:[%s112 + $0x270] sm:$0x1] %vm113, 0.0
  %139 = vst.msk [vmem:[%s112 + $0x288] sm:$0x1] %vm113, 0.0
  %140 = vst.msk [vmem:[%s112 + $0x2a0] sm:$0x1] %vm113, 0.0
  %141 = vst.msk [vmem:[%s112 + $0x2b8] sm:$0x1] %vm113, 0.0
  %142 = vst.msk [vmem:[%s112 + $0x2d0] sm:$0x1] %vm113, 0.0
  %143 = vst.msk [vmem:[%s112 + $0x2e8] sm:$0x1] %vm113, 0.0
  %144 = vst.msk [vmem:[%s112 + $0x300] sm:$0x1] %vm113, 0.0
  %145 = vst.msk [vmem:[%s112 + $0x318] sm:$0x1] %vm113, 0.0
  %146 = vst.msk [vmem:[%s112 + $0x11] sm:$0x1] %vm113, 0.0
  %147 = vst.msk [vmem:[%s112 + $0x29] sm:$0x1] %vm113, 0.0
  %148 = vst.msk [vmem:[%s112 + $0x41] sm:$0x1] %vm113, 0.0
  %149 = vst.msk [vmem:[%s112 + $0x59] sm:$0x1] %vm113, 0.0
  %150 = vst.msk [vmem:[%s112 + $0x71] sm:$0x1] %vm113, 0.0
  %151 = vst.msk [vmem:[%s112 + $0x89] sm:$0x1] %vm113, 0.0
  %152 = vst.msk [vmem:[%s112 + $0xa1] sm:$0x1] %vm113, 0.0
  %153 = vst.msk [vmem:[%s112 + $0xb9] sm:$0x1] %vm113, 0.0
  %154 = vst.msk [vmem:[%s112 + $0xd1] sm:$0x1] %vm113, 0.0
  %155 = vst.msk [vmem:[%s112 + $0xe9] sm:$0x1] %vm113, 0.0
  %156 = vst.msk [vmem:[%s112 + $0x101] sm:$0x1] %vm113, 0.0
  %157 = vst.msk [vmem:[%s112 + $0x119] sm:$0x1] %vm113, 0.0
  %158 = vst.msk [vmem:[%s112 + $0x131] sm:$0x1] %vm113, 0.0
  %159 = vst.msk [vmem:[%s112 + $0x149] sm:$0x1] %vm113, 0.0
  %160 = vst.msk [vmem:[%s112 + $0x161] sm:$0x1] %vm113, 0.0
  %161 = vst.msk [vmem:[%s112 + $0x179] sm:$0x1] %vm113, 0.0
  %162 = vst.msk [vmem:[%s112 + $0x1c1] sm:$0x1] %vm113, 0.0
  %163 = vst.msk [vmem:[%s112 + $0x1d9] sm:$0x1] %vm113, 0.0
  %164 = vst.msk [vmem:[%s112 + $0x1f1] sm:$0x1] %vm113, 0.0
  %165 = vst.msk [vmem:[%s112 + $0x209] sm:$0x1] %vm113, 0.0
  %166 = vst.msk [vmem:[%s112 + $0x221] sm:$0x1] %vm113, 0.0
  %167 = vst.msk [vmem:[%s112 + $0x239] sm:$0x1] %vm113, 0.0
  %168 = vst.msk [vmem:[%s112 + $0x251] sm:$0x1] %vm113, 0.0
  %169 = vst.msk [vmem:[%s112 + $0x269] sm:$0x1] %vm113, 0.0
  %170 = vst.msk [vmem:[%s112 + $0x281] sm:$0x1] %vm113, 0.0
  %171 = vst.msk [vmem:[%s112 + $0x299] sm:$0x1] %vm113, 0.0
  %172 = vst.msk [vmem:[%s112 + $0x2b1] sm:$0x1] %vm113, 0.0
  %173 = vst.msk [vmem:[%s112 + $0x2c9] sm:$0x1] %vm113, 0.0
  %174 = vst.msk [vmem:[%s112 + $0x2e1] sm:$0x1] %vm113, 0.0
  %175 = vst.msk [vmem:[%s112 + $0x2f9] sm:$0x1] %vm113, 0.0
  %176 = vst.msk [vmem:[%s112 + $0x311] sm:$0x1] %vm113, 0.0
  %177 = vst.msk [vmem:[%s112 + $0x329] sm:$0x1] %vm113, 0.0
  %178 = vst.msk [vmem:[%s112 + $0x1] sm:$0xff] %vm97, %v33
  %179 = vst.msk [vmem:[%s112 + $0x9] sm:$0xff] %vm97, %v34
  %180 = vst.msk [vmem:[%s112 + $0x19] sm:$0xff] %vm97, %v35
  %181 = vst.msk [vmem:[%s112 + $0x21] sm:$0xff] %vm97, %v36
  %182 = vst.msk [vmem:[%s112 + $0x31] sm:$0xff] %vm97, %v37
  %183 = vst.msk [vmem:[%s112 + $0x39] sm:$0xff] %vm97, %v38
  %184 = vst.msk [vmem:[%s112 + $0x49] sm:$0xff] %vm97, %v39
  %185 = vst.msk [vmem:[%s112 + $0x51] sm:$0xff] %vm97, %v40
  %186 = vst.msk [vmem:[%s112 + $0x61] sm:$0xff] %vm97, %v41
  %187 = vst.msk [vmem:[%s112 + $0x69] sm:$0xff] %vm97, %v42
  %188 = vst.msk [vmem:[%s112 + $0x79] sm:$0xff] %vm97, %v43
  %189 = vst.msk [vmem:[%s112 + $0x81] sm:$0xff] %vm97, %v44
  %190 = vst.msk [vmem:[%s112 + $0x91] sm:$0xff] %vm97, %v45
  %191 = vst.msk [vmem:[%s112 + $0x99] sm:$0xff] %vm97, %v46
  %192 = vst.msk [vmem:[%s112 + $0xa9] sm:$0xff] %vm97, %v47
  %193 = vst.msk [vmem:[%s112 + $0xb1] sm:$0xff] %vm97, %v48
  %194 = vst.msk [vmem:[%s112 + $0xc1] sm:$0xff] %vm97, %v49
  %195 = vst.msk [vmem:[%s112 + $0xc9] sm:$0xff] %vm97, %v50
  %196 = vst.msk [vmem:[%s112 + $0xd9] sm:$0xff] %vm97, %v51
  %197 = vst.msk [vmem:[%s112 + $0xe1] sm:$0xff] %vm97, %v52
  %198 = vst.msk [vmem:[%s112 + $0xf1] sm:$0xff] %vm97, %v53
  %199 = vst.msk [vmem:[%s112 + $0xf9] sm:$0xff] %vm97, %v54
  %200 = vst.msk [vmem:[%s112 + $0x109] sm:$0xff] %vm97, %v55
  %201 = vst.msk [vmem:[%s112 + $0x111] sm:$0xff] %vm97, %v56
  %202 = vst.msk [vmem:[%s112 + $0x121] sm:$0xff] %vm97, %v57
  %203 = vst.msk [vmem:[%s112 + $0x129] sm:$0xff] %vm97, %v58
  %204 = vst.msk [vmem:[%s112 + $0x139] sm:$0xff] %vm97, %v59
  %205 = vst.msk [vmem:[%s112 + $0x141] sm:$0xff] %vm97, %v60
  %206 = vst.msk [vmem:[%s112 + $0x151] sm:$0xff] %vm97, %v61
  %207 = vst.msk [vmem:[%s112 + $0x159] sm:$0xff] %vm97, %v62
  %208 = vst.msk [vmem:[%s112 + $0x169] sm:$0xff] %vm97, %v63
  %209 = vst.msk [vmem:[%s112 + $0x171] sm:$0xff] %vm97, %v64
  %210 = vst.msk [vmem:[%s112 + $0x1b1] sm:$0xff] %vm97, %v65
  %211 = vst.msk [vmem:[%s112 + $0x1b9] sm:$0xff] %vm97, %v66
  %212 = vst.msk [vmem:[%s112 + $0x1c9] sm:$0xff] %vm97, %v67
  %213 = vst.msk [vmem:[%s112 + $0x1d1] sm:$0xff] %vm97, %v68
  %214 = vst.msk [vmem:[%s112 + $0x1e1] sm:$0xff] %vm97, %v69
  %215 = vst.msk [vmem:[%s112 + $0x1e9] sm:$0xff] %vm97, %v70
  %216 = vst.msk [vmem:[%s112 + $0x1f9] sm:$0xff] %vm97, %v71
  %217 = vst.msk [vmem:[%s112 + $0x201] sm:$0xff] %vm97, %v72
  %218 = vst.msk [vmem:[%s112 + $0x211] sm:$0xff] %vm97, %v73
  %219 = vst.msk [vmem:[%s112 + $0x219] sm:$0xff] %vm97, %v74
  %220 = vst.msk [vmem:[%s112 + $0x229] sm:$0xff] %vm97, %v75
  %221 = vst.msk [vmem:[%s112 + $0x231] sm:$0xff] %vm97, %v76
  %222 = vst.msk [vmem:[%s112 + $0x241] sm:$0xff] %vm97, %v77
  %223 = vst.msk [vmem:[%s112 + $0x249] sm:$0xff] %vm97, %v78
  %224 = vst.msk [vmem:[%s112 + $0x259] sm:$0xff] %vm97, %v79
  %225 = vst.msk [vmem:[%s112 + $0x261] sm:$0xff] %vm97, %v80
  %226 = vst.msk [vmem:[%s112 + $0x271] sm:$0xff] %vm97, %v81
  %227 = vst.msk [vmem:[%s112 + $0x279] sm:$0xff] %vm97, %v82
  %228 = vst.msk [vmem:[%s112 + $0x289] sm:$0xff] %vm97, %v83
  %229 = vst.msk [vmem:[%s112 + $0x291] sm:$0xff] %vm97, %v84
  %230 = vst.msk [vmem:[%s112 + $0x2a1] sm:$0xff] %vm97, %v85
  %231 = vst.msk [vmem:[%s112 + $0x2a9] sm:$0xff] %vm97, %v86
  %232 = vst.msk [vmem:[%s112 + $0x2b9] sm:$0xff] %vm97, %v87
  %233 = vst.msk [vmem:[%s112 + $0x2c1] sm:$0xff] %vm97, %v88
  %234 = vst.msk [vmem:[%s112 + $0x2d1] sm:$0xff] %vm97, %v89
  %235 = vst.msk [vmem:[%s112 + $0x2d9] sm:$0xff] %vm97, %v90
  %236 = vst.msk [vmem:[%s112 + $0x2e9] sm:$0xff] %vm97, %v91
  %237 = vst.msk [vmem:[%s112 + $0x2f1] sm:$0xff] %vm97, %v92
  %238 = vst.msk [vmem:[%s112 + $0x301] sm:$0xff] %vm97, %v93
  %239 = vst.msk [vmem:[%s112 + $0x309] sm:$0xff] %vm97, %v94
  %240 = vst.msk [vmem:[%s112 + $0x319] sm:$0xff] %vm97, %v95
  %241 = vst.msk [vmem:[%s112 + $0x321] sm:$0xff] %vm97, %v96
  %v242 = vld [vmem:[%s1] sm:$0x3]
  %v243 = vld [vmem:[%s1 + $0x2] sm:$0x3]
  %v244 = vld [vmem:[%s1 + $0x4] sm:$0x3]
  %v245 = vld [vmem:[%s1 + $0x6] sm:$0x3]
  %v246 = vld [vmem:[%s1 + $0x8] sm:$0x3]
  %v247 = vld [vmem:[%s1 + $0xa] sm:$0x3]
  %v248 = vld [vmem:[%s1 + $0xc] sm:$0x3]
  %v249 = vld [vmem:[%s1 + $0xe] sm:$0x3]
  %v250 = vld [vmem:[%s1 + $0x10] sm:$0x3]
  %v251 = vld [vmem:[%s2] sm:$0x1]
  %v252 = vld [vmem:[%s3] sm:$0x1]
  %v253 = vld [vmem:[%s4] sm:$0x1]
  %v254 = vld [vmem:[#allocation2] sm:$0xff]
  %v255 = vld [vmem:[#allocation2 + $0x8] sm:$0xff]
  %v256 = vld [vmem:[#allocation2 + $0x18] sm:$0xff]
  %v257 = vld [vmem:[#allocation2 + $0x20] sm:$0xff]
  %v258 = vld [vmem:[#allocation2 + $0x30] sm:$0xff]
  %v259 = vld [vmem:[#allocation2 + $0x38] sm:$0xff]
  %v260 = vld [vmem:[#allocation2 + $0x48] sm:$0xff]
  %v261 = vld [vmem:[#allocation2 + $0x50] sm:$0xff]
  %v262 = vld [vmem:[#allocation2 + $0x60] sm:$0xff]
  %v263 = vld [vmem:[#allocation2 + $0x68] sm:$0xff]
  %v264 = vld [vmem:[#allocation2 + $0x78] sm:$0xff]
  %v265 = vld [vmem:[#allocation2 + $0x80] sm:$0xff]
  %v266 = vld [vmem:[#allocation2 + $0x90] sm:$0xff]
  %v267 = vld [vmem:[#allocation2 + $0x98] sm:$0xff]
  %v268 = vld [vmem:[#allocation2 + $0xa8] sm:$0xff]
  %v269 = vld [vmem:[#allocation2 + $0xb0] sm:$0xff]
  %v270 = vld [vmem:[#allocation2 + $0xc0] sm:$0xff]
  %v271 = vld [vmem:[#allocation2 + $0xc8] sm:$0xff]
  %v272 = vld [vmem:[#allocation2 + $0xd8] sm:$0xff]
  %v273 = vld [vmem:[#allocation2 + $0xe0] sm:$0xff]
  %v274 = vld [vmem:[#allocation2 + $0xf0] sm:$0xff]
  %v275 = vld [vmem:[#allocation2 + $0xf8] sm:$0xff]
  %v276 = vld [vmem:[#allocation2 + $0x108] sm:$0xff]
  %v277 = vld [vmem:[#allocation2 + $0x110] sm:$0xff]
  %v278 = vld [vmem:[#allocation2 + $0x120] sm:$0xff]
  %v279 = vld [vmem:[#allocation2 + $0x128] sm:$0xff]
  %v280 = vld [vmem:[#allocation2 + $0x138] sm:$0xff]
  %v281 = vld [vmem:[#allocation2 + $0x140] sm:$0xff]
  %v282 = vld [vmem:[#allocation2 + $0x150] sm:$0xff]
  %v283 = vld [vmem:[#allocation2 + $0x158] sm:$0xff]
  %v284 = vld [vmem:[#allocation2 + $0x168] sm:$0xff]
  %v285 = vld [vmem:[#allocation2 + $0x170] sm:$0xff]
  %v286 = vld [vmem:[#allocation2 + $0x1b0] sm:$0xff]
  %v287 = vld [vmem:[#allocation2 + $0x1b8] sm:$0xff]
  %v288 = vld [vmem:[#allocation2 + $0x1c8] sm:$0xff]
  %v289 = vld [vmem:[#allocation2 + $0x1d0] sm:$0xff]
  %v290 = vld [vmem:[#allocation2 + $0x1e0] sm:$0xff]
  %v291 = vld [vmem:[#allocation2 + $0x1e8] sm:$0xff]
  %v292 = vld [vmem:[#allocation2 + $0x1f8] sm:$0xff]
  %v293 = vld [vmem:[#allocation2 + $0x200] sm:$0xff]
  %v294 = vld [vmem:[#allocation2 + $0x210] sm:$0xff]
  %v295 = vld [vmem:[#allocation2 + $0x218] sm:$0xff]
  %v296 = vld [vmem:[#allocation2 + $0x228] sm:$0xff]
  %v297 = vld [vmem:[#allocation2 + $0x230] sm:$0xff]
  %v298 = vld [vmem:[#allocation2 + $0x240] sm:$0xff]
  %v299 = vld [vmem:[#allocation2 + $0x248] sm:$0xff]
  %v300 = vld [vmem:[#allocation2 + $0x258] sm:$0xff]
  %v301 = vld [vmem:[#allocation2 + $0x260] sm:$0xff]
  %v302 = vld [vmem:[#allocation2 + $0x270] sm:$0xff]
  %v303 = vld [vmem:[#allocation2 + $0x278] sm:$0xff]
  %v304 = vld [vmem:[#allocation2 + $0x288] sm:$0xff]
  %v305 = vld [vmem:[#allocation2 + $0x290] sm:$0xff]
  %v306 = vld [vmem:[#allocation2 + $0x2a0] sm:$0xff]
  %v307 = vld [vmem:[#allocation2 + $0x2a8] sm:$0xff]
  %v308 = vld [vmem:[#allocation2 + $0x2b8] sm:$0xff]
  %v309 = vld [vmem:[#allocation2 + $0x2c0] sm:$0xff]
  %v310 = vld [vmem:[#allocation2 + $0x2d0] sm:$0xff]
  %v311 = vld [vmem:[#allocation2 + $0x2d8] sm:$0xff]
  %v312 = vld [vmem:[#allocation2 + $0x2e8] sm:$0xff]
  %v313 = vld [vmem:[#allocation2 + $0x2f0] sm:$0xff]
  %v314 = vld [vmem:[#allocation2 + $0x300] sm:$0xff]
  %v315 = vld [vmem:[#allocation2 + $0x308] sm:$0xff]
  %v316 = vld [vmem:[#allocation2 + $0x318] sm:$0xff]
  %v317 = vld [vmem:[#allocation2 + $0x320] sm:$0xff]
  %v318 = vpack.c.bf16 %v255, %v254
  %v319 = vpack.c.bf16 %v257, %v256
  %v320 = vpack.c.bf16 %v259, %v258
  %v321 = vpack.c.bf16 %v261, %v260
  %v322 = vpack.c.bf16 %v263, %v262
  %v323 = vpack.c.bf16 %v265, %v264
  %v324 = vpack.c.bf16 %v267, %v266
  %v325 = vpack.c.bf16 %v269, %v268
  %v326 = vpack.c.bf16 %v271, %v270
  %v327 = vpack.c.bf16 %v273, %v272
  %v328 = vpack.c.bf16 %v275, %v274
  %v329 = vpack.c.bf16 %v277, %v276
  %v330 = vpack.c.bf16 %v279, %v278
  %v331 = vpack.c.bf16 %v281, %v280
  %v332 = vpack.c.bf16 %v283, %v282
  %v333 = vpack.c.bf16 %v285, %v284
  %v334 = vpack.c.bf16 %v287, %v286
  %v335 = vpack.c.bf16 %v289, %v288
  %v336 = vpack.c.bf16 %v291, %v290
  %v337 = vpack.c.bf16 %v293, %v292
  %v338 = vpack.c.bf16 %v295, %v294
  %v339 = vpack.c.bf16 %v297, %v296
  %v340 = vpack.c.bf16 %v299, %v298
  %v341 = vpack.c.bf16 %v301, %v300
  %v342 = vpack.c.bf16 %v303, %v302
  %v343 = vpack.c.bf16 %v305, %v304
  %v344 = vpack.c.bf16 %v307, %v306
  %v345 = vpack.c.bf16 %v309, %v308
  %v346 = vpack.c.bf16 %v311, %v310
  %v347 = vpack.c.bf16 %v313, %v312
  %v348 = vpack.c.bf16 %v315, %v314
  %v349 = vpack.c.bf16 %v317, %v316
  %v350 = vld [vmem:[#allocation2 + $0x1] sm:$0xff]
  %v351 = vld [vmem:[#allocation2 + $0x9] sm:$0xff]
  %v352 = vld [vmem:[#allocation2 + $0x19] sm:$0xff]
  %v353 = vld [vmem:[#allocation2 + $0x21] sm:$0xff]
  %v354 = vld [vmem:[#allocation2 + $0x31] sm:$0xff]
  %v355 = vld [vmem:[#allocation2 + $0x39] sm:$0xff]
  %v356 = vld [vmem:[#allocation2 + $0x49] sm:$0xff]
  %v357 = vld [vmem:[#allocation2 + $0x51] sm:$0xff]
  %v358 = vld [vmem:[#allocation2 + $0x61] sm:$0xff]
  %v359 = vld [vmem:[#allocation2 + $0x69] sm:$0xff]
  %v360 = vld [vmem:[#allocation2 + $0x79] sm:$0xff]
  %v361 = vld [vmem:[#allocation2 + $0x81] sm:$0xff]
  %v362 = vld [vmem:[#allocation2 + $0x91] sm:$0xff]
  %v363 = vld [vmem:[#allocation2 + $0x99] sm:$0xff]
  %v364 = vld [vmem:[#allocation2 + $0xa9] sm:$0xff]
  %v365 = vld [vmem:[#allocation2 + $0xb1] sm:$0xff]
  %v366 = vld [vmem:[#allocation2 + $0xc1] sm:$0xff]
  %v367 = vld [vmem:[#allocation2 + $0xc9] sm:$0xff]
  %v368 = vld [vmem:[#allocation2 + $0xd9] sm:$0xff]
  %v369 = vld [vmem:[#allocation2 + $0xe1] sm:$0xff]
  %v370 = vld [vmem:[#allocation2 + $0xf1] sm:$0xff]
  %v371 = vld [vmem:[#allocation2 + $0xf9] sm:$0xff]
  %v372 = vld [vmem:[#allocation2 + $0x109] sm:$0xff]
  %v373 = vld [vmem:[#allocation2 + $0x111] sm:$0xff]
  %v374 = vld [vmem:[#allocation2 + $0x121] sm:$0xff]
  %v375 = vld [vmem:[#allocation2 + $0x129] sm:$0xff]
  %v376 = vld [vmem:[#allocation2 + $0x139] sm:$0xff]
  %v377 = vld [vmem:[#allocation2 + $0x141] sm:$0xff]
  %v378 = vld [vmem:[#allocation2 + $0x151] sm:$0xff]
  %v379 = vld [vmem:[#allocation2 + $0x159] sm:$0xff]
  %v380 = vld [vmem:[#allocation2 + $0x169] sm:$0xff]
  %v381 = vld [vmem:[#allocation2 + $0x171] sm:$0xff]
  %v382 = vld [vmem:[#allocation2 + $0x1b1] sm:$0xff]
  %v383 = vld [vmem:[#allocation2 + $0x1b9] sm:$0xff]
  %v384 = vld [vmem:[#allocation2 + $0x1c9] sm:$0xff]
  %v385 = vld [vmem:[#allocation2 + $0x1d1] sm:$0xff]
  %v386 = vld [vmem:[#allocation2 + $0x1e1] sm:$0xff]
  %v387 = vld [vmem:[#allocation2 + $0x1e9] sm:$0xff]
  %v388 = vld [vmem:[#allocation2 + $0x1f9] sm:$0xff]
  %v389 = vld [vmem:[#allocation2 + $0x201] sm:$0xff]
  %v390 = vld [vmem:[#allocation2 + $0x211] sm:$0xff]
  %v391 = vld [vmem:[#allocation2 + $0x219] sm:$0xff]
  %v392 = vld [vmem:[#allocation2 + $0x229] sm:$0xff]
  %v393 = vld [vmem:[#allocation2 + $0x231] sm:$0xff]
  %v394 = vld [vmem:[#allocation2 + $0x241] sm:$0xff]
  %v395 = vld [vmem:[#allocation2 + $0x249] sm:$0xff]
  %v396 = vld [vmem:[#allocation2 + $0x259] sm:$0xff]
  %v397 = vld [vmem:[#allocation2 + $0x261] sm:$0xff]
  %v398 = vld [vmem:[#allocation2 + $0x271] sm:$0xff]
  %v399 = vld [vmem:[#allocation2 + $0x279] sm:$0xff]
  %v400 = vld [vmem:[#allocation2 + $0x289] sm:$0xff]
  %v401 = vld [vmem:[#allocation2 + $0x291] sm:$0xff]
  %v402 = vld [vmem:[#allocation2 + $0x2a1] sm:$0xff]
  %v403 = vld [vmem:[#allocation2 + $0x2a9] sm:$0xff]
  %v404 = vld [vmem:[#allocation2 + $0x2b9] sm:$0xff]
  %v405 = vld [vmem:[#allocation2 + $0x2c1] sm:$0xff]
  %v406 = vld [vmem:[#allocation2 + $0x2d1] sm:$0xff]
  %v407 = vld [vmem:[#allocation2 + $0x2d9] sm:$0xff]
  %v408 = vld [vmem:[#allocation2 + $0x2e9] sm:$0xff]
  %v409 = vld [vmem:[#allocation2 + $0x2f1] sm:$0xff]
  %v410 = vld [vmem:[#allocation2 + $0x301] sm:$0xff]
  %v411 = vld [vmem:[#allocation2 + $0x309] sm:$0xff]
  %v412 = vld [vmem:[#allocation2 + $0x319] sm:$0xff]
  %v413 = vld [vmem:[#allocation2 + $0x321] sm:$0xff]
  %v414 = vpack.c.bf16 %v351, %v350
  %v415 = vpack.c.bf16 %v353, %v352
  %v416 = vpack.c.bf16 %v355, %v354
  %v417 = vpack.c.bf16 %v357, %v356
  %v418 = vpack.c.bf16 %v359, %v358
  %v419 = vpack.c.bf16 %v361, %v360
  %v420 = vpack.c.bf16 %v363, %v362
  %v421 = vpack.c.bf16 %v365, %v364
  %v422 = vpack.c.bf16 %v367, %v366
  %v423 = vpack.c.bf16 %v369, %v368
  %v424 = vpack.c.bf16 %v371, %v370
  %v425 = vpack.c.bf16 %v373, %v372
  %v426 = vpack.c.bf16 %v375, %v374
  %v427 = vpack.c.bf16 %v377, %v376
  %v428 = vpack.c.bf16 %v379, %v378
  %v429 = vpack.c.bf16 %v381, %v380
  %v430 = vpack.c.bf16 %v383, %v382
  %v431 = vpack.c.bf16 %v385, %v384
  %v432 = vpack.c.bf16 %v387, %v386
  %v433 = vpack.c.bf16 %v389, %v388
  %v434 = vpack.c.bf16 %v391, %v390
  %v435 = vpack.c.bf16 %v393, %v392
  %v436 = vpack.c.bf16 %v395, %v394
  %v437 = vpack.c.bf16 %v397, %v396
  %v438 = vpack.c.bf16 %v399, %v398
  %v439 = vpack.c.bf16 %v401, %v400
  %v440 = vpack.c.bf16 %v403, %v402
  %v441 = vpack.c.bf16 %v405, %v404
  %v442 = vpack.c.bf16 %v407, %v406
  %v443 = vpack.c.bf16 %v409, %v408
  %v444 = vpack.c.bf16 %v411, %v410
  %v445 = vpack.c.bf16 %v413, %v412
  %v447 = vsel %vm97, %v414, 0
  %v450 = vsel %vm97, %v415, 0
  %v453 = vsel %vm97, %v416, 0
  %v456 = vsel %vm97, %v417, 0
  %v459 = vsel %vm97, %v418, 0
  %v462 = vsel %vm97, %v419, 0
  %v465 = vsel %vm97, %v420, 0
  %v468 = vsel %vm97, %v421, 0
  %v471 = vsel %vm97, %v422, 0
  %v474 = vsel %vm97, %v423, 0
  %v477 = vsel %vm97, %v424, 0
  %v480 = vsel %vm97, %v425, 0
  %v483 = vsel %vm97, %v426, 0
  %v486 = vsel %vm97, %v427, 0
  %v489 = vsel %vm97, %v428, 0
  %v492 = vsel %vm97, %v429, 0
  %v495 = vsel %vm97, %v430, 0
  %v498 = vsel %vm97, %v431, 0
  %v501 = vsel %vm97, %v432, 0
  %v504 = vsel %vm97, %v433, 0
  %v507 = vsel %vm97, %v434, 0
  %v510 = vsel %vm97, %v435, 0
  %v513 = vsel %vm97, %v436, 0
  %v516 = vsel %vm97, %v437, 0
  %v519 = vsel %vm97, %v438, 0
  %v522 = vsel %vm97, %v439, 0
  %v525 = vsel %vm97, %v440, 0
  %v528 = vsel %vm97, %v441, 0
  %v531 = vsel %vm97, %v442, 0
  %v534 = vsel %vm97, %v443, 0
  %v537 = vsel %vm97, %v444, 0
  %v540 = vsel %vm97, %v445, 0
  %vm542 = vcmask 1041408
  %v544 = vsel %vm542, %v243, 0
  %546 = vmatprep.subr.bf16.mxu0 0
  %547 = vmatpush1.bf16.msra.mxu0 %v544
  %548 = vmatprep.subr.bf16.mxu0 0
  %549 = vmatpush1.bf16.msra.mxu0 0
  %550 = vmatprep.subr.bf16.mxu0 0
  %551 = vmatpush1.bf16.msra.mxu0 0
  %552 = vmatprep.subr.bf16.mxu0 0
  %553 = vmatpush1.bf16.msra.mxu0 0
  %554 = vmatprep.subr.bf16.mxu0 0
  %555 = vmatpush1.bf16.msra.mxu0 0
  %556 = vmatprep.subr.bf16.mxu0 0
  %557 = vmatpush1.bf16.msra.mxu0 0
  %558 = vmatprep.subr.bf16.mxu0 0
  %559 = vmatpush1.bf16.msra.mxu0 0
  %560 = vmatprep.subr.bf16.mxu0 0
  %561 = vmatpush1.bf16.msra.mxu0 0
  %562 = vmatprep.subr.bf16.mxu0 0
  %563 = vmatpush1.bf16.msra.mxu0 0
  %564 = vmatprep.subr.bf16.mxu0 0
  %565 = vmatpush1.bf16.msra.mxu0 0
  %566 = vmatprep.subr.bf16.mxu0 0
  %567 = vmatpush1.bf16.msra.mxu0 0
  %568 = vmatprep.subr.bf16.mxu0 0
  %569 = vmatpush1.bf16.msra.mxu0 0
  %570 = vmatprep.subr.bf16.mxu0 0
  %571 = vmatpush1.bf16.msra.mxu0 0
  %572 = vmatprep.subr.bf16.mxu0 0
  %573 = vmatpush1.bf16.msra.mxu0 0
  %574 = vmatprep.subr.bf16.mxu0 0
  %575 = vmatpush1.bf16.msra.mxu0 0
  %576 = vmatprep.subr.bf16.mxu0 0
  %577 = vmatpush1.bf16.msra.mxu0 0
  %578 = vmatprep.mubr.bf16.mxu0 0
  %579 = vmatmul.mubr.bf16.gmra.mrb[0].mxu0 %v447
  %v580 = vpop.f32.mrb[0].mxu0
  %v581 = vadd.f32 0.0, %v580
  %v582 = vpop.f32.mrb[0].mxu0
  %v583 = vpop.f32.mrb[0].mxu0
  %v584 = vadd.f32 0.0, %v583
  %v585 = vpop.f32.mrb[0].mxu0
  %586 = vmatprep.mubr.bf16.mxu0 0
  %587 = vmatmul.mubr.bf16.gmra.mrb[0].mxu0 %v450
  %v588 = vpop.f32.mrb[0].mxu0
  %v589 = vadd.f32 0.0, %v588
  %v590 = vpop.f32.mrb[0].mxu0
  %v591 = vpop.f32.mrb[0].mxu0
  %v592 = vadd.f32 0.0, %v591
  %v593 = vpop.f32.mrb[0].mxu0
  %594 = vmatprep.mubr.bf16.mxu0 0
  %595 = vmatmul.mubr.bf16.gmra.mrb[0].mxu0 %v453
  %v596 = vpop.f32.mrb[0].mxu0
  %v597 = vadd.f32 0.0, %v596
  %v598 = vpop.f32.mrb[0].mxu0
  %v599 = vpop.f32.mrb[0].mxu0
  %v600 = vadd.f32 0.0, %v599
  %v601 = vpop.f32.mrb[0].mxu0
  %602 = vmatprep.mubr.bf16.mxu0 0
  %603 = vmatmul.mubr.bf16.gmra.mrb[0].mxu0 %v456
  %v604 = vpop.f32.mrb[0].mxu0
  %v605 = vadd.f32 0.0, %v604
  %v606 = vpop.f32.mrb[0].mxu0
  %v607 = vpop.f32.mrb[0].mxu0
  %v608 = vadd.f32 0.0, %v607
  %v609 = vpop.f32.mrb[0].mxu0
  %610 = vmatprep.mubr.bf16.mxu0 0
  %611 = vmatmul.mubr.bf16.gmra.mrb[0].mxu0 %v459
  %v612 = vpop.f32.mrb[0].mxu0
  %v613 = vadd.f32 0.0, %v612
  %v614 = vpop.f32.mrb[0].mxu0
  %v615 = vpop.f32.mrb[0].mxu0
  %v616 = vadd.f32 0.0, %v615
  %v617 = vpop.f32.mrb[0].mxu0
  %618 = vmatprep.mubr.bf16.mxu0 0
  %619 = vmatmul.mubr.bf16.gmra.mrb[0].mxu0 %v462
  %v620 = vpop.f32.mrb[0].mxu0
  %v621 = vadd.f32 0.0, %v620
  %v622 = vpop.f32.mrb[0].mxu0
  %v623 = vpop.f32.mrb[0].mxu0
  %v624 = vadd.f32 0.0, %v623
  %v625 = vpop.f32.mrb[0].mxu0
  %626 = vmatprep.mubr.bf16.mxu0 0
  %627 = vmatmul.mubr.bf16.gmra.mrb[0].mxu0 %v465
  %v628 = vpop.f32.mrb[0].mxu0
  %v629 = vadd.f32 0.0, %v628
  %v630 = vpop.f32.mrb[0].mxu0
  %v631 = vpop.f32.mrb[0].mxu0
  %v632 = vadd.f32 0.0, %v631
  %v633 = vpop.f32.mrb[0].mxu0
  %634 = vmatprep.mubr.bf16.mxu0 0
  %635 = vmatmul.mubr.bf16.gmra.mrb[0].mxu0 %v468
  %v636 = vpop.f32.mrb[0].mxu0
  %v637 = vadd.f32 0.0, %v636
  %v638 = vpop.f32.mrb[0].mxu0
  %v639 = vpop.f32.mrb[0].mxu0
  %v640 = vadd.f32 0.0, %v639
  %v641 = vpop.f32.mrb[0].mxu0
  %642 = vmatprep.mubr.bf16.mxu0 0
  %643 = vmatmul.mubr.bf16.gmra.mrb[0].mxu0 %v471
  %v644 = vpop.f32.mrb[0].mxu0
  %v645 = vadd.f32 0.0, %v644
  %v646 = vpop.f32.mrb[0].mxu0
  %v647 = vpop.f32.mrb[0].mxu0
  %v648 = vadd.f32 0.0, %v647
  %v649 = vpop.f32.mrb[0].mxu0
  %650 = vmatprep.mubr.bf16.mxu0 0
  %651 = vmatmul.mubr.bf16.gmra.mrb[0].mxu0 %v474
  %v652 = vpop.f32.mrb[0].mxu0
  %v653 = vadd.f32 0.0, %v652
  %v654 = vpop.f32.mrb[0].mxu0
  %v655 = vpop.f32.mrb[0].mxu0
  %v656 = vadd.f32 0.0, %v655
  %v657 = vpop.f32.mrb[0].mxu0
  %658 = vmatprep.mubr.bf16.mxu0 0
  %659 = vmatmul.mubr.bf16.gmra.mrb[0].mxu0 %v477
  %v660 = vpop.f32.mrb[0].mxu0
  %v661 = vadd.f32 0.0, %v660
  %v662 = vpop.f32.mrb[0].mxu0
  %v663 = vpop.f32.mrb[0].mxu0
  %v664 = vadd.f32 0.0, %v663
  %v665 = vpop.f32.mrb[0].mxu0
  %666 = vmatprep.mubr.bf16.mxu0 0
  %667 = vmatmul.mubr.bf16.gmra.mrb[0].mxu0 %v480
  %v668 = vpop.f32.mrb[0].mxu0
  %v669 = vadd.f32 0.0, %v668
  %v670 = vpop.f32.mrb[0].mxu0
  %v671 = vpop.f32.mrb[0].mxu0
  %v672 = vadd.f32 0.0, %v671
  %v673 = vpop.f32.mrb[0].mxu0
  %674 = vmatprep.mubr.bf16.mxu0 0
  %675 = vmatmul.mubr.bf16.gmra.mrb[0].mxu0 %v483
  %v676 = vpop.f32.mrb[0].mxu0
  %v677 = vadd.f32 0.0, %v676
  %v678 = vpop.f32.mrb[0].mxu0
  %v679 = vpop.f32.mrb[0].mxu0
  %v680 = vadd.f32 0.0, %v679
  %v681 = vpop.f32.mrb[0].mxu0
  %682 = vmatprep.mubr.bf16.mxu0 0
  %683 = vmatmul.mubr.bf16.gmra.mrb[0].mxu0 %v486
  %v684 = vpop.f32.mrb[0].mxu0
  %v685 = vadd.f32 0.0, %v684
  %v686 = vpop.f32.mrb[0].mxu0
  %v687 = vpop.f32.mrb[0].mxu0
  %v688 = vadd.f32 0.0, %v687
  %v689 = vpop.f32.mrb[0].mxu0
  %690 = vmatprep.mubr.bf16.mxu0 0
  %691 = vmatmul.mubr.bf16.gmra.mrb[0].mxu0 %v489
  %v692 = vpop.f32.mrb[0].mxu0
  %v693 = vadd.f32 0.0, %v692
  %v694 = vpop.f32.mrb[0].mxu0
  %v695 = vpop.f32.mrb[0].mxu0
  %v696 = vadd.f32 0.0, %v695
  %v697 = vpop.f32.mrb[0].mxu0
  %698 = vmatprep.mubr.bf16.mxu0 0
  %699 = vmatmul.mubr.bf16.gmra.mrb[0].mxu0 %v492
  %v700 = vpop.f32.mrb[0].mxu0
  %v701 = vadd.f32 0.0, %v700
  %v702 = vpop.f32.mrb[0].mxu0
  %v703 = vpop.f32.mrb[0].mxu0
  %v704 = vadd.f32 0.0, %v703
  %v705 = vpop.f32.mrb[0].mxu0
  %706 = vmatprep.mubr.bf16.mxu0 0
  %707 = vmatmul.mubr.bf16.gmra.mrb[0].mxu0 %v495
  %v708 = vpop.f32.mrb[0].mxu0
  %v709 = vadd.f32 0.0, %v708
  %v710 = vpop.f32.mrb[0].mxu0
  %v711 = vpop.f32.mrb[0].mxu0
  %v712 = vadd.f32 0.0, %v711
  %v713 = vpop.f32.mrb[0].mxu0
  %714 = vmatprep.mubr.bf16.mxu0 0
  %715 = vmatmul.mubr.bf16.gmra.mrb[0].mxu0 %v498
  %v716 = vpop.f32.mrb[0].mxu0
  %v717 = vadd.f32 0.0, %v716
  %v718 = vpop.f32.mrb[0].mxu0
  %v719 = vpop.f32.mrb[0].mxu0
  %v720 = vadd.f32 0.0, %v719
  %v721 = vpop.f32.mrb[0].mxu0
  %722 = vmatprep.mubr.bf16.mxu0 0
  %723 = vmatmul.mubr.bf16.gmra.mrb[0].mxu0 %v501
  %v724 = vpop.f32.mrb[0].mxu0
  %v725 = vadd.f32 0.0, %v724
  %v726 = vpop.f32.mrb[0].mxu0
  %v727 = vpop.f32.mrb[0].mxu0
  %v728 = vadd.f32 0.0, %v727
  %v729 = vpop.f32.mrb[0].mxu0
  %730 = vmatprep.mubr.bf16.mxu0 0
  %731 = vmatmul.mubr.bf16.gmra.mrb[0].mxu0 %v504
  %v732 = vpop.f32.mrb[0].mxu0
  %v733 = vadd.f32 0.0, %v732
  %v734 = vpop.f32.mrb[0].mxu0
  %v735 = vpop.f32.mrb[0].mxu0
  %v736 = vadd.f32 0.0, %v735
  %v737 = vpop.f32.mrb[0].mxu0
  %738 = vmatprep.mubr.bf16.mxu0 0
  %739 = vmatmul.mubr.bf16.gmra.mrb[0].mxu0 %v507
  %v740 = vpop.f32.mrb[0].mxu0
  %v741 = vadd.f32 0.0, %v740
  %v742 = vpop.f32.mrb[0].mxu0
  %v743 = vpop.f32.mrb[0].mxu0
  %v744 = vadd.f32 0.0, %v743
  %v745 = vpop.f32.mrb[0].mxu0
  %746 = vmatprep.mubr.bf16.mxu0 0
  %747 = vmatmul.mubr.bf16.gmra.mrb[0].mxu0 %v510
  %v748 = vpop.f32.mrb[0].mxu0
  %v749 = vadd.f32 0.0, %v748
  %v750 = vpop.f32.mrb[0].mxu0
  %v751 = vpop.f32.mrb[0].mxu0
  %v752 = vadd.f32 0.0, %v751
  %v753 = vpop.f32.mrb[0].mxu0
  %754 = vmatprep.mubr.bf16.mxu0 0
  %755 = vmatmul.mubr.bf16.gmra.mrb[0].mxu0 %v513
  %v756 = vpop.f32.mrb[0].mxu0
  %v757 = vadd.f32 0.0, %v756
  %v758 = vpop.f32.mrb[0].mxu0
  %v759 = vpop.f32.mrb[0].mxu0
  %v760 = vadd.f32 0.0, %v759
  %v761 = vpop.f32.mrb[0].mxu0
  %762 = vmatprep.mubr.bf16.mxu0 0
  %763 = vmatmul.mubr.bf16.gmra.mrb[0].mxu0 %v516
  %v764 = vpop.f32.mrb[0].mxu0
  %v765 = vadd.f32 0.0, %v764
  %v766 = vpop.f32.mrb[0].mxu0
  %v767 = vpop.f32.mrb[0].mxu0
  %v768 = vadd.f32 0.0, %v767
  %v769 = vpop.f32.mrb[0].mxu0
  %770 = vmatprep.mubr.bf16.mxu0 0
  %771 = vmatmul.mubr.bf16.gmra.mrb[0].mxu0 %v519
  %v772 = vpop.f32.mrb[0].mxu0
  %v773 = vadd.f32 0.0, %v772
  %v774 = vpop.f32.mrb[0].mxu0
  %v775 = vpop.f32.mrb[0].mxu0
  %v776 = vadd.f32 0.0, %v775
  %v777 = vpop.f32.mrb[0].mxu0
  %778 = vmatprep.mubr.bf16.mxu0 0
  %779 = vmatmul.mubr.bf16.gmra.mrb[0].mxu0 %v522
  %v780 = vpop.f32.mrb[0].mxu0
  %v781 = vadd.f32 0.0, %v780
  %v782 = vpop.f32.mrb[0].mxu0
  %v783 = vpop.f32.mrb[0].mxu0
  %v784 = vadd.f32 0.0, %v783
  %v785 = vpop.f32.mrb[0].mxu0
  %786 = vmatprep.mubr.bf16.mxu0 0
  %787 = vmatmul.mubr.bf16.gmra.mrb[0].mxu0 %v525
  %v788 = vpop.f32.mrb[0].mxu0
  %v789 = vadd.f32 0.0, %v788
  %v790 = vpop.f32.mrb[0].mxu0
  %v791 = vpop.f32.mrb[0].mxu0
  %v792 = vadd.f32 0.0, %v791
  %v793 = vpop.f32.mrb[0].mxu0
  %794 = vmatprep.mubr.bf16.mxu0 0
  %795 = vmatmul.mubr.bf16.gmra.mrb[0].mxu0 %v528
  %v796 = vpop.f32.mrb[0].mxu0
  %v797 = vadd.f32 0.0, %v796
  %v798 = vpop.f32.mrb[0].mxu0
  %v799 = vpop.f32.mrb[0].mxu0
  %v800 = vadd.f32 0.0, %v799
  %v801 = vpop.f32.mrb[0].mxu0
  %802 = vmatprep.mubr.bf16.mxu0 0
  %803 = vmatmul.mubr.bf16.gmra.mrb[0].mxu0 %v531
  %v804 = vpop.f32.mrb[0].mxu0
  %v805 = vadd.f32 0.0, %v804
  %v806 = vpop.f32.mrb[0].mxu0
  %v807 = vpop.f32.mrb[0].mxu0
  %v808 = vadd.f32 0.0, %v807
  %v809 = vpop.f32.mrb[0].mxu0
  %810 = vmatprep.mubr.bf16.mxu0 0
  %811 = vmatmul.mubr.bf16.gmra.mrb[0].mxu0 %v534
  %v812 = vpop.f32.mrb[0].mxu0
  %v813 = vadd.f32 0.0, %v812
  %v814 = vpop.f32.mrb[0].mxu0
  %v815 = vpop.f32.mrb[0].mxu0
  %v816 = vadd.f32 0.0, %v815
  %v817 = vpop.f32.mrb[0].mxu0
  %818 = vmatprep.mubr.bf16.mxu0 0
  %819 = vmatmul.mubr.bf16.gmra.mrb[0].mxu0 %v537
  %v820 = vpop.f32.mrb[0].mxu0
  %v821 = vadd.f32 0.0, %v820
  %v822 = vpop.f32.mrb[0].mxu0
  %v823 = vpop.f32.mrb[0].mxu0
  %v824 = vadd.f32 0.0, %v823
  %v825 = vpop.f32.mrb[0].mxu0
  %826 = vmatprep.mubr.bf16.mxu0 0
  %827 = vmatmul.mubr.bf16.gmra.mrb[0].mxu0 %v540
  %v828 = vpop.f32.mrb[0].mxu0
  %v829 = vadd.f32 0.0, %v828
  %v830 = vpop.f32.mrb[0].mxu0
  %v831 = vpop.f32.mrb[0].mxu0
  %v832 = vadd.f32 0.0, %v831
  %v833 = vpop.f32.mrb[0].mxu0
  %834 = vdwg.mxu0
  %v836 = vsel %vm97, %v318, 0
  %v839 = vsel %vm97, %v319, 0
  %v842 = vsel %vm97, %v320, 0
  %v845 = vsel %vm97, %v321, 0
  %v848 = vsel %vm97, %v322, 0
  %v851 = vsel %vm97, %v323, 0
  %v854 = vsel %vm97, %v324, 0
  %v857 = vsel %vm97, %v325, 0
  %v860 = vsel %vm97, %v326, 0
  %v863 = vsel %vm97, %v327, 0
  %v866 = vsel %vm97, %v328, 0
  %v869 = vsel %vm97, %v329, 0
  %v872 = vsel %vm97, %v330, 0
  %v875 = vsel %vm97, %v331, 0
  %v878 = vsel %vm97, %v332, 0
  %v881 = vsel %vm97, %v333, 0
  %v884 = vsel %vm97, %v334, 0
  %v887 = vsel %vm97, %v335, 0
  %v890 = vsel %vm97, %v336, 0
  %v893 = vsel %vm97, %v337, 0
  %v896 = vsel %vm97, %v338, 0
  %v899 = vsel %vm97, %v339, 0
  %v902 = vsel %vm97, %v340, 0
  %v905 = vsel %vm97, %v341, 0
  %v908 = vsel %vm97, %v342, 0
  %v911 = vsel %vm97, %v343, 0
  %v914 = vsel %vm97, %v344, 0
  %v917 = vsel %vm97, %v345, 0
  %v920 = vsel %vm97, %v346, 0
  %v923 = vsel %vm97, %v347, 0
  %v926 = vsel %vm97, %v348, 0
  %v929 = vsel %vm97, %v349, 0
  %v932 = vsel %vm542, %v242, 0
  %934 = vmatprep.subr.bf16.mxu0 0
  %935 = vmatpush1.bf16.msra.mxu0 %v932
  %936 = vmatprep.subr.bf16.mxu0 0
  %937 = vmatpush1.bf16.msra.mxu0 0
  %938 = vmatprep.subr.bf16.mxu0 0
  %939 = vmatpush1.bf16.msra.mxu0 0
  %940 = vmatprep.subr.bf16.mxu0 0
  %941 = vmatpush1.bf16.msra.mxu0 0
  %942 = vmatprep.subr.bf16.mxu0 0
  %943 = vmatpush1.bf16.msra.mxu0 0
  %944 = vmatprep.subr.bf16.mxu0 0
  %945 = vmatpush1.bf16.msra.mxu0 0
  %946 = vmatprep.subr.bf16.mxu0 0
  %947 = vmatpush1.bf16.msra.mxu0 0
  %948 = vmatprep.subr.bf16.mxu0 0
  %949 = vmatpush1.bf16.msra.mxu0 0
  %950 = vmatprep.subr.bf16.mxu0 0
  %951 = vmatpush1.bf16.msra.mxu0 0
  %952 = vmatprep.subr.bf16.mxu0 0
  %953 = vmatpush1.bf16.msra.mxu0 0
  %954 = vmatprep.subr.bf16.mxu0 0
  %955 = vmatpush1.bf16.msra.mxu0 0
  %956 = vmatprep.subr.bf16.mxu0 0
  %957 = vmatpush1.bf16.msra.mxu0 0
  %958 = vmatprep.subr.bf16.mxu0 0
  %959 = vmatpush1.bf16.msra.mxu0 0
  %960 = vmatprep.subr.bf16.mxu0 0
  %961 = vmatpush1.bf16.msra.mxu0 0
  %962 = vmatprep.subr.bf16.mxu0 0
  %963 = vmatpush1.bf16.msra.mxu0 0
  %964 = vmatprep.subr.bf16.mxu0 0
  %965 = vmatpush1.bf16.msra.mxu0 0
  %966 = vmatprep.mubr.bf16.mxu0 0
  %967 = vmatmul.mubr.bf16.gmra.mrb[0].mxu0 %v836
  %v968 = vpop.f32.mrb[0].mxu0
  %v969 = vadd.f32 %v581, %v968
  %v970 = vpop.f32.mrb[0].mxu0
  %v971 = vpop.f32.mrb[0].mxu0
  %v972 = vadd.f32 %v584, %v971
  %v973 = vpop.f32.mrb[0].mxu0
  %974 = vmatprep.mubr.bf16.mxu0 0
  %975 = vmatmul.mubr.bf16.gmra.mrb[0].mxu0 %v839
  %v976 = vpop.f32.mrb[0].mxu0
  %v977 = vadd.f32 %v589, %v976
  %v978 = vpop.f32.mrb[0].mxu0
  %v979 = vpop.f32.mrb[0].mxu0
  %v980 = vadd.f32 %v592, %v979
  %v981 = vpop.f32.mrb[0].mxu0
  %982 = vmatprep.mubr.bf16.mxu0 0
  %983 = vmatmul.mubr.bf16.gmra.mrb[0].mxu0 %v842
  %v984 = vpop.f32.mrb[0].mxu0
  %v985 = vadd.f32 %v597, %v984
  %v986 = vpop.f32.mrb[0].mxu0
  %v987 = vpop.f32.mrb[0].mxu0
  %v988 = vadd.f32 %v600, %v987
  %v989 = vpop.f32.mrb[0].mxu0
  %990 = vmatprep.mubr.bf16.mxu0 0
  %991 = vmatmul.mubr.bf16.gmra.mrb[0].mxu0 %v845
  %v992 = vpop.f32.mrb[0].mxu0
  %v993 = vadd.f32 %v605, %v992
  %v994 = vpop.f32.mrb[0].mxu0
  %v995 = vpop.f32.mrb[0].mxu0
  %v996 = vadd.f32 %v608, %v995
  %v997 = vpop.f32.mrb[0].mxu0
  %998 = vmatprep.mubr.bf16.mxu0 0
  %999 = vmatmul.mubr.bf16.gmra.mrb[0].mxu0 %v848
  %v1000 = vpop.f32.mrb[0].mxu0
  %v1001 = vadd.f32 %v613, %v1000
  %v1002 = vpop.f32.mrb[0].mxu0
  %v1003 = vpop.f32.mrb[0].mxu0
  %v1004 = vadd.f32 %v616, %v1003
  %v1005 = vpop.f32.mrb[0].mxu0
  %1006 = vmatprep.mubr.bf16.mxu0 0
  %1007 = vmatmul.mubr.bf16.gmra.mrb[0].mxu0 %v851
  %v1008 = vpop.f32.mrb[0].mxu0
  %v1009 = vadd.f32 %v621, %v1008
  %v1010 = vpop.f32.mrb[0].mxu0
  %v1011 = vpop.f32.mrb[0].mxu0
  %v1012 = vadd.f32 %v624, %v1011
  %v1013 = vpop.f32.mrb[0].mxu0
  %1014 = vmatprep.mubr.bf16.mxu0 0
  %1015 = vmatmul.mubr.bf16.gmra.mrb[0].mxu0 %v854
  %v1016 = vpop.f32.mrb[0].mxu0
  %v1017 = vadd.f32 %v629, %v1016
  %v1018 = vpop.f32.mrb[0].mxu0
  %v1019 = vpop.f32.mrb[0].mxu0
  %v1020 = vadd.f32 %v632, %v1019
  %v1021 = vpop.f32.mrb[0].mxu0
  %1022 = vmatprep.mubr.bf16.mxu0 0
  %1023 = vmatmul.mubr.bf16.gmra.mrb[0].mxu0 %v857
  %v1024 = vpop.f32.mrb[0].mxu0
  %v1025 = vadd.f32 %v637, %v1024
  %v1026 = vpop.f32.mrb[0].mxu0
  %v1027 = vpop.f32.mrb[0].mxu0
  %v1028 = vadd.f32 %v640, %v1027
  %v1029 = vpop.f32.mrb[0].mxu0
  %1030 = vmatprep.mubr.bf16.mxu0 0
  %1031 = vmatmul.mubr.bf16.gmra.mrb[0].mxu0 %v860
  %v1032 = vpop.f32.mrb[0].mxu0
  %v1033 = vadd.f32 %v645, %v1032
  %v1034 = vpop.f32.mrb[0].mxu0
  %v1035 = vpop.f32.mrb[0].mxu0
  %v1036 = vadd.f32 %v648, %v1035
  %v1037 = vpop.f32.mrb[0].mxu0
  %1038 = vmatprep.mubr.bf16.mxu0 0
  %1039 = vmatmul.mubr.bf16.gmra.mrb[0].mxu0 %v863
  %v1040 = vpop.f32.mrb[0].mxu0
  %v1041 = vadd.f32 %v653, %v1040
  %v1042 = vpop.f32.mrb[0].mxu0
  %v1043 = vpop.f32.mrb[0].mxu0
  %v1044 = vadd.f32 %v656, %v1043
  %v1045 = vpop.f32.mrb[0].mxu0
  %1046 = vmatprep.mubr.bf16.mxu0 0
  %1047 = vmatmul.mubr.bf16.gmra.mrb[0].mxu0 %v866
  %v1048 = vpop.f32.mrb[0].mxu0
  %v1049 = vadd.f32 %v661, %v1048
  %v1050 = vpop.f32.mrb[0].mxu0
  %v1051 = vpop.f32.mrb[0].mxu0
  %v1052 = vadd.f32 %v664, %v1051
  %v1053 = vpop.f32.mrb[0].mxu0
  %1054 = vmatprep.mubr.bf16.mxu0 0
  %1055 = vmatmul.mubr.bf16.gmra.mrb[0].mxu0 %v869
  %v1056 = vpop.f32.mrb[0].mxu0
  %v1057 = vadd.f32 %v669, %v1056
  %v1058 = vpop.f32.mrb[0].mxu0
  %v1059 = vpop.f32.mrb[0].mxu0
  %v1060 = vadd.f32 %v672, %v1059
  %v1061 = vpop.f32.mrb[0].mxu0
  %1062 = vmatprep.mubr.bf16.mxu0 0
  %1063 = vmatmul.mubr.bf16.gmra.mrb[0].mxu0 %v872
  %v1064 = vpop.f32.mrb[0].mxu0
  %v1065 = vadd.f32 %v677, %v1064
  %v1066 = vpop.f32.mrb[0].mxu0
  %v1067 = vpop.f32.mrb[0].mxu0
  %v1068 = vadd.f32 %v680, %v1067
  %v1069 = vpop.f32.mrb[0].mxu0
  %1070 = vmatprep.mubr.bf16.mxu0 0
  %1071 = vmatmul.mubr.bf16.gmra.mrb[0].mxu0 %v875
  %v1072 = vpop.f32.mrb[0].mxu0
  %v1073 = vadd.f32 %v685, %v1072
  %v1074 = vpop.f32.mrb[0].mxu0
  %v1075 = vpop.f32.mrb[0].mxu0
  %v1076 = vadd.f32 %v688, %v1075
  %v1077 = vpop.f32.mrb[0].mxu0
  %1078 = vmatprep.mubr.bf16.mxu0 0
  %1079 = vmatmul.mubr.bf16.gmra.mrb[0].mxu0 %v878
  %v1080 = vpop.f32.mrb[0].mxu0
  %v1081 = vadd.f32 %v693, %v1080
  %v1082 = vpop.f32.mrb[0].mxu0
  %v1083 = vpop.f32.mrb[0].mxu0
  %v1084 = vadd.f32 %v696, %v1083
  %v1085 = vpop.f32.mrb[0].mxu0
  %1086 = vmatprep.mubr.bf16.mxu0 0
  %1087 = vmatmul.mubr.bf16.gmra.mrb[0].mxu0 %v881
  %v1088 = vpop.f32.mrb[0].mxu0
  %v1089 = vadd.f32 %v701, %v1088
  %v1090 = vpop.f32.mrb[0].mxu0
  %v1091 = vpop.f32.mrb[0].mxu0
  %v1092 = vadd.f32 %v704, %v1091
  %v1093 = vpop.f32.mrb[0].mxu0
  %1094 = vmatprep.mubr.bf16.mxu0 0
  %1095 = vmatmul.mubr.bf16.gmra.mrb[0].mxu0 %v884
  %v1096 = vpop.f32.mrb[0].mxu0
  %v1097 = vadd.f32 %v709, %v1096
  %v1098 = vpop.f32.mrb[0].mxu0
  %v1099 = vpop.f32.mrb[0].mxu0
  %v1100 = vadd.f32 %v712, %v1099
  %v1101 = vpop.f32.mrb[0].mxu0
  %1102 = vmatprep.mubr.bf16.mxu0 0
  %1103 = vmatmul.mubr.bf16.gmra.mrb[0].mxu0 %v887
  %v1104 = vpop.f32.mrb[0].mxu0
  %v1105 = vadd.f32 %v717, %v1104
  %v1106 = vpop.f32.mrb[0].mxu0
  %v1107 = vpop.f32.mrb[0].mxu0
  %v1108 = vadd.f32 %v720, %v1107
  %v1109 = vpop.f32.mrb[0].mxu0
  %1110 = vmatprep.mubr.bf16.mxu0 0
  %1111 = vmatmul.mubr.bf16.gmra.mrb[0].mxu0 %v890
  %v1112 = vpop.f32.mrb[0].mxu0
  %v1113 = vadd.f32 %v725, %v1112
  %v1114 = vpop.f32.mrb[0].mxu0
  %v1115 = vpop.f32.mrb[0].mxu0
  %v1116 = vadd.f32 %v728, %v1115
  %v1117 = vpop.f32.mrb[0].mxu0
  %1118 = vmatprep.mubr.bf16.mxu0 0
  %1119 = vmatmul.mubr.bf16.gmra.mrb[0].mxu0 %v893
  %v1120 = vpop.f32.mrb[0].mxu0
  %v1121 = vadd.f32 %v733, %v1120
  %v1122 = vpop.f32.mrb[0].mxu0
  %v1123 = vpop.f32.mrb[0].mxu0
  %v1124 = vadd.f32 %v736, %v1123
  %v1125 = vpop.f32.mrb[0].mxu0
  %1126 = vmatprep.mubr.bf16.mxu0 0
  %1127 = vmatmul.mubr.bf16.gmra.mrb[0].mxu0 %v896
  %v1128 = vpop.f32.mrb[0].mxu0
  %v1129 = vadd.f32 %v741, %v1128
  %v1130 = vpop.f32.mrb[0].mxu0
  %v1131 = vpop.f32.mrb[0].mxu0
  %v1132 = vadd.f32 %v744, %v1131
  %v1133 = vpop.f32.mrb[0].mxu0
  %1134 = vmatprep.mubr.bf16.mxu0 0
  %1135 = vmatmul.mubr.bf16.gmra.mrb[0].mxu0 %v899
  %v1136 = vpop.f32.mrb[0].mxu0
  %v1137 = vadd.f32 %v749, %v1136
  %v1138 = vpop.f32.mrb[0].mxu0
  %v1139 = vpop.f32.mrb[0].mxu0
  %v1140 = vadd.f32 %v752, %v1139
  %v1141 = vpop.f32.mrb[0].mxu0
  %1142 = vmatprep.mubr.bf16.mxu0 0
  %1143 = vmatmul.mubr.bf16.gmra.mrb[0].mxu0 %v902
  %v1144 = vpop.f32.mrb[0].mxu0
  %v1145 = vadd.f32 %v757, %v1144
  %v1146 = vpop.f32.mrb[0].mxu0
  %v1147 = vpop.f32.mrb[0].mxu0
  %v1148 = vadd.f32 %v760, %v1147
  %v1149 = vpop.f32.mrb[0].mxu0
  %1150 = vmatprep.mubr.bf16.mxu0 0
  %1151 = vmatmul.mubr.bf16.gmra.mrb[0].mxu0 %v905
  %v1152 = vpop.f32.mrb[0].mxu0
  %v1153 = vadd.f32 %v765, %v1152
  %v1154 = vpop.f32.mrb[0].mxu0
  %v1155 = vpop.f32.mrb[0].mxu0
  %v1156 = vadd.f32 %v768, %v1155
  %v1157 = vpop.f32.mrb[0].mxu0
  %1158 = vmatprep.mubr.bf16.mxu0 0
  %1159 = vmatmul.mubr.bf16.gmra.mrb[0].mxu0 %v908
  %v1160 = vpop.f32.mrb[0].mxu0
  %v1161 = vadd.f32 %v773, %v1160
  %v1162 = vpop.f32.mrb[0].mxu0
  %v1163 = vpop.f32.mrb[0].mxu0
  %v1164 = vadd.f32 %v776, %v1163
  %v1165 = vpop.f32.mrb[0].mxu0
  %1166 = vmatprep.mubr.bf16.mxu0 0
  %1167 = vmatmul.mubr.bf16.gmra.mrb[0].mxu0 %v911
  %v1168 = vpop.f32.mrb[0].mxu0
  %v1169 = vadd.f32 %v781, %v1168
  %v1170 = vpop.f32.mrb[0].mxu0
  %v1171 = vpop.f32.mrb[0].mxu0
  %v1172 = vadd.f32 %v784, %v1171
  %v1173 = vpop.f32.mrb[0].mxu0
  %1174 = vmatprep.mubr.bf16.mxu0 0
  %1175 = vmatmul.mubr.bf16.gmra.mrb[0].mxu0 %v914
  %v1176 = vpop.f32.mrb[0].mxu0
  %v1177 = vadd.f32 %v789, %v1176
  %v1178 = vpop.f32.mrb[0].mxu0
  %v1179 = vpop.f32.mrb[0].mxu0
  %v1180 = vadd.f32 %v792, %v1179
  %v1181 = vpop.f32.mrb[0].mxu0
  %1182 = vmatprep.mubr.bf16.mxu0 0
  %1183 = vmatmul.mubr.bf16.gmra.mrb[0].mxu0 %v917
  %v1184 = vpop.f32.mrb[0].mxu0
  %v1185 = vadd.f32 %v797, %v1184
  %v1186 = vpop.f32.mrb[0].mxu0
  %v1187 = vpop.f32.mrb[0].mxu0
  %v1188 = vadd.f32 %v800, %v1187
  %v1189 = vpop.f32.mrb[0].mxu0
  %1190 = vmatprep.mubr.bf16.mxu0 0
  %1191 = vmatmul.mubr.bf16.gmra.mrb[0].mxu0 %v920
  %v1192 = vpop.f32.mrb[0].mxu0
  %v1193 = vadd.f32 %v805, %v1192
  %v1194 = vpop.f32.mrb[0].mxu0
  %v1195 = vpop.f32.mrb[0].mxu0
  %v1196 = vadd.f32 %v808, %v1195
  %v1197 = vpop.f32.mrb[0].mxu0
  %1198 = vmatprep.mubr.bf16.mxu0 0
  %1199 = vmatmul.mubr.bf16.gmra.mrb[0].mxu0 %v923
  %v1200 = vpop.f32.mrb[0].mxu0
  %v1201 = vadd.f32 %v813, %v1200
  %v1202 = vpop.f32.mrb[0].mxu0
  %v1203 = vpop.f32.mrb[0].mxu0
  %v1204 = vadd.f32 %v816, %v1203
  %v1205 = vpop.f32.mrb[0].mxu0
  %1206 = vmatprep.mubr.bf16.mxu0 0
  %1207 = vmatmul.mubr.bf16.gmra.mrb[0].mxu0 %v926
  %v1208 = vpop.f32.mrb[0].mxu0
  %v1209 = vadd.f32 %v821, %v1208
  %v1210 = vpop.f32.mrb[0].mxu0
  %v1211 = vpop.f32.mrb[0].mxu0
  %v1212 = vadd.f32 %v824, %v1211
  %v1213 = vpop.f32.mrb[0].mxu0
  %1214 = vmatprep.mubr.bf16.mxu0 0
  %1215 = vmatmul.mubr.bf16.gmra.mrb[0].mxu0 %v929
  %v1216 = vpop.f32.mrb[0].mxu0
  %v1217 = vadd.f32 %v829, %v1216
  %v1218 = vpop.f32.mrb[0].mxu0
  %v1219 = vpop.f32.mrb[0].mxu0
  %v1220 = vadd.f32 %v832, %v1219
  %v1221 = vpop.f32.mrb[0].mxu0
  %1222 = vdwg.mxu0
  %v1223 = vld [vmem:[#allocation2 + $0x2] sm:$0xff]
  %v1224 = vld [vmem:[#allocation2 + $0xa] sm:$0xff]
  %v1225 = vld [vmem:[#allocation2 + $0x1a] sm:$0xff]
  %v1226 = vld [vmem:[#allocation2 + $0x22] sm:$0xff]
  %v1227 = vld [vmem:[#allocation2 + $0x32] sm:$0xff]
  %v1228 = vld [vmem:[#allocation2 + $0x3a] sm:$0xff]
  %v1229 = vld [vmem:[#allocation2 + $0x4a] sm:$0xff]
  %v1230 = vld [vmem:[#allocation2 + $0x52] sm:$0xff]
  %v1231 = vld [vmem:[#allocation2 + $0x62] sm:$0xff]
  %v1232 = vld [vmem:[#allocation2 + $0x6a] sm:$0xff]
  %v1233 = vld [vmem:[#allocation2 + $0x7a] sm:$0xff]
  %v1234 = vld [vmem:[#allocation2 + $0x82] sm:$0xff]
  %v1235 = vld [vmem:[#allocation2 + $0x92] sm:$0xff]
  %v1236 = vld [vmem:[#allocation2 + $0x9a] sm:$0xff]
  %v1237 = vld [vmem:[#allocation2 + $0xaa] sm:$0xff]
  %v1238 = vld [vmem:[#allocation2 + $0xb2] sm:$0xff]
  %v1239 = vld [vmem:[#allocation2 + $0xc2] sm:$0xff]
  %v1240 = vld [vmem:[#allocation2 + $0xca] sm:$0xff]
  %v1241 = vld [vmem:[#allocation2 + $0xda] sm:$0xff]
  %v1242 = vld [vmem:[#allocation2 + $0xe2] sm:$0xff]
  %v1243 = vld [vmem:[#allocation2 + $0xf2] sm:$0xff]
  %v1244 = vld [vmem:[#allocation2 + $0xfa] sm:$0xff]
  %v1245 = vld [vmem:[#allocation2 + $0x10a] sm:$0xff]
  %v1246 = vld [vmem:[#allocation2 + $0x112] sm:$0xff]
  %v1247 = vld [vmem:[#allocation2 + $0x122] sm:$0xff]
  %v1248 = vld [vmem:[#allocation2 + $0x12a] sm:$0xff]
  %v1249 = vld [vmem:[#allocation2 + $0x13a] sm:$0xff]
  %v1250 = vld [vmem:[#allocation2 + $0x142] sm:$0xff]
  %v1251 = vld [vmem:[#allocation2 + $0x152] sm:$0xff]
  %v1252 = vld [vmem:[#allocation2 + $0x15a] sm:$0xff]
  %v1253 = vld [vmem:[#allocation2 + $0x16a] sm:$0xff]
  %v1254 = vld [vmem:[#allocation2 + $0x172] sm:$0xff]
  %v1255 = vld [vmem:[#allocation2 + $0x1b2] sm:$0xff]
  %v1256 = vld [vmem:[#allocation2 + $0x1ba] sm:$0xff]
  %v1257 = vld [vmem:[#allocation2 + $0x1ca] sm:$0xff]
  %v1258 = vld [vmem:[#allocation2 + $0x1d2] sm:$0xff]
  %v1259 = vld [vmem:[#allocation2 + $0x1e2] sm:$0xff]
  %v1260 = vld [vmem:[#allocation2 + $0x1ea] sm:$0xff]
  %v1261 = vld [vmem:[#allocation2 + $0x1fa] sm:$0xff]
  %v1262 = vld [vmem:[#allocation2 + $0x202] sm:$0xff]
  %v1263 = vld [vmem:[#allocation2 + $0x212] sm:$0xff]
  %v1264 = vld [vmem:[#allocation2 + $0x21a] sm:$0xff]
  %v1265 = vld [vmem:[#allocation2 + $0x22a] sm:$0xff]
  %v1266 = vld [vmem:[#allocation2 + $0x232] sm:$0xff]
  %v1267 = vld [vmem:[#allocation2 + $0x242] sm:$0xff]
  %v1268 = vld [vmem:[#allocation2 + $0x24a] sm:$0xff]
  %v1269 = vld [vmem:[#allocation2 + $0x25a] sm:$0xff]
  %v1270 = vld [vmem:[#allocation2 + $0x262] sm:$0xff]
  %v1271 = vld [vmem:[#allocation2 + $0x272] sm:$0xff]
  %v1272 = vld [vmem:[#allocation2 + $0x27a] sm:$0xff]
  %v1273 = vld [vmem:[#allocation2 + $0x28a] sm:$0xff]
  %v1274 = vld [vmem:[#allocation2 + $0x292] sm:$0xff]
  %v1275 = vld [vmem:[#allocation2 + $0x2a2] sm:$0xff]
  %v1276 = vld [vmem:[#allocation2 + $0x2aa] sm:$0xff]
  %v1277 = vld [vmem:[#allocation2 + $0x2ba] sm:$0xff]
  %v1278 = vld [vmem:[#allocation2 + $0x2c2] sm:$0xff]
  %v1279 = vld [vmem:[#allocation2 + $0x2d2] sm:$0xff]
  %v1280 = vld [vmem:[#allocation2 + $0x2da] sm:$0xff]
  %v1281 = vld [vmem:[#allocation2 + $0x2ea] sm:$0xff]
  %v1282 = vld [vmem:[#allocation2 + $0x2f2] sm:$0xff]
  %v1283 = vld [vmem:[#allocation2 + $0x302] sm:$0xff]
  %v1284 = vld [vmem:[#allocation2 + $0x30a] sm:$0xff]
  %v1285 = vld [vmem:[#allocation2 + $0x31a] sm:$0xff]
  %v1286 = vld [vmem:[#allocation2 + $0x322] sm:$0xff]
  %v1287 = vpack.c.bf16 %v1224, %v1223
  %v1288 = vpack.c.bf16 %v1226, %v1225
  %v1289 = vpack.c.bf16 %v1228, %v1227
  %v1290 = vpack.c.bf16 %v1230, %v1229
  %v1291 = vpack.c.bf16 %v1232, %v1231
  %v1292 = vpack.c.bf16 %v1234, %v1233
  %v1293 = vpack.c.bf16 %v1236, %v1235
  %v1294 = vpack.c.bf16 %v1238, %v1237
  %v1295 = vpack.c.bf16 %v1240, %v1239
  %v1296 = vpack.c.bf16 %v1242, %v1241
  %v1297 = vpack.c.bf16 %v1244, %v1243
  %v1298 = vpack.c.bf16 %v1246, %v1245
  %v1299 = vpack.c.bf16 %v1248, %v1247
  %v1300 = vpack.c.bf16 %v1250, %v1249
  %v1301 = vpack.c.bf16 %v1252, %v1251
  %v1302 = vpack.c.bf16 %v1254, %v1253
  %v1303 = vpack.c.bf16 %v1256, %v1255
  %v1304 = vpack.c.bf16 %v1258, %v1257
  %v1305 = vpack.c.bf16 %v1260, %v1259
  %v1306 = vpack.c.bf16 %v1262, %v1261
  %v1307 = vpack.c.bf16 %v1264, %v1263
  %v1308 = vpack.c.bf16 %v1266, %v1265
  %v1309 = vpack.c.bf16 %v1268, %v1267
  %v1310 = vpack.c.bf16 %v1270, %v1269
  %v1311 = vpack.c.bf16 %v1272, %v1271
  %v1312 = vpack.c.bf16 %v1274, %v1273
  %v1313 = vpack.c.bf16 %v1276, %v1275
  %v1314 = vpack.c.bf16 %v1278, %v1277
  %v1315 = vpack.c.bf16 %v1280, %v1279
  %v1316 = vpack.c.bf16 %v1282, %v1281
  %v1317 = vpack.c.bf16 %v1284, %v1283
  %v1318 = vpack.c.bf16 %v1286, %v1285
  %v1320 = vsel %vm97, %v1287, 0
  %v1323 = vsel %vm97, %v1288, 0
  %v1326 = vsel %vm97, %v1289, 0
  %v1329 = vsel %vm97, %v1290, 0
  %v1332 = vsel %vm97, %v1291, 0
  %v1335 = vsel %vm97, %v1292, 0
  %v1338 = vsel %vm97, %v1293, 0
  %v1341 = vsel %vm97, %v1294, 0
  %v1344 = vsel %vm97, %v1295, 0
  %v1347 = vsel %vm97, %v1296, 0
  %v1350 = vsel %vm97, %v1297, 0
  %v1353 = vsel %vm97, %v1298, 0
  %v1356 = vsel %vm97, %v1299, 0
  %v1359 = vsel %vm97, %v1300, 0
  %v1362 = vsel %vm97, %v1301, 0
  %v1365 = vsel %vm97, %v1302, 0
  %v1368 = vsel %vm97, %v1303, 0
  %v1371 = vsel %vm97, %v1304, 0
  %v1374 = vsel %vm97, %v1305, 0
  %v1377 = vsel %vm97, %v1306, 0
  %v1380 = vsel %vm97, %v1307, 0
  %v1383 = vsel %vm97, %v1308, 0
  %v1386 = vsel %vm97, %v1309, 0
  %v1389 = vsel %vm97, %v1310, 0
  %v1392 = vsel %vm97, %v1311, 0
  %v1395 = vsel %vm97, %v1312, 0
  %v1398 = vsel %vm97, %v1313, 0
  %v1401 = vsel %vm97, %v1314, 0
  %v1404 = vsel %vm97, %v1315, 0
  %v1407 = vsel %vm97, %v1316, 0
  %v1410 = vsel %vm97, %v1317, 0
  %v1413 = vsel %vm97, %v1318, 0
  %v1416 = vsel %vm542, %v244, 0
  %1418 = vmatprep.subr.bf16.mxu0 0
  %1419 = vmatpush1.bf16.msra.mxu0 %v1416
  %1420 = vmatprep.subr.bf16.mxu0 0
  %1421 = vmatpush1.bf16.msra.mxu0 0
  %1422 = vmatprep.subr.bf16.mxu0 0
  %1423 = vmatpush1.bf16.msra.mxu0 0
  %1424 = vmatprep.subr.bf16.mxu0 0
  %1425 = vmatpush1.bf16.msra.mxu0 0
  %1426 = vmatprep.subr.bf16.mxu0 0
  %1427 = vmatpush1.bf16.msra.mxu0 0
  %1428 = vmatprep.subr.bf16.mxu0 0
  %1429 = vmatpush1.bf16.msra.mxu0 0
  %1430 = vmatprep.subr.bf16.mxu0 0
  %1431 = vmatpush1.bf16.msra.mxu0 0
  %1432 = vmatprep.subr.bf16.mxu0 0
  %1433 = vmatpush1.bf16.msra.mxu0 0
  %1434 = vmatprep.subr.bf16.mxu0 0
  %1435 = vmatpush1.bf16.msra.mxu0 0
  %1436 = vmatprep.subr.bf16.mxu0 0
  %1437 = vmatpush1.bf16.msra.mxu0 0
  %1438 = vmatprep.subr.bf16.mxu0 0
  %1439 = vmatpush1.bf16.msra.mxu0 0
  %1440 = vmatprep.subr.bf16.mxu0 0
  %1441 = vmatpush1.bf16.msra.mxu0 0
  %1442 = vmatprep.subr.bf16.mxu0 0
  %1443 = vmatpush1.bf16.msra.mxu0 0
  %1444 = vmatprep.subr.bf16.mxu0 0
  %1445 = vmatpush1.bf16.msra.mxu0 0
  %1446 = vmatprep.subr.bf16.mxu0 0
  %1447 = vmatpush1.bf16.msra.mxu0 0
  %1448 = vmatprep.subr.bf16.mxu0 0
  %1449 = vmatpush1.bf16.msra.mxu0 0
  %1450 = vmatprep.mubr.bf16.mxu0 0
  %1451 = vmatmul.mubr.bf16.gmra.mrb[0].mxu0 %v1320
  %v1452 = vpop.f32.mrb[0].mxu0
  %v1453 = vadd.f32 0.0, %v1452
  %v1454 = vpop.f32.mrb[0].mxu0
  %v1455 = vpop.f32.mrb[0].mxu0
  %v1456 = vadd.f32 0.0, %v1455
  %v1457 = vpop.f32.mrb[0].mxu0
  %1458 = vmatprep.mubr.bf16.mxu0 0
  %1459 = vmatmul.mubr.bf16.gmra.mrb[0].mxu0 %v1323
  %v1460 = vpop.f32.mrb[0].mxu0
  %v1461 = vadd.f32 0.0, %v1460
  %v1462 = vpop.f32.mrb[0].mxu0
  %v1463 = vpop.f32.mrb[0].mxu0
  %v1464 = vadd.f32 0.0, %v1463
  %v1465 = vpop.f32.mrb[0].mxu0
  %1466 = vmatprep.mubr.bf16.mxu0 0
  %1467 = vmatmul.mubr.bf16.gmra.mrb[0].mxu0 %v1326
  %v1468 = vpop.f32.mrb[0].mxu0
  %v1469 = vadd.f32 0.0, %v1468
  %v1470 = vpop.f32.mrb[0].mxu0
  %v1471 = vpop.f32.mrb[0].mxu0
  %v1472 = vadd.f32 0.0, %v1471
  %v1473 = vpop.f32.mrb[0].mxu0
  %1474 = vmatprep.mubr.bf16.mxu0 0
  %1475 = vmatmul.mubr.bf16.gmra.mrb[0].mxu0 %v1329
  %v1476 = vpop.f32.mrb[0].mxu0
  %v1477 = vadd.f32 0.0, %v1476
  %v1478 = vpop.f32.mrb[0].mxu0
  %v1479 = vpop.f32.mrb[0].mxu0
  %v1480 = vadd.f32 0.0, %v1479
  %v1481 = vpop.f32.mrb[0].mxu0
  %1482 = vmatprep.mubr.bf16.mxu0 0
  %1483 = vmatmul.mubr.bf16.gmra.mrb[0].mxu0 %v1332
  %v1484 = vpop.f32.mrb[0].mxu0
  %v1485 = vadd.f32 0.0, %v1484
  %v1486 = vpop.f32.mrb[0].mxu0
  %v1487 = vpop.f32.mrb[0].mxu0
  %v1488 = vadd.f32 0.0, %v1487
  %v1489 = vpop.f32.mrb[0].mxu0
  %1490 = vmatprep.mubr.bf16.mxu0 0
  %1491 = vmatmul.mubr.bf16.gmra.mrb[0].mxu0 %v1335
  %v1492 = vpop.f32.mrb[0].mxu0
  %v1493 = vadd.f32 0.0, %v1492
  %v1494 = vpop.f32.mrb[0].mxu0
  %v1495 = vpop.f32.mrb[0].mxu0
  %v1496 = vadd.f32 0.0, %v1495
  %v1497 = vpop.f32.mrb[0].mxu0
  %1498 = vmatprep.mubr.bf16.mxu0 0
  %1499 = vmatmul.mubr.bf16.gmra.mrb[0].mxu0 %v1338
  %v1500 = vpop.f32.mrb[0].mxu0
  %v1501 = vadd.f32 0.0, %v1500
  %v1502 = vpop.f32.mrb[0].mxu0
  %v1503 = vpop.f32.mrb[0].mxu0
  %v1504 = vadd.f32 0.0, %v1503
  %v1505 = vpop.f32.mrb[0].mxu0
  %1506 = vmatprep.mubr.bf16.mxu0 0
  %1507 = vmatmul.mubr.bf16.gmra.mrb[0].mxu0 %v1341
  %v1508 = vpop.f32.mrb[0].mxu0
  %v1509 = vadd.f32 0.0, %v1508
  %v1510 = vpop.f32.mrb[0].mxu0
  %v1511 = vpop.f32.mrb[0].mxu0
  %v1512 = vadd.f32 0.0, %v1511
  %v1513 = vpop.f32.mrb[0].mxu0
  %1514 = vmatprep.mubr.bf16.mxu0 0
  %1515 = vmatmul.mubr.bf16.gmra.mrb[0].mxu0 %v1344
  %v1516 = vpop.f32.mrb[0].mxu0
  %v1517 = vadd.f32 0.0, %v1516
  %v1518 = vpop.f32.mrb[0].mxu0
  %v1519 = vpop.f32.mrb[0].mxu0
  %v1520 = vadd.f32 0.0, %v1519
  %v1521 = vpop.f32.mrb[0].mxu0
  %1522 = vmatprep.mubr.bf16.mxu0 0
  %1523 = vmatmul.mubr.bf16.gmra.mrb[0].mxu0 %v1347
  %v1524 = vpop.f32.mrb[0].mxu0
  %v1525 = vadd.f32 0.0, %v1524
  %v1526 = vpop.f32.mrb[0].mxu0
  %v1527 = vpop.f32.mrb[0].mxu0
  %v1528 = vadd.f32 0.0, %v1527
  %v1529 = vpop.f32.mrb[0].mxu0
  %1530 = vmatprep.mubr.bf16.mxu0 0
  %1531 = vmatmul.mubr.bf16.gmra.mrb[0].mxu0 %v1350
  %v1532 = vpop.f32.mrb[0].mxu0
  %v1533 = vadd.f32 0.0, %v1532
  %v1534 = vpop.f32.mrb[0].mxu0
  %v1535 = vpop.f32.mrb[0].mxu0
  %v1536 = vadd.f32 0.0, %v1535
  %v1537 = vpop.f32.mrb[0].mxu0
  %1538 = vmatprep.mubr.bf16.mxu0 0
  %1539 = vmatmul.mubr.bf16.gmra.mrb[0].mxu0 %v1353
  %v1540 = vpop.f32.mrb[0].mxu0
  %v1541 = vadd.f32 0.0, %v1540
  %v1542 = vpop.f32.mrb[0].mxu0
  %v1543 = vpop.f32.mrb[0].mxu0
  %v1544 = vadd.f32 0.0, %v1543
  %v1545 = vpop.f32.mrb[0].mxu0
  %1546 = vmatprep.mubr.bf16.mxu0 0
  %1547 = vmatmul.mubr.bf16.gmra.mrb[0].mxu0 %v1356
  %v1548 = vpop.f32.mrb[0].mxu0
  %v1549 = vadd.f32 0.0, %v1548
  %v1550 = vpop.f32.mrb[0].mxu0
  %v1551 = vpop.f32.mrb[0].mxu0
  %v1552 = vadd.f32 0.0, %v1551
  %v1553 = vpop.f32.mrb[0].mxu0
  %1554 = vmatprep.mubr.bf16.mxu0 0
  %1555 = vmatmul.mubr.bf16.gmra.mrb[0].mxu0 %v1359
  %v1556 = vpop.f32.mrb[0].mxu0
  %v1557 = vadd.f32 0.0, %v1556
  %v1558 = vpop.f32.mrb[0].mxu0
  %v1559 = vpop.f32.mrb[0].mxu0
  %v1560 = vadd.f32 0.0, %v1559
  %v1561 = vpop.f32.mrb[0].mxu0
  %1562 = vmatprep.mubr.bf16.mxu0 0
  %1563 = vmatmul.mubr.bf16.gmra.mrb[0].mxu0 %v1362
  %v1564 = vpop.f32.mrb[0].mxu0
  %v1565 = vadd.f32 0.0, %v1564
  %v1566 = vpop.f32.mrb[0].mxu0
  %v1567 = vpop.f32.mrb[0].mxu0
  %v1568 = vadd.f32 0.0, %v1567
  %v1569 = vpop.f32.mrb[0].mxu0
  %1570 = vmatprep.mubr.bf16.mxu0 0
  %1571 = vmatmul.mubr.bf16.gmra.mrb[0].mxu0 %v1365
  %v1572 = vpop.f32.mrb[0].mxu0
  %v1573 = vadd.f32 0.0, %v1572
  %v1574 = vpop.f32.mrb[0].mxu0
  %v1575 = vpop.f32.mrb[0].mxu0
  %v1576 = vadd.f32 0.0, %v1575
  %v1577 = vpop.f32.mrb[0].mxu0
  %1578 = vmatprep.mubr.bf16.mxu0 0
  %1579 = vmatmul.mubr.bf16.gmra.mrb[0].mxu0 %v1368
  %v1580 = vpop.f32.mrb[0].mxu0
  %v1581 = vadd.f32 0.0, %v1580
  %v1582 = vpop.f32.mrb[0].mxu0
  %v1583 = vpop.f32.mrb[0].mxu0
  %v1584 = vadd.f32 0.0, %v1583
  %v1585 = vpop.f32.mrb[0].mxu0
  %1586 = vmatprep.mubr.bf16.mxu0 0
  %1587 = vmatmul.mubr.bf16.gmra.mrb[0].mxu0 %v1371
  %v1588 = vpop.f32.mrb[0].mxu0
  %v1589 = vadd.f32 0.0, %v1588
  %v1590 = vpop.f32.mrb[0].mxu0
  %v1591 = vpop.f32.mrb[0].mxu0
  %v1592 = vadd.f32 0.0, %v1591
  %v1593 = vpop.f32.mrb[0].mxu0
  %1594 = vmatprep.mubr.bf16.mxu0 0
  %1595 = vmatmul.mubr.bf16.gmra.mrb[0].mxu0 %v1374
  %v1596 = vpop.f32.mrb[0].mxu0
  %v1597 = vadd.f32 0.0, %v1596
  %v1598 = vpop.f32.mrb[0].mxu0
  %v1599 = vpop.f32.mrb[0].mxu0
  %v1600 = vadd.f32 0.0, %v1599
  %v1601 = vpop.f32.mrb[0].mxu0
  %1602 = vmatprep.mubr.bf16.mxu0 0
  %1603 = vmatmul.mubr.bf16.gmra.mrb[0].mxu0 %v1377
  %v1604 = vpop.f32.mrb[0].mxu0
  %v1605 = vadd.f32 0.0, %v1604
  %v1606 = vpop.f32.mrb[0].mxu0
  %v1607 = vpop.f32.mrb[0].mxu0
  %v1608 = vadd.f32 0.0, %v1607
  %v1609 = vpop.f32.mrb[0].mxu0
  %1610 = vmatprep.mubr.bf16.mxu0 0
  %1611 = vmatmul.mubr.bf16.gmra.mrb[0].mxu0 %v1380
  %v1612 = vpop.f32.mrb[0].mxu0
  %v1613 = vadd.f32 0.0, %v1612
  %v1614 = vpop.f32.mrb[0].mxu0
  %v1615 = vpop.f32.mrb[0].mxu0
  %v1616 = vadd.f32 0.0, %v1615
  %v1617 = vpop.f32.mrb[0].mxu0
  %1618 = vmatprep.mubr.bf16.mxu0 0
  %1619 = vmatmul.mubr.bf16.gmra.mrb[0].mxu0 %v1383
  %v1620 = vpop.f32.mrb[0].mxu0
  %v1621 = vadd.f32 0.0, %v1620
  %v1622 = vpop.f32.mrb[0].mxu0
  %v1623 = vpop.f32.mrb[0].mxu0
  %v1624 = vadd.f32 0.0, %v1623
  %v1625 = vpop.f32.mrb[0].mxu0
  %1626 = vmatprep.mubr.bf16.mxu0 0
  %1627 = vmatmul.mubr.bf16.gmra.mrb[0].mxu0 %v1386
  %v1628 = vpop.f32.mrb[0].mxu0
  %v1629 = vadd.f32 0.0, %v1628
  %v1630 = vpop.f32.mrb[0].mxu0
  %v1631 = vpop.f32.mrb[0].mxu0
  %v1632 = vadd.f32 0.0, %v1631
  %v1633 = vpop.f32.mrb[0].mxu0
  %1634 = vmatprep.mubr.bf16.mxu0 0
  %1635 = vmatmul.mubr.bf16.gmra.mrb[0].mxu0 %v1389
  %v1636 = vpop.f32.mrb[0].mxu0
  %v1637 = vadd.f32 0.0, %v1636
  %v1638 = vpop.f32.mrb[0].mxu0
  %v1639 = vpop.f32.mrb[0].mxu0
  %v1640 = vadd.f32 0.0, %v1639
  %v1641 = vpop.f32.mrb[0].mxu0
  %1642 = vmatprep.mubr.bf16.mxu0 0
  %1643 = vmatmul.mubr.bf16.gmra.mrb[0].mxu0 %v1392
  %v1644 = vpop.f32.mrb[0].mxu0
  %v1645 = vadd.f32 0.0, %v1644
  %v1646 = vpop.f32.mrb[0].mxu0
  %v1647 = vpop.f32.mrb[0].mxu0
  %v1648 = vadd.f32 0.0, %v1647
  %v1649 = vpop.f32.mrb[0].mxu0
  %1650 = vmatprep.mubr.bf16.mxu0 0
  %1651 = vmatmul.mubr.bf16.gmra.mrb[0].mxu0 %v1395
  %v1652 = vpop.f32.mrb[0].mxu0
  %v1653 = vadd.f32 0.0, %v1652
  %v1654 = vpop.f32.mrb[0].mxu0
  %v1655 = vpop.f32.mrb[0].mxu0
  %v1656 = vadd.f32 0.0, %v1655
  %v1657 = vpop.f32.mrb[0].mxu0
  %1658 = vmatprep.mubr.bf16.mxu0 0
  %1659 = vmatmul.mubr.bf16.gmra.mrb[0].mxu0 %v1398
  %v1660 = vpop.f32.mrb[0].mxu0
  %v1661 = vadd.f32 0.0, %v1660
  %v1662 = vpop.f32.mrb[0].mxu0
  %v1663 = vpop.f32.mrb[0].mxu0
  %v1664 = vadd.f32 0.0, %v1663
  %v1665 = vpop.f32.mrb[0].mxu0
  %1666 = vmatprep.mubr.bf16.mxu0 0
  %1667 = vmatmul.mubr.bf16.gmra.mrb[0].mxu0 %v1401
  %v1668 = vpop.f32.mrb[0].mxu0
  %v1669 = vadd.f32 0.0, %v1668
  %v1670 = vpop.f32.mrb[0].mxu0
  %v1671 = vpop.f32.mrb[0].mxu0
  %v1672 = vadd.f32 0.0, %v1671
  %v1673 = vpop.f32.mrb[0].mxu0
  %1674 = vmatprep.mubr.bf16.mxu0 0
  %1675 = vmatmul.mubr.bf16.gmra.mrb[0].mxu0 %v1404
  %v1676 = vpop.f32.mrb[0].mxu0
  %v1677 = vadd.f32 0.0, %v1676
  %v1678 = vpop.f32.mrb[0].mxu0
  %v1679 = vpop.f32.mrb[0].mxu0
  %v1680 = vadd.f32 0.0, %v1679
  %v1681 = vpop.f32.mrb[0].mxu0
  %1682 = vmatprep.mubr.bf16.mxu0 0
  %1683 = vmatmul.mubr.bf16.gmra.mrb[0].mxu0 %v1407
  %v1684 = vpop.f32.mrb[0].mxu0
  %v1685 = vadd.f32 0.0, %v1684
  %v1686 = vpop.f32.mrb[0].mxu0
  %v1687 = vpop.f32.mrb[0].mxu0
  %v1688 = vadd.f32 0.0, %v1687
  %v1689 = vpop.f32.mrb[0].mxu0
  %1690 = vmatprep.mubr.bf16.mxu0 0
  %1691 = vmatmul.mubr.bf16.gmra.mrb[0].mxu0 %v1410
  %v1692 = vpop.f32.mrb[0].mxu0
  %v1693 = vadd.f32 0.0, %v1692
  %v1694 = vpop.f32.mrb[0].mxu0
  %v1695 = vpop.f32.mrb[0].mxu0
  %v1696 = vadd.f32 0.0, %v1695
  %v1697 = vpop.f32.mrb[0].mxu0
  %1698 = vmatprep.mubr.bf16.mxu0 0
  %1699 = vmatmul.mubr.bf16.gmra.mrb[0].mxu0 %v1413
  %v1700 = vpop.f32.mrb[0].mxu0
  %v1701 = vadd.f32 0.0, %v1700
  %v1702 = vpop.f32.mrb[0].mxu0
  %v1703 = vpop.f32.mrb[0].mxu0
  %v1704 = vadd.f32 0.0, %v1703
  %v1705 = vpop.f32.mrb[0].mxu0
  %1706 = vdwg.mxu0
  %v1707 = vadd.f32 %v969, %v1453
  %v1708 = vadd.f32 %v972, %v1456
  %v1709 = vadd.f32 %v977, %v1461
  %v1710 = vadd.f32 %v980, %v1464
  %v1711 = vadd.f32 %v985, %v1469
  %v1712 = vadd.f32 %v988, %v1472
  %v1713 = vadd.f32 %v993, %v1477
  %v1714 = vadd.f32 %v996, %v1480
  %v1715 = vadd.f32 %v1001, %v1485
  %v1716 = vadd.f32 %v1004, %v1488
  %v1717 = vadd.f32 %v1009, %v1493
  %v1718 = vadd.f32 %v1012, %v1496
  %v1719 = vadd.f32 %v1017, %v1501
  %v1720 = vadd.f32 %v1020, %v1504
  %v1721 = vadd.f32 %v1025, %v1509
  %v1722 = vadd.f32 %v1028, %v1512
  %v1723 = vadd.f32 %v1033, %v1517
  %v1724 = vadd.f32 %v1036, %v1520
  %v1725 = vadd.f32 %v1041, %v1525
  %v1726 = vadd.f32 %v1044, %v1528
  %v1727 = vadd.f32 %v1049, %v1533
  %v1728 = vadd.f32 %v1052, %v1536
  %v1729 = vadd.f32 %v1057, %v1541
  %v1730 = vadd.f32 %v1060, %v1544
  %v1731 = vadd.f32 %v1065, %v1549
  %v1732 = vadd.f32 %v1068, %v1552
  %v1733 = vadd.f32 %v1073, %v1557
  %v1734 = vadd.f32 %v1076, %v1560
  %v1735 = vadd.f32 %v1081, %v1565
  %v1736 = vadd.f32 %v1084, %v1568
  %v1737 = vadd.f32 %v1089, %v1573
  %v1738 = vadd.f32 %v1092, %v1576
  %v1739 = vadd.f32 %v1097, %v1581
  %v1740 = vadd.f32 %v1100, %v1584
  %v1741 = vadd.f32 %v1105, %v1589
  %v1742 = vadd.f32 %v1108, %v1592
  %v1743 = vadd.f32 %v1113, %v1597
  %v1744 = vadd.f32 %v1116, %v1600
  %v1745 = vadd.f32 %v1121, %v1605
  %v1746 = vadd.f32 %v1124, %v1608
  %v1747 = vadd.f32 %v1129, %v1613
  %v1748 = vadd.f32 %v1132, %v1616
  %v1749 = vadd.f32 %v1137, %v1621
  %v1750 = vadd.f32 %v1140, %v1624
  %v1751 = vadd.f32 %v1145, %v1629
  %v1752 = vadd.f32 %v1148, %v1632
  %v1753 = vadd.f32 %v1153, %v1637
  %v1754 = vadd.f32 %v1156, %v1640
  %v1755 = vadd.f32 %v1161, %v1645
  %v1756 = vadd.f32 %v1164, %v1648
  %v1757 = vadd.f32 %v1169, %v1653
  %v1758 = vadd.f32 %v1172, %v1656
  %v1759 = vadd.f32 %v1177, %v1661
  %v1760 = vadd.f32 %v1180, %v1664
  %v1761 = vadd.f32 %v1185, %v1669
  %v1762 = vadd.f32 %v1188, %v1672
  %v1763 = vadd.f32 %v1193, %v1677
  %v1764 = vadd.f32 %v1196, %v1680
  %v1765 = vadd.f32 %v1201, %v1685
  %v1766 = vadd.f32 %v1204, %v1688
  %v1767 = vadd.f32 %v1209, %v1693
  %v1768 = vadd.f32 %v1212, %v1696
  %v1769 = vadd.f32 %v1217, %v1701
  %v1770 = vadd.f32 %v1220, %v1704
  %v1771 = vld [vmem:[%s112] sm:$0xff]
  %v1772 = vld [vmem:[%s112 + $0x8] sm:$0xff]
  %v1773 = vld [vmem:[%s112 + $0x18] sm:$0xff]
  %v1774 = vld [vmem:[%s112 + $0x20] sm:$0xff]
  %v1775 = vld [vmem:[%s112 + $0x30] sm:$0xff]
  %v1776 = vld [vmem:[%s112 + $0x38] sm:$0xff]
  %v1777 = vld [vmem:[%s112 + $0x48] sm:$0xff]
  %v1778 = vld [vmem:[%s112 + $0x50] sm:$0xff]
  %v1779 = vld [vmem:[%s112 + $0x60] sm:$0xff]
  %v1780 = vld [vmem:[%s112 + $0x68] sm:$0xff]
  %v1781 = vld [vmem:[%s112 + $0x78] sm:$0xff]
  %v1782 = vld [vmem:[%s112 + $0x80] sm:$0xff]
  %v1783 = vld [vmem:[%s112 + $0x90] sm:$0xff]
  %v1784 = vld [vmem:[%s112 + $0x98] sm:$0xff]
  %v1785 = vld [vmem:[%s112 + $0xa8] sm:$0xff]
  %v1786 = vld [vmem:[%s112 + $0xb0] sm:$0xff]
  %v1787 = vld [vmem:[%s112 + $0xc0] sm:$0xff]
  %v1788 = vld [vmem:[%s112 + $0xc8] sm:$0xff]
  %v1789 = vld [vmem:[%s112 + $0xd8] sm:$0xff]
  %v1790 = vld [vmem:[%s112 + $0xe0] sm:$0xff]
  %v1791 = vld [vmem:[%s112 + $0xf0] sm:$0xff]
  %v1792 = vld [vmem:[%s112 + $0xf8] sm:$0xff]
  %v1793 = vld [vmem:[%s112 + $0x108] sm:$0xff]
  %v1794 = vld [vmem:[%s112 + $0x110] sm:$0xff]
  %v1795 = vld [vmem:[%s112 + $0x120] sm:$0xff]
  %v1796 = vld [vmem:[%s112 + $0x128] sm:$0xff]
  %v1797 = vld [vmem:[%s112 + $0x138] sm:$0xff]
  %v1798 = vld [vmem:[%s112 + $0x140] sm:$0xff]
  %v1799 = vld [vmem:[%s112 + $0x150] sm:$0xff]
  %v1800 = vld [vmem:[%s112 + $0x158] sm:$0xff]
  %v1801 = vld [vmem:[%s112 + $0x168] sm:$0xff]
  %v1802 = vld [vmem:[%s112 + $0x170] sm:$0xff]
  %v1803 = vld [vmem:[%s112 + $0x1b0] sm:$0xff]
  %v1804 = vld [vmem:[%s112 + $0x1b8] sm:$0xff]
  %v1805 = vld [vmem:[%s112 + $0x1c8] sm:$0xff]
  %v1806 = vld [vmem:[%s112 + $0x1d0] sm:$0xff]
  %v1807 = vld [vmem:[%s112 + $0x1e0] sm:$0xff]
  %v1808 = vld [vmem:[%s112 + $0x1e8] sm:$0xff]
  %v1809 = vld [vmem:[%s112 + $0x1f8] sm:$0xff]
  %v1810 = vld [vmem:[%s112 + $0x200] sm:$0xff]
  %v1811 = vld [vmem:[%s112 + $0x210] sm:$0xff]
  %v1812 = vld [vmem:[%s112 + $0x218] sm:$0xff]
  %v1813 = vld [vmem:[%s112 + $0x228] sm:$0xff]
  %v1814 = vld [vmem:[%s112 + $0x230] sm:$0xff]
  %v1815 = vld [vmem:[%s112 + $0x240] sm:$0xff]
  %v1816 = vld [vmem:[%s112 + $0x248] sm:$0xff]
  %v1817 = vld [vmem:[%s112 + $0x258] sm:$0xff]
  %v1818 = vld [vmem:[%s112 + $0x260] sm:$0xff]
  %v1819 = vld [vmem:[%s112 + $0x270] sm:$0xff]
  %v1820 = vld [vmem:[%s112 + $0x278] sm:$0xff]
  %v1821 = vld [vmem:[%s112 + $0x288] sm:$0xff]
  %v1822 = vld [vmem:[%s112 + $0x290] sm:$0xff]
  %v1823 = vld [vmem:[%s112 + $0x2a0] sm:$0xff]
  %v1824 = vld [vmem:[%s112 + $0x2a8] sm:$0xff]
  %v1825 = vld [vmem:[%s112 + $0x2b8] sm:$0xff]
  %v1826 = vld [vmem:[%s112 + $0x2c0] sm:$0xff]
  %v1827 = vld [vmem:[%s112 + $0x2d0] sm:$0xff]
  %v1828 = vld [vmem:[%s112 + $0x2d8] sm:$0xff]
  %v1829 = vld [vmem:[%s112 + $0x2e8] sm:$0xff]
  %v1830 = vld [vmem:[%s112 + $0x2f0] sm:$0xff]
  %v1831 = vld [vmem:[%s112 + $0x300] sm:$0xff]
  %v1832 = vld [vmem:[%s112 + $0x308] sm:$0xff]
  %v1833 = vld [vmem:[%s112 + $0x318] sm:$0xff]
  %v1834 = vld [vmem:[%s112 + $0x320] sm:$0xff]
  %v1835 = vpack.c.bf16 %v1772, %v1771
  %v1836 = vpack.c.bf16 %v1774, %v1773
  %v1837 = vpack.c.bf16 %v1776, %v1775
  %v1838 = vpack.c.bf16 %v1778, %v1777
  %v1839 = vpack.c.bf16 %v1780, %v1779
  %v1840 = vpack.c.bf16 %v1782, %v1781
  %v1841 = vpack.c.bf16 %v1784, %v1783
  %v1842 = vpack.c.bf16 %v1786, %v1785
  %v1843 = vpack.c.bf16 %v1788, %v1787
  %v1844 = vpack.c.bf16 %v1790, %v1789
  %v1845 = vpack.c.bf16 %v1792, %v1791
  %v1846 = vpack.c.bf16 %v1794, %v1793
  %v1847 = vpack.c.bf16 %v1796, %v1795
  %v1848 = vpack.c.bf16 %v1798, %v1797
  %v1849 = vpack.c.bf16 %v1800, %v1799
  %v1850 = vpack.c.bf16 %v1802, %v1801
  %v1851 = vpack.c.bf16 %v1804, %v1803
  %v1852 = vpack.c.bf16 %v1806, %v1805
  %v1853 = vpack.c.bf16 %v1808, %v1807
  %v1854 = vpack.c.bf16 %v1810, %v1809
  %v1855 = vpack.c.bf16 %v1812, %v1811
  %v1856 = vpack.c.bf16 %v1814, %v1813
  %v1857 = vpack.c.bf16 %v1816, %v1815
  %v1858 = vpack.c.bf16 %v1818, %v1817
  %v1859 = vpack.c.bf16 %v1820, %v1819
  %v1860 = vpack.c.bf16 %v1822, %v1821
  %v1861 = vpack.c.bf16 %v1824, %v1823
  %v1862 = vpack.c.bf16 %v1826, %v1825
  %v1863 = vpack.c.bf16 %v1828, %v1827
  %v1864 = vpack.c.bf16 %v1830, %v1829
  %v1865 = vpack.c.bf16 %v1832, %v1831
  %v1866 = vpack.c.bf16 %v1834, %v1833
  %v1868 = vsel %vm97, %v1835, 0
  %v1871 = vsel %vm97, %v1836, 0
  %v1874 = vsel %vm97, %v1837, 0
  %v1877 = vsel %vm97, %v1838, 0
  %v1880 = vsel %vm97, %v1839, 0
  %v1883 = vsel %vm97, %v1840, 0
  %v1886 = vsel %vm97, %v1841, 0
  %v1889 = vsel %vm97, %v1842, 0
  %v1892 = vsel %vm97, %v1843, 0
  %v1895 = vsel %vm97, %v1844, 0
  %v1898 = vsel %vm97, %v1845, 0
  %v1901 = vsel %vm97, %v1846, 0
  %v1904 = vsel %vm97, %v1847, 0
  %v1907 = vsel %vm97, %v1848, 0
  %v1910 = vsel %vm97, %v1849, 0
  %v1913 = vsel %vm97, %v1850, 0
  %v1916 = vsel %vm97, %v1851, 0
  %v1919 = vsel %vm97, %v1852, 0
  %v1922 = vsel %vm97, %v1853, 0
  %v1925 = vsel %vm97, %v1854, 0
  %v1928 = vsel %vm97, %v1855, 0
  %v1931 = vsel %vm97, %v1856, 0
  %v1934 = vsel %vm97, %v1857, 0
  %v1937 = vsel %vm97, %v1858, 0
  %v1940 = vsel %vm97, %v1859, 0
  %v1943 = vsel %vm97, %v1860, 0
  %v1946 = vsel %vm97, %v1861, 0
  %v1949 = vsel %vm97, %v1862, 0
  %v1952 = vsel %vm97, %v1863, 0
  %v1955 = vsel %vm97, %v1864, 0
  %v1958 = vsel %vm97, %v1865, 0
  %v1961 = vsel %vm97, %v1866, 0
  %v1964 = vsel %vm542, %v245, 0
  %1966 = vmatprep.subr.bf16.mxu0 0
  %1967 = vmatpush1.bf16.msra.mxu0 %v1964
  %1968 = vmatprep.subr.bf16.mxu0 0
  %1969 = vmatpush1.bf16.msra.mxu0 0
  %1970 = vmatprep.subr.bf16.mxu0 0
  %1971 = vmatpush1.bf16.msra.mxu0 0
  %1972 = vmatprep.subr.bf16.mxu0 0
  %1973 = vmatpush1.bf16.msra.mxu0 0
  %1974 = vmatprep.subr.bf16.mxu0 0
  %1975 = vmatpush1.bf16.msra.mxu0 0
  %1976 = vmatprep.subr.bf16.mxu0 0
  %1977 = vmatpush1.bf16.msra.mxu0 0
  %1978 = vmatprep.subr.bf16.mxu0 0
  %1979 = vmatpush1.bf16.msra.mxu0 0
  %1980 = vmatprep.subr.bf16.mxu0 0
  %1981 = vmatpush1.bf16.msra.mxu0 0
  %1982 = vmatprep.subr.bf16.mxu0 0
  %1983 = vmatpush1.bf16.msra.mxu0 0
  %1984 = vmatprep.subr.bf16.mxu0 0
  %1985 = vmatpush1.bf16.msra.mxu0 0
  %1986 = vmatprep.subr.bf16.mxu0 0
  %1987 = vmatpush1.bf16.msra.mxu0 0
  %1988 = vmatprep.subr.bf16.mxu0 0
  %1989 = vmatpush1.bf16.msra.mxu0 0
  %1990 = vmatprep.subr.bf16.mxu0 0
  %1991 = vmatpush1.bf16.msra.mxu0 0
  %1992 = vmatprep.subr.bf16.mxu0 0
  %1993 = vmatpush1.bf16.msra.mxu0 0
  %1994 = vmatprep.subr.bf16.mxu0 0
  %1995 = vmatpush1.bf16.msra.mxu0 0
  %1996 = vmatprep.subr.bf16.mxu0 0
  %1997 = vmatpush1.bf16.msra.mxu0 0
  %1998 = vmatprep.mubr.bf16.mxu0 0
  %1999 = vmatmul.mubr.bf16.gmra.mrb[0].mxu0 %v1868
  %v2000 = vpop.f32.mrb[0].mxu0
  %v2001 = vadd.f32 0.0, %v2000
  %v2002 = vpop.f32.mrb[0].mxu0
  %v2003 = vpop.f32.mrb[0].mxu0
  %v2004 = vadd.f32 0.0, %v2003
  %v2005 = vpop.f32.mrb[0].mxu0
  %2006 = vmatprep.mubr.bf16.mxu0 0
  %2007 = vmatmul.mubr.bf16.gmra.mrb[0].mxu0 %v1871
  %v2008 = vpop.f32.mrb[0].mxu0
  %v2009 = vadd.f32 0.0, %v2008
  %v2010 = vpop.f32.mrb[0].mxu0
  %v2011 = vpop.f32.mrb[0].mxu0
  %v2012 = vadd.f32 0.0, %v2011
  %v2013 = vpop.f32.mrb[0].mxu0
  %2014 = vmatprep.mubr.bf16.mxu0 0
  %2015 = vmatmul.mubr.bf16.gmra.mrb[0].mxu0 %v1874
  %v2016 = vpop.f32.mrb[0].mxu0
  %v2017 = vadd.f32 0.0, %v2016
  %v2018 = vpop.f32.mrb[0].mxu0
  %v2019 = vpop.f32.mrb[0].mxu0
  %v2020 = vadd.f32 0.0, %v2019
  %v2021 = vpop.f32.mrb[0].mxu0
  %2022 = vmatprep.mubr.bf16.mxu0 0
  %2023 = vmatmul.mubr.bf16.gmra.mrb[0].mxu0 %v1877
  %v2024 = vpop.f32.mrb[0].mxu0
  %v2025 = vadd.f32 0.0, %v2024
  %v2026 = vpop.f32.mrb[0].mxu0
  %v2027 = vpop.f32.mrb[0].mxu0
  %v2028 = vadd.f32 0.0, %v2027
  %v2029 = vpop.f32.mrb[0].mxu0
  %2030 = vmatprep.mubr.bf16.mxu0 0
  %2031 = vmatmul.mubr.bf16.gmra.mrb[0].mxu0 %v1880
  %v2032 = vpop.f32.mrb[0].mxu0
  %v2033 = vadd.f32 0.0, %v2032
  %v2034 = vpop.f32.mrb[0].mxu0
  %v2035 = vpop.f32.mrb[0].mxu0
  %v2036 = vadd.f32 0.0, %v2035
  %v2037 = vpop.f32.mrb[0].mxu0
  %2038 = vmatprep.mubr.bf16.mxu0 0
  %2039 = vmatmul.mubr.bf16.gmra.mrb[0].mxu0 %v1883
  %v2040 = vpop.f32.mrb[0].mxu0
  %v2041 = vadd.f32 0.0, %v2040
  %v2042 = vpop.f32.mrb[0].mxu0
  %v2043 = vpop.f32.mrb[0].mxu0
  %v2044 = vadd.f32 0.0, %v2043
  %v2045 = vpop.f32.mrb[0].mxu0
  %2046 = vmatprep.mubr.bf16.mxu0 0
  %2047 = vmatmul.mubr.bf16.gmra.mrb[0].mxu0 %v1886
  %v2048 = vpop.f32.mrb[0].mxu0
  %v2049 = vadd.f32 0.0, %v2048
  %v2050 = vpop.f32.mrb[0].mxu0
  %v2051 = vpop.f32.mrb[0].mxu0
  %v2052 = vadd.f32 0.0, %v2051
  %v2053 = vpop.f32.mrb[0].mxu0
  %2054 = vmatprep.mubr.bf16.mxu0 0
  %2055 = vmatmul.mubr.bf16.gmra.mrb[0].mxu0 %v1889
  %v2056 = vpop.f32.mrb[0].mxu0
  %v2057 = vadd.f32 0.0, %v2056
  %v2058 = vpop.f32.mrb[0].mxu0
  %v2059 = vpop.f32.mrb[0].mxu0
  %v2060 = vadd.f32 0.0, %v2059
  %v2061 = vpop.f32.mrb[0].mxu0
  %2062 = vmatprep.mubr.bf16.mxu0 0
  %2063 = vmatmul.mubr.bf16.gmra.mrb[0].mxu0 %v1892
  %v2064 = vpop.f32.mrb[0].mxu0
  %v2065 = vadd.f32 0.0, %v2064
  %v2066 = vpop.f32.mrb[0].mxu0
  %v2067 = vpop.f32.mrb[0].mxu0
  %v2068 = vadd.f32 0.0, %v2067
  %v2069 = vpop.f32.mrb[0].mxu0
  %2070 = vmatprep.mubr.bf16.mxu0 0
  %2071 = vmatmul.mubr.bf16.gmra.mrb[0].mxu0 %v1895
  %v2072 = vpop.f32.mrb[0].mxu0
  %v2073 = vadd.f32 0.0, %v2072
  %v2074 = vpop.f32.mrb[0].mxu0
  %v2075 = vpop.f32.mrb[0].mxu0
  %v2076 = vadd.f32 0.0, %v2075
  %v2077 = vpop.f32.mrb[0].mxu0
  %2078 = vmatprep.mubr.bf16.mxu0 0
  %2079 = vmatmul.mubr.bf16.gmra.mrb[0].mxu0 %v1898
  %v2080 = vpop.f32.mrb[0].mxu0
  %v2081 = vadd.f32 0.0, %v2080
  %v2082 = vpop.f32.mrb[0].mxu0
  %v2083 = vpop.f32.mrb[0].mxu0
  %v2084 = vadd.f32 0.0, %v2083
  %v2085 = vpop.f32.mrb[0].mxu0
  %2086 = vmatprep.mubr.bf16.mxu0 0
  %2087 = vmatmul.mubr.bf16.gmra.mrb[0].mxu0 %v1901
  %v2088 = vpop.f32.mrb[0].mxu0
  %v2089 = vadd.f32 0.0, %v2088
  %v2090 = vpop.f32.mrb[0].mxu0
  %v2091 = vpop.f32.mrb[0].mxu0
  %v2092 = vadd.f32 0.0, %v2091
  %v2093 = vpop.f32.mrb[0].mxu0
  %2094 = vmatprep.mubr.bf16.mxu0 0
  %2095 = vmatmul.mubr.bf16.gmra.mrb[0].mxu0 %v1904
  %v2096 = vpop.f32.mrb[0].mxu0
  %v2097 = vadd.f32 0.0, %v2096
  %v2098 = vpop.f32.mrb[0].mxu0
  %v2099 = vpop.f32.mrb[0].mxu0
  %v2100 = vadd.f32 0.0, %v2099
  %v2101 = vpop.f32.mrb[0].mxu0
  %2102 = vmatprep.mubr.bf16.mxu0 0
  %2103 = vmatmul.mubr.bf16.gmra.mrb[0].mxu0 %v1907
  %v2104 = vpop.f32.mrb[0].mxu0
  %v2105 = vadd.f32 0.0, %v2104
  %v2106 = vpop.f32.mrb[0].mxu0
  %v2107 = vpop.f32.mrb[0].mxu0
  %v2108 = vadd.f32 0.0, %v2107
  %v2109 = vpop.f32.mrb[0].mxu0
  %2110 = vmatprep.mubr.bf16.mxu0 0
  %2111 = vmatmul.mubr.bf16.gmra.mrb[0].mxu0 %v1910
  %v2112 = vpop.f32.mrb[0].mxu0
  %v2113 = vadd.f32 0.0, %v2112
  %v2114 = vpop.f32.mrb[0].mxu0
  %v2115 = vpop.f32.mrb[0].mxu0
  %v2116 = vadd.f32 0.0, %v2115
  %v2117 = vpop.f32.mrb[0].mxu0
  %2118 = vmatprep.mubr.bf16.mxu0 0
  %2119 = vmatmul.mubr.bf16.gmra.mrb[0].mxu0 %v1913
  %v2120 = vpop.f32.mrb[0].mxu0
  %v2121 = vadd.f32 0.0, %v2120
  %v2122 = vpop.f32.mrb[0].mxu0
  %v2123 = vpop.f32.mrb[0].mxu0
  %v2124 = vadd.f32 0.0, %v2123
  %v2125 = vpop.f32.mrb[0].mxu0
  %2126 = vmatprep.mubr.bf16.mxu0 0
  %2127 = vmatmul.mubr.bf16.gmra.mrb[0].mxu0 %v1916
  %v2128 = vpop.f32.mrb[0].mxu0
  %v2129 = vadd.f32 0.0, %v2128
  %v2130 = vpop.f32.mrb[0].mxu0
  %v2131 = vpop.f32.mrb[0].mxu0
  %v2132 = vadd.f32 0.0, %v2131
  %v2133 = vpop.f32.mrb[0].mxu0
  %2134 = vmatprep.mubr.bf16.mxu0 0
  %2135 = vmatmul.mubr.bf16.gmra.mrb[0].mxu0 %v1919
  %v2136 = vpop.f32.mrb[0].mxu0
  %v2137 = vadd.f32 0.0, %v2136
  %v2138 = vpop.f32.mrb[0].mxu0
  %v2139 = vpop.f32.mrb[0].mxu0
  %v2140 = vadd.f32 0.0, %v2139
  %v2141 = vpop.f32.mrb[0].mxu0
  %2142 = vmatprep.mubr.bf16.mxu0 0
  %2143 = vmatmul.mubr.bf16.gmra.mrb[0].mxu0 %v1922
  %v2144 = vpop.f32.mrb[0].mxu0
  %v2145 = vadd.f32 0.0, %v2144
  %v2146 = vpop.f32.mrb[0].mxu0
  %v2147 = vpop.f32.mrb[0].mxu0
  %v2148 = vadd.f32 0.0, %v2147
  %v2149 = vpop.f32.mrb[0].mxu0
  %2150 = vmatprep.mubr.bf16.mxu0 0
  %2151 = vmatmul.mubr.bf16.gmra.mrb[0].mxu0 %v1925
  %v2152 = vpop.f32.mrb[0].mxu0
  %v2153 = vadd.f32 0.0, %v2152
  %v2154 = vpop.f32.mrb[0].mxu0
  %v2155 = vpop.f32.mrb[0].mxu0
  %v2156 = vadd.f32 0.0, %v2155
  %v2157 = vpop.f32.mrb[0].mxu0
  %2158 = vmatprep.mubr.bf16.mxu0 0
  %2159 = vmatmul.mubr.bf16.gmra.mrb[0].mxu0 %v1928
  %v2160 = vpop.f32.mrb[0].mxu0
  %v2161 = vadd.f32 0.0, %v2160
  %v2162 = vpop.f32.mrb[0].mxu0
  %v2163 = vpop.f32.mrb[0].mxu0
  %v2164 = vadd.f32 0.0, %v2163
  %v2165 = vpop.f32.mrb[0].mxu0
  %2166 = vmatprep.mubr.bf16.mxu0 0
  %2167 = vmatmul.mubr.bf16.gmra.mrb[0].mxu0 %v1931
  %v2168 = vpop.f32.mrb[0].mxu0
  %v2169 = vadd.f32 0.0, %v2168
  %v2170 = vpop.f32.mrb[0].mxu0
  %v2171 = vpop.f32.mrb[0].mxu0
  %v2172 = vadd.f32 0.0, %v2171
  %v2173 = vpop.f32.mrb[0].mxu0
  %2174 = vmatprep.mubr.bf16.mxu0 0
  %2175 = vmatmul.mubr.bf16.gmra.mrb[0].mxu0 %v1934
  %v2176 = vpop.f32.mrb[0].mxu0
  %v2177 = vadd.f32 0.0, %v2176
  %v2178 = vpop.f32.mrb[0].mxu0
  %v2179 = vpop.f32.mrb[0].mxu0
  %v2180 = vadd.f32 0.0, %v2179
  %v2181 = vpop.f32.mrb[0].mxu0
  %2182 = vmatprep.mubr.bf16.mxu0 0
  %2183 = vmatmul.mubr.bf16.gmra.mrb[0].mxu0 %v1937
  %v2184 = vpop.f32.mrb[0].mxu0
  %v2185 = vadd.f32 0.0, %v2184
  %v2186 = vpop.f32.mrb[0].mxu0
  %v2187 = vpop.f32.mrb[0].mxu0
  %v2188 = vadd.f32 0.0, %v2187
  %v2189 = vpop.f32.mrb[0].mxu0
  %2190 = vmatprep.mubr.bf16.mxu0 0
  %2191 = vmatmul.mubr.bf16.gmra.mrb[0].mxu0 %v1940
  %v2192 = vpop.f32.mrb[0].mxu0
  %v2193 = vadd.f32 0.0, %v2192
  %v2194 = vpop.f32.mrb[0].mxu0
  %v2195 = vpop.f32.mrb[0].mxu0
  %v2196 = vadd.f32 0.0, %v2195
  %v2197 = vpop.f32.mrb[0].mxu0
  %2198 = vmatprep.mubr.bf16.mxu0 0
  %2199 = vmatmul.mubr.bf16.gmra.mrb[0].mxu0 %v1943
  %v2200 = vpop.f32.mrb[0].mxu0
  %v2201 = vadd.f32 0.0, %v2200
  %v2202 = vpop.f32.mrb[0].mxu0
  %v2203 = vpop.f32.mrb[0].mxu0
  %v2204 = vadd.f32 0.0, %v2203
  %v2205 = vpop.f32.mrb[0].mxu0
  %2206 = vmatprep.mubr.bf16.mxu0 0
  %2207 = vmatmul.mubr.bf16.gmra.mrb[0].mxu0 %v1946
  %v2208 = vpop.f32.mrb[0].mxu0
  %v2209 = vadd.f32 0.0, %v2208
  %v2210 = vpop.f32.mrb[0].mxu0
  %v2211 = vpop.f32.mrb[0].mxu0
  %v2212 = vadd.f32 0.0, %v2211
  %v2213 = vpop.f32.mrb[0].mxu0
  %2214 = vmatprep.mubr.bf16.mxu0 0
  %2215 = vmatmul.mubr.bf16.gmra.mrb[0].mxu0 %v1949
  %v2216 = vpop.f32.mrb[0].mxu0
  %v2217 = vadd.f32 0.0, %v2216
  %v2218 = vpop.f32.mrb[0].mxu0
  %v2219 = vpop.f32.mrb[0].mxu0
  %v2220 = vadd.f32 0.0, %v2219
  %v2221 = vpop.f32.mrb[0].mxu0
  %2222 = vmatprep.mubr.bf16.mxu0 0
  %2223 = vmatmul.mubr.bf16.gmra.mrb[0].mxu0 %v1952
  %v2224 = vpop.f32.mrb[0].mxu0
  %v2225 = vadd.f32 0.0, %v2224
  %v2226 = vpop.f32.mrb[0].mxu0
  %v2227 = vpop.f32.mrb[0].mxu0
  %v2228 = vadd.f32 0.0, %v2227
  %v2229 = vpop.f32.mrb[0].mxu0
  %2230 = vmatprep.mubr.bf16.mxu0 0
  %2231 = vmatmul.mubr.bf16.gmra.mrb[0].mxu0 %v1955
  %v2232 = vpop.f32.mrb[0].mxu0
  %v2233 = vadd.f32 0.0, %v2232
  %v2234 = vpop.f32.mrb[0].mxu0
  %v2235 = vpop.f32.mrb[0].mxu0
  %v2236 = vadd.f32 0.0, %v2235
  %v2237 = vpop.f32.mrb[0].mxu0
  %2238 = vmatprep.mubr.bf16.mxu0 0
  %2239 = vmatmul.mubr.bf16.gmra.mrb[0].mxu0 %v1958
  %v2240 = vpop.f32.mrb[0].mxu0
  %v2241 = vadd.f32 0.0, %v2240
  %v2242 = vpop.f32.mrb[0].mxu0
  %v2243 = vpop.f32.mrb[0].mxu0
  %v2244 = vadd.f32 0.0, %v2243
  %v2245 = vpop.f32.mrb[0].mxu0
  %2246 = vmatprep.mubr.bf16.mxu0 0
  %2247 = vmatmul.mubr.bf16.gmra.mrb[0].mxu0 %v1961
  %v2248 = vpop.f32.mrb[0].mxu0
  %v2249 = vadd.f32 0.0, %v2248
  %v2250 = vpop.f32.mrb[0].mxu0
  %v2251 = vpop.f32.mrb[0].mxu0
  %v2252 = vadd.f32 0.0, %v2251
  %v2253 = vpop.f32.mrb[0].mxu0
  %2254 = vdwg.mxu0
  %v2255 = vadd.f32 %v1707, %v2001
  %v2256 = vadd.f32 %v1708, %v2004
  %v2257 = vadd.f32 %v1709, %v2009
  %v2258 = vadd.f32 %v1710, %v2012
  %v2259 = vadd.f32 %v1711, %v2017
  %v2260 = vadd.f32 %v1712, %v2020
  %v2261 = vadd.f32 %v1713, %v2025
  %v2262 = vadd.f32 %v1714, %v2028
  %v2263 = vadd.f32 %v1715, %v2033
  %v2264 = vadd.f32 %v1716, %v2036
  %v2265 = vadd.f32 %v1717, %v2041
  %v2266 = vadd.f32 %v1718, %v2044
  %v2267 = vadd.f32 %v1719, %v2049
  %v2268 = vadd.f32 %v1720, %v2052
  %v2269 = vadd.f32 %v1721, %v2057
  %v2270 = vadd.f32 %v1722, %v2060
  %v2271 = vadd.f32 %v1723, %v2065
  %v2272 = vadd.f32 %v1724, %v2068
  %v2273 = vadd.f32 %v1725, %v2073
  %v2274 = vadd.f32 %v1726, %v2076
  %v2275 = vadd.f32 %v1727, %v2081
  %v2276 = vadd.f32 %v1728, %v2084
  %v2277 = vadd.f32 %v1729, %v2089
  %v2278 = vadd.f32 %v1730, %v2092
  %v2279 = vadd.f32 %v1731, %v2097
  %v2280 = vadd.f32 %v1732, %v2100
  %v2281 = vadd.f32 %v1733, %v2105
  %v2282 = vadd.f32 %v1734, %v2108
  %v2283 = vadd.f32 %v1735, %v2113
  %v2284 = vadd.f32 %v1736, %v2116
  %v2285 = vadd.f32 %v1737, %v2121
  %v2286 = vadd.f32 %v1738, %v2124
  %v2287 = vadd.f32 %v1739, %v2129
  %v2288 = vadd.f32 %v1740, %v2132
  %v2289 = vadd.f32 %v1741, %v2137
  %v2290 = vadd.f32 %v1742, %v2140
  %v2291 = vadd.f32 %v1743, %v2145
  %v2292 = vadd.f32 %v1744, %v2148
  %v2293 = vadd.f32 %v1745, %v2153
  %v2294 = vadd.f32 %v1746, %v2156
  %v2295 = vadd.f32 %v1747, %v2161
  %v2296 = vadd.f32 %v1748, %v2164
  %v2297 = vadd.f32 %v1749, %v2169
  %v2298 = vadd.f32 %v1750, %v2172
  %v2299 = vadd.f32 %v1751, %v2177
  %v2300 = vadd.f32 %v1752, %v2180
  %v2301 = vadd.f32 %v1753, %v2185
  %v2302 = vadd.f32 %v1754, %v2188
  %v2303 = vadd.f32 %v1755, %v2193
  %v2304 = vadd.f32 %v1756, %v2196
  %v2305 = vadd.f32 %v1757, %v2201
  %v2306 = vadd.f32 %v1758, %v2204
  %v2307 = vadd.f32 %v1759, %v2209
  %v2308 = vadd.f32 %v1760, %v2212
  %v2309 = vadd.f32 %v1761, %v2217
  %v2310 = vadd.f32 %v1762, %v2220
  %v2311 = vadd.f32 %v1763, %v2225
  %v2312 = vadd.f32 %v1764, %v2228
  %v2313 = vadd.f32 %v1765, %v2233
  %v2314 = vadd.f32 %v1766, %v2236
  %v2315 = vadd.f32 %v1767, %v2241
  %v2316 = vadd.f32 %v1768, %v2244
  %v2317 = vadd.f32 %v1769, %v2249
  %v2318 = vadd.f32 %v1770, %v2252
  %v2319 = vld [vmem:[%s112 + $0x1] sm:$0xff]
  %v2320 = vld [vmem:[%s112 + $0x9] sm:$0xff]
  %v2321 = vld [vmem:[%s112 + $0x19] sm:$0xff]
  %v2322 = vld [vmem:[%s112 + $0x21] sm:$0xff]
  %v2323 = vld [vmem:[%s112 + $0x31] sm:$0xff]
  %v2324 = vld [vmem:[%s112 + $0x39] sm:$0xff]
  %v2325 = vld [vmem:[%s112 + $0x49] sm:$0xff]
  %v2326 = vld [vmem:[%s112 + $0x51] sm:$0xff]
  %v2327 = vld [vmem:[%s112 + $0x61] sm:$0xff]
  %v2328 = vld [vmem:[%s112 + $0x69] sm:$0xff]
  %v2329 = vld [vmem:[%s112 + $0x79] sm:$0xff]
  %v2330 = vld [vmem:[%s112 + $0x81] sm:$0xff]
  %v2331 = vld [vmem:[%s112 + $0x91] sm:$0xff]
  %v2332 = vld [vmem:[%s112 + $0x99] sm:$0xff]
  %v2333 = vld [vmem:[%s112 + $0xa9] sm:$0xff]
  %v2334 = vld [vmem:[%s112 + $0xb1] sm:$0xff]
  %v2335 = vld [vmem:[%s112 + $0xc1] sm:$0xff]
  %v2336 = vld [vmem:[%s112 + $0xc9] sm:$0xff]
  %v2337 = vld [vmem:[%s112 + $0xd9] sm:$0xff]
  %v2338 = vld [vmem:[%s112 + $0xe1] sm:$0xff]
  %v2339 = vld [vmem:[%s112 + $0xf1] sm:$0xff]
  %v2340 = vld [vmem:[%s112 + $0xf9] sm:$0xff]
  %v2341 = vld [vmem:[%s112 + $0x109] sm:$0xff]
  %v2342 = vld [vmem:[%s112 + $0x111] sm:$0xff]
  %v2343 = vld [vmem:[%s112 + $0x121] sm:$0xff]
  %v2344 = vld [vmem:[%s112 + $0x129] sm:$0xff]
  %v2345 = vld [vmem:[%s112 + $0x139] sm:$0xff]
  %v2346 = vld [vmem:[%s112 + $0x141] sm:$0xff]
  %v2347 = vld [vmem:[%s112 + $0x151] sm:$0xff]
  %v2348 = vld [vmem:[%s112 + $0x159] sm:$0xff]
  %v2349 = vld [vmem:[%s112 + $0x169] sm:$0xff]
  %v2350 = vld [vmem:[%s112 + $0x171] sm:$0xff]
  %v2351 = vld [vmem:[%s112 + $0x1b1] sm:$0xff]
  %v2352 = vld [vmem:[%s112 + $0x1b9] sm:$0xff]
  %v2353 = vld [vmem:[%s112 + $0x1c9] sm:$0xff]
  %v2354 = vld [vmem:[%s112 + $0x1d1] sm:$0xff]
  %v2355 = vld [vmem:[%s112 + $0x1e1] sm:$0xff]
  %v2356 = vld [vmem:[%s112 + $0x1e9] sm:$0xff]
  %v2357 = vld [vmem:[%s112 + $0x1f9] sm:$0xff]
  %v2358 = vld [vmem:[%s112 + $0x201] sm:$0xff]
  %v2359 = vld [vmem:[%s112 + $0x211] sm:$0xff]
  %v2360 = vld [vmem:[%s112 + $0x219] sm:$0xff]
  %v2361 = vld [vmem:[%s112 + $0x229] sm:$0xff]
  %v2362 = vld [vmem:[%s112 + $0x231] sm:$0xff]
  %v2363 = vld [vmem:[%s112 + $0x241] sm:$0xff]
  %v2364 = vld [vmem:[%s112 + $0x249] sm:$0xff]
  %v2365 = vld [vmem:[%s112 + $0x259] sm:$0xff]
  %v2366 = vld [vmem:[%s112 + $0x261] sm:$0xff]
  %v2367 = vld [vmem:[%s112 + $0x271] sm:$0xff]
  %v2368 = vld [vmem:[%s112 + $0x279] sm:$0xff]
  %v2369 = vld [vmem:[%s112 + $0x289] sm:$0xff]
  %v2370 = vld [vmem:[%s112 + $0x291] sm:$0xff]
  %v2371 = vld [vmem:[%s112 + $0x2a1] sm:$0xff]
  %v2372 = vld [vmem:[%s112 + $0x2a9] sm:$0xff]
  %v2373 = vld [vmem:[%s112 + $0x2b9] sm:$0xff]
  %v2374 = vld [vmem:[%s112 + $0x2c1] sm:$0xff]
  %v2375 = vld [vmem:[%s112 + $0x2d1] sm:$0xff]
  %v2376 = vld [vmem:[%s112 + $0x2d9] sm:$0xff]
  %v2377 = vld [vmem:[%s112 + $0x2e9] sm:$0xff]
  %v2378 = vld [vmem:[%s112 + $0x2f1] sm:$0xff]
  %v2379 = vld [vmem:[%s112 + $0x301] sm:$0xff]
  %v2380 = vld [vmem:[%s112 + $0x309] sm:$0xff]
  %v2381 = vld [vmem:[%s112 + $0x319] sm:$0xff]
  %v2382 = vld [vmem:[%s112 + $0x321] sm:$0xff]
  %v2383 = vpack.c.bf16 %v2320, %v2319
  %v2384 = vpack.c.bf16 %v2322, %v2321
  %v2385 = vpack.c.bf16 %v2324, %v2323
  %v2386 = vpack.c.bf16 %v2326, %v2325
  %v2387 = vpack.c.bf16 %v2328, %v2327
  %v2388 = vpack.c.bf16 %v2330, %v2329
  %v2389 = vpack.c.bf16 %v2332, %v2331
  %v2390 = vpack.c.bf16 %v2334, %v2333
  %v2391 = vpack.c.bf16 %v2336, %v2335
  %v2392 = vpack.c.bf16 %v2338, %v2337
  %v2393 = vpack.c.bf16 %v2340, %v2339
  %v2394 = vpack.c.bf16 %v2342, %v2341
  %v2395 = vpack.c.bf16 %v2344, %v2343
  %v2396 = vpack.c.bf16 %v2346, %v2345
  %v2397 = vpack.c.bf16 %v2348, %v2347
  %v2398 = vpack.c.bf16 %v2350, %v2349
  %v2399 = vpack.c.bf16 %v2352, %v2351
  %v2400 = vpack.c.bf16 %v2354, %v2353
  %v2401 = vpack.c.bf16 %v2356, %v2355
  %v2402 = vpack.c.bf16 %v2358, %v2357
  %v2403 = vpack.c.bf16 %v2360, %v2359
  %v2404 = vpack.c.bf16 %v2362, %v2361
  %v2405 = vpack.c.bf16 %v2364, %v2363
  %v2406 = vpack.c.bf16 %v2366, %v2365
  %v2407 = vpack.c.bf16 %v2368, %v2367
  %v2408 = vpack.c.bf16 %v2370, %v2369
  %v2409 = vpack.c.bf16 %v2372, %v2371
  %v2410 = vpack.c.bf16 %v2374, %v2373
  %v2411 = vpack.c.bf16 %v2376, %v2375
  %v2412 = vpack.c.bf16 %v2378, %v2377
  %v2413 = vpack.c.bf16 %v2380, %v2379
  %v2414 = vpack.c.bf16 %v2382, %v2381
  %v2416 = vsel %vm97, %v2383, 0
  %v2419 = vsel %vm97, %v2384, 0
  %v2422 = vsel %vm97, %v2385, 0
  %v2425 = vsel %vm97, %v2386, 0
  %v2428 = vsel %vm97, %v2387, 0
  %v2431 = vsel %vm97, %v2388, 0
  %v2434 = vsel %vm97, %v2389, 0
  %v2437 = vsel %vm97, %v2390, 0
  %v2440 = vsel %vm97, %v2391, 0
  %v2443 = vsel %vm97, %v2392, 0
  %v2446 = vsel %vm97, %v2393, 0
  %v2449 = vsel %vm97, %v2394, 0
  %v2452 = vsel %vm97, %v2395, 0
  %v2455 = vsel %vm97, %v2396, 0
  %v2458 = vsel %vm97, %v2397, 0
  %v2461 = vsel %vm97, %v2398, 0
  %v2464 = vsel %vm97, %v2399, 0
  %v2467 = vsel %vm97, %v2400, 0
  %v2470 = vsel %vm97, %v2401, 0
  %v2473 = vsel %vm97, %v2402, 0
  %v2476 = vsel %vm97, %v2403, 0
  %v2479 = vsel %vm97, %v2404, 0
  %v2482 = vsel %vm97, %v2405, 0
  %v2485 = vsel %vm97, %v2406, 0
  %v2488 = vsel %vm97, %v2407, 0
  %v2491 = vsel %vm97, %v2408, 0
  %v2494 = vsel %vm97, %v2409, 0
  %v2497 = vsel %vm97, %v2410, 0
  %v2500 = vsel %vm97, %v2411, 0
  %v2503 = vsel %vm97, %v2412, 0
  %v2506 = vsel %vm97, %v2413, 0
  %v2509 = vsel %vm97, %v2414, 0
  %v2512 = vsel %vm542, %v246, 0
  %2514 = vmatprep.subr.bf16.mxu0 0
  %2515 = vmatpush1.bf16.msra.mxu0 %v2512
  %2516 = vmatprep.subr.bf16.mxu0 0
  %2517 = vmatpush1.bf16.msra.mxu0 0
  %2518 = vmatprep.subr.bf16.mxu0 0
  %2519 = vmatpush1.bf16.msra.mxu0 0
  %2520 = vmatprep.subr.bf16.mxu0 0
  %2521 = vmatpush1.bf16.msra.mxu0 0
  %2522 = vmatprep.subr.bf16.mxu0 0
  %2523 = vmatpush1.bf16.msra.mxu0 0
  %2524 = vmatprep.subr.bf16.mxu0 0
  %2525 = vmatpush1.bf16.msra.mxu0 0
  %2526 = vmatprep.subr.bf16.mxu0 0
  %2527 = vmatpush1.bf16.msra.mxu0 0
  %2528 = vmatprep.subr.bf16.mxu0 0
  %2529 = vmatpush1.bf16.msra.mxu0 0
  %2530 = vmatprep.subr.bf16.mxu0 0
  %2531 = vmatpush1.bf16.msra.mxu0 0
  %2532 = vmatprep.subr.bf16.mxu0 0
  %2533 = vmatpush1.bf16.msra.mxu0 0
  %2534 = vmatprep.subr.bf16.mxu0 0
  %2535 = vmatpush1.bf16.msra.mxu0 0
  %2536 = vmatprep.subr.bf16.mxu0 0
  %2537 = vmatpush1.bf16.msra.mxu0 0
  %2538 = vmatprep.subr.bf16.mxu0 0
  %2539 = vmatpush1.bf16.msra.mxu0 0
  %2540 = vmatprep.subr.bf16.mxu0 0
  %2541 = vmatpush1.bf16.msra.mxu0 0
  %2542 = vmatprep.subr.bf16.mxu0 0
  %2543 = vmatpush1.bf16.msra.mxu0 0
  %2544 = vmatprep.subr.bf16.mxu0 0
  %2545 = vmatpush1.bf16.msra.mxu0 0
  %2546 = vmatprep.mubr.bf16.mxu0 0
  %2547 = vmatmul.mubr.bf16.gmra.mrb[0].mxu0 %v2416
  %v2548 = vpop.f32.mrb[0].mxu0
  %v2549 = vadd.f32 0.0, %v2548
  %v2550 = vpop.f32.mrb[0].mxu0
  %v2551 = vpop.f32.mrb[0].mxu0
  %v2552 = vadd.f32 0.0, %v2551
  %v2553 = vpop.f32.mrb[0].mxu0
  %2554 = vmatprep.mubr.bf16.mxu0 0
  %2555 = vmatmul.mubr.bf16.gmra.mrb[0].mxu0 %v2419
  %v2556 = vpop.f32.mrb[0].mxu0
  %v2557 = vadd.f32 0.0, %v2556
  %v2558 = vpop.f32.mrb[0].mxu0
  %v2559 = vpop.f32.mrb[0].mxu0
  %v2560 = vadd.f32 0.0, %v2559
  %v2561 = vpop.f32.mrb[0].mxu0
  %2562 = vmatprep.mubr.bf16.mxu0 0
  %2563 = vmatmul.mubr.bf16.gmra.mrb[0].mxu0 %v2422
  %v2564 = vpop.f32.mrb[0].mxu0
  %v2565 = vadd.f32 0.0, %v2564
  %v2566 = vpop.f32.mrb[0].mxu0
  %v2567 = vpop.f32.mrb[0].mxu0
  %v2568 = vadd.f32 0.0, %v2567
  %v2569 = vpop.f32.mrb[0].mxu0
  %2570 = vmatprep.mubr.bf16.mxu0 0
  %2571 = vmatmul.mubr.bf16.gmra.mrb[0].mxu0 %v2425
  %v2572 = vpop.f32.mrb[0].mxu0
  %v2573 = vadd.f32 0.0, %v2572
  %v2574 = vpop.f32.mrb[0].mxu0
  %v2575 = vpop.f32.mrb[0].mxu0
  %v2576 = vadd.f32 0.0, %v2575
  %v2577 = vpop.f32.mrb[0].mxu0
  %2578 = vmatprep.mubr.bf16.mxu0 0
  %2579 = vmatmul.mubr.bf16.gmra.mrb[0].mxu0 %v2428
  %v2580 = vpop.f32.mrb[0].mxu0
  %v2581 = vadd.f32 0.0, %v2580
  %v2582 = vpop.f32.mrb[0].mxu0
  %v2583 = vpop.f32.mrb[0].mxu0
  %v2584 = vadd.f32 0.0, %v2583
  %v2585 = vpop.f32.mrb[0].mxu0
  %2586 = vmatprep.mubr.bf16.mxu0 0
  %2587 = vmatmul.mubr.bf16.gmra.mrb[0].mxu0 %v2431
  %v2588 = vpop.f32.mrb[0].mxu0
  %v2589 = vadd.f32 0.0, %v2588
  %v2590 = vpop.f32.mrb[0].mxu0
  %v2591 = vpop.f32.mrb[0].mxu0
  %v2592 = vadd.f32 0.0, %v2591
  %v2593 = vpop.f32.mrb[0].mxu0
  %2594 = vmatprep.mubr.bf16.mxu0 0
  %2595 = vmatmul.mubr.bf16.gmra.mrb[0].mxu0 %v2434
  %v2596 = vpop.f32.mrb[0].mxu0
  %v2597 = vadd.f32 0.0, %v2596
  %v2598 = vpop.f32.mrb[0].mxu0
  %v2599 = vpop.f32.mrb[0].mxu0
  %v2600 = vadd.f32 0.0, %v2599
  %v2601 = vpop.f32.mrb[0].mxu0
  %2602 = vmatprep.mubr.bf16.mxu0 0
  %2603 = vmatmul.mubr.bf16.gmra.mrb[0].mxu0 %v2437
  %v2604 = vpop.f32.mrb[0].mxu0
  %v2605 = vadd.f32 0.0, %v2604
  %v2606 = vpop.f32.mrb[0].mxu0
  %v2607 = vpop.f32.mrb[0].mxu0
  %v2608 = vadd.f32 0.0, %v2607
  %v2609 = vpop.f32.mrb[0].mxu0
  %2610 = vmatprep.mubr.bf16.mxu0 0
  %2611 = vmatmul.mubr.bf16.gmra.mrb[0].mxu0 %v2440
  %v2612 = vpop.f32.mrb[0].mxu0
  %v2613 = vadd.f32 0.0, %v2612
  %v2614 = vpop.f32.mrb[0].mxu0
  %v2615 = vpop.f32.mrb[0].mxu0
  %v2616 = vadd.f32 0.0, %v2615
  %v2617 = vpop.f32.mrb[0].mxu0
  %2618 = vmatprep.mubr.bf16.mxu0 0
  %2619 = vmatmul.mubr.bf16.gmra.mrb[0].mxu0 %v2443
  %v2620 = vpop.f32.mrb[0].mxu0
  %v2621 = vadd.f32 0.0, %v2620
  %v2622 = vpop.f32.mrb[0].mxu0
  %v2623 = vpop.f32.mrb[0].mxu0
  %v2624 = vadd.f32 0.0, %v2623
  %v2625 = vpop.f32.mrb[0].mxu0
  %2626 = vmatprep.mubr.bf16.mxu0 0
  %2627 = vmatmul.mubr.bf16.gmra.mrb[0].mxu0 %v2446
  %v2628 = vpop.f32.mrb[0].mxu0
  %v2629 = vadd.f32 0.0, %v2628
  %v2630 = vpop.f32.mrb[0].mxu0
  %v2631 = vpop.f32.mrb[0].mxu0
  %v2632 = vadd.f32 0.0, %v2631
  %v2633 = vpop.f32.mrb[0].mxu0
  %2634 = vmatprep.mubr.bf16.mxu0 0
  %2635 = vmatmul.mubr.bf16.gmra.mrb[0].mxu0 %v2449
  %v2636 = vpop.f32.mrb[0].mxu0
  %v2637 = vadd.f32 0.0, %v2636
  %v2638 = vpop.f32.mrb[0].mxu0
  %v2639 = vpop.f32.mrb[0].mxu0
  %v2640 = vadd.f32 0.0, %v2639
  %v2641 = vpop.f32.mrb[0].mxu0
  %2642 = vmatprep.mubr.bf16.mxu0 0
  %2643 = vmatmul.mubr.bf16.gmra.mrb[0].mxu0 %v2452
  %v2644 = vpop.f32.mrb[0].mxu0
  %v2645 = vadd.f32 0.0, %v2644
  %v2646 = vpop.f32.mrb[0].mxu0
  %v2647 = vpop.f32.mrb[0].mxu0
  %v2648 = vadd.f32 0.0, %v2647
  %v2649 = vpop.f32.mrb[0].mxu0
  %2650 = vmatprep.mubr.bf16.mxu0 0
  %2651 = vmatmul.mubr.bf16.gmra.mrb[0].mxu0 %v2455
  %v2652 = vpop.f32.mrb[0].mxu0
  %v2653 = vadd.f32 0.0, %v2652
  %v2654 = vpop.f32.mrb[0].mxu0
  %v2655 = vpop.f32.mrb[0].mxu0
  %v2656 = vadd.f32 0.0, %v2655
  %v2657 = vpop.f32.mrb[0].mxu0
  %2658 = vmatprep.mubr.bf16.mxu0 0
  %2659 = vmatmul.mubr.bf16.gmra.mrb[0].mxu0 %v2458
  %v2660 = vpop.f32.mrb[0].mxu0
  %v2661 = vadd.f32 0.0, %v2660
  %v2662 = vpop.f32.mrb[0].mxu0
  %v2663 = vpop.f32.mrb[0].mxu0
  %v2664 = vadd.f32 0.0, %v2663
  %v2665 = vpop.f32.mrb[0].mxu0
  %2666 = vmatprep.mubr.bf16.mxu0 0
  %2667 = vmatmul.mubr.bf16.gmra.mrb[0].mxu0 %v2461
  %v2668 = vpop.f32.mrb[0].mxu0
  %v2669 = vadd.f32 0.0, %v2668
  %v2670 = vpop.f32.mrb[0].mxu0
  %v2671 = vpop.f32.mrb[0].mxu0
  %v2672 = vadd.f32 0.0, %v2671
  %v2673 = vpop.f32.mrb[0].mxu0
  %2674 = vmatprep.mubr.bf16.mxu0 0
  %2675 = vmatmul.mubr.bf16.gmra.mrb[0].mxu0 %v2464
  %v2676 = vpop.f32.mrb[0].mxu0
  %v2677 = vadd.f32 0.0, %v2676
  %v2678 = vpop.f32.mrb[0].mxu0
  %v2679 = vpop.f32.mrb[0].mxu0
  %v2680 = vadd.f32 0.0, %v2679
  %v2681 = vpop.f32.mrb[0].mxu0
  %2682 = vmatprep.mubr.bf16.mxu0 0
  %2683 = vmatmul.mubr.bf16.gmra.mrb[0].mxu0 %v2467
  %v2684 = vpop.f32.mrb[0].mxu0
  %v2685 = vadd.f32 0.0, %v2684
  %v2686 = vpop.f32.mrb[0].mxu0
  %v2687 = vpop.f32.mrb[0].mxu0
  %v2688 = vadd.f32 0.0, %v2687
  %v2689 = vpop.f32.mrb[0].mxu0
  %2690 = vmatprep.mubr.bf16.mxu0 0
  %2691 = vmatmul.mubr.bf16.gmra.mrb[0].mxu0 %v2470
  %v2692 = vpop.f32.mrb[0].mxu0
  %v2693 = vadd.f32 0.0, %v2692
  %v2694 = vpop.f32.mrb[0].mxu0
  %v2695 = vpop.f32.mrb[0].mxu0
  %v2696 = vadd.f32 0.0, %v2695
  %v2697 = vpop.f32.mrb[0].mxu0
  %2698 = vmatprep.mubr.bf16.mxu0 0
  %2699 = vmatmul.mubr.bf16.gmra.mrb[0].mxu0 %v2473
  %v2700 = vpop.f32.mrb[0].mxu0
  %v2701 = vadd.f32 0.0, %v2700
  %v2702 = vpop.f32.mrb[0].mxu0
  %v2703 = vpop.f32.mrb[0].mxu0
  %v2704 = vadd.f32 0.0, %v2703
  %v2705 = vpop.f32.mrb[0].mxu0
  %2706 = vmatprep.mubr.bf16.mxu0 0
  %2707 = vmatmul.mubr.bf16.gmra.mrb[0].mxu0 %v2476
  %v2708 = vpop.f32.mrb[0].mxu0
  %v2709 = vadd.f32 0.0, %v2708
  %v2710 = vpop.f32.mrb[0].mxu0
  %v2711 = vpop.f32.mrb[0].mxu0
  %v2712 = vadd.f32 0.0, %v2711
  %v2713 = vpop.f32.mrb[0].mxu0
  %2714 = vmatprep.mubr.bf16.mxu0 0
  %2715 = vmatmul.mubr.bf16.gmra.mrb[0].mxu0 %v2479
  %v2716 = vpop.f32.mrb[0].mxu0
  %v2717 = vadd.f32 0.0, %v2716
  %v2718 = vpop.f32.mrb[0].mxu0
  %v2719 = vpop.f32.mrb[0].mxu0
  %v2720 = vadd.f32 0.0, %v2719
  %v2721 = vpop.f32.mrb[0].mxu0
  %2722 = vmatprep.mubr.bf16.mxu0 0
  %2723 = vmatmul.mubr.bf16.gmra.mrb[0].mxu0 %v2482
  %v2724 = vpop.f32.mrb[0].mxu0
  %v2725 = vadd.f32 0.0, %v2724
  %v2726 = vpop.f32.mrb[0].mxu0
  %v2727 = vpop.f32.mrb[0].mxu0
  %v2728 = vadd.f32 0.0, %v2727
  %v2729 = vpop.f32.mrb[0].mxu0
  %2730 = vmatprep.mubr.bf16.mxu0 0
  %2731 = vmatmul.mubr.bf16.gmra.mrb[0].mxu0 %v2485
  %v2732 = vpop.f32.mrb[0].mxu0
  %v2733 = vadd.f32 0.0, %v2732
  %v2734 = vpop.f32.mrb[0].mxu0
  %v2735 = vpop.f32.mrb[0].mxu0
  %v2736 = vadd.f32 0.0, %v2735
  %v2737 = vpop.f32.mrb[0].mxu0
  %2738 = vmatprep.mubr.bf16.mxu0 0
  %2739 = vmatmul.mubr.bf16.gmra.mrb[0].mxu0 %v2488
  %v2740 = vpop.f32.mrb[0].mxu0
  %v2741 = vadd.f32 0.0, %v2740
  %v2742 = vpop.f32.mrb[0].mxu0
  %v2743 = vpop.f32.mrb[0].mxu0
  %v2744 = vadd.f32 0.0, %v2743
  %v2745 = vpop.f32.mrb[0].mxu0
  %2746 = vmatprep.mubr.bf16.mxu0 0
  %2747 = vmatmul.mubr.bf16.gmra.mrb[0].mxu0 %v2491
  %v2748 = vpop.f32.mrb[0].mxu0
  %v2749 = vadd.f32 0.0, %v2748
  %v2750 = vpop.f32.mrb[0].mxu0
  %v2751 = vpop.f32.mrb[0].mxu0
  %v2752 = vadd.f32 0.0, %v2751
  %v2753 = vpop.f32.mrb[0].mxu0
  %2754 = vmatprep.mubr.bf16.mxu0 0
  %2755 = vmatmul.mubr.bf16.gmra.mrb[0].mxu0 %v2494
  %v2756 = vpop.f32.mrb[0].mxu0
  %v2757 = vadd.f32 0.0, %v2756
  %v2758 = vpop.f32.mrb[0].mxu0
  %v2759 = vpop.f32.mrb[0].mxu0
  %v2760 = vadd.f32 0.0, %v2759
  %v2761 = vpop.f32.mrb[0].mxu0
  %2762 = vmatprep.mubr.bf16.mxu0 0
  %2763 = vmatmul.mubr.bf16.gmra.mrb[0].mxu0 %v2497
  %v2764 = vpop.f32.mrb[0].mxu0
  %v2765 = vadd.f32 0.0, %v2764
  %v2766 = vpop.f32.mrb[0].mxu0
  %v2767 = vpop.f32.mrb[0].mxu0
  %v2768 = vadd.f32 0.0, %v2767
  %v2769 = vpop.f32.mrb[0].mxu0
  %2770 = vmatprep.mubr.bf16.mxu0 0
  %2771 = vmatmul.mubr.bf16.gmra.mrb[0].mxu0 %v2500
  %v2772 = vpop.f32.mrb[0].mxu0
  %v2773 = vadd.f32 0.0, %v2772
  %v2774 = vpop.f32.mrb[0].mxu0
  %v2775 = vpop.f32.mrb[0].mxu0
  %v2776 = vadd.f32 0.0, %v2775
  %v2777 = vpop.f32.mrb[0].mxu0
  %2778 = vmatprep.mubr.bf16.mxu0 0
  %2779 = vmatmul.mubr.bf16.gmra.mrb[0].mxu0 %v2503
  %v2780 = vpop.f32.mrb[0].mxu0
  %v2781 = vadd.f32 0.0, %v2780
  %v2782 = vpop.f32.mrb[0].mxu0
  %v2783 = vpop.f32.mrb[0].mxu0
  %v2784 = vadd.f32 0.0, %v2783
  %v2785 = vpop.f32.mrb[0].mxu0
  %2786 = vmatprep.mubr.bf16.mxu0 0
  %2787 = vmatmul.mubr.bf16.gmra.mrb[0].mxu0 %v2506
  %v2788 = vpop.f32.mrb[0].mxu0
  %v2789 = vadd.f32 0.0, %v2788
  %v2790 = vpop.f32.mrb[0].mxu0
  %v2791 = vpop.f32.mrb[0].mxu0
  %v2792 = vadd.f32 0.0, %v2791
  %v2793 = vpop.f32.mrb[0].mxu0
  %2794 = vmatprep.mubr.bf16.mxu0 0
  %2795 = vmatmul.mubr.bf16.gmra.mrb[0].mxu0 %v2509
  %v2796 = vpop.f32.mrb[0].mxu0
  %v2797 = vadd.f32 0.0, %v2796
  %v2798 = vpop.f32.mrb[0].mxu0
  %v2799 = vpop.f32.mrb[0].mxu0
  %v2800 = vadd.f32 0.0, %v2799
  %v2801 = vpop.f32.mrb[0].mxu0
  %2802 = vdwg.mxu0
  %v2803 = vadd.f32 %v2255, %v2549
  %v2804 = vadd.f32 %v2256, %v2552
  %v2805 = vadd.f32 %v2257, %v2557
  %v2806 = vadd.f32 %v2258, %v2560
  %v2807 = vadd.f32 %v2259, %v2565
  %v2808 = vadd.f32 %v2260, %v2568
  %v2809 = vadd.f32 %v2261, %v2573
  %v2810 = vadd.f32 %v2262, %v2576
  %v2811 = vadd.f32 %v2263, %v2581
  %v2812 = vadd.f32 %v2264, %v2584
  %v2813 = vadd.f32 %v2265, %v2589
  %v2814 = vadd.f32 %v2266, %v2592
  %v2815 = vadd.f32 %v2267, %v2597
  %v2816 = vadd.f32 %v2268, %v2600
  %v2817 = vadd.f32 %v2269, %v2605
  %v2818 = vadd.f32 %v2270, %v2608
  %v2819 = vadd.f32 %v2271, %v2613
  %v2820 = vadd.f32 %v2272, %v2616
  %v2821 = vadd.f32 %v2273, %v2621
  %v2822 = vadd.f32 %v2274, %v2624
  %v2823 = vadd.f32 %v2275, %v2629
  %v2824 = vadd.f32 %v2276, %v2632
  %v2825 = vadd.f32 %v2277, %v2637
  %v2826 = vadd.f32 %v2278, %v2640
  %v2827 = vadd.f32 %v2279, %v2645
  %v2828 = vadd.f32 %v2280, %v2648
  %v2829 = vadd.f32 %v2281, %v2653
  %v2830 = vadd.f32 %v2282, %v2656
  %v2831 = vadd.f32 %v2283, %v2661
  %v2832 = vadd.f32 %v2284, %v2664
  %v2833 = vadd.f32 %v2285, %v2669
  %v2834 = vadd.f32 %v2286, %v2672
  %v2835 = vadd.f32 %v2287, %v2677
  %v2836 = vadd.f32 %v2288, %v2680
  %v2837 = vadd.f32 %v2289, %v2685
  %v2838 = vadd.f32 %v2290, %v2688
  %v2839 = vadd.f32 %v2291, %v2693
  %v2840 = vadd.f32 %v2292, %v2696
  %v2841 = vadd.f32 %v2293, %v2701
  %v2842 = vadd.f32 %v2294, %v2704
  %v2843 = vadd.f32 %v2295, %v2709
  %v2844 = vadd.f32 %v2296, %v2712
  %v2845 = vadd.f32 %v2297, %v2717
  %v2846 = vadd.f32 %v2298, %v2720
  %v2847 = vadd.f32 %v2299, %v2725
  %v2848 = vadd.f32 %v2300, %v2728
  %v2849 = vadd.f32 %v2301, %v2733
  %v2850 = vadd.f32 %v2302, %v2736
  %v2851 = vadd.f32 %v2303, %v2741
  %v2852 = vadd.f32 %v2304, %v2744
  %v2853 = vadd.f32 %v2305, %v2749
  %v2854 = vadd.f32 %v2306, %v2752
  %v2855 = vadd.f32 %v2307, %v2757
  %v2856 = vadd.f32 %v2308, %v2760
  %v2857 = vadd.f32 %v2309, %v2765
  %v2858 = vadd.f32 %v2310, %v2768
  %v2859 = vadd.f32 %v2311, %v2773
  %v2860 = vadd.f32 %v2312, %v2776
  %v2861 = vadd.f32 %v2313, %v2781
  %v2862 = vadd.f32 %v2314, %v2784
  %v2863 = vadd.f32 %v2315, %v2789
  %v2864 = vadd.f32 %v2316, %v2792
  %v2865 = vadd.f32 %v2317, %v2797
  %v2866 = vadd.f32 %v2318, %v2800
  %v2867 = vld [vmem:[%s112 + $0x2] sm:$0xff]
  %v2868 = vld [vmem:[%s112 + $0xa] sm:$0xff]
  %v2869 = vld [vmem:[%s112 + $0x1a] sm:$0xff]
  %v2870 = vld [vmem:[%s112 + $0x22] sm:$0xff]
  %v2871 = vld [vmem:[%s112 + $0x32] sm:$0xff]
  %v2872 = vld [vmem:[%s112 + $0x3a] sm:$0xff]
  %v2873 = vld [vmem:[%s112 + $0x4a] sm:$0xff]
  %v2874 = vld [vmem:[%s112 + $0x52] sm:$0xff]
  %v2875 = vld [vmem:[%s112 + $0x62] sm:$0xff]
  %v2876 = vld [vmem:[%s112 + $0x6a] sm:$0xff]
  %v2877 = vld [vmem:[%s112 + $0x7a] sm:$0xff]
  %v2878 = vld [vmem:[%s112 + $0x82] sm:$0xff]
  %v2879 = vld [vmem:[%s112 + $0x92] sm:$0xff]
  %v2880 = vld [vmem:[%s112 + $0x9a] sm:$0xff]
  %v2881 = vld [vmem:[%s112 + $0xaa] sm:$0xff]
  %v2882 = vld [vmem:[%s112 + $0xb2] sm:$0xff]
  %v2883 = vld [vmem:[%s112 + $0xc2] sm:$0xff]
  %v2884 = vld [vmem:[%s112 + $0xca] sm:$0xff]
  %v2885 = vld [vmem:[%s112 + $0xda] sm:$0xff]
  %v2886 = vld [vmem:[%s112 + $0xe2] sm:$0xff]
  %v2887 = vld [vmem:[%s112 + $0xf2] sm:$0xff]
  %v2888 = vld [vmem:[%s112 + $0xfa] sm:$0xff]
  %v2889 = vld [vmem:[%s112 + $0x10a] sm:$0xff]
  %v2890 = vld [vmem:[%s112 + $0x112] sm:$0xff]
  %v2891 = vld [vmem:[%s112 + $0x122] sm:$0xff]
  %v2892 = vld [vmem:[%s112 + $0x12a] sm:$0xff]
  %v2893 = vld [vmem:[%s112 + $0x13a] sm:$0xff]
  %v2894 = vld [vmem:[%s112 + $0x142] sm:$0xff]
  %v2895 = vld [vmem:[%s112 + $0x152] sm:$0xff]
  %v2896 = vld [vmem:[%s112 + $0x15a] sm:$0xff]
  %v2897 = vld [vmem:[%s112 + $0x16a] sm:$0xff]
  %v2898 = vld [vmem:[%s112 + $0x172] sm:$0xff]
  %v2899 = vld [vmem:[%s112 + $0x1b2] sm:$0xff]
  %v2900 = vld [vmem:[%s112 + $0x1ba] sm:$0xff]
  %v2901 = vld [vmem:[%s112 + $0x1ca] sm:$0xff]
  %v2902 = vld [vmem:[%s112 + $0x1d2] sm:$0xff]
  %v2903 = vld [vmem:[%s112 + $0x1e2] sm:$0xff]
  %v2904 = vld [vmem:[%s112 + $0x1ea] sm:$0xff]
  %v2905 = vld [vmem:[%s112 + $0x1fa] sm:$0xff]
  %v2906 = vld [vmem:[%s112 + $0x202] sm:$0xff]
  %v2907 = vld [vmem:[%s112 + $0x212] sm:$0xff]
  %v2908 = vld [vmem:[%s112 + $0x21a] sm:$0xff]
  %v2909 = vld [vmem:[%s112 + $0x22a] sm:$0xff]
  %v2910 = vld [vmem:[%s112 + $0x232] sm:$0xff]
  %v2911 = vld [vmem:[%s112 + $0x242] sm:$0xff]
  %v2912 = vld [vmem:[%s112 + $0x24a] sm:$0xff]
  %v2913 = vld [vmem:[%s112 + $0x25a] sm:$0xff]
  %v2914 = vld [vmem:[%s112 + $0x262] sm:$0xff]
  %v2915 = vld [vmem:[%s112 + $0x272] sm:$0xff]
  %v2916 = vld [vmem:[%s112 + $0x27a] sm:$0xff]
  %v2917 = vld [vmem:[%s112 + $0x28a] sm:$0xff]
  %v2918 = vld [vmem:[%s112 + $0x292] sm:$0xff]
  %v2919 = vld [vmem:[%s112 + $0x2a2] sm:$0xff]
  %v2920 = vld [vmem:[%s112 + $0x2aa] sm:$0xff]
  %v2921 = vld [vmem:[%s112 + $0x2ba] sm:$0xff]
  %v2922 = vld [vmem:[%s112 + $0x2c2] sm:$0xff]
  %v2923 = vld [vmem:[%s112 + $0x2d2] sm:$0xff]
  %v2924 = vld [vmem:[%s112 + $0x2da] sm:$0xff]
  %v2925 = vld [vmem:[%s112 + $0x2ea] sm:$0xff]
  %v2926 = vld [vmem:[%s112 + $0x2f2] sm:$0xff]
  %v2927 = vld [vmem:[%s112 + $0x302] sm:$0xff]
  %v2928 = vld [vmem:[%s112 + $0x30a] sm:$0xff]
  %v2929 = vld [vmem:[%s112 + $0x31a] sm:$0xff]
  %v2930 = vld [vmem:[%s112 + $0x322] sm:$0xff]
  %v2931 = vpack.c.bf16 %v2868, %v2867
  %v2932 = vpack.c.bf16 %v2870, %v2869
  %v2933 = vpack.c.bf16 %v2872, %v2871
  %v2934 = vpack.c.bf16 %v2874, %v2873
  %v2935 = vpack.c.bf16 %v2876, %v2875
  %v2936 = vpack.c.bf16 %v2878, %v2877
  %v2937 = vpack.c.bf16 %v2880, %v2879
  %v2938 = vpack.c.bf16 %v2882, %v2881
  %v2939 = vpack.c.bf16 %v2884, %v2883
  %v2940 = vpack.c.bf16 %v2886, %v2885
  %v2941 = vpack.c.bf16 %v2888, %v2887
  %v2942 = vpack.c.bf16 %v2890, %v2889
  %v2943 = vpack.c.bf16 %v2892, %v2891
  %v2944 = vpack.c.bf16 %v2894, %v2893
  %v2945 = vpack.c.bf16 %v2896, %v2895
  %v2946 = vpack.c.bf16 %v2898, %v2897
  %v2947 = vpack.c.bf16 %v2900, %v2899
  %v2948 = vpack.c.bf16 %v2902, %v2901
  %v2949 = vpack.c.bf16 %v2904, %v2903
  %v2950 = vpack.c.bf16 %v2906, %v2905
  %v2951 = vpack.c.bf16 %v2908, %v2907
  %v2952 = vpack.c.bf16 %v2910, %v2909
  %v2953 = vpack.c.bf16 %v2912, %v2911
  %v2954 = vpack.c.bf16 %v2914, %v2913
  %v2955 = vpack.c.bf16 %v2916, %v2915
  %v2956 = vpack.c.bf16 %v2918, %v2917
  %v2957 = vpack.c.bf16 %v2920, %v2919
  %v2958 = vpack.c.bf16 %v2922, %v2921
  %v2959 = vpack.c.bf16 %v2924, %v2923
  %v2960 = vpack.c.bf16 %v2926, %v2925
  %v2961 = vpack.c.bf16 %v2928, %v2927
  %v2962 = vpack.c.bf16 %v2930, %v2929
  %v2964 = vsel %vm97, %v2931, 0
  %v2967 = vsel %vm97, %v2932, 0
  %v2970 = vsel %vm97, %v2933, 0
  %v2973 = vsel %vm97, %v2934, 0
  %v2976 = vsel %vm97, %v2935, 0
  %v2979 = vsel %vm97, %v2936, 0
  %v2982 = vsel %vm97, %v2937, 0
  %v2985 = vsel %vm97, %v2938, 0
  %v2988 = vsel %vm97, %v2939, 0
  %v2991 = vsel %vm97, %v2940, 0
  %v2994 = vsel %vm97, %v2941, 0
  %v2997 = vsel %vm97, %v2942, 0
  %v3000 = vsel %vm97, %v2943, 0
  %v3003 = vsel %vm97, %v2944, 0
  %v3006 = vsel %vm97, %v2945, 0
  %v3009 = vsel %vm97, %v2946, 0
  %v3012 = vsel %vm97, %v2947, 0
  %v3015 = vsel %vm97, %v2948, 0
  %v3018 = vsel %vm97, %v2949, 0
  %v3021 = vsel %vm97, %v2950, 0
  %v3024 = vsel %vm97, %v2951, 0
  %v3027 = vsel %vm97, %v2952, 0
  %v3030 = vsel %vm97, %v2953, 0
  %v3033 = vsel %vm97, %v2954, 0
  %v3036 = vsel %vm97, %v2955, 0
  %v3039 = vsel %vm97, %v2956, 0
  %v3042 = vsel %vm97, %v2957, 0
  %v3045 = vsel %vm97, %v2958, 0
  %v3048 = vsel %vm97, %v2959, 0
  %v3051 = vsel %vm97, %v2960, 0
  %v3054 = vsel %vm97, %v2961, 0
  %v3057 = vsel %vm97, %v2962, 0
  %v3060 = vsel %vm542, %v247, 0
  %3062 = vmatprep.subr.bf16.mxu0 0
  %3063 = vmatpush1.bf16.msra.mxu0 %v3060
  %3064 = vmatprep.subr.bf16.mxu0 0
  %3065 = vmatpush1.bf16.msra.mxu0 0
  %3066 = vmatprep.subr.bf16.mxu0 0
  %3067 = vmatpush1.bf16.msra.mxu0 0
  %3068 = vmatprep.subr.bf16.mxu0 0
  %3069 = vmatpush1.bf16.msra.mxu0 0
  %3070 = vmatprep.subr.bf16.mxu0 0
  %3071 = vmatpush1.bf16.msra.mxu0 0
  %3072 = vmatprep.subr.bf16.mxu0 0
  %3073 = vmatpush1.bf16.msra.mxu0 0
  %3074 = vmatprep.subr.bf16.mxu0 0
  %3075 = vmatpush1.bf16.msra.mxu0 0
  %3076 = vmatprep.subr.bf16.mxu0 0
  %3077 = vmatpush1.bf16.msra.mxu0 0
  %3078 = vmatprep.subr.bf16.mxu0 0
  %3079 = vmatpush1.bf16.msra.mxu0 0
  %3080 = vmatprep.subr.bf16.mxu0 0
  %3081 = vmatpush1.bf16.msra.mxu0 0
  %3082 = vmatprep.subr.bf16.mxu0 0
  %3083 = vmatpush1.bf16.msra.mxu0 0
  %3084 = vmatprep.subr.bf16.mxu0 0
  %3085 = vmatpush1.bf16.msra.mxu0 0
  %3086 = vmatprep.subr.bf16.mxu0 0
  %3087 = vmatpush1.bf16.msra.mxu0 0
  %3088 = vmatprep.subr.bf16.mxu0 0
  %3089 = vmatpush1.bf16.msra.mxu0 0
  %3090 = vmatprep.subr.bf16.mxu0 0
  %3091 = vmatpush1.bf16.msra.mxu0 0
  %3092 = vmatprep.subr.bf16.mxu0 0
  %3093 = vmatpush1.bf16.msra.mxu0 0
  %3094 = vmatprep.mubr.bf16.mxu0 0
  %3095 = vmatmul.mubr.bf16.gmra.mrb[0].mxu0 %v2964
  %v3096 = vpop.f32.mrb[0].mxu0
  %v3097 = vadd.f32 0.0, %v3096
  %v3098 = vpop.f32.mrb[0].mxu0
  %v3099 = vpop.f32.mrb[0].mxu0
  %v3100 = vadd.f32 0.0, %v3099
  %v3101 = vpop.f32.mrb[0].mxu0
  %3102 = vmatprep.mubr.bf16.mxu0 0
  %3103 = vmatmul.mubr.bf16.gmra.mrb[0].mxu0 %v2967
  %v3104 = vpop.f32.mrb[0].mxu0
  %v3105 = vadd.f32 0.0, %v3104
  %v3106 = vpop.f32.mrb[0].mxu0
  %v3107 = vpop.f32.mrb[0].mxu0
  %v3108 = vadd.f32 0.0, %v3107
  %v3109 = vpop.f32.mrb[0].mxu0
  %3110 = vmatprep.mubr.bf16.mxu0 0
  %3111 = vmatmul.mubr.bf16.gmra.mrb[0].mxu0 %v2970
  %v3112 = vpop.f32.mrb[0].mxu0
  %v3113 = vadd.f32 0.0, %v3112
  %v3114 = vpop.f32.mrb[0].mxu0
  %v3115 = vpop.f32.mrb[0].mxu0
  %v3116 = vadd.f32 0.0, %v3115
  %v3117 = vpop.f32.mrb[0].mxu0
  %3118 = vmatprep.mubr.bf16.mxu0 0
  %3119 = vmatmul.mubr.bf16.gmra.mrb[0].mxu0 %v2973
  %v3120 = vpop.f32.mrb[0].mxu0
  %v3121 = vadd.f32 0.0, %v3120
  %v3122 = vpop.f32.mrb[0].mxu0
  %v3123 = vpop.f32.mrb[0].mxu0
  %v3124 = vadd.f32 0.0, %v3123
  %v3125 = vpop.f32.mrb[0].mxu0
  %3126 = vmatprep.mubr.bf16.mxu0 0
  %3127 = vmatmul.mubr.bf16.gmra.mrb[0].mxu0 %v2976
  %v3128 = vpop.f32.mrb[0].mxu0
  %v3129 = vadd.f32 0.0, %v3128
  %v3130 = vpop.f32.mrb[0].mxu0
  %v3131 = vpop.f32.mrb[0].mxu0
  %v3132 = vadd.f32 0.0, %v3131
  %v3133 = vpop.f32.mrb[0].mxu0
  %3134 = vmatprep.mubr.bf16.mxu0 0
  %3135 = vmatmul.mubr.bf16.gmra.mrb[0].mxu0 %v2979
  %v3136 = vpop.f32.mrb[0].mxu0
  %v3137 = vadd.f32 0.0, %v3136
  %v3138 = vpop.f32.mrb[0].mxu0
  %v3139 = vpop.f32.mrb[0].mxu0
  %v3140 = vadd.f32 0.0, %v3139
  %v3141 = vpop.f32.mrb[0].mxu0
  %3142 = vmatprep.mubr.bf16.mxu0 0
  %3143 = vmatmul.mubr.bf16.gmra.mrb[0].mxu0 %v2982
  %v3144 = vpop.f32.mrb[0].mxu0
  %v3145 = vadd.f32 0.0, %v3144
  %v3146 = vpop.f32.mrb[0].mxu0
  %v3147 = vpop.f32.mrb[0].mxu0
  %v3148 = vadd.f32 0.0, %v3147
  %v3149 = vpop.f32.mrb[0].mxu0
  %3150 = vmatprep.mubr.bf16.mxu0 0
  %3151 = vmatmul.mubr.bf16.gmra.mrb[0].mxu0 %v2985
  %v3152 = vpop.f32.mrb[0].mxu0
  %v3153 = vadd.f32 0.0, %v3152
  %v3154 = vpop.f32.mrb[0].mxu0
  %v3155 = vpop.f32.mrb[0].mxu0
  %v3156 = vadd.f32 0.0, %v3155
  %v3157 = vpop.f32.mrb[0].mxu0
  %3158 = vmatprep.mubr.bf16.mxu0 0
  %3159 = vmatmul.mubr.bf16.gmra.mrb[0].mxu0 %v2988
  %v3160 = vpop.f32.mrb[0].mxu0
  %v3161 = vadd.f32 0.0, %v3160
  %v3162 = vpop.f32.mrb[0].mxu0
  %v3163 = vpop.f32.mrb[0].mxu0
  %v3164 = vadd.f32 0.0, %v3163
  %v3165 = vpop.f32.mrb[0].mxu0
  %3166 = vmatprep.mubr.bf16.mxu0 0
  %3167 = vmatmul.mubr.bf16.gmra.mrb[0].mxu0 %v2991
  %v3168 = vpop.f32.mrb[0].mxu0
  %v3169 = vadd.f32 0.0, %v3168
  %v3170 = vpop.f32.mrb[0].mxu0
  %v3171 = vpop.f32.mrb[0].mxu0
  %v3172 = vadd.f32 0.0, %v3171
  %v3173 = vpop.f32.mrb[0].mxu0
  %3174 = vmatprep.mubr.bf16.mxu0 0
  %3175 = vmatmul.mubr.bf16.gmra.mrb[0].mxu0 %v2994
  %v3176 = vpop.f32.mrb[0].mxu0
  %v3177 = vadd.f32 0.0, %v3176
  %v3178 = vpop.f32.mrb[0].mxu0
  %v3179 = vpop.f32.mrb[0].mxu0
  %v3180 = vadd.f32 0.0, %v3179
  %v3181 = vpop.f32.mrb[0].mxu0
  %3182 = vmatprep.mubr.bf16.mxu0 0
  %3183 = vmatmul.mubr.bf16.gmra.mrb[0].mxu0 %v2997
  %v3184 = vpop.f32.mrb[0].mxu0
  %v3185 = vadd.f32 0.0, %v3184
  %v3186 = vpop.f32.mrb[0].mxu0
  %v3187 = vpop.f32.mrb[0].mxu0
  %v3188 = vadd.f32 0.0, %v3187
  %v3189 = vpop.f32.mrb[0].mxu0
  %3190 = vmatprep.mubr.bf16.mxu0 0
  %3191 = vmatmul.mubr.bf16.gmra.mrb[0].mxu0 %v3000
  %v3192 = vpop.f32.mrb[0].mxu0
  %v3193 = vadd.f32 0.0, %v3192
  %v3194 = vpop.f32.mrb[0].mxu0
  %v3195 = vpop.f32.mrb[0].mxu0
  %v3196 = vadd.f32 0.0, %v3195
  %v3197 = vpop.f32.mrb[0].mxu0
  %3198 = vmatprep.mubr.bf16.mxu0 0
  %3199 = vmatmul.mubr.bf16.gmra.mrb[0].mxu0 %v3003
  %v3200 = vpop.f32.mrb[0].mxu0
  %v3201 = vadd.f32 0.0, %v3200
  %v3202 = vpop.f32.mrb[0].mxu0
  %v3203 = vpop.f32.mrb[0].mxu0
  %v3204 = vadd.f32 0.0, %v3203
  %v3205 = vpop.f32.mrb[0].mxu0
  %3206 = vmatprep.mubr.bf16.mxu0 0
  %3207 = vmatmul.mubr.bf16.gmra.mrb[0].mxu0 %v3006
  %v3208 = vpop.f32.mrb[0].mxu0
  %v3209 = vadd.f32 0.0, %v3208
  %v3210 = vpop.f32.mrb[0].mxu0
  %v3211 = vpop.f32.mrb[0].mxu0
  %v3212 = vadd.f32 0.0, %v3211
  %v3213 = vpop.f32.mrb[0].mxu0
  %3214 = vmatprep.mubr.bf16.mxu0 0
  %3215 = vmatmul.mubr.bf16.gmra.mrb[0].mxu0 %v3009
  %v3216 = vpop.f32.mrb[0].mxu0
  %v3217 = vadd.f32 0.0, %v3216
  %v3218 = vpop.f32.mrb[0].mxu0
  %v3219 = vpop.f32.mrb[0].mxu0
  %v3220 = vadd.f32 0.0, %v3219
  %v3221 = vpop.f32.mrb[0].mxu0
  %3222 = vmatprep.mubr.bf16.mxu0 0
  %3223 = vmatmul.mubr.bf16.gmra.mrb[0].mxu0 %v3012
  %v3224 = vpop.f32.mrb[0].mxu0
  %v3225 = vadd.f32 0.0, %v3224
  %v3226 = vpop.f32.mrb[0].mxu0
  %v3227 = vpop.f32.mrb[0].mxu0
  %v3228 = vadd.f32 0.0, %v3227
  %v3229 = vpop.f32.mrb[0].mxu0
  %3230 = vmatprep.mubr.bf16.mxu0 0
  %3231 = vmatmul.mubr.bf16.gmra.mrb[0].mxu0 %v3015
  %v3232 = vpop.f32.mrb[0].mxu0
  %v3233 = vadd.f32 0.0, %v3232
  %v3234 = vpop.f32.mrb[0].mxu0
  %v3235 = vpop.f32.mrb[0].mxu0
  %v3236 = vadd.f32 0.0, %v3235
  %v3237 = vpop.f32.mrb[0].mxu0
  %3238 = vmatprep.mubr.bf16.mxu0 0
  %3239 = vmatmul.mubr.bf16.gmra.mrb[0].mxu0 %v3018
  %v3240 = vpop.f32.mrb[0].mxu0
  %v3241 = vadd.f32 0.0, %v3240
  %v3242 = vpop.f32.mrb[0].mxu0
  %v3243 = vpop.f32.mrb[0].mxu0
  %v3244 = vadd.f32 0.0, %v3243
  %v3245 = vpop.f32.mrb[0].mxu0
  %3246 = vmatprep.mubr.bf16.mxu0 0
  %3247 = vmatmul.mubr.bf16.gmra.mrb[0].mxu0 %v3021
  %v3248 = vpop.f32.mrb[0].mxu0
  %v3249 = vadd.f32 0.0, %v3248
  %v3250 = vpop.f32.mrb[0].mxu0
  %v3251 = vpop.f32.mrb[0].mxu0
  %v3252 = vadd.f32 0.0, %v3251
  %v3253 = vpop.f32.mrb[0].mxu0
  %3254 = vmatprep.mubr.bf16.mxu0 0
  %3255 = vmatmul.mubr.bf16.gmra.mrb[0].mxu0 %v3024
  %v3256 = vpop.f32.mrb[0].mxu0
  %v3257 = vadd.f32 0.0, %v3256
  %v3258 = vpop.f32.mrb[0].mxu0
  %v3259 = vpop.f32.mrb[0].mxu0
  %v3260 = vadd.f32 0.0, %v3259
  %v3261 = vpop.f32.mrb[0].mxu0
  %3262 = vmatprep.mubr.bf16.mxu0 0
  %3263 = vmatmul.mubr.bf16.gmra.mrb[0].mxu0 %v3027
  %v3264 = vpop.f32.mrb[0].mxu0
  %v3265 = vadd.f32 0.0, %v3264
  %v3266 = vpop.f32.mrb[0].mxu0
  %v3267 = vpop.f32.mrb[0].mxu0
  %v3268 = vadd.f32 0.0, %v3267
  %v3269 = vpop.f32.mrb[0].mxu0
  %3270 = vmatprep.mubr.bf16.mxu0 0
  %3271 = vmatmul.mubr.bf16.gmra.mrb[0].mxu0 %v3030
  %v3272 = vpop.f32.mrb[0].mxu0
  %v3273 = vadd.f32 0.0, %v3272
  %v3274 = vpop.f32.mrb[0].mxu0
  %v3275 = vpop.f32.mrb[0].mxu0
  %v3276 = vadd.f32 0.0, %v3275
  %v3277 = vpop.f32.mrb[0].mxu0
  %3278 = vmatprep.mubr.bf16.mxu0 0
  %3279 = vmatmul.mubr.bf16.gmra.mrb[0].mxu0 %v3033
  %v3280 = vpop.f32.mrb[0].mxu0
  %v3281 = vadd.f32 0.0, %v3280
  %v3282 = vpop.f32.mrb[0].mxu0
  %v3283 = vpop.f32.mrb[0].mxu0
  %v3284 = vadd.f32 0.0, %v3283
  %v3285 = vpop.f32.mrb[0].mxu0
  %3286 = vmatprep.mubr.bf16.mxu0 0
  %3287 = vmatmul.mubr.bf16.gmra.mrb[0].mxu0 %v3036
  %v3288 = vpop.f32.mrb[0].mxu0
  %v3289 = vadd.f32 0.0, %v3288
  %v3290 = vpop.f32.mrb[0].mxu0
  %v3291 = vpop.f32.mrb[0].mxu0
  %v3292 = vadd.f32 0.0, %v3291
  %v3293 = vpop.f32.mrb[0].mxu0
  %3294 = vmatprep.mubr.bf16.mxu0 0
  %3295 = vmatmul.mubr.bf16.gmra.mrb[0].mxu0 %v3039
  %v3296 = vpop.f32.mrb[0].mxu0
  %v3297 = vadd.f32 0.0, %v3296
  %v3298 = vpop.f32.mrb[0].mxu0
  %v3299 = vpop.f32.mrb[0].mxu0
  %v3300 = vadd.f32 0.0, %v3299
  %v3301 = vpop.f32.mrb[0].mxu0
  %3302 = vmatprep.mubr.bf16.mxu0 0
  %3303 = vmatmul.mubr.bf16.gmra.mrb[0].mxu0 %v3042
  %v3304 = vpop.f32.mrb[0].mxu0
  %v3305 = vadd.f32 0.0, %v3304
  %v3306 = vpop.f32.mrb[0].mxu0
  %v3307 = vpop.f32.mrb[0].mxu0
  %v3308 = vadd.f32 0.0, %v3307
  %v3309 = vpop.f32.mrb[0].mxu0
  %3310 = vmatprep.mubr.bf16.mxu0 0
  %3311 = vmatmul.mubr.bf16.gmra.mrb[0].mxu0 %v3045
  %v3312 = vpop.f32.mrb[0].mxu0
  %v3313 = vadd.f32 0.0, %v3312
  %v3314 = vpop.f32.mrb[0].mxu0
  %v3315 = vpop.f32.mrb[0].mxu0
  %v3316 = vadd.f32 0.0, %v3315
  %v3317 = vpop.f32.mrb[0].mxu0
  %3318 = vmatprep.mubr.bf16.mxu0 0
  %3319 = vmatmul.mubr.bf16.gmra.mrb[0].mxu0 %v3048
  %v3320 = vpop.f32.mrb[0].mxu0
  %v3321 = vadd.f32 0.0, %v3320
  %v3322 = vpop.f32.mrb[0].mxu0
  %v3323 = vpop.f32.mrb[0].mxu0
  %v3324 = vadd.f32 0.0, %v3323
  %v3325 = vpop.f32.mrb[0].mxu0
  %3326 = vmatprep.mubr.bf16.mxu0 0
  %3327 = vmatmul.mubr.bf16.gmra.mrb[0].mxu0 %v3051
  %v3328 = vpop.f32.mrb[0].mxu0
  %v3329 = vadd.f32 0.0, %v3328
  %v3330 = vpop.f32.mrb[0].mxu0
  %v3331 = vpop.f32.mrb[0].mxu0
  %v3332 = vadd.f32 0.0, %v3331
  %v3333 = vpop.f32.mrb[0].mxu0
  %3334 = vmatprep.mubr.bf16.mxu0 0
  %3335 = vmatmul.mubr.bf16.gmra.mrb[0].mxu0 %v3054
  %v3336 = vpop.f32.mrb[0].mxu0
  %v3337 = vadd.f32 0.0, %v3336
  %v3338 = vpop.f32.mrb[0].mxu0
  %v3339 = vpop.f32.mrb[0].mxu0
  %v3340 = vadd.f32 0.0, %v3339
  %v3341 = vpop.f32.mrb[0].mxu0
  %3342 = vmatprep.mubr.bf16.mxu0 0
  %3343 = vmatmul.mubr.bf16.gmra.mrb[0].mxu0 %v3057
  %v3344 = vpop.f32.mrb[0].mxu0
  %v3345 = vadd.f32 0.0, %v3344
  %v3346 = vpop.f32.mrb[0].mxu0
  %v3347 = vpop.f32.mrb[0].mxu0
  %v3348 = vadd.f32 0.0, %v3347
  %v3349 = vpop.f32.mrb[0].mxu0
  %3350 = vdwg.mxu0
  %v3351 = vadd.f32 %v2803, %v3097
  %v3352 = vadd.f32 %v2804, %v3100
  %v3353 = vadd.f32 %v2805, %v3105
  %v3354 = vadd.f32 %v2806, %v3108
  %v3355 = vadd.f32 %v2807, %v3113
  %v3356 = vadd.f32 %v2808, %v3116
  %v3357 = vadd.f32 %v2809, %v3121
  %v3358 = vadd.f32 %v2810, %v3124
  %v3359 = vadd.f32 %v2811, %v3129
  %v3360 = vadd.f32 %v2812, %v3132
  %v3361 = vadd.f32 %v2813, %v3137
  %v3362 = vadd.f32 %v2814, %v3140
  %v3363 = vadd.f32 %v2815, %v3145
  %v3364 = vadd.f32 %v2816, %v3148
  %v3365 = vadd.f32 %v2817, %v3153
  %v3366 = vadd.f32 %v2818, %v3156
  %v3367 = vadd.f32 %v2819, %v3161
  %v3368 = vadd.f32 %v2820, %v3164
  %v3369 = vadd.f32 %v2821, %v3169
  %v3370 = vadd.f32 %v2822, %v3172
  %v3371 = vadd.f32 %v2823, %v3177
  %v3372 = vadd.f32 %v2824, %v3180
  %v3373 = vadd.f32 %v2825, %v3185
  %v3374 = vadd.f32 %v2826, %v3188
  %v3375 = vadd.f32 %v2827, %v3193
  %v3376 = vadd.f32 %v2828, %v3196
  %v3377 = vadd.f32 %v2829, %v3201
  %v3378 = vadd.f32 %v2830, %v3204
  %v3379 = vadd.f32 %v2831, %v3209
  %v3380 = vadd.f32 %v2832, %v3212
  %v3381 = vadd.f32 %v2833, %v3217
  %v3382 = vadd.f32 %v2834, %v3220
  %v3383 = vadd.f32 %v2835, %v3225
  %v3384 = vadd.f32 %v2836, %v3228
  %v3385 = vadd.f32 %v2837, %v3233
  %v3386 = vadd.f32 %v2838, %v3236
  %v3387 = vadd.f32 %v2839, %v3241
  %v3388 = vadd.f32 %v2840, %v3244
  %v3389 = vadd.f32 %v2841, %v3249
  %v3390 = vadd.f32 %v2842, %v3252
  %v3391 = vadd.f32 %v2843, %v3257
  %v3392 = vadd.f32 %v2844, %v3260
  %v3393 = vadd.f32 %v2845, %v3265
  %v3394 = vadd.f32 %v2846, %v3268
  %v3395 = vadd.f32 %v2847, %v3273
  %v3396 = vadd.f32 %v2848, %v3276
  %v3397 = vadd.f32 %v2849, %v3281
  %v3398 = vadd.f32 %v2850, %v3284
  %v3399 = vadd.f32 %v2851, %v3289
  %v3400 = vadd.f32 %v2852, %v3292
  %v3401 = vadd.f32 %v2853, %v3297
  %v3402 = vadd.f32 %v2854, %v3300
  %v3403 = vadd.f32 %v2855, %v3305
  %v3404 = vadd.f32 %v2856, %v3308
  %v3405 = vadd.f32 %v2857, %v3313
  %v3406 = vadd.f32 %v2858, %v3316
  %v3407 = vadd.f32 %v2859, %v3321
  %v3408 = vadd.f32 %v2860, %v3324
  %v3409 = vadd.f32 %v2861, %v3329
  %v3410 = vadd.f32 %v2862, %v3332
  %v3411 = vadd.f32 %v2863, %v3337
  %v3412 = vadd.f32 %v2864, %v3340
  %v3413 = vadd.f32 %v2865, %v3345
  %v3414 = vadd.f32 %v2866, %v3348
  %s3415 = scalar_lea.vmem [#allocation2], 48
  %v3416 = vld [vmem:[%s3415] sm:$0xff]
  %v3417 = vld [vmem:[%s3415 + $0x8] sm:$0xff]
  %v3418 = vld [vmem:[%s3415 + $0x18] sm:$0xff]
  %v3419 = vld [vmem:[%s3415 + $0x20] sm:$0xff]
  %v3420 = vld [vmem:[%s3415 + $0x30] sm:$0xff]
  %v3421 = vld [vmem:[%s3415 + $0x38] sm:$0xff]
  %v3422 = vld [vmem:[%s3415 + $0x48] sm:$0xff]
  %v3423 = vld [vmem:[%s3415 + $0x50] sm:$0xff]
  %v3424 = vld [vmem:[%s3415 + $0x60] sm:$0xff]
  %v3425 = vld [vmem:[%s3415 + $0x68] sm:$0xff]
  %v3426 = vld [vmem:[%s3415 + $0x78] sm:$0xff]
  %v3427 = vld [vmem:[%s3415 + $0x80] sm:$0xff]
  %v3428 = vld [vmem:[%s3415 + $0x90] sm:$0xff]
  %v3429 = vld [vmem:[%s3415 + $0x98] sm:$0xff]
  %v3430 = vld [vmem:[%s3415 + $0xa8] sm:$0xff]
  %v3431 = vld [vmem:[%s3415 + $0xb0] sm:$0xff]
  %v3432 = vld [vmem:[%s3415 + $0xc0] sm:$0xff]
  %v3433 = vld [vmem:[%s3415 + $0xc8] sm:$0xff]
  %v3434 = vld [vmem:[%s3415 + $0xd8] sm:$0xff]
  %v3435 = vld [vmem:[%s3415 + $0xe0] sm:$0xff]
  %v3436 = vld [vmem:[%s3415 + $0xf0] sm:$0xff]
  %v3437 = vld [vmem:[%s3415 + $0xf8] sm:$0xff]
  %v3438 = vld [vmem:[%s3415 + $0x108] sm:$0xff]
  %v3439 = vld [vmem:[%s3415 + $0x110] sm:$0xff]
  %v3440 = vld [vmem:[%s3415 + $0x120] sm:$0xff]
  %v3441 = vld [vmem:[%s3415 + $0x128] sm:$0xff]
  %v3442 = vld [vmem:[%s3415 + $0x138] sm:$0xff]
  %v3443 = vld [vmem:[%s3415 + $0x140] sm:$0xff]
  %v3444 = vld [vmem:[%s3415 + $0x150] sm:$0xff]
  %v3445 = vld [vmem:[%s3415 + $0x158] sm:$0xff]
  %v3446 = vld [vmem:[%s3415 + $0x168] sm:$0xff]
  %v3447 = vld [vmem:[%s3415 + $0x170] sm:$0xff]
  %v3448 = vld [vmem:[%s3415 + $0x1b0] sm:$0xff]
  %v3449 = vld [vmem:[%s3415 + $0x1b8] sm:$0xff]
  %v3450 = vld [vmem:[%s3415 + $0x1c8] sm:$0xff]
  %v3451 = vld [vmem:[%s3415 + $0x1d0] sm:$0xff]
  %v3452 = vld [vmem:[%s3415 + $0x1e0] sm:$0xff]
  %v3453 = vld [vmem:[%s3415 + $0x1e8] sm:$0xff]
  %v3454 = vld [vmem:[%s3415 + $0x1f8] sm:$0xff]
  %v3455 = vld [vmem:[%s3415 + $0x200] sm:$0xff]
  %v3456 = vld [vmem:[%s3415 + $0x210] sm:$0xff]
  %v3457 = vld [vmem:[%s3415 + $0x218] sm:$0xff]
  %v3458 = vld [vmem:[%s3415 + $0x228] sm:$0xff]
  %v3459 = vld [vmem:[%s3415 + $0x230] sm:$0xff]
  %v3460 = vld [vmem:[%s3415 + $0x240] sm:$0xff]
  %v3461 = vld [vmem:[%s3415 + $0x248] sm:$0xff]
  %v3462 = vld [vmem:[%s3415 + $0x258] sm:$0xff]
  %v3463 = vld [vmem:[%s3415 + $0x260] sm:$0xff]
  %v3464 = vld [vmem:[%s3415 + $0x270] sm:$0xff]
  %v3465 = vld [vmem:[%s3415 + $0x278] sm:$0xff]
  %v3466 = vld [vmem:[%s3415 + $0x288] sm:$0xff]
  %v3467 = vld [vmem:[%s3415 + $0x290] sm:$0xff]
  %v3468 = vld [vmem:[%s3415 + $0x2a0] sm:$0xff]
  %v3469 = vld [vmem:[%s3415 + $0x2a8] sm:$0xff]
  %v3470 = vld [vmem:[%s3415 + $0x2b8] sm:$0xff]
  %v3471 = vld [vmem:[%s3415 + $0x2c0] sm:$0xff]
  %v3472 = vld [vmem:[%s3415 + $0x2d0] sm:$0xff]
  %v3473 = vld [vmem:[%s3415 + $0x2d8] sm:$0xff]
  %v3474 = vld [vmem:[%s3415 + $0x2e8] sm:$0xff]
  %v3475 = vld [vmem:[%s3415 + $0x2f0] sm:$0xff]
  %v3476 = vld [vmem:[%s3415 + $0x300] sm:$0xff]
  %v3477 = vld [vmem:[%s3415 + $0x308] sm:$0xff]
  %v3478 = vld [vmem:[%s3415 + $0x318] sm:$0xff]
  %v3479 = vld [vmem:[%s3415 + $0x320] sm:$0xff]
  %v3480 = vpack.c.bf16 %v3417, %v3416
  %v3481 = vpack.c.bf16 %v3419, %v3418
  %v3482 = vpack.c.bf16 %v3421, %v3420
  %v3483 = vpack.c.bf16 %v3423, %v3422
  %v3484 = vpack.c.bf16 %v3425, %v3424
  %v3485 = vpack.c.bf16 %v3427, %v3426
  %v3486 = vpack.c.bf16 %v3429, %v3428
  %v3487 = vpack.c.bf16 %v3431, %v3430
  %v3488 = vpack.c.bf16 %v3433, %v3432
  %v3489 = vpack.c.bf16 %v3435, %v3434
  %v3490 = vpack.c.bf16 %v3437, %v3436
  %v3491 = vpack.c.bf16 %v3439, %v3438
  %v3492 = vpack.c.bf16 %v3441, %v3440
  %v3493 = vpack.c.bf16 %v3443, %v3442
  %v3494 = vpack.c.bf16 %v3445, %v3444
  %v3495 = vpack.c.bf16 %v3447, %v3446
  %v3496 = vpack.c.bf16 %v3449, %v3448
  %v3497 = vpack.c.bf16 %v3451, %v3450
  %v3498 = vpack.c.bf16 %v3453, %v3452
  %v3499 = vpack.c.bf16 %v3455, %v3454
  %v3500 = vpack.c.bf16 %v3457, %v3456
  %v3501 = vpack.c.bf16 %v3459, %v3458
  %v3502 = vpack.c.bf16 %v3461, %v3460
  %v3503 = vpack.c.bf16 %v3463, %v3462
  %v3504 = vpack.c.bf16 %v3465, %v3464
  %v3505 = vpack.c.bf16 %v3467, %v3466
  %v3506 = vpack.c.bf16 %v3469, %v3468
  %v3507 = vpack.c.bf16 %v3471, %v3470
  %v3508 = vpack.c.bf16 %v3473, %v3472
  %v3509 = vpack.c.bf16 %v3475, %v3474
  %v3510 = vpack.c.bf16 %v3477, %v3476
  %v3511 = vpack.c.bf16 %v3479, %v3478
  %v3513 = vsel %vm97, %v3480, 0
  %v3516 = vsel %vm97, %v3481, 0
  %v3519 = vsel %vm97, %v3482, 0
  %v3522 = vsel %vm97, %v3483, 0
  %v3525 = vsel %vm97, %v3484, 0
  %v3528 = vsel %vm97, %v3485, 0
  %v3531 = vsel %vm97, %v3486, 0
  %v3534 = vsel %vm97, %v3487, 0
  %v3537 = vsel %vm97, %v3488, 0
  %v3540 = vsel %vm97, %v3489, 0
  %v3543 = vsel %vm97, %v3490, 0
  %v3546 = vsel %vm97, %v3491, 0
  %v3549 = vsel %vm97, %v3492, 0
  %v3552 = vsel %vm97, %v3493, 0
  %v3555 = vsel %vm97, %v3494, 0
  %v3558 = vsel %vm97, %v3495, 0
  %v3561 = vsel %vm97, %v3496, 0
  %v3564 = vsel %vm97, %v3497, 0
  %v3567 = vsel %vm97, %v3498, 0
  %v3570 = vsel %vm97, %v3499, 0
  %v3573 = vsel %vm97, %v3500, 0
  %v3576 = vsel %vm97, %v3501, 0
  %v3579 = vsel %vm97, %v3502, 0
  %v3582 = vsel %vm97, %v3503, 0
  %v3585 = vsel %vm97, %v3504, 0
  %v3588 = vsel %vm97, %v3505, 0
  %v3591 = vsel %vm97, %v3506, 0
  %v3594 = vsel %vm97, %v3507, 0
  %v3597 = vsel %vm97, %v3508, 0
  %v3600 = vsel %vm97, %v3509, 0
  %v3603 = vsel %vm97, %v3510, 0
  %v3606 = vsel %vm97, %v3511, 0
  %v3609 = vsel %vm542, %v248, 0
  %3611 = vmatprep.subr.bf16.mxu0 0
  %3612 = vmatpush1.bf16.msra.mxu0 %v3609
  %3613 = vmatprep.subr.bf16.mxu0 0
  %3614 = vmatpush1.bf16.msra.mxu0 0
  %3615 = vmatprep.subr.bf16.mxu0 0
  %3616 = vmatpush1.bf16.msra.mxu0 0
  %3617 = vmatprep.subr.bf16.mxu0 0
  %3618 = vmatpush1.bf16.msra.mxu0 0
  %3619 = vmatprep.subr.bf16.mxu0 0
  %3620 = vmatpush1.bf16.msra.mxu0 0
  %3621 = vmatprep.subr.bf16.mxu0 0
  %3622 = vmatpush1.bf16.msra.mxu0 0
  %3623 = vmatprep.subr.bf16.mxu0 0
  %3624 = vmatpush1.bf16.msra.mxu0 0
  %3625 = vmatprep.subr.bf16.mxu0 0
  %3626 = vmatpush1.bf16.msra.mxu0 0
  %3627 = vmatprep.subr.bf16.mxu0 0
  %3628 = vmatpush1.bf16.msra.mxu0 0
  %3629 = vmatprep.subr.bf16.mxu0 0
  %3630 = vmatpush1.bf16.msra.mxu0 0
  %3631 = vmatprep.subr.bf16.mxu0 0
  %3632 = vmatpush1.bf16.msra.mxu0 0
  %3633 = vmatprep.subr.bf16.mxu0 0
  %3634 = vmatpush1.bf16.msra.mxu0 0
  %3635 = vmatprep.subr.bf16.mxu0 0
  %3636 = vmatpush1.bf16.msra.mxu0 0
  %3637 = vmatprep.subr.bf16.mxu0 0
  %3638 = vmatpush1.bf16.msra.mxu0 0
  %3639 = vmatprep.subr.bf16.mxu0 0
  %3640 = vmatpush1.bf16.msra.mxu0 0
  %3641 = vmatprep.subr.bf16.mxu0 0
  %3642 = vmatpush1.bf16.msra.mxu0 0
  %3643 = vmatprep.mubr.bf16.mxu0 0
  %3644 = vmatmul.mubr.bf16.gmra.mrb[0].mxu0 %v3513
  %v3645 = vpop.f32.mrb[0].mxu0
  %v3646 = vadd.f32 0.0, %v3645
  %v3647 = vpop.f32.mrb[0].mxu0
  %v3648 = vpop.f32.mrb[0].mxu0
  %v3649 = vadd.f32 0.0, %v3648
  %v3650 = vpop.f32.mrb[0].mxu0
  %3651 = vmatprep.mubr.bf16.mxu0 0
  %3652 = vmatmul.mubr.bf16.gmra.mrb[0].mxu0 %v3516
  %v3653 = vpop.f32.mrb[0].mxu0
  %v3654 = vadd.f32 0.0, %v3653
  %v3655 = vpop.f32.mrb[0].mxu0
  %v3656 = vpop.f32.mrb[0].mxu0
  %v3657 = vadd.f32 0.0, %v3656
  %v3658 = vpop.f32.mrb[0].mxu0
  %3659 = vmatprep.mubr.bf16.mxu0 0
  %3660 = vmatmul.mubr.bf16.gmra.mrb[0].mxu0 %v3519
  %v3661 = vpop.f32.mrb[0].mxu0
  %v3662 = vadd.f32 0.0, %v3661
  %v3663 = vpop.f32.mrb[0].mxu0
  %v3664 = vpop.f32.mrb[0].mxu0
  %v3665 = vadd.f32 0.0, %v3664
  %v3666 = vpop.f32.mrb[0].mxu0
  %3667 = vmatprep.mubr.bf16.mxu0 0
  %3668 = vmatmul.mubr.bf16.gmra.mrb[0].mxu0 %v3522
  %v3669 = vpop.f32.mrb[0].mxu0
  %v3670 = vadd.f32 0.0, %v3669
  %v3671 = vpop.f32.mrb[0].mxu0
  %v3672 = vpop.f32.mrb[0].mxu0
  %v3673 = vadd.f32 0.0, %v3672
  %v3674 = vpop.f32.mrb[0].mxu0
  %3675 = vmatprep.mubr.bf16.mxu0 0
  %3676 = vmatmul.mubr.bf16.gmra.mrb[0].mxu0 %v3525
  %v3677 = vpop.f32.mrb[0].mxu0
  %v3678 = vadd.f32 0.0, %v3677
  %v3679 = vpop.f32.mrb[0].mxu0
  %v3680 = vpop.f32.mrb[0].mxu0
  %v3681 = vadd.f32 0.0, %v3680
  %v3682 = vpop.f32.mrb[0].mxu0
  %3683 = vmatprep.mubr.bf16.mxu0 0
  %3684 = vmatmul.mubr.bf16.gmra.mrb[0].mxu0 %v3528
  %v3685 = vpop.f32.mrb[0].mxu0
  %v3686 = vadd.f32 0.0, %v3685
  %v3687 = vpop.f32.mrb[0].mxu0
  %v3688 = vpop.f32.mrb[0].mxu0
  %v3689 = vadd.f32 0.0, %v3688
  %v3690 = vpop.f32.mrb[0].mxu0
  %3691 = vmatprep.mubr.bf16.mxu0 0
  %3692 = vmatmul.mubr.bf16.gmra.mrb[0].mxu0 %v3531
  %v3693 = vpop.f32.mrb[0].mxu0
  %v3694 = vadd.f32 0.0, %v3693
  %v3695 = vpop.f32.mrb[0].mxu0
  %v3696 = vpop.f32.mrb[0].mxu0
  %v3697 = vadd.f32 0.0, %v3696
  %v3698 = vpop.f32.mrb[0].mxu0
  %3699 = vmatprep.mubr.bf16.mxu0 0
  %3700 = vmatmul.mubr.bf16.gmra.mrb[0].mxu0 %v3534
  %v3701 = vpop.f32.mrb[0].mxu0
  %v3702 = vadd.f32 0.0, %v3701
  %v3703 = vpop.f32.mrb[0].mxu0
  %v3704 = vpop.f32.mrb[0].mxu0
  %v3705 = vadd.f32 0.0, %v3704
  %v3706 = vpop.f32.mrb[0].mxu0
  %3707 = vmatprep.mubr.bf16.mxu0 0
  %3708 = vmatmul.mubr.bf16.gmra.mrb[0].mxu0 %v3537
  %v3709 = vpop.f32.mrb[0].mxu0
  %v3710 = vadd.f32 0.0, %v3709
  %v3711 = vpop.f32.mrb[0].mxu0
  %v3712 = vpop.f32.mrb[0].mxu0
  %v3713 = vadd.f32 0.0, %v3712
  %v3714 = vpop.f32.mrb[0].mxu0
  %3715 = vmatprep.mubr.bf16.mxu0 0
  %3716 = vmatmul.mubr.bf16.gmra.mrb[0].mxu0 %v3540
  %v3717 = vpop.f32.mrb[0].mxu0
  %v3718 = vadd.f32 0.0, %v3717
  %v3719 = vpop.f32.mrb[0].mxu0
  %v3720 = vpop.f32.mrb[0].mxu0
  %v3721 = vadd.f32 0.0, %v3720
  %v3722 = vpop.f32.mrb[0].mxu0
  %3723 = vmatprep.mubr.bf16.mxu0 0
  %3724 = vmatmul.mubr.bf16.gmra.mrb[0].mxu0 %v3543
  %v3725 = vpop.f32.mrb[0].mxu0
  %v3726 = vadd.f32 0.0, %v3725
  %v3727 = vpop.f32.mrb[0].mxu0
  %v3728 = vpop.f32.mrb[0].mxu0
  %v3729 = vadd.f32 0.0, %v3728
  %v3730 = vpop.f32.mrb[0].mxu0
  %3731 = vmatprep.mubr.bf16.mxu0 0
  %3732 = vmatmul.mubr.bf16.gmra.mrb[0].mxu0 %v3546
  %v3733 = vpop.f32.mrb[0].mxu0
  %v3734 = vadd.f32 0.0, %v3733
  %v3735 = vpop.f32.mrb[0].mxu0
  %v3736 = vpop.f32.mrb[0].mxu0
  %v3737 = vadd.f32 0.0, %v3736
  %v3738 = vpop.f32.mrb[0].mxu0
  %3739 = vmatprep.mubr.bf16.mxu0 0
  %3740 = vmatmul.mubr.bf16.gmra.mrb[0].mxu0 %v3549
  %v3741 = vpop.f32.mrb[0].mxu0
  %v3742 = vadd.f32 0.0, %v3741
  %v3743 = vpop.f32.mrb[0].mxu0
  %v3744 = vpop.f32.mrb[0].mxu0
  %v3745 = vadd.f32 0.0, %v3744
  %v3746 = vpop.f32.mrb[0].mxu0
  %3747 = vmatprep.mubr.bf16.mxu0 0
  %3748 = vmatmul.mubr.bf16.gmra.mrb[0].mxu0 %v3552
  %v3749 = vpop.f32.mrb[0].mxu0
  %v3750 = vadd.f32 0.0, %v3749
  %v3751 = vpop.f32.mrb[0].mxu0
  %v3752 = vpop.f32.mrb[0].mxu0
  %v3753 = vadd.f32 0.0, %v3752
  %v3754 = vpop.f32.mrb[0].mxu0
  %3755 = vmatprep.mubr.bf16.mxu0 0
  %3756 = vmatmul.mubr.bf16.gmra.mrb[0].mxu0 %v3555
  %v3757 = vpop.f32.mrb[0].mxu0
  %v3758 = vadd.f32 0.0, %v3757
  %v3759 = vpop.f32.mrb[0].mxu0
  %v3760 = vpop.f32.mrb[0].mxu0
  %v3761 = vadd.f32 0.0, %v3760
  %v3762 = vpop.f32.mrb[0].mxu0
  %3763 = vmatprep.mubr.bf16.mxu0 0
  %3764 = vmatmul.mubr.bf16.gmra.mrb[0].mxu0 %v3558
  %v3765 = vpop.f32.mrb[0].mxu0
  %v3766 = vadd.f32 0.0, %v3765
  %v3767 = vpop.f32.mrb[0].mxu0
  %v3768 = vpop.f32.mrb[0].mxu0
  %v3769 = vadd.f32 0.0, %v3768
  %v3770 = vpop.f32.mrb[0].mxu0
  %3771 = vmatprep.mubr.bf16.mxu0 0
  %3772 = vmatmul.mubr.bf16.gmra.mrb[0].mxu0 %v3561
  %v3773 = vpop.f32.mrb[0].mxu0
  %v3774 = vadd.f32 0.0, %v3773
  %v3775 = vpop.f32.mrb[0].mxu0
  %v3776 = vpop.f32.mrb[0].mxu0
  %v3777 = vadd.f32 0.0, %v3776
  %v3778 = vpop.f32.mrb[0].mxu0
  %3779 = vmatprep.mubr.bf16.mxu0 0
  %3780 = vmatmul.mubr.bf16.gmra.mrb[0].mxu0 %v3564
  %v3781 = vpop.f32.mrb[0].mxu0
  %v3782 = vadd.f32 0.0, %v3781
  %v3783 = vpop.f32.mrb[0].mxu0
  %v3784 = vpop.f32.mrb[0].mxu0
  %v3785 = vadd.f32 0.0, %v3784
  %v3786 = vpop.f32.mrb[0].mxu0
  %3787 = vmatprep.mubr.bf16.mxu0 0
  %3788 = vmatmul.mubr.bf16.gmra.mrb[0].mxu0 %v3567
  %v3789 = vpop.f32.mrb[0].mxu0
  %v3790 = vadd.f32 0.0, %v3789
  %v3791 = vpop.f32.mrb[0].mxu0
  %v3792 = vpop.f32.mrb[0].mxu0
  %v3793 = vadd.f32 0.0, %v3792
  %v3794 = vpop.f32.mrb[0].mxu0
  %3795 = vmatprep.mubr.bf16.mxu0 0
  %3796 = vmatmul.mubr.bf16.gmra.mrb[0].mxu0 %v3570
  %v3797 = vpop.f32.mrb[0].mxu0
  %v3798 = vadd.f32 0.0, %v3797
  %v3799 = vpop.f32.mrb[0].mxu0
  %v3800 = vpop.f32.mrb[0].mxu0
  %v3801 = vadd.f32 0.0, %v3800
  %v3802 = vpop.f32.mrb[0].mxu0
  %3803 = vmatprep.mubr.bf16.mxu0 0
  %3804 = vmatmul.mubr.bf16.gmra.mrb[0].mxu0 %v3573
  %v3805 = vpop.f32.mrb[0].mxu0
  %v3806 = vadd.f32 0.0, %v3805
  %v3807 = vpop.f32.mrb[0].mxu0
  %v3808 = vpop.f32.mrb[0].mxu0
  %v3809 = vadd.f32 0.0, %v3808
  %v3810 = vpop.f32.mrb[0].mxu0
  %3811 = vmatprep.mubr.bf16.mxu0 0
  %3812 = vmatmul.mubr.bf16.gmra.mrb[0].mxu0 %v3576
  %v3813 = vpop.f32.mrb[0].mxu0
  %v3814 = vadd.f32 0.0, %v3813
  %v3815 = vpop.f32.mrb[0].mxu0
  %v3816 = vpop.f32.mrb[0].mxu0
  %v3817 = vadd.f32 0.0, %v3816
  %v3818 = vpop.f32.mrb[0].mxu0
  %3819 = vmatprep.mubr.bf16.mxu0 0
  %3820 = vmatmul.mubr.bf16.gmra.mrb[0].mxu0 %v3579
  %v3821 = vpop.f32.mrb[0].mxu0
  %v3822 = vadd.f32 0.0, %v3821
  %v3823 = vpop.f32.mrb[0].mxu0
  %v3824 = vpop.f32.mrb[0].mxu0
  %v3825 = vadd.f32 0.0, %v3824
  %v3826 = vpop.f32.mrb[0].mxu0
  %3827 = vmatprep.mubr.bf16.mxu0 0
  %3828 = vmatmul.mubr.bf16.gmra.mrb[0].mxu0 %v3582
  %v3829 = vpop.f32.mrb[0].mxu0
  %v3830 = vadd.f32 0.0, %v3829
  %v3831 = vpop.f32.mrb[0].mxu0
  %v3832 = vpop.f32.mrb[0].mxu0
  %v3833 = vadd.f32 0.0, %v3832
  %v3834 = vpop.f32.mrb[0].mxu0
  %3835 = vmatprep.mubr.bf16.mxu0 0
  %3836 = vmatmul.mubr.bf16.gmra.mrb[0].mxu0 %v3585
  %v3837 = vpop.f32.mrb[0].mxu0
  %v3838 = vadd.f32 0.0, %v3837
  %v3839 = vpop.f32.mrb[0].mxu0
  %v3840 = vpop.f32.mrb[0].mxu0
  %v3841 = vadd.f32 0.0, %v3840
  %v3842 = vpop.f32.mrb[0].mxu0
  %3843 = vmatprep.mubr.bf16.mxu0 0
  %3844 = vmatmul.mubr.bf16.gmra.mrb[0].mxu0 %v3588
  %v3845 = vpop.f32.mrb[0].mxu0
  %v3846 = vadd.f32 0.0, %v3845
  %v3847 = vpop.f32.mrb[0].mxu0
  %v3848 = vpop.f32.mrb[0].mxu0
  %v3849 = vadd.f32 0.0, %v3848
  %v3850 = vpop.f32.mrb[0].mxu0
  %3851 = vmatprep.mubr.bf16.mxu0 0
  %3852 = vmatmul.mubr.bf16.gmra.mrb[0].mxu0 %v3591
  %v3853 = vpop.f32.mrb[0].mxu0
  %v3854 = vadd.f32 0.0, %v3853
  %v3855 = vpop.f32.mrb[0].mxu0
  %v3856 = vpop.f32.mrb[0].mxu0
  %v3857 = vadd.f32 0.0, %v3856
  %v3858 = vpop.f32.mrb[0].mxu0
  %3859 = vmatprep.mubr.bf16.mxu0 0
  %3860 = vmatmul.mubr.bf16.gmra.mrb[0].mxu0 %v3594
  %v3861 = vpop.f32.mrb[0].mxu0
  %v3862 = vadd.f32 0.0, %v3861
  %v3863 = vpop.f32.mrb[0].mxu0
  %v3864 = vpop.f32.mrb[0].mxu0
  %v3865 = vadd.f32 0.0, %v3864
  %v3866 = vpop.f32.mrb[0].mxu0
  %3867 = vmatprep.mubr.bf16.mxu0 0
  %3868 = vmatmul.mubr.bf16.gmra.mrb[0].mxu0 %v3597
  %v3869 = vpop.f32.mrb[0].mxu0
  %v3870 = vadd.f32 0.0, %v3869
  %v3871 = vpop.f32.mrb[0].mxu0
  %v3872 = vpop.f32.mrb[0].mxu0
  %v3873 = vadd.f32 0.0, %v3872
  %v3874 = vpop.f32.mrb[0].mxu0
  %3875 = vmatprep.mubr.bf16.mxu0 0
  %3876 = vmatmul.mubr.bf16.gmra.mrb[0].mxu0 %v3600
  %v3877 = vpop.f32.mrb[0].mxu0
  %v3878 = vadd.f32 0.0, %v3877
  %v3879 = vpop.f32.mrb[0].mxu0
  %v3880 = vpop.f32.mrb[0].mxu0
  %v3881 = vadd.f32 0.0, %v3880
  %v3882 = vpop.f32.mrb[0].mxu0
  %3883 = vmatprep.mubr.bf16.mxu0 0
  %3884 = vmatmul.mubr.bf16.gmra.mrb[0].mxu0 %v3603
  %v3885 = vpop.f32.mrb[0].mxu0
  %v3886 = vadd.f32 0.0, %v3885
  %v3887 = vpop.f32.mrb[0].mxu0
  %v3888 = vpop.f32.mrb[0].mxu0
  %v3889 = vadd.f32 0.0, %v3888
  %v3890 = vpop.f32.mrb[0].mxu0
  %3891 = vmatprep.mubr.bf16.mxu0 0
  %3892 = vmatmul.mubr.bf16.gmra.mrb[0].mxu0 %v3606
  %v3893 = vpop.f32.mrb[0].mxu0
  %v3894 = vadd.f32 0.0, %v3893
  %v3895 = vpop.f32.mrb[0].mxu0
  %v3896 = vpop.f32.mrb[0].mxu0
  %v3897 = vadd.f32 0.0, %v3896
  %v3898 = vpop.f32.mrb[0].mxu0
  %3899 = vdwg.mxu0
  %v3900 = vadd.f32 %v3351, %v3646
  %v3901 = vadd.f32 %v3352, %v3649
  %v3902 = vadd.f32 %v3353, %v3654
  %v3903 = vadd.f32 %v3354, %v3657
  %v3904 = vadd.f32 %v3355, %v3662
  %v3905 = vadd.f32 %v3356, %v3665
  %v3906 = vadd.f32 %v3357, %v3670
  %v3907 = vadd.f32 %v3358, %v3673
  %v3908 = vadd.f32 %v3359, %v3678
  %v3909 = vadd.f32 %v3360, %v3681
  %v3910 = vadd.f32 %v3361, %v3686
  %v3911 = vadd.f32 %v3362, %v3689
  %v3912 = vadd.f32 %v3363, %v3694
  %v3913 = vadd.f32 %v3364, %v3697
  %v3914 = vadd.f32 %v3365, %v3702
  %v3915 = vadd.f32 %v3366, %v3705
  %v3916 = vadd.f32 %v3367, %v3710
  %v3917 = vadd.f32 %v3368, %v3713
  %v3918 = vadd.f32 %v3369, %v3718
  %v3919 = vadd.f32 %v3370, %v3721
  %v3920 = vadd.f32 %v3371, %v3726
  %v3921 = vadd.f32 %v3372, %v3729
  %v3922 = vadd.f32 %v3373, %v3734
  %v3923 = vadd.f32 %v3374, %v3737
  %v3924 = vadd.f32 %v3375, %v3742
  %v3925 = vadd.f32 %v3376, %v3745
  %v3926 = vadd.f32 %v3377, %v3750
  %v3927 = vadd.f32 %v3378, %v3753
  %v3928 = vadd.f32 %v3379, %v3758
  %v3929 = vadd.f32 %v3380, %v3761
  %v3930 = vadd.f32 %v3381, %v3766
  %v3931 = vadd.f32 %v3382, %v3769
  %v3932 = vadd.f32 %v3383, %v3774
  %v3933 = vadd.f32 %v3384, %v3777
  %v3934 = vadd.f32 %v3385, %v3782
  %v3935 = vadd.f32 %v3386, %v3785
  %v3936 = vadd.f32 %v3387, %v3790
  %v3937 = vadd.f32 %v3388, %v3793
  %v3938 = vadd.f32 %v3389, %v3798
  %v3939 = vadd.f32 %v3390, %v3801
  %v3940 = vadd.f32 %v3391, %v3806
  %v3941 = vadd.f32 %v3392, %v3809
  %v3942 = vadd.f32 %v3393, %v3814
  %v3943 = vadd.f32 %v3394, %v3817
  %v3944 = vadd.f32 %v3395, %v3822
  %v3945 = vadd.f32 %v3396, %v3825
  %v3946 = vadd.f32 %v3397, %v3830
  %v3947 = vadd.f32 %v3398, %v3833
  %v3948 = vadd.f32 %v3399, %v3838
  %v3949 = vadd.f32 %v3400, %v3841
  %v3950 = vadd.f32 %v3401, %v3846
  %v3951 = vadd.f32 %v3402, %v3849
  %v3952 = vadd.f32 %v3403, %v3854
  %v3953 = vadd.f32 %v3404, %v3857
  %v3954 = vadd.f32 %v3405, %v3862
  %v3955 = vadd.f32 %v3406, %v3865
  %v3956 = vadd.f32 %v3407, %v3870
  %v3957 = vadd.f32 %v3408, %v3873
  %v3958 = vadd.f32 %v3409, %v3878
  %v3959 = vadd.f32 %v3410, %v3881
  %v3960 = vadd.f32 %v3411, %v3886
  %v3961 = vadd.f32 %v3412, %v3889
  %v3962 = vadd.f32 %v3413, %v3894
  %v3963 = vadd.f32 %v3414, %v3897
  %v3964 = vld [vmem:[%s3415 + $0x1] sm:$0xff]
  %v3965 = vld [vmem:[%s3415 + $0x9] sm:$0xff]
  %v3966 = vld [vmem:[%s3415 + $0x19] sm:$0xff]
  %v3967 = vld [vmem:[%s3415 + $0x21] sm:$0xff]
  %v3968 = vld [vmem:[%s3415 + $0x31] sm:$0xff]
  %v3969 = vld [vmem:[%s3415 + $0x39] sm:$0xff]
  %v3970 = vld [vmem:[%s3415 + $0x49] sm:$0xff]
  %v3971 = vld [vmem:[%s3415 + $0x51] sm:$0xff]
  %v3972 = vld [vmem:[%s3415 + $0x61] sm:$0xff]
  %v3973 = vld [vmem:[%s3415 + $0x69] sm:$0xff]
  %v3974 = vld [vmem:[%s3415 + $0x79] sm:$0xff]
  %v3975 = vld [vmem:[%s3415 + $0x81] sm:$0xff]
  %v3976 = vld [vmem:[%s3415 + $0x91] sm:$0xff]
  %v3977 = vld [vmem:[%s3415 + $0x99] sm:$0xff]
  %v3978 = vld [vmem:[%s3415 + $0xa9] sm:$0xff]
  %v3979 = vld [vmem:[%s3415 + $0xb1] sm:$0xff]
  %v3980 = vld [vmem:[%s3415 + $0xc1] sm:$0xff]
  %v3981 = vld [vmem:[%s3415 + $0xc9] sm:$0xff]
  %v3982 = vld [vmem:[%s3415 + $0xd9] sm:$0xff]
  %v3983 = vld [vmem:[%s3415 + $0xe1] sm:$0xff]
  %v3984 = vld [vmem:[%s3415 + $0xf1] sm:$0xff]
  %v3985 = vld [vmem:[%s3415 + $0xf9] sm:$0xff]
  %v3986 = vld [vmem:[%s3415 + $0x109] sm:$0xff]
  %v3987 = vld [vmem:[%s3415 + $0x111] sm:$0xff]
  %v3988 = vld [vmem:[%s3415 + $0x121] sm:$0xff]
  %v3989 = vld [vmem:[%s3415 + $0x129] sm:$0xff]
  %v3990 = vld [vmem:[%s3415 + $0x139] sm:$0xff]
  %v3991 = vld [vmem:[%s3415 + $0x141] sm:$0xff]
  %v3992 = vld [vmem:[%s3415 + $0x151] sm:$0xff]
  %v3993 = vld [vmem:[%s3415 + $0x159] sm:$0xff]
  %v3994 = vld [vmem:[%s3415 + $0x169] sm:$0xff]
  %v3995 = vld [vmem:[%s3415 + $0x171] sm:$0xff]
  %v3996 = vld [vmem:[%s3415 + $0x1b1] sm:$0xff]
  %v3997 = vld [vmem:[%s3415 + $0x1b9] sm:$0xff]
  %v3998 = vld [vmem:[%s3415 + $0x1c9] sm:$0xff]
  %v3999 = vld [vmem:[%s3415 + $0x1d1] sm:$0xff]
  %v4000 = vld [vmem:[%s3415 + $0x1e1] sm:$0xff]
  %v4001 = vld [vmem:[%s3415 + $0x1e9] sm:$0xff]
  %v4002 = vld [vmem:[%s3415 + $0x1f9] sm:$0xff]
  %v4003 = vld [vmem:[%s3415 + $0x201] sm:$0xff]
  %v4004 = vld [vmem:[%s3415 + $0x211] sm:$0xff]
  %v4005 = vld [vmem:[%s3415 + $0x219] sm:$0xff]
  %v4006 = vld [vmem:[%s3415 + $0x229] sm:$0xff]
  %v4007 = vld [vmem:[%s3415 + $0x231] sm:$0xff]
  %v4008 = vld [vmem:[%s3415 + $0x241] sm:$0xff]
  %v4009 = vld [vmem:[%s3415 + $0x249] sm:$0xff]
  %v4010 = vld [vmem:[%s3415 + $0x259] sm:$0xff]
  %v4011 = vld [vmem:[%s3415 + $0x261] sm:$0xff]
  %v4012 = vld [vmem:[%s3415 + $0x271] sm:$0xff]
  %v4013 = vld [vmem:[%s3415 + $0x279] sm:$0xff]
  %v4014 = vld [vmem:[%s3415 + $0x289] sm:$0xff]
  %v4015 = vld [vmem:[%s3415 + $0x291] sm:$0xff]
  %v4016 = vld [vmem:[%s3415 + $0x2a1] sm:$0xff]
  %v4017 = vld [vmem:[%s3415 + $0x2a9] sm:$0xff]
  %v4018 = vld [vmem:[%s3415 + $0x2b9] sm:$0xff]
  %v4019 = vld [vmem:[%s3415 + $0x2c1] sm:$0xff]
  %v4020 = vld [vmem:[%s3415 + $0x2d1] sm:$0xff]
  %v4021 = vld [vmem:[%s3415 + $0x2d9] sm:$0xff]
  %v4022 = vld [vmem:[%s3415 + $0x2e9] sm:$0xff]
  %v4023 = vld [vmem:[%s3415 + $0x2f1] sm:$0xff]
  %v4024 = vld [vmem:[%s3415 + $0x301] sm:$0xff]
  %v4025 = vld [vmem:[%s3415 + $0x309] sm:$0xff]
  %v4026 = vld [vmem:[%s3415 + $0x319] sm:$0xff]
  %v4027 = vld [vmem:[%s3415 + $0x321] sm:$0xff]
  %v4028 = vpack.c.bf16 %v3965, %v3964
  %v4029 = vpack.c.bf16 %v3967, %v3966
  %v4030 = vpack.c.bf16 %v3969, %v3968
  %v4031 = vpack.c.bf16 %v3971, %v3970
  %v4032 = vpack.c.bf16 %v3973, %v3972
  %v4033 = vpack.c.bf16 %v3975, %v3974
  %v4034 = vpack.c.bf16 %v3977, %v3976
  %v4035 = vpack.c.bf16 %v3979, %v3978
  %v4036 = vpack.c.bf16 %v3981, %v3980
  %v4037 = vpack.c.bf16 %v3983, %v3982
  %v4038 = vpack.c.bf16 %v3985, %v3984
  %v4039 = vpack.c.bf16 %v3987, %v3986
  %v4040 = vpack.c.bf16 %v3989, %v3988
  %v4041 = vpack.c.bf16 %v3991, %v3990
  %v4042 = vpack.c.bf16 %v3993, %v3992
  %v4043 = vpack.c.bf16 %v3995, %v3994
  %v4044 = vpack.c.bf16 %v3997, %v3996
  %v4045 = vpack.c.bf16 %v3999, %v3998
  %v4046 = vpack.c.bf16 %v4001, %v4000
  %v4047 = vpack.c.bf16 %v4003, %v4002
  %v4048 = vpack.c.bf16 %v4005, %v4004
  %v4049 = vpack.c.bf16 %v4007, %v4006
  %v4050 = vpack.c.bf16 %v4009, %v4008
  %v4051 = vpack.c.bf16 %v4011, %v4010
  %v4052 = vpack.c.bf16 %v4013, %v4012
  %v4053 = vpack.c.bf16 %v4015, %v4014
  %v4054 = vpack.c.bf16 %v4017, %v4016
  %v4055 = vpack.c.bf16 %v4019, %v4018
  %v4056 = vpack.c.bf16 %v4021, %v4020
  %v4057 = vpack.c.bf16 %v4023, %v4022
  %v4058 = vpack.c.bf16 %v4025, %v4024
  %v4059 = vpack.c.bf16 %v4027, %v4026
  %v4061 = vsel %vm97, %v4028, 0
  %v4064 = vsel %vm97, %v4029, 0
  %v4067 = vsel %vm97, %v4030, 0
  %v4070 = vsel %vm97, %v4031, 0
  %v4073 = vsel %vm97, %v4032, 0
  %v4076 = vsel %vm97, %v4033, 0
  %v4079 = vsel %vm97, %v4034, 0
  %v4082 = vsel %vm97, %v4035, 0
  %v4085 = vsel %vm97, %v4036, 0
  %v4088 = vsel %vm97, %v4037, 0
  %v4091 = vsel %vm97, %v4038, 0
  %v4094 = vsel %vm97, %v4039, 0
  %v4097 = vsel %vm97, %v4040, 0
  %v4100 = vsel %vm97, %v4041, 0
  %v4103 = vsel %vm97, %v4042, 0
  %v4106 = vsel %vm97, %v4043, 0
  %v4109 = vsel %vm97, %v4044, 0
  %v4112 = vsel %vm97, %v4045, 0
  %v4115 = vsel %vm97, %v4046, 0
  %v4118 = vsel %vm97, %v4047, 0
  %v4121 = vsel %vm97, %v4048, 0
  %v4124 = vsel %vm97, %v4049, 0
  %v4127 = vsel %vm97, %v4050, 0
  %v4130 = vsel %vm97, %v4051, 0
  %v4133 = vsel %vm97, %v4052, 0
  %v4136 = vsel %vm97, %v4053, 0
  %v4139 = vsel %vm97, %v4054, 0
  %v4142 = vsel %vm97, %v4055, 0
  %v4145 = vsel %vm97, %v4056, 0
  %v4148 = vsel %vm97, %v4057, 0
  %v4151 = vsel %vm97, %v4058, 0
  %v4154 = vsel %vm97, %v4059, 0
  %v4157 = vsel %vm542, %v249, 0
  %4159 = vmatprep.subr.bf16.mxu0 0
  %4160 = vmatpush1.bf16.msra.mxu0 %v4157
  %4161 = vmatprep.subr.bf16.mxu0 0
  %4162 = vmatpush1.bf16.msra.mxu0 0
  %4163 = vmatprep.subr.bf16.mxu0 0
  %4164 = vmatpush1.bf16.msra.mxu0 0
  %4165 = vmatprep.subr.bf16.mxu0 0
  %4166 = vmatpush1.bf16.msra.mxu0 0
  %4167 = vmatprep.subr.bf16.mxu0 0
  %4168 = vmatpush1.bf16.msra.mxu0 0
  %4169 = vmatprep.subr.bf16.mxu0 0
  %4170 = vmatpush1.bf16.msra.mxu0 0
  %4171 = vmatprep.subr.bf16.mxu0 0
  %4172 = vmatpush1.bf16.msra.mxu0 0
  %4173 = vmatprep.subr.bf16.mxu0 0
  %4174 = vmatpush1.bf16.msra.mxu0 0
  %4175 = vmatprep.subr.bf16.mxu0 0
  %4176 = vmatpush1.bf16.msra.mxu0 0
  %4177 = vmatprep.subr.bf16.mxu0 0
  %4178 = vmatpush1.bf16.msra.mxu0 0
  %4179 = vmatprep.subr.bf16.mxu0 0
  %4180 = vmatpush1.bf16.msra.mxu0 0
  %4181 = vmatprep.subr.bf16.mxu0 0
  %4182 = vmatpush1.bf16.msra.mxu0 0
  %4183 = vmatprep.subr.bf16.mxu0 0
  %4184 = vmatpush1.bf16.msra.mxu0 0
  %4185 = vmatprep.subr.bf16.mxu0 0
  %4186 = vmatpush1.bf16.msra.mxu0 0
  %4187 = vmatprep.subr.bf16.mxu0 0
  %4188 = vmatpush1.bf16.msra.mxu0 0
  %4189 = vmatprep.subr.bf16.mxu0 0
  %4190 = vmatpush1.bf16.msra.mxu0 0
  %4191 = vmatprep.mubr.bf16.mxu0 0
  %4192 = vmatmul.mubr.bf16.gmra.mrb[0].mxu0 %v4061
  %v4193 = vpop.f32.mrb[0].mxu0
  %v4194 = vadd.f32 0.0, %v4193
  %v4195 = vpop.f32.mrb[0].mxu0
  %v4196 = vpop.f32.mrb[0].mxu0
  %v4197 = vadd.f32 0.0, %v4196
  %v4198 = vpop.f32.mrb[0].mxu0
  %4199 = vmatprep.mubr.bf16.mxu0 0
  %4200 = vmatmul.mubr.bf16.gmra.mrb[0].mxu0 %v4064
  %v4201 = vpop.f32.mrb[0].mxu0
  %v4202 = vadd.f32 0.0, %v4201
  %v4203 = vpop.f32.mrb[0].mxu0
  %v4204 = vpop.f32.mrb[0].mxu0
  %v4205 = vadd.f32 0.0, %v4204
  %v4206 = vpop.f32.mrb[0].mxu0
  %4207 = vmatprep.mubr.bf16.mxu0 0
  %4208 = vmatmul.mubr.bf16.gmra.mrb[0].mxu0 %v4067
  %v4209 = vpop.f32.mrb[0].mxu0
  %v4210 = vadd.f32 0.0, %v4209
  %v4211 = vpop.f32.mrb[0].mxu0
  %v4212 = vpop.f32.mrb[0].mxu0
  %v4213 = vadd.f32 0.0, %v4212
  %v4214 = vpop.f32.mrb[0].mxu0
  %4215 = vmatprep.mubr.bf16.mxu0 0
  %4216 = vmatmul.mubr.bf16.gmra.mrb[0].mxu0 %v4070
  %v4217 = vpop.f32.mrb[0].mxu0
  %v4218 = vadd.f32 0.0, %v4217
  %v4219 = vpop.f32.mrb[0].mxu0
  %v4220 = vpop.f32.mrb[0].mxu0
  %v4221 = vadd.f32 0.0, %v4220
  %v4222 = vpop.f32.mrb[0].mxu0
  %4223 = vmatprep.mubr.bf16.mxu0 0
  %4224 = vmatmul.mubr.bf16.gmra.mrb[0].mxu0 %v4073
  %v4225 = vpop.f32.mrb[0].mxu0
  %v4226 = vadd.f32 0.0, %v4225
  %v4227 = vpop.f32.mrb[0].mxu0
  %v4228 = vpop.f32.mrb[0].mxu0
  %v4229 = vadd.f32 0.0, %v4228
  %v4230 = vpop.f32.mrb[0].mxu0
  %4231 = vmatprep.mubr.bf16.mxu0 0
  %4232 = vmatmul.mubr.bf16.gmra.mrb[0].mxu0 %v4076
  %v4233 = vpop.f32.mrb[0].mxu0
  %v4234 = vadd.f32 0.0, %v4233
  %v4235 = vpop.f32.mrb[0].mxu0
  %v4236 = vpop.f32.mrb[0].mxu0
  %v4237 = vadd.f32 0.0, %v4236
  %v4238 = vpop.f32.mrb[0].mxu0
  %4239 = vmatprep.mubr.bf16.mxu0 0
  %4240 = vmatmul.mubr.bf16.gmra.mrb[0].mxu0 %v4079
  %v4241 = vpop.f32.mrb[0].mxu0
  %v4242 = vadd.f32 0.0, %v4241
  %v4243 = vpop.f32.mrb[0].mxu0
  %v4244 = vpop.f32.mrb[0].mxu0
  %v4245 = vadd.f32 0.0, %v4244
  %v4246 = vpop.f32.mrb[0].mxu0
  %4247 = vmatprep.mubr.bf16.mxu0 0
  %4248 = vmatmul.mubr.bf16.gmra.mrb[0].mxu0 %v4082
  %v4249 = vpop.f32.mrb[0].mxu0
  %v4250 = vadd.f32 0.0, %v4249
  %v4251 = vpop.f32.mrb[0].mxu0
  %v4252 = vpop.f32.mrb[0].mxu0
  %v4253 = vadd.f32 0.0, %v4252
  %v4254 = vpop.f32.mrb[0].mxu0
  %4255 = vmatprep.mubr.bf16.mxu0 0
  %4256 = vmatmul.mubr.bf16.gmra.mrb[0].mxu0 %v4085
  %v4257 = vpop.f32.mrb[0].mxu0
  %v4258 = vadd.f32 0.0, %v4257
  %v4259 = vpop.f32.mrb[0].mxu0
  %v4260 = vpop.f32.mrb[0].mxu0
  %v4261 = vadd.f32 0.0, %v4260
  %v4262 = vpop.f32.mrb[0].mxu0
  %4263 = vmatprep.mubr.bf16.mxu0 0
  %4264 = vmatmul.mubr.bf16.gmra.mrb[0].mxu0 %v4088
  %v4265 = vpop.f32.mrb[0].mxu0
  %v4266 = vadd.f32 0.0, %v4265
  %v4267 = vpop.f32.mrb[0].mxu0
  %v4268 = vpop.f32.mrb[0].mxu0
  %v4269 = vadd.f32 0.0, %v4268
  %v4270 = vpop.f32.mrb[0].mxu0
  %4271 = vmatprep.mubr.bf16.mxu0 0
  %4272 = vmatmul.mubr.bf16.gmra.mrb[0].mxu0 %v4091
  %v4273 = vpop.f32.mrb[0].mxu0
  %v4274 = vadd.f32 0.0, %v4273
  %v4275 = vpop.f32.mrb[0].mxu0
  %v4276 = vpop.f32.mrb[0].mxu0
  %v4277 = vadd.f32 0.0, %v4276
  %v4278 = vpop.f32.mrb[0].mxu0
  %4279 = vmatprep.mubr.bf16.mxu0 0
  %4280 = vmatmul.mubr.bf16.gmra.mrb[0].mxu0 %v4094
  %v4281 = vpop.f32.mrb[0].mxu0
  %v4282 = vadd.f32 0.0, %v4281
  %v4283 = vpop.f32.mrb[0].mxu0
  %v4284 = vpop.f32.mrb[0].mxu0
  %v4285 = vadd.f32 0.0, %v4284
  %v4286 = vpop.f32.mrb[0].mxu0
  %4287 = vmatprep.mubr.bf16.mxu0 0
  %4288 = vmatmul.mubr.bf16.gmra.mrb[0].mxu0 %v4097
  %v4289 = vpop.f32.mrb[0].mxu0
  %v4290 = vadd.f32 0.0, %v4289
  %v4291 = vpop.f32.mrb[0].mxu0
  %v4292 = vpop.f32.mrb[0].mxu0
  %v4293 = vadd.f32 0.0, %v4292
  %v4294 = vpop.f32.mrb[0].mxu0
  %4295 = vmatprep.mubr.bf16.mxu0 0
  %4296 = vmatmul.mubr.bf16.gmra.mrb[0].mxu0 %v4100
  %v4297 = vpop.f32.mrb[0].mxu0
  %v4298 = vadd.f32 0.0, %v4297
  %v4299 = vpop.f32.mrb[0].mxu0
  %v4300 = vpop.f32.mrb[0].mxu0
  %v4301 = vadd.f32 0.0, %v4300
  %v4302 = vpop.f32.mrb[0].mxu0
  %4303 = vmatprep.mubr.bf16.mxu0 0
  %4304 = vmatmul.mubr.bf16.gmra.mrb[0].mxu0 %v4103
  %v4305 = vpop.f32.mrb[0].mxu0
  %v4306 = vadd.f32 0.0, %v4305
  %v4307 = vpop.f32.mrb[0].mxu0
  %v4308 = vpop.f32.mrb[0].mxu0
  %v4309 = vadd.f32 0.0, %v4308
  %v4310 = vpop.f32.mrb[0].mxu0
  %4311 = vmatprep.mubr.bf16.mxu0 0
  %4312 = vmatmul.mubr.bf16.gmra.mrb[0].mxu0 %v4106
  %v4313 = vpop.f32.mrb[0].mxu0
  %v4314 = vadd.f32 0.0, %v4313
  %v4315 = vpop.f32.mrb[0].mxu0
  %v4316 = vpop.f32.mrb[0].mxu0
  %v4317 = vadd.f32 0.0, %v4316
  %v4318 = vpop.f32.mrb[0].mxu0
  %4319 = vmatprep.mubr.bf16.mxu0 0
  %4320 = vmatmul.mubr.bf16.gmra.mrb[0].mxu0 %v4109
  %v4321 = vpop.f32.mrb[0].mxu0
  %v4322 = vadd.f32 0.0, %v4321
  %v4323 = vpop.f32.mrb[0].mxu0
  %v4324 = vpop.f32.mrb[0].mxu0
  %v4325 = vadd.f32 0.0, %v4324
  %v4326 = vpop.f32.mrb[0].mxu0
  %4327 = vmatprep.mubr.bf16.mxu0 0
  %4328 = vmatmul.mubr.bf16.gmra.mrb[0].mxu0 %v4112
  %v4329 = vpop.f32.mrb[0].mxu0
  %v4330 = vadd.f32 0.0, %v4329
  %v4331 = vpop.f32.mrb[0].mxu0
  %v4332 = vpop.f32.mrb[0].mxu0
  %v4333 = vadd.f32 0.0, %v4332
  %v4334 = vpop.f32.mrb[0].mxu0
  %4335 = vmatprep.mubr.bf16.mxu0 0
  %4336 = vmatmul.mubr.bf16.gmra.mrb[0].mxu0 %v4115
  %v4337 = vpop.f32.mrb[0].mxu0
  %v4338 = vadd.f32 0.0, %v4337
  %v4339 = vpop.f32.mrb[0].mxu0
  %v4340 = vpop.f32.mrb[0].mxu0
  %v4341 = vadd.f32 0.0, %v4340
  %v4342 = vpop.f32.mrb[0].mxu0
  %4343 = vmatprep.mubr.bf16.mxu0 0
  %4344 = vmatmul.mubr.bf16.gmra.mrb[0].mxu0 %v4118
  %v4345 = vpop.f32.mrb[0].mxu0
  %v4346 = vadd.f32 0.0, %v4345
  %v4347 = vpop.f32.mrb[0].mxu0
  %v4348 = vpop.f32.mrb[0].mxu0
  %v4349 = vadd.f32 0.0, %v4348
  %v4350 = vpop.f32.mrb[0].mxu0
  %4351 = vmatprep.mubr.bf16.mxu0 0
  %4352 = vmatmul.mubr.bf16.gmra.mrb[0].mxu0 %v4121
  %v4353 = vpop.f32.mrb[0].mxu0
  %v4354 = vadd.f32 0.0, %v4353
  %v4355 = vpop.f32.mrb[0].mxu0
  %v4356 = vpop.f32.mrb[0].mxu0
  %v4357 = vadd.f32 0.0, %v4356
  %v4358 = vpop.f32.mrb[0].mxu0
  %4359 = vmatprep.mubr.bf16.mxu0 0
  %4360 = vmatmul.mubr.bf16.gmra.mrb[0].mxu0 %v4124
  %v4361 = vpop.f32.mrb[0].mxu0
  %v4362 = vadd.f32 0.0, %v4361
  %v4363 = vpop.f32.mrb[0].mxu0
  %v4364 = vpop.f32.mrb[0].mxu0
  %v4365 = vadd.f32 0.0, %v4364
  %v4366 = vpop.f32.mrb[0].mxu0
  %4367 = vmatprep.mubr.bf16.mxu0 0
  %4368 = vmatmul.mubr.bf16.gmra.mrb[0].mxu0 %v4127
  %v4369 = vpop.f32.mrb[0].mxu0
  %v4370 = vadd.f32 0.0, %v4369
  %v4371 = vpop.f32.mrb[0].mxu0
  %v4372 = vpop.f32.mrb[0].mxu0
  %v4373 = vadd.f32 0.0, %v4372
  %v4374 = vpop.f32.mrb[0].mxu0
  %4375 = vmatprep.mubr.bf16.mxu0 0
  %4376 = vmatmul.mubr.bf16.gmra.mrb[0].mxu0 %v4130
  %v4377 = vpop.f32.mrb[0].mxu0
  %v4378 = vadd.f32 0.0, %v4377
  %v4379 = vpop.f32.mrb[0].mxu0
  %v4380 = vpop.f32.mrb[0].mxu0
  %v4381 = vadd.f32 0.0, %v4380
  %v4382 = vpop.f32.mrb[0].mxu0
  %4383 = vmatprep.mubr.bf16.mxu0 0
  %4384 = vmatmul.mubr.bf16.gmra.mrb[0].mxu0 %v4133
  %v4385 = vpop.f32.mrb[0].mxu0
  %v4386 = vadd.f32 0.0, %v4385
  %v4387 = vpop.f32.mrb[0].mxu0
  %v4388 = vpop.f32.mrb[0].mxu0
  %v4389 = vadd.f32 0.0, %v4388
  %v4390 = vpop.f32.mrb[0].mxu0
  %4391 = vmatprep.mubr.bf16.mxu0 0
  %4392 = vmatmul.mubr.bf16.gmra.mrb[0].mxu0 %v4136
  %v4393 = vpop.f32.mrb[0].mxu0
  %v4394 = vadd.f32 0.0, %v4393
  %v4395 = vpop.f32.mrb[0].mxu0
  %v4396 = vpop.f32.mrb[0].mxu0
  %v4397 = vadd.f32 0.0, %v4396
  %v4398 = vpop.f32.mrb[0].mxu0
  %4399 = vmatprep.mubr.bf16.mxu0 0
  %4400 = vmatmul.mubr.bf16.gmra.mrb[0].mxu0 %v4139
  %v4401 = vpop.f32.mrb[0].mxu0
  %v4402 = vadd.f32 0.0, %v4401
  %v4403 = vpop.f32.mrb[0].mxu0
  %v4404 = vpop.f32.mrb[0].mxu0
  %v4405 = vadd.f32 0.0, %v4404
  %v4406 = vpop.f32.mrb[0].mxu0
  %4407 = vmatprep.mubr.bf16.mxu0 0
  %4408 = vmatmul.mubr.bf16.gmra.mrb[0].mxu0 %v4142
  %v4409 = vpop.f32.mrb[0].mxu0
  %v4410 = vadd.f32 0.0, %v4409
  %v4411 = vpop.f32.mrb[0].mxu0
  %v4412 = vpop.f32.mrb[0].mxu0
  %v4413 = vadd.f32 0.0, %v4412
  %v4414 = vpop.f32.mrb[0].mxu0
  %4415 = vmatprep.mubr.bf16.mxu0 0
  %4416 = vmatmul.mubr.bf16.gmra.mrb[0].mxu0 %v4145
  %v4417 = vpop.f32.mrb[0].mxu0
  %v4418 = vadd.f32 0.0, %v4417
  %v4419 = vpop.f32.mrb[0].mxu0
  %v4420 = vpop.f32.mrb[0].mxu0
  %v4421 = vadd.f32 0.0, %v4420
  %v4422 = vpop.f32.mrb[0].mxu0
  %4423 = vmatprep.mubr.bf16.mxu0 0
  %4424 = vmatmul.mubr.bf16.gmra.mrb[0].mxu0 %v4148
  %v4425 = vpop.f32.mrb[0].mxu0
  %v4426 = vadd.f32 0.0, %v4425
  %v4427 = vpop.f32.mrb[0].mxu0
  %v4428 = vpop.f32.mrb[0].mxu0
  %v4429 = vadd.f32 0.0, %v4428
  %v4430 = vpop.f32.mrb[0].mxu0
  %4431 = vmatprep.mubr.bf16.mxu0 0
  %4432 = vmatmul.mubr.bf16.gmra.mrb[0].mxu0 %v4151
  %v4433 = vpop.f32.mrb[0].mxu0
  %v4434 = vadd.f32 0.0, %v4433
  %v4435 = vpop.f32.mrb[0].mxu0
  %v4436 = vpop.f32.mrb[0].mxu0
  %v4437 = vadd.f32 0.0, %v4436
  %v4438 = vpop.f32.mrb[0].mxu0
  %4439 = vmatprep.mubr.bf16.mxu0 0
  %4440 = vmatmul.mubr.bf16.gmra.mrb[0].mxu0 %v4154
  %v4441 = vpop.f32.mrb[0].mxu0
  %v4442 = vadd.f32 0.0, %v4441
  %v4443 = vpop.f32.mrb[0].mxu0
  %v4444 = vpop.f32.mrb[0].mxu0
  %v4445 = vadd.f32 0.0, %v4444
  %v4446 = vpop.f32.mrb[0].mxu0
  %4447 = vdwg.mxu0
  %v4448 = vadd.f32 %v3900, %v4194
  %v4449 = vadd.f32 %v3901, %v4197
  %v4450 = vadd.f32 %v3902, %v4202
  %v4451 = vadd.f32 %v3903, %v4205
  %v4452 = vadd.f32 %v3904, %v4210
  %v4453 = vadd.f32 %v3905, %v4213
  %v4454 = vadd.f32 %v3906, %v4218
  %v4455 = vadd.f32 %v3907, %v4221
  %v4456 = vadd.f32 %v3908, %v4226
  %v4457 = vadd.f32 %v3909, %v4229
  %v4458 = vadd.f32 %v3910, %v4234
  %v4459 = vadd.f32 %v3911, %v4237
  %v4460 = vadd.f32 %v3912, %v4242
  %v4461 = vadd.f32 %v3913, %v4245
  %v4462 = vadd.f32 %v3914, %v4250
  %v4463 = vadd.f32 %v3915, %v4253
  %v4464 = vadd.f32 %v3916, %v4258
  %v4465 = vadd.f32 %v3917, %v4261
  %v4466 = vadd.f32 %v3918, %v4266
  %v4467 = vadd.f32 %v3919, %v4269
  %v4468 = vadd.f32 %v3920, %v4274
  %v4469 = vadd.f32 %v3921, %v4277
  %v4470 = vadd.f32 %v3922, %v4282
  %v4471 = vadd.f32 %v3923, %v4285
  %v4472 = vadd.f32 %v3924, %v4290
  %v4473 = vadd.f32 %v3925, %v4293
  %v4474 = vadd.f32 %v3926, %v4298
  %v4475 = vadd.f32 %v3927, %v4301
  %v4476 = vadd.f32 %v3928, %v4306
  %v4477 = vadd.f32 %v3929, %v4309
  %v4478 = vadd.f32 %v3930, %v4314
  %v4479 = vadd.f32 %v3931, %v4317
  %v4480 = vadd.f32 %v3932, %v4322
  %v4481 = vadd.f32 %v3933, %v4325
  %v4482 = vadd.f32 %v3934, %v4330
  %v4483 = vadd.f32 %v3935, %v4333
  %v4484 = vadd.f32 %v3936, %v4338
  %v4485 = vadd.f32 %v3937, %v4341
  %v4486 = vadd.f32 %v3938, %v4346
  %v4487 = vadd.f32 %v3939, %v4349
  %v4488 = vadd.f32 %v3940, %v4354
  %v4489 = vadd.f32 %v3941, %v4357
  %v4490 = vadd.f32 %v3942, %v4362
  %v4491 = vadd.f32 %v3943, %v4365
  %v4492 = vadd.f32 %v3944, %v4370
  %v4493 = vadd.f32 %v3945, %v4373
  %v4494 = vadd.f32 %v3946, %v4378
  %v4495 = vadd.f32 %v3947, %v4381
  %v4496 = vadd.f32 %v3948, %v4386
  %v4497 = vadd.f32 %v3949, %v4389
  %v4498 = vadd.f32 %v3950, %v4394
  %v4499 = vadd.f32 %v3951, %v4397
  %v4500 = vadd.f32 %v3952, %v4402
  %v4501 = vadd.f32 %v3953, %v4405
  %v4502 = vadd.f32 %v3954, %v4410
  %v4503 = vadd.f32 %v3955, %v4413
  %v4504 = vadd.f32 %v3956, %v4418
  %v4505 = vadd.f32 %v3957, %v4421
  %v4506 = vadd.f32 %v3958, %v4426
  %v4507 = vadd.f32 %v3959, %v4429
  %v4508 = vadd.f32 %v3960, %v4434
  %v4509 = vadd.f32 %v3961, %v4437
  %v4510 = vadd.f32 %v3962, %v4442
  %v4511 = vadd.f32 %v3963, %v4445
  %v4512 = vld [vmem:[%s3415 + $0x2] sm:$0xff]
  %v4513 = vld [vmem:[%s3415 + $0xa] sm:$0xff]
  %v4514 = vld [vmem:[%s3415 + $0x1a] sm:$0xff]
  %v4515 = vld [vmem:[%s3415 + $0x22] sm:$0xff]
  %v4516 = vld [vmem:[%s3415 + $0x32] sm:$0xff]
  %v4517 = vld [vmem:[%s3415 + $0x3a] sm:$0xff]
  %v4518 = vld [vmem:[%s3415 + $0x4a] sm:$0xff]
  %v4519 = vld [vmem:[%s3415 + $0x52] sm:$0xff]
  %v4520 = vld [vmem:[%s3415 + $0x62] sm:$0xff]
  %v4521 = vld [vmem:[%s3415 + $0x6a] sm:$0xff]
  %v4522 = vld [vmem:[%s3415 + $0x7a] sm:$0xff]
  %v4523 = vld [vmem:[%s3415 + $0x82] sm:$0xff]
  %v4524 = vld [vmem:[%s3415 + $0x92] sm:$0xff]
  %v4525 = vld [vmem:[%s3415 + $0x9a] sm:$0xff]
  %v4526 = vld [vmem:[%s3415 + $0xaa] sm:$0xff]
  %v4527 = vld [vmem:[%s3415 + $0xb2] sm:$0xff]
  %v4528 = vld [vmem:[%s3415 + $0xc2] sm:$0xff]
  %v4529 = vld [vmem:[%s3415 + $0xca] sm:$0xff]
  %v4530 = vld [vmem:[%s3415 + $0xda] sm:$0xff]
  %v4531 = vld [vmem:[%s3415 + $0xe2] sm:$0xff]
  %v4532 = vld [vmem:[%s3415 + $0xf2] sm:$0xff]
  %v4533 = vld [vmem:[%s3415 + $0xfa] sm:$0xff]
  %v4534 = vld [vmem:[%s3415 + $0x10a] sm:$0xff]
  %v4535 = vld [vmem:[%s3415 + $0x112] sm:$0xff]
  %v4536 = vld [vmem:[%s3415 + $0x122] sm:$0xff]
  %v4537 = vld [vmem:[%s3415 + $0x12a] sm:$0xff]
  %v4538 = vld [vmem:[%s3415 + $0x13a] sm:$0xff]
  %v4539 = vld [vmem:[%s3415 + $0x142] sm:$0xff]
  %v4540 = vld [vmem:[%s3415 + $0x152] sm:$0xff]
  %v4541 = vld [vmem:[%s3415 + $0x15a] sm:$0xff]
  %v4542 = vld [vmem:[%s3415 + $0x16a] sm:$0xff]
  %v4543 = vld [vmem:[%s3415 + $0x172] sm:$0xff]
  %v4544 = vld [vmem:[%s3415 + $0x1b2] sm:$0xff]
  %v4545 = vld [vmem:[%s3415 + $0x1ba] sm:$0xff]
  %v4546 = vld [vmem:[%s3415 + $0x1ca] sm:$0xff]
  %v4547 = vld [vmem:[%s3415 + $0x1d2] sm:$0xff]
  %v4548 = vld [vmem:[%s3415 + $0x1e2] sm:$0xff]
  %v4549 = vld [vmem:[%s3415 + $0x1ea] sm:$0xff]
  %v4550 = vld [vmem:[%s3415 + $0x1fa] sm:$0xff]
  %v4551 = vld [vmem:[%s3415 + $0x202] sm:$0xff]
  %v4552 = vld [vmem:[%s3415 + $0x212] sm:$0xff]
  %v4553 = vld [vmem:[%s3415 + $0x21a] sm:$0xff]
  %v4554 = vld [vmem:[%s3415 + $0x22a] sm:$0xff]
  %v4555 = vld [vmem:[%s3415 + $0x232] sm:$0xff]
  %v4556 = vld [vmem:[%s3415 + $0x242] sm:$0xff]
  %v4557 = vld [vmem:[%s3415 + $0x24a] sm:$0xff]
  %v4558 = vld [vmem:[%s3415 + $0x25a] sm:$0xff]
  %v4559 = vld [vmem:[%s3415 + $0x262] sm:$0xff]
  %v4560 = vld [vmem:[%s3415 + $0x272] sm:$0xff]
  %v4561 = vld [vmem:[%s3415 + $0x27a] sm:$0xff]
  %v4562 = vld [vmem:[%s3415 + $0x28a] sm:$0xff]
  %v4563 = vld [vmem:[%s3415 + $0x292] sm:$0xff]
  %v4564 = vld [vmem:[%s3415 + $0x2a2] sm:$0xff]
  %v4565 = vld [vmem:[%s3415 + $0x2aa] sm:$0xff]
  %v4566 = vld [vmem:[%s3415 + $0x2ba] sm:$0xff]
  %v4567 = vld [vmem:[%s3415 + $0x2c2] sm:$0xff]
  %v4568 = vld [vmem:[%s3415 + $0x2d2] sm:$0xff]
  %v4569 = vld [vmem:[%s3415 + $0x2da] sm:$0xff]
  %v4570 = vld [vmem:[%s3415 + $0x2ea] sm:$0xff]
  %v4571 = vld [vmem:[%s3415 + $0x2f2] sm:$0xff]
  %v4572 = vld [vmem:[%s3415 + $0x302] sm:$0xff]
  %v4573 = vld [vmem:[%s3415 + $0x30a] sm:$0xff]
  %v4574 = vld [vmem:[%s3415 + $0x31a] sm:$0xff]
  %v4575 = vld [vmem:[%s3415 + $0x322] sm:$0xff]
  %v4576 = vpack.c.bf16 %v4513, %v4512
  %v4577 = vpack.c.bf16 %v4515, %v4514
  %v4578 = vpack.c.bf16 %v4517, %v4516
  %v4579 = vpack.c.bf16 %v4519, %v4518
  %v4580 = vpack.c.bf16 %v4521, %v4520
  %v4581 = vpack.c.bf16 %v4523, %v4522
  %v4582 = vpack.c.bf16 %v4525, %v4524
  %v4583 = vpack.c.bf16 %v4527, %v4526
  %v4584 = vpack.c.bf16 %v4529, %v4528
  %v4585 = vpack.c.bf16 %v4531, %v4530
  %v4586 = vpack.c.bf16 %v4533, %v4532
  %v4587 = vpack.c.bf16 %v4535, %v4534
  %v4588 = vpack.c.bf16 %v4537, %v4536
  %v4589 = vpack.c.bf16 %v4539, %v4538
  %v4590 = vpack.c.bf16 %v4541, %v4540
  %v4591 = vpack.c.bf16 %v4543, %v4542
  %v4592 = vpack.c.bf16 %v4545, %v4544
  %v4593 = vpack.c.bf16 %v4547, %v4546
  %v4594 = vpack.c.bf16 %v4549, %v4548
  %v4595 = vpack.c.bf16 %v4551, %v4550
  %v4596 = vpack.c.bf16 %v4553, %v4552
  %v4597 = vpack.c.bf16 %v4555, %v4554
  %v4598 = vpack.c.bf16 %v4557, %v4556
  %v4599 = vpack.c.bf16 %v4559, %v4558
  %v4600 = vpack.c.bf16 %v4561, %v4560
  %v4601 = vpack.c.bf16 %v4563, %v4562
  %v4602 = vpack.c.bf16 %v4565, %v4564
  %v4603 = vpack.c.bf16 %v4567, %v4566
  %v4604 = vpack.c.bf16 %v4569, %v4568
  %v4605 = vpack.c.bf16 %v4571, %v4570
  %v4606 = vpack.c.bf16 %v4573, %v4572
  %v4607 = vpack.c.bf16 %v4575, %v4574
  %v4609 = vsel %vm97, %v4576, 0
  %v4612 = vsel %vm97, %v4577, 0
  %v4615 = vsel %vm97, %v4578, 0
  %v4618 = vsel %vm97, %v4579, 0
  %v4621 = vsel %vm97, %v4580, 0
  %v4624 = vsel %vm97, %v4581, 0
  %v4627 = vsel %vm97, %v4582, 0
  %v4630 = vsel %vm97, %v4583, 0
  %v4633 = vsel %vm97, %v4584, 0
  %v4636 = vsel %vm97, %v4585, 0
  %v4639 = vsel %vm97, %v4586, 0
  %v4642 = vsel %vm97, %v4587, 0
  %v4645 = vsel %vm97, %v4588, 0
  %v4648 = vsel %vm97, %v4589, 0
  %v4651 = vsel %vm97, %v4590, 0
  %v4654 = vsel %vm97, %v4591, 0
  %v4657 = vsel %vm97, %v4592, 0
  %v4660 = vsel %vm97, %v4593, 0
  %v4663 = vsel %vm97, %v4594, 0
  %v4666 = vsel %vm97, %v4595, 0
  %v4669 = vsel %vm97, %v4596, 0
  %v4672 = vsel %vm97, %v4597, 0
  %v4675 = vsel %vm97, %v4598, 0
  %v4678 = vsel %vm97, %v4599, 0
  %v4681 = vsel %vm97, %v4600, 0
  %v4684 = vsel %vm97, %v4601, 0
  %v4687 = vsel %vm97, %v4602, 0
  %v4690 = vsel %vm97, %v4603, 0
  %v4693 = vsel %vm97, %v4604, 0
  %v4696 = vsel %vm97, %v4605, 0
  %v4699 = vsel %vm97, %v4606, 0
  %v4702 = vsel %vm97, %v4607, 0
  %v4705 = vsel %vm542, %v250, 0
  %4707 = vmatprep.subr.bf16.mxu0 0
  %4708 = vmatpush1.bf16.msra.mxu0 %v4705
  %4709 = vmatprep.subr.bf16.mxu0 0
  %4710 = vmatpush1.bf16.msra.mxu0 0
  %4711 = vmatprep.subr.bf16.mxu0 0
  %4712 = vmatpush1.bf16.msra.mxu0 0
  %4713 = vmatprep.subr.bf16.mxu0 0
  %4714 = vmatpush1.bf16.msra.mxu0 0
  %4715 = vmatprep.subr.bf16.mxu0 0
  %4716 = vmatpush1.bf16.msra.mxu0 0
  %4717 = vmatprep.subr.bf16.mxu0 0
  %4718 = vmatpush1.bf16.msra.mxu0 0
  %4719 = vmatprep.subr.bf16.mxu0 0
  %4720 = vmatpush1.bf16.msra.mxu0 0
  %4721 = vmatprep.subr.bf16.mxu0 0
  %4722 = vmatpush1.bf16.msra.mxu0 0
  %4723 = vmatprep.subr.bf16.mxu0 0
  %4724 = vmatpush1.bf16.msra.mxu0 0
  %4725 = vmatprep.subr.bf16.mxu0 0
  %4726 = vmatpush1.bf16.msra.mxu0 0
  %4727 = vmatprep.subr.bf16.mxu0 0
  %4728 = vmatpush1.bf16.msra.mxu0 0
  %4729 = vmatprep.subr.bf16.mxu0 0
  %4730 = vmatpush1.bf16.msra.mxu0 0
  %4731 = vmatprep.subr.bf16.mxu0 0
  %4732 = vmatpush1.bf16.msra.mxu0 0
  %4733 = vmatprep.subr.bf16.mxu0 0
  %4734 = vmatpush1.bf16.msra.mxu0 0
  %4735 = vmatprep.subr.bf16.mxu0 0
  %4736 = vmatpush1.bf16.msra.mxu0 0
  %4737 = vmatprep.subr.bf16.mxu0 0
  %4738 = vmatpush1.bf16.msra.mxu0 0
  %4739 = vmatprep.mubr.bf16.mxu0 0
  %4740 = vmatmul.mubr.bf16.gmra.mrb[0].mxu0 %v4609
  %v4741 = vpop.f32.mrb[0].mxu0
  %v4742 = vadd.f32 0.0, %v4741
  %v4743 = vpop.f32.mrb[0].mxu0
  %v4744 = vpop.f32.mrb[0].mxu0
  %v4745 = vadd.f32 0.0, %v4744
  %v4746 = vpop.f32.mrb[0].mxu0
  %4747 = vmatprep.mubr.bf16.mxu0 0
  %4748 = vmatmul.mubr.bf16.gmra.mrb[0].mxu0 %v4612
  %v4749 = vpop.f32.mrb[0].mxu0
  %v4750 = vadd.f32 0.0, %v4749
  %v4751 = vpop.f32.mrb[0].mxu0
  %v4752 = vpop.f32.mrb[0].mxu0
  %v4753 = vadd.f32 0.0, %v4752
  %v4754 = vpop.f32.mrb[0].mxu0
  %4755 = vmatprep.mubr.bf16.mxu0 0
  %4756 = vmatmul.mubr.bf16.gmra.mrb[0].mxu0 %v4615
  %v4757 = vpop.f32.mrb[0].mxu0
  %v4758 = vadd.f32 0.0, %v4757
  %v4759 = vpop.f32.mrb[0].mxu0
  %v4760 = vpop.f32.mrb[0].mxu0
  %v4761 = vadd.f32 0.0, %v4760
  %v4762 = vpop.f32.mrb[0].mxu0
  %4763 = vmatprep.mubr.bf16.mxu0 0
  %4764 = vmatmul.mubr.bf16.gmra.mrb[0].mxu0 %v4618
  %v4765 = vpop.f32.mrb[0].mxu0
  %v4766 = vadd.f32 0.0, %v4765
  %v4767 = vpop.f32.mrb[0].mxu0
  %v4768 = vpop.f32.mrb[0].mxu0
  %v4769 = vadd.f32 0.0, %v4768
  %v4770 = vpop.f32.mrb[0].mxu0
  %4771 = vmatprep.mubr.bf16.mxu0 0
  %4772 = vmatmul.mubr.bf16.gmra.mrb[0].mxu0 %v4621
  %v4773 = vpop.f32.mrb[0].mxu0
  %v4774 = vadd.f32 0.0, %v4773
  %v4775 = vpop.f32.mrb[0].mxu0
  %v4776 = vpop.f32.mrb[0].mxu0
  %v4777 = vadd.f32 0.0, %v4776
  %v4778 = vpop.f32.mrb[0].mxu0
  %4779 = vmatprep.mubr.bf16.mxu0 0
  %4780 = vmatmul.mubr.bf16.gmra.mrb[0].mxu0 %v4624
  %v4781 = vpop.f32.mrb[0].mxu0
  %v4782 = vadd.f32 0.0, %v4781
  %v4783 = vpop.f32.mrb[0].mxu0
  %v4784 = vpop.f32.mrb[0].mxu0
  %v4785 = vadd.f32 0.0, %v4784
  %v4786 = vpop.f32.mrb[0].mxu0
  %4787 = vmatprep.mubr.bf16.mxu0 0
  %4788 = vmatmul.mubr.bf16.gmra.mrb[0].mxu0 %v4627
  %v4789 = vpop.f32.mrb[0].mxu0
  %v4790 = vadd.f32 0.0, %v4789
  %v4791 = vpop.f32.mrb[0].mxu0
  %v4792 = vpop.f32.mrb[0].mxu0
  %v4793 = vadd.f32 0.0, %v4792
  %v4794 = vpop.f32.mrb[0].mxu0
  %4795 = vmatprep.mubr.bf16.mxu0 0
  %4796 = vmatmul.mubr.bf16.gmra.mrb[0].mxu0 %v4630
  %v4797 = vpop.f32.mrb[0].mxu0
  %v4798 = vadd.f32 0.0, %v4797
  %v4799 = vpop.f32.mrb[0].mxu0
  %v4800 = vpop.f32.mrb[0].mxu0
  %v4801 = vadd.f32 0.0, %v4800
  %v4802 = vpop.f32.mrb[0].mxu0
  %4803 = vmatprep.mubr.bf16.mxu0 0
  %4804 = vmatmul.mubr.bf16.gmra.mrb[0].mxu0 %v4633
  %v4805 = vpop.f32.mrb[0].mxu0
  %v4806 = vadd.f32 0.0, %v4805
  %v4807 = vpop.f32.mrb[0].mxu0
  %v4808 = vpop.f32.mrb[0].mxu0
  %v4809 = vadd.f32 0.0, %v4808
  %v4810 = vpop.f32.mrb[0].mxu0
  %4811 = vmatprep.mubr.bf16.mxu0 0
  %4812 = vmatmul.mubr.bf16.gmra.mrb[0].mxu0 %v4636
  %v4813 = vpop.f32.mrb[0].mxu0
  %v4814 = vadd.f32 0.0, %v4813
  %v4815 = vpop.f32.mrb[0].mxu0
  %v4816 = vpop.f32.mrb[0].mxu0
  %v4817 = vadd.f32 0.0, %v4816
  %v4818 = vpop.f32.mrb[0].mxu0
  %4819 = vmatprep.mubr.bf16.mxu0 0
  %4820 = vmatmul.mubr.bf16.gmra.mrb[0].mxu0 %v4639
  %v4821 = vpop.f32.mrb[0].mxu0
  %v4822 = vadd.f32 0.0, %v4821
  %v4823 = vpop.f32.mrb[0].mxu0
  %v4824 = vpop.f32.mrb[0].mxu0
  %v4825 = vadd.f32 0.0, %v4824
  %v4826 = vpop.f32.mrb[0].mxu0
  %4827 = vmatprep.mubr.bf16.mxu0 0
  %4828 = vmatmul.mubr.bf16.gmra.mrb[0].mxu0 %v4642
  %v4829 = vpop.f32.mrb[0].mxu0
  %v4830 = vadd.f32 0.0, %v4829
  %v4831 = vpop.f32.mrb[0].mxu0
  %v4832 = vpop.f32.mrb[0].mxu0
  %v4833 = vadd.f32 0.0, %v4832
  %v4834 = vpop.f32.mrb[0].mxu0
  %4835 = vmatprep.mubr.bf16.mxu0 0
  %4836 = vmatmul.mubr.bf16.gmra.mrb[0].mxu0 %v4645
  %v4837 = vpop.f32.mrb[0].mxu0
  %v4838 = vadd.f32 0.0, %v4837
  %v4839 = vpop.f32.mrb[0].mxu0
  %v4840 = vpop.f32.mrb[0].mxu0
  %v4841 = vadd.f32 0.0, %v4840
  %v4842 = vpop.f32.mrb[0].mxu0
  %4843 = vmatprep.mubr.bf16.mxu0 0
  %4844 = vmatmul.mubr.bf16.gmra.mrb[0].mxu0 %v4648
  %v4845 = vpop.f32.mrb[0].mxu0
  %v4846 = vadd.f32 0.0, %v4845
  %v4847 = vpop.f32.mrb[0].mxu0
  %v4848 = vpop.f32.mrb[0].mxu0
  %v4849 = vadd.f32 0.0, %v4848
  %v4850 = vpop.f32.mrb[0].mxu0
  %4851 = vmatprep.mubr.bf16.mxu0 0
  %4852 = vmatmul.mubr.bf16.gmra.mrb[0].mxu0 %v4651
  %v4853 = vpop.f32.mrb[0].mxu0
  %v4854 = vadd.f32 0.0, %v4853
  %v4855 = vpop.f32.mrb[0].mxu0
  %v4856 = vpop.f32.mrb[0].mxu0
  %v4857 = vadd.f32 0.0, %v4856
  %v4858 = vpop.f32.mrb[0].mxu0
  %4859 = vmatprep.mubr.bf16.mxu0 0
  %4860 = vmatmul.mubr.bf16.gmra.mrb[0].mxu0 %v4654
  %v4861 = vpop.f32.mrb[0].mxu0
  %v4862 = vadd.f32 0.0, %v4861
  %v4863 = vpop.f32.mrb[0].mxu0
  %v4864 = vpop.f32.mrb[0].mxu0
  %v4865 = vadd.f32 0.0, %v4864
  %v4866 = vpop.f32.mrb[0].mxu0
  %4867 = vmatprep.mubr.bf16.mxu0 0
  %4868 = vmatmul.mubr.bf16.gmra.mrb[0].mxu0 %v4657
  %v4869 = vpop.f32.mrb[0].mxu0
  %v4870 = vadd.f32 0.0, %v4869
  %v4871 = vpop.f32.mrb[0].mxu0
  %v4872 = vpop.f32.mrb[0].mxu0
  %v4873 = vadd.f32 0.0, %v4872
  %v4874 = vpop.f32.mrb[0].mxu0
  %4875 = vmatprep.mubr.bf16.mxu0 0
  %4876 = vmatmul.mubr.bf16.gmra.mrb[0].mxu0 %v4660
  %v4877 = vpop.f32.mrb[0].mxu0
  %v4878 = vadd.f32 0.0, %v4877
  %v4879 = vpop.f32.mrb[0].mxu0
  %v4880 = vpop.f32.mrb[0].mxu0
  %v4881 = vadd.f32 0.0, %v4880
  %v4882 = vpop.f32.mrb[0].mxu0
  %4883 = vmatprep.mubr.bf16.mxu0 0
  %4884 = vmatmul.mubr.bf16.gmra.mrb[0].mxu0 %v4663
  %v4885 = vpop.f32.mrb[0].mxu0
  %v4886 = vadd.f32 0.0, %v4885
  %v4887 = vpop.f32.mrb[0].mxu0
  %v4888 = vpop.f32.mrb[0].mxu0
  %v4889 = vadd.f32 0.0, %v4888
  %v4890 = vpop.f32.mrb[0].mxu0
  %4891 = vmatprep.mubr.bf16.mxu0 0
  %4892 = vmatmul.mubr.bf16.gmra.mrb[0].mxu0 %v4666
  %v4893 = vpop.f32.mrb[0].mxu0
  %v4894 = vadd.f32 0.0, %v4893
  %v4895 = vpop.f32.mrb[0].mxu0
  %v4896 = vpop.f32.mrb[0].mxu0
  %v4897 = vadd.f32 0.0, %v4896
  %v4898 = vpop.f32.mrb[0].mxu0
  %4899 = vmatprep.mubr.bf16.mxu0 0
  %4900 = vmatmul.mubr.bf16.gmra.mrb[0].mxu0 %v4669
  %v4901 = vpop.f32.mrb[0].mxu0
  %v4902 = vadd.f32 0.0, %v4901
  %v4903 = vpop.f32.mrb[0].mxu0
  %v4904 = vpop.f32.mrb[0].mxu0
  %v4905 = vadd.f32 0.0, %v4904
  %v4906 = vpop.f32.mrb[0].mxu0
  %4907 = vmatprep.mubr.bf16.mxu0 0
  %4908 = vmatmul.mubr.bf16.gmra.mrb[0].mxu0 %v4672
  %v4909 = vpop.f32.mrb[0].mxu0
  %v4910 = vadd.f32 0.0, %v4909
  %v4911 = vpop.f32.mrb[0].mxu0
  %v4912 = vpop.f32.mrb[0].mxu0
  %v4913 = vadd.f32 0.0, %v4912
  %v4914 = vpop.f32.mrb[0].mxu0
  %4915 = vmatprep.mubr.bf16.mxu0 0
  %4916 = vmatmul.mubr.bf16.gmra.mrb[0].mxu0 %v4675
  %v4917 = vpop.f32.mrb[0].mxu0
  %v4918 = vadd.f32 0.0, %v4917
  %v4919 = vpop.f32.mrb[0].mxu0
  %v4920 = vpop.f32.mrb[0].mxu0
  %v4921 = vadd.f32 0.0, %v4920
  %v4922 = vpop.f32.mrb[0].mxu0
  %4923 = vmatprep.mubr.bf16.mxu0 0
  %4924 = vmatmul.mubr.bf16.gmra.mrb[0].mxu0 %v4678
  %v4925 = vpop.f32.mrb[0].mxu0
  %v4926 = vadd.f32 0.0, %v4925
  %v4927 = vpop.f32.mrb[0].mxu0
  %v4928 = vpop.f32.mrb[0].mxu0
  %v4929 = vadd.f32 0.0, %v4928
  %v4930 = vpop.f32.mrb[0].mxu0
  %4931 = vmatprep.mubr.bf16.mxu0 0
  %4932 = vmatmul.mubr.bf16.gmra.mrb[0].mxu0 %v4681
  %v4933 = vpop.f32.mrb[0].mxu0
  %v4934 = vadd.f32 0.0, %v4933
  %v4935 = vpop.f32.mrb[0].mxu0
  %v4936 = vpop.f32.mrb[0].mxu0
  %v4937 = vadd.f32 0.0, %v4936
  %v4938 = vpop.f32.mrb[0].mxu0
  %4939 = vmatprep.mubr.bf16.mxu0 0
  %4940 = vmatmul.mubr.bf16.gmra.mrb[0].mxu0 %v4684
  %v4941 = vpop.f32.mrb[0].mxu0
  %v4942 = vadd.f32 0.0, %v4941
  %v4943 = vpop.f32.mrb[0].mxu0
  %v4944 = vpop.f32.mrb[0].mxu0
  %v4945 = vadd.f32 0.0, %v4944
  %v4946 = vpop.f32.mrb[0].mxu0
  %4947 = vmatprep.mubr.bf16.mxu0 0
  %4948 = vmatmul.mubr.bf16.gmra.mrb[0].mxu0 %v4687
  %v4949 = vpop.f32.mrb[0].mxu0
  %v4950 = vadd.f32 0.0, %v4949
  %v4951 = vpop.f32.mrb[0].mxu0
  %v4952 = vpop.f32.mrb[0].mxu0
  %v4953 = vadd.f32 0.0, %v4952
  %v4954 = vpop.f32.mrb[0].mxu0
  %4955 = vmatprep.mubr.bf16.mxu0 0
  %4956 = vmatmul.mubr.bf16.gmra.mrb[0].mxu0 %v4690
  %v4957 = vpop.f32.mrb[0].mxu0
  %v4958 = vadd.f32 0.0, %v4957
  %v4959 = vpop.f32.mrb[0].mxu0
  %v4960 = vpop.f32.mrb[0].mxu0
  %v4961 = vadd.f32 0.0, %v4960
  %v4962 = vpop.f32.mrb[0].mxu0
  %4963 = vmatprep.mubr.bf16.mxu0 0
  %4964 = vmatmul.mubr.bf16.gmra.mrb[0].mxu0 %v4693
  %v4965 = vpop.f32.mrb[0].mxu0
  %v4966 = vadd.f32 0.0, %v4965
  %v4967 = vpop.f32.mrb[0].mxu0
  %v4968 = vpop.f32.mrb[0].mxu0
  %v4969 = vadd.f32 0.0, %v4968
  %v4970 = vpop.f32.mrb[0].mxu0
  %4971 = vmatprep.mubr.bf16.mxu0 0
  %4972 = vmatmul.mubr.bf16.gmra.mrb[0].mxu0 %v4696
  %v4973 = vpop.f32.mrb[0].mxu0
  %v4974 = vadd.f32 0.0, %v4973
  %v4975 = vpop.f32.mrb[0].mxu0
  %v4976 = vpop.f32.mrb[0].mxu0
  %v4977 = vadd.f32 0.0, %v4976
  %v4978 = vpop.f32.mrb[0].mxu0
  %4979 = vmatprep.mubr.bf16.mxu0 0
  %4980 = vmatmul.mubr.bf16.gmra.mrb[0].mxu0 %v4699
  %v4981 = vpop.f32.mrb[0].mxu0
  %v4982 = vadd.f32 0.0, %v4981
  %v4983 = vpop.f32.mrb[0].mxu0
  %v4984 = vpop.f32.mrb[0].mxu0
  %v4985 = vadd.f32 0.0, %v4984
  %v4986 = vpop.f32.mrb[0].mxu0
  %4987 = vmatprep.mubr.bf16.mxu0 0
  %4988 = vmatmul.mubr.bf16.gmra.mrb[0].mxu0 %v4702
  %v4989 = vpop.f32.mrb[0].mxu0
  %v4990 = vadd.f32 0.0, %v4989
  %v4991 = vpop.f32.mrb[0].mxu0
  %v4992 = vpop.f32.mrb[0].mxu0
  %v4993 = vadd.f32 0.0, %v4992
  %v4994 = vpop.f32.mrb[0].mxu0
  %4995 = vdwg.mxu0
  %v4996 = vadd.f32 %v4448, %v4742
  %v4997 = vadd.f32 %v4449, %v4745
  %v4998 = vadd.f32 %v4450, %v4750
  %v4999 = vadd.f32 %v4451, %v4753
  %v5000 = vadd.f32 %v4452, %v4758
  %v5001 = vadd.f32 %v4453, %v4761
  %v5002 = vadd.f32 %v4454, %v4766
  %v5003 = vadd.f32 %v4455, %v4769
  %v5004 = vadd.f32 %v4456, %v4774
  %v5005 = vadd.f32 %v4457, %v4777
  %v5006 = vadd.f32 %v4458, %v4782
  %v5007 = vadd.f32 %v4459, %v4785
  %v5008 = vadd.f32 %v4460, %v4790
  %v5009 = vadd.f32 %v4461, %v4793
  %v5010 = vadd.f32 %v4462, %v4798
  %v5011 = vadd.f32 %v4463, %v4801
  %v5012 = vadd.f32 %v4464, %v4806
  %v5013 = vadd.f32 %v4465, %v4809
  %v5014 = vadd.f32 %v4466, %v4814
  %v5015 = vadd.f32 %v4467, %v4817
  %v5016 = vadd.f32 %v4468, %v4822
  %v5017 = vadd.f32 %v4469, %v4825
  %v5018 = vadd.f32 %v4470, %v4830
  %v5019 = vadd.f32 %v4471, %v4833
  %v5020 = vadd.f32 %v4472, %v4838
  %v5021 = vadd.f32 %v4473, %v4841
  %v5022 = vadd.f32 %v4474, %v4846
  %v5023 = vadd.f32 %v4475, %v4849
  %v5024 = vadd.f32 %v4476, %v4854
  %v5025 = vadd.f32 %v4477, %v4857
  %v5026 = vadd.f32 %v4478, %v4862
  %v5027 = vadd.f32 %v4479, %v4865
  %v5028 = vadd.f32 %v4480, %v4870
  %v5029 = vadd.f32 %v4481, %v4873
  %v5030 = vadd.f32 %v4482, %v4878
  %v5031 = vadd.f32 %v4483, %v4881
  %v5032 = vadd.f32 %v4484, %v4886
  %v5033 = vadd.f32 %v4485, %v4889
  %v5034 = vadd.f32 %v4486, %v4894
  %v5035 = vadd.f32 %v4487, %v4897
  %v5036 = vadd.f32 %v4488, %v4902
  %v5037 = vadd.f32 %v4489, %v4905
  %v5038 = vadd.f32 %v4490, %v4910
  %v5039 = vadd.f32 %v4491, %v4913
  %v5040 = vadd.f32 %v4492, %v4918
  %v5041 = vadd.f32 %v4493, %v4921
  %v5042 = vadd.f32 %v4494, %v4926
  %v5043 = vadd.f32 %v4495, %v4929
  %v5044 = vadd.f32 %v4496, %v4934
  %v5045 = vadd.f32 %v4497, %v4937
  %v5046 = vadd.f32 %v4498, %v4942
  %v5047 = vadd.f32 %v4499, %v4945
  %v5048 = vadd.f32 %v4500, %v4950
  %v5049 = vadd.f32 %v4501, %v4953
  %v5050 = vadd.f32 %v4502, %v4958
  %v5051 = vadd.f32 %v4503, %v4961
  %v5052 = vadd.f32 %v4504, %v4966
  %v5053 = vadd.f32 %v4505, %v4969
  %v5054 = vadd.f32 %v4506, %v4974
  %v5055 = vadd.f32 %v4507, %v4977
  %v5056 = vadd.f32 %v4508, %v4982
  %v5057 = vadd.f32 %v4509, %v4985
  %v5058 = vadd.f32 %v4510, %v4990
  %v5059 = vadd.f32 %v4511, %v4993
  %v5061 = vlaneseq
  %v5062 = vshrl.u32 %v5061, 7
  %v5063 = vsub.s32 0, %v5062
  %v5064 = vrot.slane %v251, %v5063
  %v5066 = vadd.f32 %v4996, %v5064
  %v5067 = vadd.f32 %v4997, %v5064
  %v5068 = vadd.f32 %v4998, %v5064
  %v5069 = vadd.f32 %v4999, %v5064
  %v5070 = vadd.f32 %v5000, %v5064
  %v5071 = vadd.f32 %v5001, %v5064
  %v5072 = vadd.f32 %v5002, %v5064
  %v5073 = vadd.f32 %v5003, %v5064
  %v5074 = vadd.f32 %v5004, %v5064
  %v5075 = vadd.f32 %v5005, %v5064
  %v5076 = vadd.f32 %v5006, %v5064
  %v5077 = vadd.f32 %v5007, %v5064
  %v5078 = vadd.f32 %v5008, %v5064
  %v5079 = vadd.f32 %v5009, %v5064
  %v5080 = vadd.f32 %v5010, %v5064
  %v5081 = vadd.f32 %v5011, %v5064
  %v5082 = vadd.f32 %v5012, %v5064
  %v5083 = vadd.f32 %v5013, %v5064
  %v5084 = vadd.f32 %v5014, %v5064
  %v5085 = vadd.f32 %v5015, %v5064
  %v5086 = vadd.f32 %v5016, %v5064
  %v5087 = vadd.f32 %v5017, %v5064
  %v5088 = vadd.f32 %v5018, %v5064
  %v5089 = vadd.f32 %v5019, %v5064
  %v5090 = vadd.f32 %v5020, %v5064
  %v5091 = vadd.f32 %v5021, %v5064
  %v5092 = vadd.f32 %v5022, %v5064
  %v5093 = vadd.f32 %v5023, %v5064
  %v5094 = vadd.f32 %v5024, %v5064
  %v5095 = vadd.f32 %v5025, %v5064
  %v5096 = vadd.f32 %v5026, %v5064
  %v5097 = vadd.f32 %v5027, %v5064
  %v5098 = vadd.f32 %v5028, %v5064
  %v5099 = vadd.f32 %v5029, %v5064
  %v5100 = vadd.f32 %v5030, %v5064
  %v5101 = vadd.f32 %v5031, %v5064
  %v5102 = vadd.f32 %v5032, %v5064
  %v5103 = vadd.f32 %v5033, %v5064
  %v5104 = vadd.f32 %v5034, %v5064
  %v5105 = vadd.f32 %v5035, %v5064
  %v5106 = vadd.f32 %v5036, %v5064
  %v5107 = vadd.f32 %v5037, %v5064
  %v5108 = vadd.f32 %v5038, %v5064
  %v5109 = vadd.f32 %v5039, %v5064
  %v5110 = vadd.f32 %v5040, %v5064
  %v5111 = vadd.f32 %v5041, %v5064
  %v5112 = vadd.f32 %v5042, %v5064
  %v5113 = vadd.f32 %v5043, %v5064
  %v5114 = vadd.f32 %v5044, %v5064
  %v5115 = vadd.f32 %v5045, %v5064
  %v5116 = vadd.f32 %v5046, %v5064
  %v5117 = vadd.f32 %v5047, %v5064
  %v5118 = vadd.f32 %v5048, %v5064
  %v5119 = vadd.f32 %v5049, %v5064
  %v5120 = vadd.f32 %v5050, %v5064
  %v5121 = vadd.f32 %v5051, %v5064
  %v5122 = vadd.f32 %v5052, %v5064
  %v5123 = vadd.f32 %v5053, %v5064
  %v5124 = vadd.f32 %v5054, %v5064
  %v5125 = vadd.f32 %v5055, %v5064
  %v5126 = vadd.f32 %v5056, %v5064
  %v5127 = vadd.f32 %v5057, %v5064
  %v5128 = vadd.f32 %v5058, %v5064
  %v5129 = vadd.f32 %v5059, %v5064
  %v5130 = vmax.f32 %v5066, 0.0
  %v5131 = vmax.f32 %v5067, 0.0
  %v5132 = vmax.f32 %v5068, 0.0
  %v5133 = vmax.f32 %v5069, 0.0
  %v5134 = vmax.f32 %v5070, 0.0
  %v5135 = vmax.f32 %v5071, 0.0
  %v5136 = vmax.f32 %v5072, 0.0
  %v5137 = vmax.f32 %v5073, 0.0
  %v5138 = vmax.f32 %v5074, 0.0
  %v5139 = vmax.f32 %v5075, 0.0
  %v5140 = vmax.f32 %v5076, 0.0
  %v5141 = vmax.f32 %v5077, 0.0
  %v5142 = vmax.f32 %v5078, 0.0
  %v5143 = vmax.f32 %v5079, 0.0
  %v5144 = vmax.f32 %v5080, 0.0
  %v5145 = vmax.f32 %v5081, 0.0
  %v5146 = vmax.f32 %v5082, 0.0
  %v5147 = vmax.f32 %v5083, 0.0
  %v5148 = vmax.f32 %v5084, 0.0
  %v5149 = vmax.f32 %v5085, 0.0
  %v5150 = vmax.f32 %v5086, 0.0
  %v5151 = vmax.f32 %v5087, 0.0
  %v5152 = vmax.f32 %v5088, 0.0
  %v5153 = vmax.f32 %v5089, 0.0
  %v5154 = vmax.f32 %v5090, 0.0
  %v5155 = vmax.f32 %v5091, 0.0
  %v5156 = vmax.f32 %v5092, 0.0
  %v5157 = vmax.f32 %v5093, 0.0
  %v5158 = vmax.f32 %v5094, 0.0
  %v5159 = vmax.f32 %v5095, 0.0
  %v5160 = vmax.f32 %v5096, 0.0
  %v5161 = vmax.f32 %v5097, 0.0
  %v5162 = vmax.f32 %v5098, 0.0
  %v5163 = vmax.f32 %v5099, 0.0
  %v5164 = vmax.f32 %v5100, 0.0
  %v5165 = vmax.f32 %v5101, 0.0
  %v5166 = vmax.f32 %v5102, 0.0
  %v5167 = vmax.f32 %v5103, 0.0
  %v5168 = vmax.f32 %v5104, 0.0
  %v5169 = vmax.f32 %v5105, 0.0
  %v5170 = vmax.f32 %v5106, 0.0
  %v5171 = vmax.f32 %v5107, 0.0
  %v5172 = vmax.f32 %v5108, 0.0
  %v5173 = vmax.f32 %v5109, 0.0
  %v5174 = vmax.f32 %v5110, 0.0
  %v5175 = vmax.f32 %v5111, 0.0
  %v5176 = vmax.f32 %v5112, 0.0
  %v5177 = vmax.f32 %v5113, 0.0
  %v5178 = vmax.f32 %v5114, 0.0
  %v5179 = vmax.f32 %v5115, 0.0
  %v5180 = vmax.f32 %v5116, 0.0
  %v5181 = vmax.f32 %v5117, 0.0
  %v5182 = vmax.f32 %v5118, 0.0
  %v5183 = vmax.f32 %v5119, 0.0
  %v5184 = vmax.f32 %v5120, 0.0
  %v5185 = vmax.f32 %v5121, 0.0
  %v5186 = vmax.f32 %v5122, 0.0
  %v5187 = vmax.f32 %v5123, 0.0
  %v5188 = vmax.f32 %v5124, 0.0
  %v5189 = vmax.f32 %v5125, 0.0
  %v5190 = vmax.f32 %v5126, 0.0
  %v5191 = vmax.f32 %v5127, 0.0
  %v5192 = vmax.f32 %v5128, 0.0
  %v5193 = vmax.f32 %v5129, 0.0
  %vm5194 = vcmask 64512
  %v5195 = vsel %vm5194, %v5130, 0.0
  %v5196 = vsel %vm5194, %v5131, 0.0
  %v5197 = vadd.f32 %v5195, %v5196
  %v5198 = vsel %vm5194, %v5132, 0.0
  %v5199 = vadd.f32 %v5197, %v5198
  %v5200 = vsel %vm5194, %v5133, 0.0
  %v5201 = vadd.f32 %v5199, %v5200
  %v5202 = vsel %vm5194, %v5134, 0.0
  %v5203 = vadd.f32 %v5201, %v5202
  %v5204 = vsel %vm5194, %v5135, 0.0
  %v5205 = vadd.f32 %v5203, %v5204
  %v5206 = vsel %vm5194, %v5136, 0.0
  %v5207 = vadd.f32 %v5205, %v5206
  %v5208 = vsel %vm5194, %v5137, 0.0
  %v5209 = vadd.f32 %v5207, %v5208
  %v5210 = vsel %vm5194, %v5138, 0.0
  %v5211 = vadd.f32 %v5209, %v5210
  %v5212 = vsel %vm5194, %v5139, 0.0
  %v5213 = vadd.f32 %v5211, %v5212
  %v5214 = vsel %vm5194, %v5140, 0.0
  %v5215 = vadd.f32 %v5213, %v5214
  %v5216 = vsel %vm5194, %v5141, 0.0
  %v5217 = vadd.f32 %v5215, %v5216
  %v5218 = vsel %vm5194, %v5142, 0.0
  %v5219 = vadd.f32 %v5217, %v5218
  %v5220 = vsel %vm5194, %v5143, 0.0
  %v5221 = vadd.f32 %v5219, %v5220
  %v5222 = vsel %vm5194, %v5144, 0.0
  %v5223 = vadd.f32 %v5221, %v5222
  %v5224 = vsel %vm5194, %v5145, 0.0
  %v5225 = vadd.f32 %v5223, %v5224
  %v5226 = vsel %vm5194, %v5146, 0.0
  %v5227 = vadd.f32 %v5225, %v5226
  %v5228 = vsel %vm5194, %v5147, 0.0
  %v5229 = vadd.f32 %v5227, %v5228
  %v5230 = vsel %vm5194, %v5148, 0.0
  %v5231 = vadd.f32 %v5229, %v5230
  %v5232 = vsel %vm5194, %v5149, 0.0
  %v5233 = vadd.f32 %v5231, %v5232
  %v5234 = vsel %vm5194, %v5150, 0.0
  %v5235 = vadd.f32 %v5233, %v5234
  %v5236 = vsel %vm5194, %v5151, 0.0
  %v5237 = vadd.f32 %v5235, %v5236
  %v5238 = vsel %vm5194, %v5152, 0.0
  %v5239 = vadd.f32 %v5237, %v5238
  %v5240 = vsel %vm5194, %v5153, 0.0
  %v5241 = vadd.f32 %v5239, %v5240
  %v5242 = vsel %vm5194, %v5154, 0.0
  %v5243 = vadd.f32 %v5241, %v5242
  %v5244 = vsel %vm5194, %v5155, 0.0
  %v5245 = vadd.f32 %v5243, %v5244
  %v5246 = vsel %vm5194, %v5156, 0.0
  %v5247 = vadd.f32 %v5245, %v5246
  %v5248 = vsel %vm5194, %v5157, 0.0
  %v5249 = vadd.f32 %v5247, %v5248
  %v5250 = vsel %vm5194, %v5158, 0.0
  %v5251 = vadd.f32 %v5249, %v5250
  %v5252 = vsel %vm5194, %v5159, 0.0
  %v5253 = vadd.f32 %v5251, %v5252
  %v5254 = vsel %vm5194, %v5160, 0.0
  %v5255 = vadd.f32 %v5253, %v5254
  %v5256 = vsel %vm5194, %v5161, 0.0
  %v5257 = vadd.f32 %v5255, %v5256
  %v5258 = vsel %vm5194, %v5162, 0.0
  %v5259 = vadd.f32 %v5257, %v5258
  %v5260 = vsel %vm5194, %v5163, 0.0
  %v5261 = vadd.f32 %v5259, %v5260
  %v5262 = vsel %vm5194, %v5164, 0.0
  %v5263 = vadd.f32 %v5261, %v5262
  %v5264 = vsel %vm5194, %v5165, 0.0
  %v5265 = vadd.f32 %v5263, %v5264
  %v5266 = vsel %vm5194, %v5166, 0.0
  %v5267 = vadd.f32 %v5265, %v5266
  %v5268 = vsel %vm5194, %v5167, 0.0
  %v5269 = vadd.f32 %v5267, %v5268
  %v5270 = vsel %vm5194, %v5168, 0.0
  %v5271 = vadd.f32 %v5269, %v5270
  %v5272 = vsel %vm5194, %v5169, 0.0
  %v5273 = vadd.f32 %v5271, %v5272
  %v5274 = vsel %vm5194, %v5170, 0.0
  %v5275 = vadd.f32 %v5273, %v5274
  %v5276 = vsel %vm5194, %v5171, 0.0
  %v5277 = vadd.f32 %v5275, %v5276
  %v5278 = vsel %vm5194, %v5172, 0.0
  %v5279 = vadd.f32 %v5277, %v5278
  %v5280 = vsel %vm5194, %v5173, 0.0
  %v5281 = vadd.f32 %v5279, %v5280
  %v5282 = vsel %vm5194, %v5174, 0.0
  %v5283 = vadd.f32 %v5281, %v5282
  %v5284 = vsel %vm5194, %v5175, 0.0
  %v5285 = vadd.f32 %v5283, %v5284
  %v5286 = vsel %vm5194, %v5176, 0.0
  %v5287 = vadd.f32 %v5285, %v5286
  %v5288 = vsel %vm5194, %v5177, 0.0
  %v5289 = vadd.f32 %v5287, %v5288
  %v5290 = vsel %vm5194, %v5178, 0.0
  %v5291 = vadd.f32 %v5289, %v5290
  %v5292 = vsel %vm5194, %v5179, 0.0
  %v5293 = vadd.f32 %v5291, %v5292
  %v5294 = vsel %vm5194, %v5180, 0.0
  %v5295 = vadd.f32 %v5293, %v5294
  %v5296 = vsel %vm5194, %v5181, 0.0
  %v5297 = vadd.f32 %v5295, %v5296
  %v5298 = vsel %vm5194, %v5182, 0.0
  %v5299 = vadd.f32 %v5297, %v5298
  %v5300 = vsel %vm5194, %v5183, 0.0
  %v5301 = vadd.f32 %v5299, %v5300
  %v5302 = vsel %vm5194, %v5184, 0.0
  %v5303 = vadd.f32 %v5301, %v5302
  %v5304 = vsel %vm5194, %v5185, 0.0
  %v5305 = vadd.f32 %v5303, %v5304
  %v5306 = vsel %vm5194, %v5186, 0.0
  %v5307 = vadd.f32 %v5305, %v5306
  %v5308 = vsel %vm5194, %v5187, 0.0
  %v5309 = vadd.f32 %v5307, %v5308
  %v5310 = vsel %vm5194, %v5188, 0.0
  %v5311 = vadd.f32 %v5309, %v5310
  %v5312 = vsel %vm5194, %v5189, 0.0
  %v5313 = vadd.f32 %v5311, %v5312
  %v5314 = vsel %vm5194, %v5190, 0.0
  %v5315 = vadd.f32 %v5313, %v5314
  %v5316 = vsel %vm5194, %v5191, 0.0
  %v5317 = vadd.f32 %v5315, %v5316
  %v5318 = vsel %vm5194, %v5192, 0.0
  %v5319 = vadd.f32 %v5317, %v5318
  %v5320 = vsel %vm5194, %v5193, 0.0
  %v5321 = vadd.f32 %v5319, %v5320
  %v5322 = vrot.slane %v5321, 4
  %v5323 = vadd.f32 %v5321, %v5322
  %v5324 = vrot.slane %v5323, 2
  %v5325 = vadd.f32 %v5323, %v5324
  %v5326 = vrot.slane %v5325, 1
  %v5327 = vadd.f32 %v5325, %v5326
  %v5328 = vmul.f32 %v5327, 0.001953125
  %v5329 = vsub.f32 %v5130, %v5328
  %v5330 = vsub.f32 %v5131, %v5328
  %v5331 = vsub.f32 %v5132, %v5328
  %v5332 = vsub.f32 %v5133, %v5328
  %v5333 = vsub.f32 %v5134, %v5328
  %v5334 = vsub.f32 %v5135, %v5328
  %v5335 = vsub.f32 %v5136, %v5328
  %v5336 = vsub.f32 %v5137, %v5328
  %v5337 = vsub.f32 %v5138, %v5328
  %v5338 = vsub.f32 %v5139, %v5328
  %v5339 = vsub.f32 %v5140, %v5328
  %v5340 = vsub.f32 %v5141, %v5328
  %v5341 = vsub.f32 %v5142, %v5328
  %v5342 = vsub.f32 %v5143, %v5328
  %v5343 = vsub.f32 %v5144, %v5328
  %v5344 = vsub.f32 %v5145, %v5328
  %v5345 = vsub.f32 %v5146, %v5328
  %v5346 = vsub.f32 %v5147, %v5328
  %v5347 = vsub.f32 %v5148, %v5328
  %v5348 = vsub.f32 %v5149, %v5328
  %v5349 = vsub.f32 %v5150, %v5328
  %v5350 = vsub.f32 %v5151, %v5328
  %v5351 = vsub.f32 %v5152, %v5328
  %v5352 = vsub.f32 %v5153, %v5328
  %v5353 = vsub.f32 %v5154, %v5328
  %v5354 = vsub.f32 %v5155, %v5328
  %v5355 = vsub.f32 %v5156, %v5328
  %v5356 = vsub.f32 %v5157, %v5328
  %v5357 = vsub.f32 %v5158, %v5328
  %v5358 = vsub.f32 %v5159, %v5328
  %v5359 = vsub.f32 %v5160, %v5328
  %v5360 = vsub.f32 %v5161, %v5328
  %v5361 = vsub.f32 %v5162, %v5328
  %v5362 = vsub.f32 %v5163, %v5328
  %v5363 = vsub.f32 %v5164, %v5328
  %v5364 = vsub.f32 %v5165, %v5328
  %v5365 = vsub.f32 %v5166, %v5328
  %v5366 = vsub.f32 %v5167, %v5328
  %v5367 = vsub.f32 %v5168, %v5328
  %v5368 = vsub.f32 %v5169, %v5328
  %v5369 = vsub.f32 %v5170, %v5328
  %v5370 = vsub.f32 %v5171, %v5328
  %v5371 = vsub.f32 %v5172, %v5328
  %v5372 = vsub.f32 %v5173, %v5328
  %v5373 = vsub.f32 %v5174, %v5328
  %v5374 = vsub.f32 %v5175, %v5328
  %v5375 = vsub.f32 %v5176, %v5328
  %v5376 = vsub.f32 %v5177, %v5328
  %v5377 = vsub.f32 %v5178, %v5328
  %v5378 = vsub.f32 %v5179, %v5328
  %v5379 = vsub.f32 %v5180, %v5328
  %v5380 = vsub.f32 %v5181, %v5328
  %v5381 = vsub.f32 %v5182, %v5328
  %v5382 = vsub.f32 %v5183, %v5328
  %v5383 = vsub.f32 %v5184, %v5328
  %v5384 = vsub.f32 %v5185, %v5328
  %v5385 = vsub.f32 %v5186, %v5328
  %v5386 = vsub.f32 %v5187, %v5328
  %v5387 = vsub.f32 %v5188, %v5328
  %v5388 = vsub.f32 %v5189, %v5328
  %v5389 = vsub.f32 %v5190, %v5328
  %v5390 = vsub.f32 %v5191, %v5328
  %v5391 = vsub.f32 %v5192, %v5328
  %v5392 = vsub.f32 %v5193, %v5328
  %v5393 = vmul.f32 %v5329, %v5329
  %v5394 = vmul.f32 %v5330, %v5330
  %v5395 = vmul.f32 %v5331, %v5331
  %v5396 = vmul.f32 %v5332, %v5332
  %v5397 = vmul.f32 %v5333, %v5333
  %v5398 = vmul.f32 %v5334, %v5334
  %v5399 = vmul.f32 %v5335, %v5335
  %v5400 = vmul.f32 %v5336, %v5336
  %v5401 = vmul.f32 %v5337, %v5337
  %v5402 = vmul.f32 %v5338, %v5338
  %v5403 = vmul.f32 %v5339, %v5339
  %v5404 = vmul.f32 %v5340, %v5340
  %v5405 = vmul.f32 %v5341, %v5341
  %v5406 = vmul.f32 %v5342, %v5342
  %v5407 = vmul.f32 %v5343, %v5343
  %v5408 = vmul.f32 %v5344, %v5344
  %v5409 = vmul.f32 %v5345, %v5345
  %v5410 = vmul.f32 %v5346, %v5346
  %v5411 = vmul.f32 %v5347, %v5347
  %v5412 = vmul.f32 %v5348, %v5348
  %v5413 = vmul.f32 %v5349, %v5349
  %v5414 = vmul.f32 %v5350, %v5350
  %v5415 = vmul.f32 %v5351, %v5351
  %v5416 = vmul.f32 %v5352, %v5352
  %v5417 = vmul.f32 %v5353, %v5353
  %v5418 = vmul.f32 %v5354, %v5354
  %v5419 = vmul.f32 %v5355, %v5355
  %v5420 = vmul.f32 %v5356, %v5356
  %v5421 = vmul.f32 %v5357, %v5357
  %v5422 = vmul.f32 %v5358, %v5358
  %v5423 = vmul.f32 %v5359, %v5359
  %v5424 = vmul.f32 %v5360, %v5360
  %v5425 = vmul.f32 %v5361, %v5361
  %v5426 = vmul.f32 %v5362, %v5362
  %v5427 = vmul.f32 %v5363, %v5363
  %v5428 = vmul.f32 %v5364, %v5364
  %v5429 = vmul.f32 %v5365, %v5365
  %v5430 = vmul.f32 %v5366, %v5366
  %v5431 = vmul.f32 %v5367, %v5367
  %v5432 = vmul.f32 %v5368, %v5368
  %v5433 = vmul.f32 %v5369, %v5369
  %v5434 = vmul.f32 %v5370, %v5370
  %v5435 = vmul.f32 %v5371, %v5371
  %v5436 = vmul.f32 %v5372, %v5372
  %v5437 = vmul.f32 %v5373, %v5373
  %v5438 = vmul.f32 %v5374, %v5374
  %v5439 = vmul.f32 %v5375, %v5375
  %v5440 = vmul.f32 %v5376, %v5376
  %v5441 = vmul.f32 %v5377, %v5377
  %v5442 = vmul.f32 %v5378, %v5378
  %v5443 = vmul.f32 %v5379, %v5379
  %v5444 = vmul.f32 %v5380, %v5380
  %v5445 = vmul.f32 %v5381, %v5381
  %v5446 = vmul.f32 %v5382, %v5382
  %v5447 = vmul.f32 %v5383, %v5383
  %v5448 = vmul.f32 %v5384, %v5384
  %v5449 = vmul.f32 %v5385, %v5385
  %v5450 = vmul.f32 %v5386, %v5386
  %v5451 = vmul.f32 %v5387, %v5387
  %v5452 = vmul.f32 %v5388, %v5388
  %v5453 = vmul.f32 %v5389, %v5389
  %v5454 = vmul.f32 %v5390, %v5390
  %v5455 = vmul.f32 %v5391, %v5391
  %v5456 = vmul.f32 %v5392, %v5392
  %v5457 = vsel %vm5194, %v5393, 0.0
  %v5458 = vsel %vm5194, %v5394, 0.0
  %v5459 = vadd.f32 %v5457, %v5458
  %v5460 = vsel %vm5194, %v5395, 0.0
  %v5461 = vadd.f32 %v5459, %v5460
  %v5462 = vsel %vm5194, %v5396, 0.0
  %v5463 = vadd.f32 %v5461, %v5462
  %v5464 = vsel %vm5194, %v5397, 0.0
  %v5465 = vadd.f32 %v5463, %v5464
  %v5466 = vsel %vm5194, %v5398, 0.0
  %v5467 = vadd.f32 %v5465, %v5466
  %v5468 = vsel %vm5194, %v5399, 0.0
  %v5469 = vadd.f32 %v5467, %v5468
  %v5470 = vsel %vm5194, %v5400, 0.0
  %v5471 = vadd.f32 %v5469, %v5470
  %v5472 = vsel %vm5194, %v5401, 0.0
  %v5473 = vadd.f32 %v5471, %v5472
  %v5474 = vsel %vm5194, %v5402, 0.0
  %v5475 = vadd.f32 %v5473, %v5474
  %v5476 = vsel %vm5194, %v5403, 0.0
  %v5477 = vadd.f32 %v5475, %v5476
  %v5478 = vsel %vm5194, %v5404, 0.0
  %v5479 = vadd.f32 %v5477, %v5478
  %v5480 = vsel %vm5194, %v5405, 0.0
  %v5481 = vadd.f32 %v5479, %v5480
  %v5482 = vsel %vm5194, %v5406, 0.0
  %v5483 = vadd.f32 %v5481, %v5482
  %v5484 = vsel %vm5194, %v5407, 0.0
  %v5485 = vadd.f32 %v5483, %v5484
  %v5486 = vsel %vm5194, %v5408, 0.0
  %v5487 = vadd.f32 %v5485, %v5486
  %v5488 = vsel %vm5194, %v5409, 0.0
  %v5489 = vadd.f32 %v5487, %v5488
  %v5490 = vsel %vm5194, %v5410, 0.0
  %v5491 = vadd.f32 %v5489, %v5490
  %v5492 = vsel %vm5194, %v5411, 0.0
  %v5493 = vadd.f32 %v5491, %v5492
  %v5494 = vsel %vm5194, %v5412, 0.0
  %v5495 = vadd.f32 %v5493, %v5494
  %v5496 = vsel %vm5194, %v5413, 0.0
  %v5497 = vadd.f32 %v5495, %v5496
  %v5498 = vsel %vm5194, %v5414, 0.0
  %v5499 = vadd.f32 %v5497, %v5498
  %v5500 = vsel %vm5194, %v5415, 0.0
  %v5501 = vadd.f32 %v5499, %v5500
  %v5502 = vsel %vm5194, %v5416, 0.0
  %v5503 = vadd.f32 %v5501, %v5502
  %v5504 = vsel %vm5194, %v5417, 0.0
  %v5505 = vadd.f32 %v5503, %v5504
  %v5506 = vsel %vm5194, %v5418, 0.0
  %v5507 = vadd.f32 %v5505, %v5506
  %v5508 = vsel %vm5194, %v5419, 0.0
  %v5509 = vadd.f32 %v5507, %v5508
  %v5510 = vsel %vm5194, %v5420, 0.0
  %v5511 = vadd.f32 %v5509, %v5510
  %v5512 = vsel %vm5194, %v5421, 0.0
  %v5513 = vadd.f32 %v5511, %v5512
  %v5514 = vsel %vm5194, %v5422, 0.0
  %v5515 = vadd.f32 %v5513, %v5514
  %v5516 = vsel %vm5194, %v5423, 0.0
  %v5517 = vadd.f32 %v5515, %v5516
  %v5518 = vsel %vm5194, %v5424, 0.0
  %v5519 = vadd.f32 %v5517, %v5518
  %v5520 = vsel %vm5194, %v5425, 0.0
  %v5521 = vadd.f32 %v5519, %v5520
  %v5522 = vsel %vm5194, %v5426, 0.0
  %v5523 = vadd.f32 %v5521, %v5522
  %v5524 = vsel %vm5194, %v5427, 0.0
  %v5525 = vadd.f32 %v5523, %v5524
  %v5526 = vsel %vm5194, %v5428, 0.0
  %v5527 = vadd.f32 %v5525, %v5526
  %v5528 = vsel %vm5194, %v5429, 0.0
  %v5529 = vadd.f32 %v5527, %v5528
  %v5530 = vsel %vm5194, %v5430, 0.0
  %v5531 = vadd.f32 %v5529, %v5530
  %v5532 = vsel %vm5194, %v5431, 0.0
  %v5533 = vadd.f32 %v5531, %v5532
  %v5534 = vsel %vm5194, %v5432, 0.0
  %v5535 = vadd.f32 %v5533, %v5534
  %v5536 = vsel %vm5194, %v5433, 0.0
  %v5537 = vadd.f32 %v5535, %v5536
  %v5538 = vsel %vm5194, %v5434, 0.0
  %v5539 = vadd.f32 %v5537, %v5538
  %v5540 = vsel %vm5194, %v5435, 0.0
  %v5541 = vadd.f32 %v5539, %v5540
  %v5542 = vsel %vm5194, %v5436, 0.0
  %v5543 = vadd.f32 %v5541, %v5542
  %v5544 = vsel %vm5194, %v5437, 0.0
  %v5545 = vadd.f32 %v5543, %v5544
  %v5546 = vsel %vm5194, %v5438, 0.0
  %v5547 = vadd.f32 %v5545, %v5546
  %v5548 = vsel %vm5194, %v5439, 0.0
  %v5549 = vadd.f32 %v5547, %v5548
  %v5550 = vsel %vm5194, %v5440, 0.0
  %v5551 = vadd.f32 %v5549, %v5550
  %v5552 = vsel %vm5194, %v5441, 0.0
  %v5553 = vadd.f32 %v5551, %v5552
  %v5554 = vsel %vm5194, %v5442, 0.0
  %v5555 = vadd.f32 %v5553, %v5554
  %v5556 = vsel %vm5194, %v5443, 0.0
  %v5557 = vadd.f32 %v5555, %v5556
  %v5558 = vsel %vm5194, %v5444, 0.0
  %v5559 = vadd.f32 %v5557, %v5558
  %v5560 = vsel %vm5194, %v5445, 0.0
  %v5561 = vadd.f32 %v5559, %v5560
  %v5562 = vsel %vm5194, %v5446, 0.0
  %v5563 = vadd.f32 %v5561, %v5562
  %v5564 = vsel %vm5194, %v5447, 0.0
  %v5565 = vadd.f32 %v5563, %v5564
  %v5566 = vsel %vm5194, %v5448, 0.0
  %v5567 = vadd.f32 %v5565, %v5566
  %v5568 = vsel %vm5194, %v5449, 0.0
  %v5569 = vadd.f32 %v5567, %v5568
  %v5570 = vsel %vm5194, %v5450, 0.0
  %v5571 = vadd.f32 %v5569, %v5570
  %v5572 = vsel %vm5194, %v5451, 0.0
  %v5573 = vadd.f32 %v5571, %v5572
  %v5574 = vsel %vm5194, %v5452, 0.0
  %v5575 = vadd.f32 %v5573, %v5574
  %v5576 = vsel %vm5194, %v5453, 0.0
  %v5577 = vadd.f32 %v5575, %v5576
  %v5578 = vsel %vm5194, %v5454, 0.0
  %v5579 = vadd.f32 %v5577, %v5578
  %v5580 = vsel %vm5194, %v5455, 0.0
  %v5581 = vadd.f32 %v5579, %v5580
  %v5582 = vsel %vm5194, %v5456, 0.0
  %v5583 = vadd.f32 %v5581, %v5582
  %v5584 = vrot.slane %v5583, 4
  %v5585 = vadd.f32 %v5583, %v5584
  %v5586 = vrot.slane %v5585, 2
  %v5587 = vadd.f32 %v5585, %v5586
  %v5588 = vrot.slane %v5587, 1
  %v5589 = vadd.f32 %v5587, %v5588
  %v5590 = vmul.f32 %v5589, 0.001953125
  %v5591 = vadd.f32 %v5590, 1e-05
  %v5592 = vrsqrt.pop %v5591
  %v5593 = vmul.f32 %v252, %v5592
  %v5595 = vlaneseq
  %v5596 = vshrl.u32 %v5595, 7
  %v5597 = vsub.s32 0, %v5596
  %v5598 = vrot.slane %v5593, %v5597
  %v5600 = vmul.f32 %v5329, %v5598
  %v5601 = vmul.f32 %v5330, %v5598
  %v5602 = vmul.f32 %v5331, %v5598
  %v5603 = vmul.f32 %v5332, %v5598
  %v5604 = vmul.f32 %v5333, %v5598
  %v5605 = vmul.f32 %v5334, %v5598
  %v5606 = vmul.f32 %v5335, %v5598
  %v5607 = vmul.f32 %v5336, %v5598
  %v5608 = vmul.f32 %v5337, %v5598
  %v5609 = vmul.f32 %v5338, %v5598
  %v5610 = vmul.f32 %v5339, %v5598
  %v5611 = vmul.f32 %v5340, %v5598
  %v5612 = vmul.f32 %v5341, %v5598
  %v5613 = vmul.f32 %v5342, %v5598
  %v5614 = vmul.f32 %v5343, %v5598
  %v5615 = vmul.f32 %v5344, %v5598
  %v5616 = vmul.f32 %v5345, %v5598
  %v5617 = vmul.f32 %v5346, %v5598
  %v5618 = vmul.f32 %v5347, %v5598
  %v5619 = vmul.f32 %v5348, %v5598
  %v5620 = vmul.f32 %v5349, %v5598
  %v5621 = vmul.f32 %v5350, %v5598
  %v5622 = vmul.f32 %v5351, %v5598
  %v5623 = vmul.f32 %v5352, %v5598
  %v5624 = vmul.f32 %v5353, %v5598
  %v5625 = vmul.f32 %v5354, %v5598
  %v5626 = vmul.f32 %v5355, %v5598
  %v5627 = vmul.f32 %v5356, %v5598
  %v5628 = vmul.f32 %v5357, %v5598
  %v5629 = vmul.f32 %v5358, %v5598
  %v5630 = vmul.f32 %v5359, %v5598
  %v5631 = vmul.f32 %v5360, %v5598
  %v5632 = vmul.f32 %v5361, %v5598
  %v5633 = vmul.f32 %v5362, %v5598
  %v5634 = vmul.f32 %v5363, %v5598
  %v5635 = vmul.f32 %v5364, %v5598
  %v5636 = vmul.f32 %v5365, %v5598
  %v5637 = vmul.f32 %v5366, %v5598
  %v5638 = vmul.f32 %v5367, %v5598
  %v5639 = vmul.f32 %v5368, %v5598
  %v5640 = vmul.f32 %v5369, %v5598
  %v5641 = vmul.f32 %v5370, %v5598
  %v5642 = vmul.f32 %v5371, %v5598
  %v5643 = vmul.f32 %v5372, %v5598
  %v5644 = vmul.f32 %v5373, %v5598
  %v5645 = vmul.f32 %v5374, %v5598
  %v5646 = vmul.f32 %v5375, %v5598
  %v5647 = vmul.f32 %v5376, %v5598
  %v5648 = vmul.f32 %v5377, %v5598
  %v5649 = vmul.f32 %v5378, %v5598
  %v5650 = vmul.f32 %v5379, %v5598
  %v5651 = vmul.f32 %v5380, %v5598
  %v5652 = vmul.f32 %v5381, %v5598
  %v5653 = vmul.f32 %v5382, %v5598
  %v5654 = vmul.f32 %v5383, %v5598
  %v5655 = vmul.f32 %v5384, %v5598
  %v5656 = vmul.f32 %v5385, %v5598
  %v5657 = vmul.f32 %v5386, %v5598
  %v5658 = vmul.f32 %v5387, %v5598
  %v5659 = vmul.f32 %v5388, %v5598
  %v5660 = vmul.f32 %v5389, %v5598
  %v5661 = vmul.f32 %v5390, %v5598
  %v5662 = vmul.f32 %v5391, %v5598
  %v5663 = vmul.f32 %v5392, %v5598
  %v5665 = vlaneseq
  %v5666 = vshrl.u32 %v5665, 7
  %v5667 = vsub.s32 0, %v5666
  %v5668 = vrot.slane %v253, %v5667
  %v5670 = vadd.f32 %v5600, %v5668
  %v5671 = vadd.f32 %v5601, %v5668
  %v5672 = vadd.f32 %v5602, %v5668
  %v5673 = vadd.f32 %v5603, %v5668
  %v5674 = vadd.f32 %v5604, %v5668
  %v5675 = vadd.f32 %v5605, %v5668
  %v5676 = vadd.f32 %v5606, %v5668
  %v5677 = vadd.f32 %v5607, %v5668
  %v5678 = vadd.f32 %v5608, %v5668
  %v5679 = vadd.f32 %v5609, %v5668
  %v5680 = vadd.f32 %v5610, %v5668
  %v5681 = vadd.f32 %v5611, %v5668
  %v5682 = vadd.f32 %v5612, %v5668
  %v5683 = vadd.f32 %v5613, %v5668
  %v5684 = vadd.f32 %v5614, %v5668
  %v5685 = vadd.f32 %v5615, %v5668
  %v5686 = vadd.f32 %v5616, %v5668
  %v5687 = vadd.f32 %v5617, %v5668
  %v5688 = vadd.f32 %v5618, %v5668
  %v5689 = vadd.f32 %v5619, %v5668
  %v5690 = vadd.f32 %v5620, %v5668
  %v5691 = vadd.f32 %v5621, %v5668
  %v5692 = vadd.f32 %v5622, %v5668
  %v5693 = vadd.f32 %v5623, %v5668
  %v5694 = vadd.f32 %v5624, %v5668
  %v5695 = vadd.f32 %v5625, %v5668
  %v5696 = vadd.f32 %v5626, %v5668
  %v5697 = vadd.f32 %v5627, %v5668
  %v5698 = vadd.f32 %v5628, %v5668
  %v5699 = vadd.f32 %v5629, %v5668
  %v5700 = vadd.f32 %v5630, %v5668
  %v5701 = vadd.f32 %v5631, %v5668
  %v5702 = vadd.f32 %v5632, %v5668
  %v5703 = vadd.f32 %v5633, %v5668
  %v5704 = vadd.f32 %v5634, %v5668
  %v5705 = vadd.f32 %v5635, %v5668
  %v5706 = vadd.f32 %v5636, %v5668
  %v5707 = vadd.f32 %v5637, %v5668
  %v5708 = vadd.f32 %v5638, %v5668
  %v5709 = vadd.f32 %v5639, %v5668
  %v5710 = vadd.f32 %v5640, %v5668
  %v5711 = vadd.f32 %v5641, %v5668
  %v5712 = vadd.f32 %v5642, %v5668
  %v5713 = vadd.f32 %v5643, %v5668
  %v5714 = vadd.f32 %v5644, %v5668
  %v5715 = vadd.f32 %v5645, %v5668
  %v5716 = vadd.f32 %v5646, %v5668
  %v5717 = vadd.f32 %v5647, %v5668
  %v5718 = vadd.f32 %v5648, %v5668
  %v5719 = vadd.f32 %v5649, %v5668
  %v5720 = vadd.f32 %v5650, %v5668
  %v5721 = vadd.f32 %v5651, %v5668
  %v5722 = vadd.f32 %v5652, %v5668
  %v5723 = vadd.f32 %v5653, %v5668
  %v5724 = vadd.f32 %v5654, %v5668
  %v5725 = vadd.f32 %v5655, %v5668
  %v5726 = vadd.f32 %v5656, %v5668
  %v5727 = vadd.f32 %v5657, %v5668
  %v5728 = vadd.f32 %v5658, %v5668
  %v5729 = vadd.f32 %v5659, %v5668
  %v5730 = vadd.f32 %v5660, %v5668
  %v5731 = vadd.f32 %v5661, %v5668
  %v5732 = vadd.f32 %v5662, %v5668
  %v5733 = vadd.f32 %v5663, %v5668
  %5734 = vst.msk [vmem:[#allocation3] sm:$0xff] %vm5194, 0.0
  %5735 = vst.msk [vmem:[#allocation3 + $0x8] sm:$0xff] %vm5194, 0.0
  %vm5736 = vcmask 58368
  %5737 = vst.msk [vmem:[#allocation3 + $0x10] sm:$0x3] %vm5736, 0.0
  %5738 = vst.msk [vmem:[#allocation3 + $0x1b0] sm:$0xff] %vm5194, 0.0
  %5739 = vst.msk [vmem:[#allocation3 + $0x1b8] sm:$0xff] %vm5194, 0.0
  %5740 = vst.msk [vmem:[#allocation3 + $0x1c0] sm:$0x3] %vm5736, 0.0
  %s5741 = scalar_lea.vmem [#allocation3], 408
  %5742 = vst.msk [vmem:[%s5741] sm:$0xff] %vm5194, 0.0
  %5743 = vst.msk [vmem:[%s5741 + $0x8] sm:$0xff] %vm5194, 0.0
  %5744 = vst.msk [vmem:[%s5741 + $0x10] sm:$0x3] %vm5736, 0.0
  %5745 = vst.msk [vmem:[%s5741 + $0x1b0] sm:$0xff] %vm5194, 0.0
  %5746 = vst.msk [vmem:[%s5741 + $0x1b8] sm:$0xff] %vm5194, 0.0
  %5747 = vst.msk [vmem:[%s5741 + $0x1c0] sm:$0x3] %vm5736, 0.0
  %s5748 = scalar_lea.vmem [#allocation3], 24
  %vm5749 = vcmask 57344
  %5750 = vst.msk [vmem:[%s5748] sm:$0x1] %vm5749, 0.0
  %5751 = vst.msk [vmem:[%s5748 + $0x18] sm:$0x1] %vm5749, 0.0
  %5752 = vst.msk [vmem:[%s5748 + $0x30] sm:$0x1] %vm5749, 0.0
  %5753 = vst.msk [vmem:[%s5748 + $0x48] sm:$0x1] %vm5749, 0.0
  %5754 = vst.msk [vmem:[%s5748 + $0x60] sm:$0x1] %vm5749, 0.0
  %5755 = vst.msk [vmem:[%s5748 + $0x78] sm:$0x1] %vm5749, 0.0
  %5756 = vst.msk [vmem:[%s5748 + $0x90] sm:$0x1] %vm5749, 0.0
  %5757 = vst.msk [vmem:[%s5748 + $0xa8] sm:$0x1] %vm5749, 0.0
  %5758 = vst.msk [vmem:[%s5748 + $0xc0] sm:$0x1] %vm5749, 0.0
  %5759 = vst.msk [vmem:[%s5748 + $0xd8] sm:$0x1] %vm5749, 0.0
  %5760 = vst.msk [vmem:[%s5748 + $0xf0] sm:$0x1] %vm5749, 0.0
  %5761 = vst.msk [vmem:[%s5748 + $0x108] sm:$0x1] %vm5749, 0.0
  %5762 = vst.msk [vmem:[%s5748 + $0x120] sm:$0x1] %vm5749, 0.0
  %5763 = vst.msk [vmem:[%s5748 + $0x138] sm:$0x1] %vm5749, 0.0
  %5764 = vst.msk [vmem:[%s5748 + $0x150] sm:$0x1] %vm5749, 0.0
  %5765 = vst.msk [vmem:[%s5748 + $0x168] sm:$0x1] %vm5749, 0.0
  %5766 = vst.msk [vmem:[%s5748 + $0x1b0] sm:$0x1] %vm5749, 0.0
  %5767 = vst.msk [vmem:[%s5748 + $0x1c8] sm:$0x1] %vm5749, 0.0
  %5768 = vst.msk [vmem:[%s5748 + $0x1e0] sm:$0x1] %vm5749, 0.0
  %5769 = vst.msk [vmem:[%s5748 + $0x1f8] sm:$0x1] %vm5749, 0.0
  %5770 = vst.msk [vmem:[%s5748 + $0x210] sm:$0x1] %vm5749, 0.0
  %5771 = vst.msk [vmem:[%s5748 + $0x228] sm:$0x1] %vm5749, 0.0
  %5772 = vst.msk [vmem:[%s5748 + $0x240] sm:$0x1] %vm5749, 0.0
  %5773 = vst.msk [vmem:[%s5748 + $0x258] sm:$0x1] %vm5749, 0.0
  %5774 = vst.msk [vmem:[%s5748 + $0x270] sm:$0x1] %vm5749, 0.0
  %5775 = vst.msk [vmem:[%s5748 + $0x288] sm:$0x1] %vm5749, 0.0
  %5776 = vst.msk [vmem:[%s5748 + $0x2a0] sm:$0x1] %vm5749, 0.0
  %5777 = vst.msk [vmem:[%s5748 + $0x2b8] sm:$0x1] %vm5749, 0.0
  %5778 = vst.msk [vmem:[%s5748 + $0x2d0] sm:$0x1] %vm5749, 0.0
  %5779 = vst.msk [vmem:[%s5748 + $0x2e8] sm:$0x1] %vm5749, 0.0
  %5780 = vst.msk [vmem:[%s5748 + $0x300] sm:$0x1] %vm5749, 0.0
  %5781 = vst.msk [vmem:[%s5748 + $0x318] sm:$0x1] %vm5749, 0.0
  %5782 = vst.msk [vmem:[%s5748 + $0x11] sm:$0x1] %vm5749, 0.0
  %5783 = vst.msk [vmem:[%s5748 + $0x29] sm:$0x1] %vm5749, 0.0
  %5784 = vst.msk [vmem:[%s5748 + $0x41] sm:$0x1] %vm5749, 0.0
  %5785 = vst.msk [vmem:[%s5748 + $0x59] sm:$0x1] %vm5749, 0.0
  %5786 = vst.msk [vmem:[%s5748 + $0x71] sm:$0x1] %vm5749, 0.0
  %5787 = vst.msk [vmem:[%s5748 + $0x89] sm:$0x1] %vm5749, 0.0
  %5788 = vst.msk [vmem:[%s5748 + $0xa1] sm:$0x1] %vm5749, 0.0
  %5789 = vst.msk [vmem:[%s5748 + $0xb9] sm:$0x1] %vm5749, 0.0
  %5790 = vst.msk [vmem:[%s5748 + $0xd1] sm:$0x1] %vm5749, 0.0
  %5791 = vst.msk [vmem:[%s5748 + $0xe9] sm:$0x1] %vm5749, 0.0
  %5792 = vst.msk [vmem:[%s5748 + $0x101] sm:$0x1] %vm5749, 0.0
  %5793 = vst.msk [vmem:[%s5748 + $0x119] sm:$0x1] %vm5749, 0.0
  %5794 = vst.msk [vmem:[%s5748 + $0x131] sm:$0x1] %vm5749, 0.0
  %5795 = vst.msk [vmem:[%s5748 + $0x149] sm:$0x1] %vm5749, 0.0
  %5796 = vst.msk [vmem:[%s5748 + $0x161] sm:$0x1] %vm5749, 0.0
  %5797 = vst.msk [vmem:[%s5748 + $0x179] sm:$0x1] %vm5749, 0.0
  %5798 = vst.msk [vmem:[%s5748 + $0x1c1] sm:$0x1] %vm5749, 0.0
  %5799 = vst.msk [vmem:[%s5748 + $0x1d9] sm:$0x1] %vm5749, 0.0
  %5800 = vst.msk [vmem:[%s5748 + $0x1f1] sm:$0x1] %vm5749, 0.0
  %5801 = vst.msk [vmem:[%s5748 + $0x209] sm:$0x1] %vm5749, 0.0
  %5802 = vst.msk [vmem:[%s5748 + $0x221] sm:$0x1] %vm5749, 0.0
  %5803 = vst.msk [vmem:[%s5748 + $0x239] sm:$0x1] %vm5749, 0.0
  %5804 = vst.msk [vmem:[%s5748 + $0x251] sm:$0x1] %vm5749, 0.0
  %5805 = vst.msk [vmem:[%s5748 + $0x269] sm:$0x1] %vm5749, 0.0
  %5806 = vst.msk [vmem:[%s5748 + $0x281] sm:$0x1] %vm5749, 0.0
  %5807 = vst.msk [vmem:[%s5748 + $0x299] sm:$0x1] %vm5749, 0.0
  %5808 = vst.msk [vmem:[%s5748 + $0x2b1] sm:$0x1] %vm5749, 0.0
  %5809 = vst.msk [vmem:[%s5748 + $0x2c9] sm:$0x1] %vm5749, 0.0
  %5810 = vst.msk [vmem:[%s5748 + $0x2e1] sm:$0x1] %vm5749, 0.0
  %5811 = vst.msk [vmem:[%s5748 + $0x2f9] sm:$0x1] %vm5749, 0.0
  %5812 = vst.msk [vmem:[%s5748 + $0x311] sm:$0x1] %vm5749, 0.0
  %5813 = vst.msk [vmem:[%s5748 + $0x329] sm:$0x1] %vm5749, 0.0
  %5814 = vst.msk [vmem:[%s5748 + $0x1] sm:$0xff] %vm5194, %v5670
  %5815 = vst.msk [vmem:[%s5748 + $0x9] sm:$0xff] %vm5194, %v5671
  %5816 = vst.msk [vmem:[%s5748 + $0x19] sm:$0xff] %vm5194, %v5672
  %5817 = vst.msk [vmem:[%s5748 + $0x21] sm:$0xff] %vm5194, %v5673
  %5818 = vst.msk [vmem:[%s5748 + $0x31] sm:$0xff] %vm5194, %v5674
  %5819 = vst.msk [vmem:[%s5748 + $0x39] sm:$0xff] %vm5194, %v5675
  %5820 = vst.msk [vmem:[%s5748 + $0x49] sm:$0xff] %vm5194, %v5676
  %5821 = vst.msk [vmem:[%s5748 + $0x51] sm:$0xff] %vm5194, %v5677
  %5822 = vst.msk [vmem:[%s5748 + $0x61] sm:$0xff] %vm5194, %v5678
  %5823 = vst.msk [vmem:[%s5748 + $0x69] sm:$0xff] %vm5194, %v5679
  %5824 = vst.msk [vmem:[%s5748 + $0x79] sm:$0xff] %vm5194, %v5680
  %5825 = vst.msk [vmem:[%s5748 + $0x81] sm:$0xff] %vm5194, %v5681
  %5826 = vst.msk [vmem:[%s5748 + $0x91] sm:$0xff] %vm5194, %v5682
  %5827 = vst.msk [vmem:[%s5748 + $0x99] sm:$0xff] %vm5194, %v5683
  %5828 = vst.msk [vmem:[%s5748 + $0xa9] sm:$0xff] %vm5194, %v5684
  %5829 = vst.msk [vmem:[%s5748 + $0xb1] sm:$0xff] %vm5194, %v5685
  %5830 = vst.msk [vmem:[%s5748 + $0xc1] sm:$0xff] %vm5194, %v5686
  %5831 = vst.msk [vmem:[%s5748 + $0xc9] sm:$0xff] %vm5194, %v5687
  %5832 = vst.msk [vmem:[%s5748 + $0xd9] sm:$0xff] %vm5194, %v5688
  %5833 = vst.msk [vmem:[%s5748 + $0xe1] sm:$0xff] %vm5194, %v5689
  %5834 = vst.msk [vmem:[%s5748 + $0xf1] sm:$0xff] %vm5194, %v5690
  %5835 = vst.msk [vmem:[%s5748 + $0xf9] sm:$0xff] %vm5194, %v5691
  %5836 = vst.msk [vmem:[%s5748 + $0x109] sm:$0xff] %vm5194, %v5692
  %5837 = vst.msk [vmem:[%s5748 + $0x111] sm:$0xff] %vm5194, %v5693
  %5838 = vst.msk [vmem:[%s5748 + $0x121] sm:$0xff] %vm5194, %v5694
  %5839 = vst.msk [vmem:[%s5748 + $0x129] sm:$0xff] %vm5194, %v5695
  %5840 = vst.msk [vmem:[%s5748 + $0x139] sm:$0xff] %vm5194, %v5696
  %5841 = vst.msk [vmem:[%s5748 + $0x141] sm:$0xff] %vm5194, %v5697
  %5842 = vst.msk [vmem:[%s5748 + $0x151] sm:$0xff] %vm5194, %v5698
  %5843 = vst.msk [vmem:[%s5748 + $0x159] sm:$0xff] %vm5194, %v5699
  %5844 = vst.msk [vmem:[%s5748 + $0x169] sm:$0xff] %vm5194, %v5700
  %5845 = vst.msk [vmem:[%s5748 + $0x171] sm:$0xff] %vm5194, %v5701
  %5846 = vst.msk [vmem:[%s5748 + $0x1b1] sm:$0xff] %vm5194, %v5702
  %5847 = vst.msk [vmem:[%s5748 + $0x1b9] sm:$0xff] %vm5194, %v5703
  %5848 = vst.msk [vmem:[%s5748 + $0x1c9] sm:$0xff] %vm5194, %v5704
  %5849 = vst.msk [vmem:[%s5748 + $0x1d1] sm:$0xff] %vm5194, %v5705
  %5850 = vst.msk [vmem:[%s5748 + $0x1e1] sm:$0xff] %vm5194, %v5706
  %5851 = vst.msk [vmem:[%s5748 + $0x1e9] sm:$0xff] %vm5194, %v5707
  %5852 = vst.msk [vmem:[%s5748 + $0x1f9] sm:$0xff] %vm5194, %v5708
  %5853 = vst.msk [vmem:[%s5748 + $0x201] sm:$0xff] %vm5194, %v5709
  %5854 = vst.msk [vmem:[%s5748 + $0x211] sm:$0xff] %vm5194, %v5710
  %5855 = vst.msk [vmem:[%s5748 + $0x219] sm:$0xff] %vm5194, %v5711
  %5856 = vst.msk [vmem:[%s5748 + $0x229] sm:$0xff] %vm5194, %v5712
  %5857 = vst.msk [vmem:[%s5748 + $0x231] sm:$0xff] %vm5194, %v5713
  %5858 = vst.msk [vmem:[%s5748 + $0x241] sm:$0xff] %vm5194, %v5714
  %5859 = vst.msk [vmem:[%s5748 + $0x249] sm:$0xff] %vm5194, %v5715
  %5860 = vst.msk [vmem:[%s5748 + $0x259] sm:$0xff] %vm5194, %v5716
  %5861 = vst.msk [vmem:[%s5748 + $0x261] sm:$0xff] %vm5194, %v5717
  %5862 = vst.msk [vmem:[%s5748 + $0x271] sm:$0xff] %vm5194, %v5718
  %5863 = vst.msk [vmem:[%s5748 + $0x279] sm:$0xff] %vm5194, %v5719
  %5864 = vst.msk [vmem:[%s5748 + $0x289] sm:$0xff] %vm5194, %v5720
  %5865 = vst.msk [vmem:[%s5748 + $0x291] sm:$0xff] %vm5194, %v5721
  %5866 = vst.msk [vmem:[%s5748 + $0x2a1] sm:$0xff] %vm5194, %v5722
  %5867 = vst.msk [vmem:[%s5748 + $0x2a9] sm:$0xff] %vm5194, %v5723
  %5868 = vst.msk [vmem:[%s5748 + $0x2b9] sm:$0xff] %vm5194, %v5724
  %5869 = vst.msk [vmem:[%s5748 + $0x2c1] sm:$0xff] %vm5194, %v5725
  %5870 = vst.msk [vmem:[%s5748 + $0x2d1] sm:$0xff] %vm5194, %v5726
  %5871 = vst.msk [vmem:[%s5748 + $0x2d9] sm:$0xff] %vm5194, %v5727
  %5872 = vst.msk [vmem:[%s5748 + $0x2e9] sm:$0xff] %vm5194, %v5728
  %5873 = vst.msk [vmem:[%s5748 + $0x2f1] sm:$0xff] %vm5194, %v5729
  %5874 = vst.msk [vmem:[%s5748 + $0x301] sm:$0xff] %vm5194, %v5730
  %5875 = vst.msk [vmem:[%s5748 + $0x309] sm:$0xff] %vm5194, %v5731
  %5876 = vst.msk [vmem:[%s5748 + $0x319] sm:$0xff] %vm5194, %v5732
  %5877 = vst.msk [vmem:[%s5748 + $0x321] sm:$0xff] %vm5194, %v5733
  %v5878 = vld [vmem:[%s5] sm:$0xf]
  %v5879 = vld [vmem:[%s5 + $0x4] sm:$0xf]
  %v5880 = vld [vmem:[%s5 + $0x8] sm:$0xf]
  %v5881 = vld [vmem:[%s5 + $0xc] sm:$0xf]
  %v5882 = vld [vmem:[%s5 + $0x10] sm:$0xf]
  %v5883 = vld [vmem:[%s5 + $0x14] sm:$0xf]
  %v5884 = vld [vmem:[%s5 + $0x18] sm:$0xf]
  %v5885 = vld [vmem:[%s5 + $0x1c] sm:$0xf]
  %v5886 = vld [vmem:[%s5 + $0x20] sm:$0xf]
  %v5887 = vld [vmem:[%s6] sm:$0x1]
  %v5888 = vld [vmem:[%s7] sm:$0x1]
  %v5889 = vld [vmem:[%s8] sm:$0x1]
  %v5890 = vld [vmem:[#allocation3] sm:$0xff]
  %v5891 = vld [vmem:[#allocation3 + $0x8] sm:$0xff]
  %v5892 = vld [vmem:[#allocation3 + $0x18] sm:$0xff]
  %v5893 = vld [vmem:[#allocation3 + $0x20] sm:$0xff]
  %v5894 = vld [vmem:[#allocation3 + $0x30] sm:$0xff]
  %v5895 = vld [vmem:[#allocation3 + $0x38] sm:$0xff]
  %v5896 = vld [vmem:[#allocation3 + $0x48] sm:$0xff]
  %v5897 = vld [vmem:[#allocation3 + $0x50] sm:$0xff]
  %v5898 = vld [vmem:[#allocation3 + $0x60] sm:$0xff]
  %v5899 = vld [vmem:[#allocation3 + $0x68] sm:$0xff]
  %v5900 = vld [vmem:[#allocation3 + $0x78] sm:$0xff]
  %v5901 = vld [vmem:[#allocation3 + $0x80] sm:$0xff]
  %v5902 = vld [vmem:[#allocation3 + $0x90] sm:$0xff]
  %v5903 = vld [vmem:[#allocation3 + $0x98] sm:$0xff]
  %v5904 = vld [vmem:[#allocation3 + $0xa8] sm:$0xff]
  %v5905 = vld [vmem:[#allocation3 + $0xb0] sm:$0xff]
  %v5906 = vld [vmem:[#allocation3 + $0xc0] sm:$0xff]
  %v5907 = vld [vmem:[#allocation3 + $0xc8] sm:$0xff]
  %v5908 = vld [vmem:[#allocation3 + $0xd8] sm:$0xff]
  %v5909 = vld [vmem:[#allocation3 + $0xe0] sm:$0xff]
  %v5910 = vld [vmem:[#allocation3 + $0xf0] sm:$0xff]
  %v5911 = vld [vmem:[#allocation3 + $0xf8] sm:$0xff]
  %v5912 = vld [vmem:[#allocation3 + $0x108] sm:$0xff]
  %v5913 = vld [vmem:[#allocation3 + $0x110] sm:$0xff]
  %v5914 = vld [vmem:[#allocation3 + $0x120] sm:$0xff]
  %v5915 = vld [vmem:[#allocation3 + $0x128] sm:$0xff]
  %v5916 = vld [vmem:[#allocation3 + $0x138] sm:$0xff]
  %v5917 = vld [vmem:[#allocation3 + $0x140] sm:$0xff]
  %v5918 = vld [vmem:[#allocation3 + $0x150] sm:$0xff]
  %v5919 = vld [vmem:[#allocation3 + $0x158] sm:$0xff]
  %v5920 = vld [vmem:[#allocation3 + $0x168] sm:$0xff]
  %v5921 = vld [vmem:[#allocation3 + $0x170] sm:$0xff]
  %v5922 = vld [vmem:[#allocation3 + $0x1b0] sm:$0xff]
  %v5923 = vld [vmem:[#allocation3 + $0x1b8] sm:$0xff]
  %v5924 = vld [vmem:[#allocation3 + $0x1c8] sm:$0xff]
  %v5925 = vld [vmem:[#allocation3 + $0x1d0] sm:$0xff]
  %v5926 = vld [vmem:[#allocation3 + $0x1e0] sm:$0xff]
  %v5927 = vld [vmem:[#allocation3 + $0x1e8] sm:$0xff]
  %v5928 = vld [vmem:[#allocation3 + $0x1f8] sm:$0xff]
  %v5929 = vld [vmem:[#allocation3 + $0x200] sm:$0xff]
  %v5930 = vld [vmem:[#allocation3 + $0x210] sm:$0xff]
  %v5931 = vld [vmem:[#allocation3 + $0x218] sm:$0xff]
  %v5932 = vld [vmem:[#allocation3 + $0x228] sm:$0xff]
  %v5933 = vld [vmem:[#allocation3 + $0x230] sm:$0xff]
  %v5934 = vld [vmem:[#allocation3 + $0x240] sm:$0xff]
  %v5935 = vld [vmem:[#allocation3 + $0x248] sm:$0xff]
  %v5936 = vld [vmem:[#allocation3 + $0x258] sm:$0xff]
  %v5937 = vld [vmem:[#allocation3 + $0x260] sm:$0xff]
  %v5938 = vld [vmem:[#allocation3 + $0x270] sm:$0xff]
  %v5939 = vld [vmem:[#allocation3 + $0x278] sm:$0xff]
  %v5940 = vld [vmem:[#allocation3 + $0x288] sm:$0xff]
  %v5941 = vld [vmem:[#allocation3 + $0x290] sm:$0xff]
  %v5942 = vld [vmem:[#allocation3 + $0x2a0] sm:$0xff]
  %v5943 = vld [vmem:[#allocation3 + $0x2a8] sm:$0xff]
  %v5944 = vld [vmem:[#allocation3 + $0x2b8] sm:$0xff]
  %v5945 = vld [vmem:[#allocation3 + $0x2c0] sm:$0xff]
  %v5946 = vld [vmem:[#allocation3 + $0x2d0] sm:$0xff]
  %v5947 = vld [vmem:[#allocation3 + $0x2d8] sm:$0xff]
  %v5948 = vld [vmem:[#allocation3 + $0x2e8] sm:$0xff]
  %v5949 = vld [vmem:[#allocation3 + $0x2f0] sm:$0xff]
  %v5950 = vld [vmem:[#allocation3 + $0x300] sm:$0xff]
  %v5951 = vld [vmem:[#allocation3 + $0x308] sm:$0xff]
  %v5952 = vld [vmem:[#allocation3 + $0x318] sm:$0xff]
  %v5953 = vld [vmem:[#allocation3 + $0x320] sm:$0xff]
  %v5954 = vpack.c.bf16 %v5891, %v5890
  %v5955 = vpack.c.bf16 %v5893, %v5892
  %v5956 = vpack.c.bf16 %v5895, %v5894
  %v5957 = vpack.c.bf16 %v5897, %v5896
  %v5958 = vpack.c.bf16 %v5899, %v5898
  %v5959 = vpack.c.bf16 %v5901, %v5900
  %v5960 = vpack.c.bf16 %v5903, %v5902
  %v5961 = vpack.c.bf16 %v5905, %v5904
  %v5962 = vpack.c.bf16 %v5907, %v5906
  %v5963 = vpack.c.bf16 %v5909, %v5908
  %v5964 = vpack.c.bf16 %v5911, %v5910
  %v5965 = vpack.c.bf16 %v5913, %v5912
  %v5966 = vpack.c.bf16 %v5915, %v5914
  %v5967 = vpack.c.bf16 %v5917, %v5916
  %v5968 = vpack.c.bf16 %v5919, %v5918
  %v5969 = vpack.c.bf16 %v5921, %v5920
  %v5970 = vpack.c.bf16 %v5923, %v5922
  %v5971 = vpack.c.bf16 %v5925, %v5924
  %v5972 = vpack.c.bf16 %v5927, %v5926
  %v5973 = vpack.c.bf16 %v5929, %v5928
  %v5974 = vpack.c.bf16 %v5931, %v5930
  %v5975 = vpack.c.bf16 %v5933, %v5932
  %v5976 = vpack.c.bf16 %v5935, %v5934
  %v5977 = vpack.c.bf16 %v5937, %v5936
  %v5978 = vpack.c.bf16 %v5939, %v5938
  %v5979 = vpack.c.bf16 %v5941, %v5940
  %v5980 = vpack.c.bf16 %v5943, %v5942
  %v5981 = vpack.c.bf16 %v5945, %v5944
  %v5982 = vpack.c.bf16 %v5947, %v5946
  %v5983 = vpack.c.bf16 %v5949, %v5948
  %v5984 = vpack.c.bf16 %v5951, %v5950
  %v5985 = vpack.c.bf16 %v5953, %v5952
  %v5986 = vld [vmem:[#allocation3 + $0x1] sm:$0xff]
  %v5987 = vld [vmem:[#allocation3 + $0x9] sm:$0xff]
  %v5988 = vld [vmem:[#allocation3 + $0x19] sm:$0xff]
  %v5989 = vld [vmem:[#allocation3 + $0x21] sm:$0xff]
  %v5990 = vld [vmem:[#allocation3 + $0x31] sm:$0xff]
  %v5991 = vld [vmem:[#allocation3 + $0x39] sm:$0xff]
  %v5992 = vld [vmem:[#allocation3 + $0x49] sm:$0xff]
  %v5993 = vld [vmem:[#allocation3 + $0x51] sm:$0xff]
  %v5994 = vld [vmem:[#allocation3 + $0x61] sm:$0xff]
  %v5995 = vld [vmem:[#allocation3 + $0x69] sm:$0xff]
  %v5996 = vld [vmem:[#allocation3 + $0x79] sm:$0xff]
  %v5997 = vld [vmem:[#allocation3 + $0x81] sm:$0xff]
  %v5998 = vld [vmem:[#allocation3 + $0x91] sm:$0xff]
  %v5999 = vld [vmem:[#allocation3 + $0x99] sm:$0xff]
  %v6000 = vld [vmem:[#allocation3 + $0xa9] sm:$0xff]
  %v6001 = vld [vmem:[#allocation3 + $0xb1] sm:$0xff]
  %v6002 = vld [vmem:[#allocation3 + $0xc1] sm:$0xff]
  %v6003 = vld [vmem:[#allocation3 + $0xc9] sm:$0xff]
  %v6004 = vld [vmem:[#allocation3 + $0xd9] sm:$0xff]
  %v6005 = vld [vmem:[#allocation3 + $0xe1] sm:$0xff]
  %v6006 = vld [vmem:[#allocation3 + $0xf1] sm:$0xff]
  %v6007 = vld [vmem:[#allocation3 + $0xf9] sm:$0xff]
  %v6008 = vld [vmem:[#allocation3 + $0x109] sm:$0xff]
  %v6009 = vld [vmem:[#allocation3 + $0x111] sm:$0xff]
  %v6010 = vld [vmem:[#allocation3 + $0x121] sm:$0xff]
  %v6011 = vld [vmem:[#allocation3 + $0x129] sm:$0xff]
  %v6012 = vld [vmem:[#allocation3 + $0x139] sm:$0xff]
  %v6013 = vld [vmem:[#allocation3 + $0x141] sm:$0xff]
  %v6014 = vld [vmem:[#allocation3 + $0x151] sm:$0xff]
  %v6015 = vld [vmem:[#allocation3 + $0x159] sm:$0xff]
  %v6016 = vld [vmem:[#allocation3 + $0x169] sm:$0xff]
  %v6017 = vld [vmem:[#allocation3 + $0x171] sm:$0xff]
  %v6018 = vld [vmem:[#allocation3 + $0x1b1] sm:$0xff]
  %v6019 = vld [vmem:[#allocation3 + $0x1b9] sm:$0xff]
  %v6020 = vld [vmem:[#allocation3 + $0x1c9] sm:$0xff]
  %v6021 = vld [vmem:[#allocation3 + $0x1d1] sm:$0xff]
  %v6022 = vld [vmem:[#allocation3 + $0x1e1] sm:$0xff]
  %v6023 = vld [vmem:[#allocation3 + $0x1e9] sm:$0xff]
  %v6024 = vld [vmem:[#allocation3 + $0x1f9] sm:$0xff]
  %v6025 = vld [vmem:[#allocation3 + $0x201] sm:$0xff]
  %v6026 = vld [vmem:[#allocation3 + $0x211] sm:$0xff]
  %v6027 = vld [vmem:[#allocation3 + $0x219] sm:$0xff]
  %v6028 = vld [vmem:[#allocation3 + $0x229] sm:$0xff]
  %v6029 = vld [vmem:[#allocation3 + $0x231] sm:$0xff]
  %v6030 = vld [vmem:[#allocation3 + $0x241] sm:$0xff]
  %v6031 = vld [vmem:[#allocation3 + $0x249] sm:$0xff]
  %v6032 = vld [vmem:[#allocation3 + $0x259] sm:$0xff]
  %v6033 = vld [vmem:[#allocation3 + $0x261] sm:$0xff]
  %v6034 = vld [vmem:[#allocation3 + $0x271] sm:$0xff]
  %v6035 = vld [vmem:[#allocation3 + $0x279] sm:$0xff]
  %v6036 = vld [vmem:[#allocation3 + $0x289] sm:$0xff]
  %v6037 = vld [vmem:[#allocation3 + $0x291] sm:$0xff]
  %v6038 = vld [vmem:[#allocation3 + $0x2a1] sm:$0xff]
  %v6039 = vld [vmem:[#allocation3 + $0x2a9] sm:$0xff]
  %v6040 = vld [vmem:[#allocation3 + $0x2b9] sm:$0xff]
  %v6041 = vld [vmem:[#allocation3 + $0x2c1] sm:$0xff]
  %v6042 = vld [vmem:[#allocation3 + $0x2d1] sm:$0xff]
  %v6043 = vld [vmem:[#allocation3 + $0x2d9] sm:$0xff]
  %v6044 = vld [vmem:[#allocation3 + $0x2e9] sm:$0xff]
  %v6045 = vld [vmem:[#allocation3 + $0x2f1] sm:$0xff]
  %v6046 = vld [vmem:[#allocation3 + $0x301] sm:$0xff]
  %v6047 = vld [vmem:[#allocation3 + $0x309] sm:$0xff]
  %v6048 = vld [vmem:[#allocation3 + $0x319] sm:$0xff]
  %v6049 = vld [vmem:[#allocation3 + $0x321] sm:$0xff]
  %v6050 = vpack.c.bf16 %v5987, %v5986
  %v6051 = vpack.c.bf16 %v5989, %v5988
  %v6052 = vpack.c.bf16 %v5991, %v5990
  %v6053 = vpack.c.bf16 %v5993, %v5992
  %v6054 = vpack.c.bf16 %v5995, %v5994
  %v6055 = vpack.c.bf16 %v5997, %v5996
  %v6056 = vpack.c.bf16 %v5999, %v5998
  %v6057 = vpack.c.bf16 %v6001, %v6000
  %v6058 = vpack.c.bf16 %v6003, %v6002
  %v6059 = vpack.c.bf16 %v6005, %v6004
  %v6060 = vpack.c.bf16 %v6007, %v6006
  %v6061 = vpack.c.bf16 %v6009, %v6008
  %v6062 = vpack.c.bf16 %v6011, %v6010
  %v6063 = vpack.c.bf16 %v6013, %v6012
  %v6064 = vpack.c.bf16 %v6015, %v6014
  %v6065 = vpack.c.bf16 %v6017, %v6016
  %v6066 = vpack.c.bf16 %v6019, %v6018
  %v6067 = vpack.c.bf16 %v6021, %v6020
  %v6068 = vpack.c.bf16 %v6023, %v6022
  %v6069 = vpack.c.bf16 %v6025, %v6024
  %v6070 = vpack.c.bf16 %v6027, %v6026
  %v6071 = vpack.c.bf16 %v6029, %v6028
  %v6072 = vpack.c.bf16 %v6031, %v6030
  %v6073 = vpack.c.bf16 %v6033, %v6032
  %v6074 = vpack.c.bf16 %v6035, %v6034
  %v6075 = vpack.c.bf16 %v6037, %v6036
  %v6076 = vpack.c.bf16 %v6039, %v6038
  %v6077 = vpack.c.bf16 %v6041, %v6040
  %v6078 = vpack.c.bf16 %v6043, %v6042
  %v6079 = vpack.c.bf16 %v6045, %v6044
  %v6080 = vpack.c.bf16 %v6047, %v6046
  %v6081 = vpack.c.bf16 %v6049, %v6048
  %v6083 = vsel %vm5194, %v6050, 0
  %v6086 = vsel %vm5194, %v6051, 0
  %v6089 = vsel %vm5194, %v6052, 0
  %v6092 = vsel %vm5194, %v6053, 0
  %v6095 = vsel %vm5194, %v6054, 0
  %v6098 = vsel %vm5194, %v6055, 0
  %v6101 = vsel %vm5194, %v6056, 0
  %v6104 = vsel %vm5194, %v6057, 0
  %v6107 = vsel %vm5194, %v6058, 0
  %v6110 = vsel %vm5194, %v6059, 0
  %v6113 = vsel %vm5194, %v6060, 0
  %v6116 = vsel %vm5194, %v6061, 0
  %v6119 = vsel %vm5194, %v6062, 0
  %v6122 = vsel %vm5194, %v6063, 0
  %v6125 = vsel %vm5194, %v6064, 0
  %v6128 = vsel %vm5194, %v6065, 0
  %v6131 = vsel %vm5194, %v6066, 0
  %v6134 = vsel %vm5194, %v6067, 0
  %v6137 = vsel %vm5194, %v6068, 0
  %v6140 = vsel %vm5194, %v6069, 0
  %v6143 = vsel %vm5194, %v6070, 0
  %v6146 = vsel %vm5194, %v6071, 0
  %v6149 = vsel %vm5194, %v6072, 0
  %v6152 = vsel %vm5194, %v6073, 0
  %v6155 = vsel %vm5194, %v6074, 0
  %v6158 = vsel %vm5194, %v6075, 0
  %v6161 = vsel %vm5194, %v6076, 0
  %v6164 = vsel %vm5194, %v6077, 0
  %v6167 = vsel %vm5194, %v6078, 0
  %v6170 = vsel %vm5194, %v6079, 0
  %v6173 = vsel %vm5194, %v6080, 0
  %v6176 = vsel %vm5194, %v6081, 0
  %vm6178 = vcmask 1043456
  %v6180 = vsel %vm6178, %v5879, 0
  %6182 = vmatprep.subr.bf16.mxu0 0
  %6183 = vmatpush1.bf16.msra.mxu0 %v6180
  %6184 = vmatprep.subr.bf16.mxu0 0
  %6185 = vmatpush1.bf16.msra.mxu0 0
  %6186 = vmatprep.subr.bf16.mxu0 0
  %6187 = vmatpush1.bf16.msra.mxu0 0
  %6188 = vmatprep.subr.bf16.mxu0 0
  %6189 = vmatpush1.bf16.msra.mxu0 0
  %6190 = vmatprep.subr.bf16.mxu0 0
  %6191 = vmatpush1.bf16.msra.mxu0 0
  %6192 = vmatprep.subr.bf16.mxu0 0
  %6193 = vmatpush1.bf16.msra.mxu0 0
  %6194 = vmatprep.subr.bf16.mxu0 0
  %6195 = vmatpush1.bf16.msra.mxu0 0
  %6196 = vmatprep.subr.bf16.mxu0 0
  %6197 = vmatpush1.bf16.msra.mxu0 0
  %6198 = vmatprep.subr.bf16.mxu0 0
  %6199 = vmatpush1.bf16.msra.mxu0 0
  %6200 = vmatprep.subr.bf16.mxu0 0
  %6201 = vmatpush1.bf16.msra.mxu0 0
  %6202 = vmatprep.subr.bf16.mxu0 0
  %6203 = vmatpush1.bf16.msra.mxu0 0
  %6204 = vmatprep.subr.bf16.mxu0 0
  %6205 = vmatpush1.bf16.msra.mxu0 0
  %6206 = vmatprep.subr.bf16.mxu0 0
  %6207 = vmatpush1.bf16.msra.mxu0 0
  %6208 = vmatprep.subr.bf16.mxu0 0
  %6209 = vmatpush1.bf16.msra.mxu0 0
  %6210 = vmatprep.subr.bf16.mxu0 0
  %6211 = vmatpush1.bf16.msra.mxu0 0
  %6212 = vmatprep.subr.bf16.mxu0 0
  %6213 = vmatpush1.bf16.msra.mxu0 0
  %6214 = vmatprep.mubr.bf16.mxu0 0
  %6215 = vmatmul.mubr.bf16.gmra.mrb[0].mxu0 %v6083
  %v6216 = vpop.f32.mrb[0].mxu0
  %v6217 = vadd.f32 0.0, %v6216
  %v6218 = vpop.f32.mrb[0].mxu0
  %v6219 = vpop.f32.mrb[0].mxu0
  %v6220 = vadd.f32 0.0, %v6219
  %v6221 = vpop.f32.mrb[0].mxu0
  %6222 = vmatprep.mubr.bf16.mxu0 0
  %6223 = vmatmul.mubr.bf16.gmra.mrb[0].mxu0 %v6086
  %v6224 = vpop.f32.mrb[0].mxu0
  %v6225 = vadd.f32 0.0, %v6224
  %v6226 = vpop.f32.mrb[0].mxu0
  %v6227 = vpop.f32.mrb[0].mxu0
  %v6228 = vadd.f32 0.0, %v6227
  %v6229 = vpop.f32.mrb[0].mxu0
  %6230 = vmatprep.mubr.bf16.mxu0 0
  %6231 = vmatmul.mubr.bf16.gmra.mrb[0].mxu0 %v6089
  %v6232 = vpop.f32.mrb[0].mxu0
  %v6233 = vadd.f32 0.0, %v6232
  %v6234 = vpop.f32.mrb[0].mxu0
  %v6235 = vpop.f32.mrb[0].mxu0
  %v6236 = vadd.f32 0.0, %v6235
  %v6237 = vpop.f32.mrb[0].mxu0
  %6238 = vmatprep.mubr.bf16.mxu0 0
  %6239 = vmatmul.mubr.bf16.gmra.mrb[0].mxu0 %v6092
  %v6240 = vpop.f32.mrb[0].mxu0
  %v6241 = vadd.f32 0.0, %v6240
  %v6242 = vpop.f32.mrb[0].mxu0
  %v6243 = vpop.f32.mrb[0].mxu0
  %v6244 = vadd.f32 0.0, %v6243
  %v6245 = vpop.f32.mrb[0].mxu0
  %6246 = vmatprep.mubr.bf16.mxu0 0
  %6247 = vmatmul.mubr.bf16.gmra.mrb[0].mxu0 %v6095
  %v6248 = vpop.f32.mrb[0].mxu0
  %v6249 = vadd.f32 0.0, %v6248
  %v6250 = vpop.f32.mrb[0].mxu0
  %v6251 = vpop.f32.mrb[0].mxu0
  %v6252 = vadd.f32 0.0, %v6251
  %v6253 = vpop.f32.mrb[0].mxu0
  %6254 = vmatprep.mubr.bf16.mxu0 0
  %6255 = vmatmul.mubr.bf16.gmra.mrb[0].mxu0 %v6098
  %v6256 = vpop.f32.mrb[0].mxu0
  %v6257 = vadd.f32 0.0, %v6256
  %v6258 = vpop.f32.mrb[0].mxu0
  %v6259 = vpop.f32.mrb[0].mxu0
  %v6260 = vadd.f32 0.0, %v6259
  %v6261 = vpop.f32.mrb[0].mxu0
  %6262 = vmatprep.mubr.bf16.mxu0 0
  %6263 = vmatmul.mubr.bf16.gmra.mrb[0].mxu0 %v6101
  %v6264 = vpop.f32.mrb[0].mxu0
  %v6265 = vadd.f32 0.0, %v6264
  %v6266 = vpop.f32.mrb[0].mxu0
  %v6267 = vpop.f32.mrb[0].mxu0
  %v6268 = vadd.f32 0.0, %v6267
  %v6269 = vpop.f32.mrb[0].mxu0
  %6270 = vmatprep.mubr.bf16.mxu0 0
  %6271 = vmatmul.mubr.bf16.gmra.mrb[0].mxu0 %v6104
  %v6272 = vpop.f32.mrb[0].mxu0
  %v6273 = vadd.f32 0.0, %v6272
  %v6274 = vpop.f32.mrb[0].mxu0
  %v6275 = vpop.f32.mrb[0].mxu0
  %v6276 = vadd.f32 0.0, %v6275
  %v6277 = vpop.f32.mrb[0].mxu0
  %6278 = vmatprep.mubr.bf16.mxu0 0
  %6279 = vmatmul.mubr.bf16.gmra.mrb[0].mxu0 %v6107
  %v6280 = vpop.f32.mrb[0].mxu0
  %v6281 = vadd.f32 0.0, %v6280
  %v6282 = vpop.f32.mrb[0].mxu0
  %v6283 = vpop.f32.mrb[0].mxu0
  %v6284 = vadd.f32 0.0, %v6283
  %v6285 = vpop.f32.mrb[0].mxu0
  %6286 = vmatprep.mubr.bf16.mxu0 0
  %6287 = vmatmul.mubr.bf16.gmra.mrb[0].mxu0 %v6110
  %v6288 = vpop.f32.mrb[0].mxu0
  %v6289 = vadd.f32 0.0, %v6288
  %v6290 = vpop.f32.mrb[0].mxu0
  %v6291 = vpop.f32.mrb[0].mxu0
  %v6292 = vadd.f32 0.0, %v6291
  %v6293 = vpop.f32.mrb[0].mxu0
  %6294 = vmatprep.mubr.bf16.mxu0 0
  %6295 = vmatmul.mubr.bf16.gmra.mrb[0].mxu0 %v6113
  %v6296 = vpop.f32.mrb[0].mxu0
  %v6297 = vadd.f32 0.0, %v6296
  %v6298 = vpop.f32.mrb[0].mxu0
  %v6299 = vpop.f32.mrb[0].mxu0
  %v6300 = vadd.f32 0.0, %v6299
  %v6301 = vpop.f32.mrb[0].mxu0
  %6302 = vmatprep.mubr.bf16.mxu0 0
  %6303 = vmatmul.mubr.bf16.gmra.mrb[0].mxu0 %v6116
  %v6304 = vpop.f32.mrb[0].mxu0
  %v6305 = vadd.f32 0.0, %v6304
  %v6306 = vpop.f32.mrb[0].mxu0
  %v6307 = vpop.f32.mrb[0].mxu0
  %v6308 = vadd.f32 0.0, %v6307
  %v6309 = vpop.f32.mrb[0].mxu0
  %6310 = vmatprep.mubr.bf16.mxu0 0
  %6311 = vmatmul.mubr.bf16.gmra.mrb[0].mxu0 %v6119
  %v6312 = vpop.f32.mrb[0].mxu0
  %v6313 = vadd.f32 0.0, %v6312
  %v6314 = vpop.f32.mrb[0].mxu0
  %v6315 = vpop.f32.mrb[0].mxu0
  %v6316 = vadd.f32 0.0, %v6315
  %v6317 = vpop.f32.mrb[0].mxu0
  %6318 = vmatprep.mubr.bf16.mxu0 0
  %6319 = vmatmul.mubr.bf16.gmra.mrb[0].mxu0 %v6122
  %v6320 = vpop.f32.mrb[0].mxu0
  %v6321 = vadd.f32 0.0, %v6320
  %v6322 = vpop.f32.mrb[0].mxu0
  %v6323 = vpop.f32.mrb[0].mxu0
  %v6324 = vadd.f32 0.0, %v6323
  %v6325 = vpop.f32.mrb[0].mxu0
  %6326 = vmatprep.mubr.bf16.mxu0 0
  %6327 = vmatmul.mubr.bf16.gmra.mrb[0].mxu0 %v6125
  %v6328 = vpop.f32.mrb[0].mxu0
  %v6329 = vadd.f32 0.0, %v6328
  %v6330 = vpop.f32.mrb[0].mxu0
  %v6331 = vpop.f32.mrb[0].mxu0
  %v6332 = vadd.f32 0.0, %v6331
  %v6333 = vpop.f32.mrb[0].mxu0
  %6334 = vmatprep.mubr.bf16.mxu0 0
  %6335 = vmatmul.mubr.bf16.gmra.mrb[0].mxu0 %v6128
  %v6336 = vpop.f32.mrb[0].mxu0
  %v6337 = vadd.f32 0.0, %v6336
  %v6338 = vpop.f32.mrb[0].mxu0
  %v6339 = vpop.f32.mrb[0].mxu0
  %v6340 = vadd.f32 0.0, %v6339
  %v6341 = vpop.f32.mrb[0].mxu0
  %6342 = vmatprep.mubr.bf16.mxu0 0
  %6343 = vmatmul.mubr.bf16.gmra.mrb[0].mxu0 %v6131
  %v6344 = vpop.f32.mrb[0].mxu0
  %v6345 = vadd.f32 0.0, %v6344
  %v6346 = vpop.f32.mrb[0].mxu0
  %v6347 = vpop.f32.mrb[0].mxu0
  %v6348 = vadd.f32 0.0, %v6347
  %v6349 = vpop.f32.mrb[0].mxu0
  %6350 = vmatprep.mubr.bf16.mxu0 0
  %6351 = vmatmul.mubr.bf16.gmra.mrb[0].mxu0 %v6134
  %v6352 = vpop.f32.mrb[0].mxu0
  %v6353 = vadd.f32 0.0, %v6352
  %v6354 = vpop.f32.mrb[0].mxu0
  %v6355 = vpop.f32.mrb[0].mxu0
  %v6356 = vadd.f32 0.0, %v6355
  %v6357 = vpop.f32.mrb[0].mxu0
  %6358 = vmatprep.mubr.bf16.mxu0 0
  %6359 = vmatmul.mubr.bf16.gmra.mrb[0].mxu0 %v6137
  %v6360 = vpop.f32.mrb[0].mxu0
  %v6361 = vadd.f32 0.0, %v6360
  %v6362 = vpop.f32.mrb[0].mxu0
  %v6363 = vpop.f32.mrb[0].mxu0
  %v6364 = vadd.f32 0.0, %v6363
  %v6365 = vpop.f32.mrb[0].mxu0
  %6366 = vmatprep.mubr.bf16.mxu0 0
  %6367 = vmatmul.mubr.bf16.gmra.mrb[0].mxu0 %v6140
  %v6368 = vpop.f32.mrb[0].mxu0
  %v6369 = vadd.f32 0.0, %v6368
  %v6370 = vpop.f32.mrb[0].mxu0
  %v6371 = vpop.f32.mrb[0].mxu0
  %v6372 = vadd.f32 0.0, %v6371
  %v6373 = vpop.f32.mrb[0].mxu0
  %6374 = vmatprep.mubr.bf16.mxu0 0
  %6375 = vmatmul.mubr.bf16.gmra.mrb[0].mxu0 %v6143
  %v6376 = vpop.f32.mrb[0].mxu0
  %v6377 = vadd.f32 0.0, %v6376
  %v6378 = vpop.f32.mrb[0].mxu0
  %v6379 = vpop.f32.mrb[0].mxu0
  %v6380 = vadd.f32 0.0, %v6379
  %v6381 = vpop.f32.mrb[0].mxu0
  %6382 = vmatprep.mubr.bf16.mxu0 0
  %6383 = vmatmul.mubr.bf16.gmra.mrb[0].mxu0 %v6146
  %v6384 = vpop.f32.mrb[0].mxu0
  %v6385 = vadd.f32 0.0, %v6384
  %v6386 = vpop.f32.mrb[0].mxu0
  %v6387 = vpop.f32.mrb[0].mxu0
  %v6388 = vadd.f32 0.0, %v6387
  %v6389 = vpop.f32.mrb[0].mxu0
  %6390 = vmatprep.mubr.bf16.mxu0 0
  %6391 = vmatmul.mubr.bf16.gmra.mrb[0].mxu0 %v6149
  %v6392 = vpop.f32.mrb[0].mxu0
  %v6393 = vadd.f32 0.0, %v6392
  %v6394 = vpop.f32.mrb[0].mxu0
  %v6395 = vpop.f32.mrb[0].mxu0
  %v6396 = vadd.f32 0.0, %v6395
  %v6397 = vpop.f32.mrb[0].mxu0
  %6398 = vmatprep.mubr.bf16.mxu0 0
  %6399 = vmatmul.mubr.bf16.gmra.mrb[0].mxu0 %v6152
  %v6400 = vpop.f32.mrb[0].mxu0
  %v6401 = vadd.f32 0.0, %v6400
  %v6402 = vpop.f32.mrb[0].mxu0
  %v6403 = vpop.f32.mrb[0].mxu0
  %v6404 = vadd.f32 0.0, %v6403
  %v6405 = vpop.f32.mrb[0].mxu0
  %6406 = vmatprep.mubr.bf16.mxu0 0
  %6407 = vmatmul.mubr.bf16.gmra.mrb[0].mxu0 %v6155
  %v6408 = vpop.f32.mrb[0].mxu0
  %v6409 = vadd.f32 0.0, %v6408
  %v6410 = vpop.f32.mrb[0].mxu0
  %v6411 = vpop.f32.mrb[0].mxu0
  %v6412 = vadd.f32 0.0, %v6411
  %v6413 = vpop.f32.mrb[0].mxu0
  %6414 = vmatprep.mubr.bf16.mxu0 0
  %6415 = vmatmul.mubr.bf16.gmra.mrb[0].mxu0 %v6158
  %v6416 = vpop.f32.mrb[0].mxu0
  %v6417 = vadd.f32 0.0, %v6416
  %v6418 = vpop.f32.mrb[0].mxu0
  %v6419 = vpop.f32.mrb[0].mxu0
  %v6420 = vadd.f32 0.0, %v6419
  %v6421 = vpop.f32.mrb[0].mxu0
  %6422 = vmatprep.mubr.bf16.mxu0 0
  %6423 = vmatmul.mubr.bf16.gmra.mrb[0].mxu0 %v6161
  %v6424 = vpop.f32.mrb[0].mxu0
  %v6425 = vadd.f32 0.0, %v6424
  %v6426 = vpop.f32.mrb[0].mxu0
  %v6427 = vpop.f32.mrb[0].mxu0
  %v6428 = vadd.f32 0.0, %v6427
  %v6429 = vpop.f32.mrb[0].mxu0
  %6430 = vmatprep.mubr.bf16.mxu0 0
  %6431 = vmatmul.mubr.bf16.gmra.mrb[0].mxu0 %v6164
  %v6432 = vpop.f32.mrb[0].mxu0
  %v6433 = vadd.f32 0.0, %v6432
  %v6434 = vpop.f32.mrb[0].mxu0
  %v6435 = vpop.f32.mrb[0].mxu0
  %v6436 = vadd.f32 0.0, %v6435
  %v6437 = vpop.f32.mrb[0].mxu0
  %6438 = vmatprep.mubr.bf16.mxu0 0
  %6439 = vmatmul.mubr.bf16.gmra.mrb[0].mxu0 %v6167
  %v6440 = vpop.f32.mrb[0].mxu0
  %v6441 = vadd.f32 0.0, %v6440
  %v6442 = vpop.f32.mrb[0].mxu0
  %v6443 = vpop.f32.mrb[0].mxu0
  %v6444 = vadd.f32 0.0, %v6443
  %v6445 = vpop.f32.mrb[0].mxu0
  %6446 = vmatprep.mubr.bf16.mxu0 0
  %6447 = vmatmul.mubr.bf16.gmra.mrb[0].mxu0 %v6170
  %v6448 = vpop.f32.mrb[0].mxu0
  %v6449 = vadd.f32 0.0, %v6448
  %v6450 = vpop.f32.mrb[0].mxu0
  %v6451 = vpop.f32.mrb[0].mxu0
  %v6452 = vadd.f32 0.0, %v6451
  %v6453 = vpop.f32.mrb[0].mxu0
  %6454 = vmatprep.mubr.bf16.mxu0 0
  %6455 = vmatmul.mubr.bf16.gmra.mrb[0].mxu0 %v6173
  %v6456 = vpop.f32.mrb[0].mxu0
  %v6457 = vadd.f32 0.0, %v6456
  %v6458 = vpop.f32.mrb[0].mxu0
  %v6459 = vpop.f32.mrb[0].mxu0
  %v6460 = vadd.f32 0.0, %v6459
  %v6461 = vpop.f32.mrb[0].mxu0
  %6462 = vmatprep.mubr.bf16.mxu0 0
  %6463 = vmatmul.mubr.bf16.gmra.mrb[0].mxu0 %v6176
  %v6464 = vpop.f32.mrb[0].mxu0
  %v6465 = vadd.f32 0.0, %v6464
  %v6466 = vpop.f32.mrb[0].mxu0
  %v6467 = vpop.f32.mrb[0].mxu0
  %v6468 = vadd.f32 0.0, %v6467
  %v6469 = vpop.f32.mrb[0].mxu0
  %6470 = vdwg.mxu0
  %v6472 = vsel %vm5194, %v5954, 0
  %v6475 = vsel %vm5194, %v5955, 0
  %v6478 = vsel %vm5194, %v5956, 0
  %v6481 = vsel %vm5194, %v5957, 0
  %v6484 = vsel %vm5194, %v5958, 0
  %v6487 = vsel %vm5194, %v5959, 0
  %v6490 = vsel %vm5194, %v5960, 0
  %v6493 = vsel %vm5194, %v5961, 0
  %v6496 = vsel %vm5194, %v5962, 0
  %v6499 = vsel %vm5194, %v5963, 0
  %v6502 = vsel %vm5194, %v5964, 0
  %v6505 = vsel %vm5194, %v5965, 0
  %v6508 = vsel %vm5194, %v5966, 0
  %v6511 = vsel %vm5194, %v5967, 0
  %v6514 = vsel %vm5194, %v5968, 0
  %v6517 = vsel %vm5194, %v5969, 0
  %v6520 = vsel %vm5194, %v5970, 0
  %v6523 = vsel %vm5194, %v5971, 0
  %v6526 = vsel %vm5194, %v5972, 0
  %v6529 = vsel %vm5194, %v5973, 0
  %v6532 = vsel %vm5194, %v5974, 0
  %v6535 = vsel %vm5194, %v5975, 0
  %v6538 = vsel %vm5194, %v5976, 0
  %v6541 = vsel %vm5194, %v5977, 0
  %v6544 = vsel %vm5194, %v5978, 0
  %v6547 = vsel %vm5194, %v5979, 0
  %v6550 = vsel %vm5194, %v5980, 0
  %v6553 = vsel %vm5194, %v5981, 0
  %v6556 = vsel %vm5194, %v5982, 0
  %v6559 = vsel %vm5194, %v5983, 0
  %v6562 = vsel %vm5194, %v5984, 0
  %v6565 = vsel %vm5194, %v5985, 0
  %v6568 = vsel %vm6178, %v5878, 0
  %6570 = vmatprep.subr.bf16.mxu0 0
  %6571 = vmatpush1.bf16.msra.mxu0 %v6568
  %6572 = vmatprep.subr.bf16.mxu0 0
  %6573 = vmatpush1.bf16.msra.mxu0 0
  %6574 = vmatprep.subr.bf16.mxu0 0
  %6575 = vmatpush1.bf16.msra.mxu0 0
  %6576 = vmatprep.subr.bf16.mxu0 0
  %6577 = vmatpush1.bf16.msra.mxu0 0
  %6578 = vmatprep.subr.bf16.mxu0 0
  %6579 = vmatpush1.bf16.msra.mxu0 0
  %6580 = vmatprep.subr.bf16.mxu0 0
  %6581 = vmatpush1.bf16.msra.mxu0 0
  %6582 = vmatprep.subr.bf16.mxu0 0
  %6583 = vmatpush1.bf16.msra.mxu0 0
  %6584 = vmatprep.subr.bf16.mxu0 0
  %6585 = vmatpush1.bf16.msra.mxu0 0
  %6586 = vmatprep.subr.bf16.mxu0 0
  %6587 = vmatpush1.bf16.msra.mxu0 0
  %6588 = vmatprep.subr.bf16.mxu0 0
  %6589 = vmatpush1.bf16.msra.mxu0 0
  %6590 = vmatprep.subr.bf16.mxu0 0
  %6591 = vmatpush1.bf16.msra.mxu0 0
  %6592 = vmatprep.subr.bf16.mxu0 0
  %6593 = vmatpush1.bf16.msra.mxu0 0
  %6594 = vmatprep.subr.bf16.mxu0 0
  %6595 = vmatpush1.bf16.msra.mxu0 0
  %6596 = vmatprep.subr.bf16.mxu0 0
  %6597 = vmatpush1.bf16.msra.mxu0 0
  %6598 = vmatprep.subr.bf16.mxu0 0
  %6599 = vmatpush1.bf16.msra.mxu0 0
  %6600 = vmatprep.subr.bf16.mxu0 0
  %6601 = vmatpush1.bf16.msra.mxu0 0
  %6602 = vmatprep.mubr.bf16.mxu0 0
  %6603 = vmatmul.mubr.bf16.gmra.mrb[0].mxu0 %v6472
  %v6604 = vpop.f32.mrb[0].mxu0
  %v6605 = vadd.f32 %v6217, %v6604
  %v6606 = vpop.f32.mrb[0].mxu0
  %v6607 = vpop.f32.mrb[0].mxu0
  %v6608 = vadd.f32 %v6220, %v6607
  %v6609 = vpop.f32.mrb[0].mxu0
  %6610 = vmatprep.mubr.bf16.mxu0 0
  %6611 = vmatmul.mubr.bf16.gmra.mrb[0].mxu0 %v6475
  %v6612 = vpop.f32.mrb[0].mxu0
  %v6613 = vadd.f32 %v6225, %v6612
  %v6614 = vpop.f32.mrb[0].mxu0
  %v6615 = vpop.f32.mrb[0].mxu0
  %v6616 = vadd.f32 %v6228, %v6615
  %v6617 = vpop.f32.mrb[0].mxu0
  %6618 = vmatprep.mubr.bf16.mxu0 0
  %6619 = vmatmul.mubr.bf16.gmra.mrb[0].mxu0 %v6478
  %v6620 = vpop.f32.mrb[0].mxu0
  %v6621 = vadd.f32 %v6233, %v6620
  %v6622 = vpop.f32.mrb[0].mxu0
  %v6623 = vpop.f32.mrb[0].mxu0
  %v6624 = vadd.f32 %v6236, %v6623
  %v6625 = vpop.f32.mrb[0].mxu0
  %6626 = vmatprep.mubr.bf16.mxu0 0
  %6627 = vmatmul.mubr.bf16.gmra.mrb[0].mxu0 %v6481
  %v6628 = vpop.f32.mrb[0].mxu0
  %v6629 = vadd.f32 %v6241, %v6628
  %v6630 = vpop.f32.mrb[0].mxu0
  %v6631 = vpop.f32.mrb[0].mxu0
  %v6632 = vadd.f32 %v6244, %v6631
  %v6633 = vpop.f32.mrb[0].mxu0
  %6634 = vmatprep.mubr.bf16.mxu0 0
  %6635 = vmatmul.mubr.bf16.gmra.mrb[0].mxu0 %v6484
  %v6636 = vpop.f32.mrb[0].mxu0
  %v6637 = vadd.f32 %v6249, %v6636
  %v6638 = vpop.f32.mrb[0].mxu0
  %v6639 = vpop.f32.mrb[0].mxu0
  %v6640 = vadd.f32 %v6252, %v6639
  %v6641 = vpop.f32.mrb[0].mxu0
  %6642 = vmatprep.mubr.bf16.mxu0 0
  %6643 = vmatmul.mubr.bf16.gmra.mrb[0].mxu0 %v6487
  %v6644 = vpop.f32.mrb[0].mxu0
  %v6645 = vadd.f32 %v6257, %v6644
  %v6646 = vpop.f32.mrb[0].mxu0
  %v6647 = vpop.f32.mrb[0].mxu0
  %v6648 = vadd.f32 %v6260, %v6647
  %v6649 = vpop.f32.mrb[0].mxu0
  %6650 = vmatprep.mubr.bf16.mxu0 0
  %6651 = vmatmul.mubr.bf16.gmra.mrb[0].mxu0 %v6490
  %v6652 = vpop.f32.mrb[0].mxu0
  %v6653 = vadd.f32 %v6265, %v6652
  %v6654 = vpop.f32.mrb[0].mxu0
  %v6655 = vpop.f32.mrb[0].mxu0
  %v6656 = vadd.f32 %v6268, %v6655
  %v6657 = vpop.f32.mrb[0].mxu0
  %6658 = vmatprep.mubr.bf16.mxu0 0
  %6659 = vmatmul.mubr.bf16.gmra.mrb[0].mxu0 %v6493
  %v6660 = vpop.f32.mrb[0].mxu0
  %v6661 = vadd.f32 %v6273, %v6660
  %v6662 = vpop.f32.mrb[0].mxu0
  %v6663 = vpop.f32.mrb[0].mxu0
  %v6664 = vadd.f32 %v6276, %v6663
  %v6665 = vpop.f32.mrb[0].mxu0
  %6666 = vmatprep.mubr.bf16.mxu0 0
  %6667 = vmatmul.mubr.bf16.gmra.mrb[0].mxu0 %v6496
  %v6668 = vpop.f32.mrb[0].mxu0
  %v6669 = vadd.f32 %v6281, %v6668
  %v6670 = vpop.f32.mrb[0].mxu0
  %v6671 = vpop.f32.mrb[0].mxu0
  %v6672 = vadd.f32 %v6284, %v6671
  %v6673 = vpop.f32.mrb[0].mxu0
  %6674 = vmatprep.mubr.bf16.mxu0 0
  %6675 = vmatmul.mubr.bf16.gmra.mrb[0].mxu0 %v6499
  %v6676 = vpop.f32.mrb[0].mxu0
  %v6677 = vadd.f32 %v6289, %v6676
  %v6678 = vpop.f32.mrb[0].mxu0
  %v6679 = vpop.f32.mrb[0].mxu0
  %v6680 = vadd.f32 %v6292, %v6679
  %v6681 = vpop.f32.mrb[0].mxu0
  %6682 = vmatprep.mubr.bf16.mxu0 0
  %6683 = vmatmul.mubr.bf16.gmra.mrb[0].mxu0 %v6502
  %v6684 = vpop.f32.mrb[0].mxu0
  %v6685 = vadd.f32 %v6297, %v6684
  %v6686 = vpop.f32.mrb[0].mxu0
  %v6687 = vpop.f32.mrb[0].mxu0
  %v6688 = vadd.f32 %v6300, %v6687
  %v6689 = vpop.f32.mrb[0].mxu0
  %6690 = vmatprep.mubr.bf16.mxu0 0
  %6691 = vmatmul.mubr.bf16.gmra.mrb[0].mxu0 %v6505
  %v6692 = vpop.f32.mrb[0].mxu0
  %v6693 = vadd.f32 %v6305, %v6692
  %v6694 = vpop.f32.mrb[0].mxu0
  %v6695 = vpop.f32.mrb[0].mxu0
  %v6696 = vadd.f32 %v6308, %v6695
  %v6697 = vpop.f32.mrb[0].mxu0
  %6698 = vmatprep.mubr.bf16.mxu0 0
  %6699 = vmatmul.mubr.bf16.gmra.mrb[0].mxu0 %v6508
  %v6700 = vpop.f32.mrb[0].mxu0
  %v6701 = vadd.f32 %v6313, %v6700
  %v6702 = vpop.f32.mrb[0].mxu0
  %v6703 = vpop.f32.mrb[0].mxu0
  %v6704 = vadd.f32 %v6316, %v6703
  %v6705 = vpop.f32.mrb[0].mxu0
  %6706 = vmatprep.mubr.bf16.mxu0 0
  %6707 = vmatmul.mubr.bf16.gmra.mrb[0].mxu0 %v6511
  %v6708 = vpop.f32.mrb[0].mxu0
  %v6709 = vadd.f32 %v6321, %v6708
  %v6710 = vpop.f32.mrb[0].mxu0
  %v6711 = vpop.f32.mrb[0].mxu0
  %v6712 = vadd.f32 %v6324, %v6711
  %v6713 = vpop.f32.mrb[0].mxu0
  %6714 = vmatprep.mubr.bf16.mxu0 0
  %6715 = vmatmul.mubr.bf16.gmra.mrb[0].mxu0 %v6514
  %v6716 = vpop.f32.mrb[0].mxu0
  %v6717 = vadd.f32 %v6329, %v6716
  %v6718 = vpop.f32.mrb[0].mxu0
  %v6719 = vpop.f32.mrb[0].mxu0
  %v6720 = vadd.f32 %v6332, %v6719
  %v6721 = vpop.f32.mrb[0].mxu0
  %6722 = vmatprep.mubr.bf16.mxu0 0
  %6723 = vmatmul.mubr.bf16.gmra.mrb[0].mxu0 %v6517
  %v6724 = vpop.f32.mrb[0].mxu0
  %v6725 = vadd.f32 %v6337, %v6724
  %v6726 = vpop.f32.mrb[0].mxu0
  %v6727 = vpop.f32.mrb[0].mxu0
  %v6728 = vadd.f32 %v6340, %v6727
  %v6729 = vpop.f32.mrb[0].mxu0
  %6730 = vmatprep.mubr.bf16.mxu0 0
  %6731 = vmatmul.mubr.bf16.gmra.mrb[0].mxu0 %v6520
  %v6732 = vpop.f32.mrb[0].mxu0
  %v6733 = vadd.f32 %v6345, %v6732
  %v6734 = vpop.f32.mrb[0].mxu0
  %v6735 = vpop.f32.mrb[0].mxu0
  %v6736 = vadd.f32 %v6348, %v6735
  %v6737 = vpop.f32.mrb[0].mxu0
  %6738 = vmatprep.mubr.bf16.mxu0 0
  %6739 = vmatmul.mubr.bf16.gmra.mrb[0].mxu0 %v6523
  %v6740 = vpop.f32.mrb[0].mxu0
  %v6741 = vadd.f32 %v6353, %v6740
  %v6742 = vpop.f32.mrb[0].mxu0
  %v6743 = vpop.f32.mrb[0].mxu0
  %v6744 = vadd.f32 %v6356, %v6743
  %v6745 = vpop.f32.mrb[0].mxu0
  %6746 = vmatprep.mubr.bf16.mxu0 0
  %6747 = vmatmul.mubr.bf16.gmra.mrb[0].mxu0 %v6526
  %v6748 = vpop.f32.mrb[0].mxu0
  %v6749 = vadd.f32 %v6361, %v6748
  %v6750 = vpop.f32.mrb[0].mxu0
  %v6751 = vpop.f32.mrb[0].mxu0
  %v6752 = vadd.f32 %v6364, %v6751
  %v6753 = vpop.f32.mrb[0].mxu0
  %6754 = vmatprep.mubr.bf16.mxu0 0
  %6755 = vmatmul.mubr.bf16.gmra.mrb[0].mxu0 %v6529
  %v6756 = vpop.f32.mrb[0].mxu0
  %v6757 = vadd.f32 %v6369, %v6756
  %v6758 = vpop.f32.mrb[0].mxu0
  %v6759 = vpop.f32.mrb[0].mxu0
  %v6760 = vadd.f32 %v6372, %v6759
  %v6761 = vpop.f32.mrb[0].mxu0
  %6762 = vmatprep.mubr.bf16.mxu0 0
  %6763 = vmatmul.mubr.bf16.gmra.mrb[0].mxu0 %v6532
  %v6764 = vpop.f32.mrb[0].mxu0
  %v6765 = vadd.f32 %v6377, %v6764
  %v6766 = vpop.f32.mrb[0].mxu0
  %v6767 = vpop.f32.mrb[0].mxu0
  %v6768 = vadd.f32 %v6380, %v6767
  %v6769 = vpop.f32.mrb[0].mxu0
  %6770 = vmatprep.mubr.bf16.mxu0 0
  %6771 = vmatmul.mubr.bf16.gmra.mrb[0].mxu0 %v6535
  %v6772 = vpop.f32.mrb[0].mxu0
  %v6773 = vadd.f32 %v6385, %v6772
  %v6774 = vpop.f32.mrb[0].mxu0
  %v6775 = vpop.f32.mrb[0].mxu0
  %v6776 = vadd.f32 %v6388, %v6775
  %v6777 = vpop.f32.mrb[0].mxu0
  %6778 = vmatprep.mubr.bf16.mxu0 0
  %6779 = vmatmul.mubr.bf16.gmra.mrb[0].mxu0 %v6538
  %v6780 = vpop.f32.mrb[0].mxu0
  %v6781 = vadd.f32 %v6393, %v6780
  %v6782 = vpop.f32.mrb[0].mxu0
  %v6783 = vpop.f32.mrb[0].mxu0
  %v6784 = vadd.f32 %v6396, %v6783
  %v6785 = vpop.f32.mrb[0].mxu0
  %6786 = vmatprep.mubr.bf16.mxu0 0
  %6787 = vmatmul.mubr.bf16.gmra.mrb[0].mxu0 %v6541
  %v6788 = vpop.f32.mrb[0].mxu0
  %v6789 = vadd.f32 %v6401, %v6788
  %v6790 = vpop.f32.mrb[0].mxu0
  %v6791 = vpop.f32.mrb[0].mxu0
  %v6792 = vadd.f32 %v6404, %v6791
  %v6793 = vpop.f32.mrb[0].mxu0
  %6794 = vmatprep.mubr.bf16.mxu0 0
  %6795 = vmatmul.mubr.bf16.gmra.mrb[0].mxu0 %v6544
  %v6796 = vpop.f32.mrb[0].mxu0
  %v6797 = vadd.f32 %v6409, %v6796
  %v6798 = vpop.f32.mrb[0].mxu0
  %v6799 = vpop.f32.mrb[0].mxu0
  %v6800 = vadd.f32 %v6412, %v6799
  %v6801 = vpop.f32.mrb[0].mxu0
  %6802 = vmatprep.mubr.bf16.mxu0 0
  %6803 = vmatmul.mubr.bf16.gmra.mrb[0].mxu0 %v6547
  %v6804 = vpop.f32.mrb[0].mxu0
  %v6805 = vadd.f32 %v6417, %v6804
  %v6806 = vpop.f32.mrb[0].mxu0
  %v6807 = vpop.f32.mrb[0].mxu0
  %v6808 = vadd.f32 %v6420, %v6807
  %v6809 = vpop.f32.mrb[0].mxu0
  %6810 = vmatprep.mubr.bf16.mxu0 0
  %6811 = vmatmul.mubr.bf16.gmra.mrb[0].mxu0 %v6550
  %v6812 = vpop.f32.mrb[0].mxu0
  %v6813 = vadd.f32 %v6425, %v6812
  %v6814 = vpop.f32.mrb[0].mxu0
  %v6815 = vpop.f32.mrb[0].mxu0
  %v6816 = vadd.f32 %v6428, %v6815
  %v6817 = vpop.f32.mrb[0].mxu0
  %6818 = vmatprep.mubr.bf16.mxu0 0
  %6819 = vmatmul.mubr.bf16.gmra.mrb[0].mxu0 %v6553
  %v6820 = vpop.f32.mrb[0].mxu0
  %v6821 = vadd.f32 %v6433, %v6820
  %v6822 = vpop.f32.mrb[0].mxu0
  %v6823 = vpop.f32.mrb[0].mxu0
  %v6824 = vadd.f32 %v6436, %v6823
  %v6825 = vpop.f32.mrb[0].mxu0
  %6826 = vmatprep.mubr.bf16.mxu0 0
  %6827 = vmatmul.mubr.bf16.gmra.mrb[0].mxu0 %v6556
  %v6828 = vpop.f32.mrb[0].mxu0
  %v6829 = vadd.f32 %v6441, %v6828
  %v6830 = vpop.f32.mrb[0].mxu0
  %v6831 = vpop.f32.mrb[0].mxu0
  %v6832 = vadd.f32 %v6444, %v6831
  %v6833 = vpop.f32.mrb[0].mxu0
  %6834 = vmatprep.mubr.bf16.mxu0 0
  %6835 = vmatmul.mubr.bf16.gmra.mrb[0].mxu0 %v6559
  %v6836 = vpop.f32.mrb[0].mxu0
  %v6837 = vadd.f32 %v6449, %v6836
  %v6838 = vpop.f32.mrb[0].mxu0
  %v6839 = vpop.f32.mrb[0].mxu0
  %v6840 = vadd.f32 %v6452, %v6839
  %v6841 = vpop.f32.mrb[0].mxu0
  %6842 = vmatprep.mubr.bf16.mxu0 0
  %6843 = vmatmul.mubr.bf16.gmra.mrb[0].mxu0 %v6562
  %v6844 = vpop.f32.mrb[0].mxu0
  %v6845 = vadd.f32 %v6457, %v6844
  %v6846 = vpop.f32.mrb[0].mxu0
  %v6847 = vpop.f32.mrb[0].mxu0
  %v6848 = vadd.f32 %v6460, %v6847
  %v6849 = vpop.f32.mrb[0].mxu0
  %6850 = vmatprep.mubr.bf16.mxu0 0
  %6851 = vmatmul.mubr.bf16.gmra.mrb[0].mxu0 %v6565
  %v6852 = vpop.f32.mrb[0].mxu0
  %v6853 = vadd.f32 %v6465, %v6852
  %v6854 = vpop.f32.mrb[0].mxu0
  %v6855 = vpop.f32.mrb[0].mxu0
  %v6856 = vadd.f32 %v6468, %v6855
  %v6857 = vpop.f32.mrb[0].mxu0
  %6858 = vdwg.mxu0
  %v6859 = vld [vmem:[#allocation3 + $0x2] sm:$0xff]
  %v6860 = vld [vmem:[#allocation3 + $0xa] sm:$0xff]
  %v6861 = vld [vmem:[#allocation3 + $0x1a] sm:$0xff]
  %v6862 = vld [vmem:[#allocation3 + $0x22] sm:$0xff]
  %v6863 = vld [vmem:[#allocation3 + $0x32] sm:$0xff]
  %v6864 = vld [vmem:[#allocation3 + $0x3a] sm:$0xff]
  %v6865 = vld [vmem:[#allocation3 + $0x4a] sm:$0xff]
  %v6866 = vld [vmem:[#allocation3 + $0x52] sm:$0xff]
  %v6867 = vld [vmem:[#allocation3 + $0x62] sm:$0xff]
  %v6868 = vld [vmem:[#allocation3 + $0x6a] sm:$0xff]
  %v6869 = vld [vmem:[#allocation3 + $0x7a] sm:$0xff]
  %v6870 = vld [vmem:[#allocation3 + $0x82] sm:$0xff]
  %v6871 = vld [vmem:[#allocation3 + $0x92] sm:$0xff]
  %v6872 = vld [vmem:[#allocation3 + $0x9a] sm:$0xff]
  %v6873 = vld [vmem:[#allocation3 + $0xaa] sm:$0xff]
  %v6874 = vld [vmem:[#allocation3 + $0xb2] sm:$0xff]
  %v6875 = vld [vmem:[#allocation3 + $0xc2] sm:$0xff]
  %v6876 = vld [vmem:[#allocation3 + $0xca] sm:$0xff]
  %v6877 = vld [vmem:[#allocation3 + $0xda] sm:$0xff]
  %v6878 = vld [vmem:[#allocation3 + $0xe2] sm:$0xff]
  %v6879 = vld [vmem:[#allocation3 + $0xf2] sm:$0xff]
  %v6880 = vld [vmem:[#allocation3 + $0xfa] sm:$0xff]
  %v6881 = vld [vmem:[#allocation3 + $0x10a] sm:$0xff]
  %v6882 = vld [vmem:[#allocation3 + $0x112] sm:$0xff]
  %v6883 = vld [vmem:[#allocation3 + $0x122] sm:$0xff]
  %v6884 = vld [vmem:[#allocation3 + $0x12a] sm:$0xff]
  %v6885 = vld [vmem:[#allocation3 + $0x13a] sm:$0xff]
  %v6886 = vld [vmem:[#allocation3 + $0x142] sm:$0xff]
  %v6887 = vld [vmem:[#allocation3 + $0x152] sm:$0xff]
  %v6888 = vld [vmem:[#allocation3 + $0x15a] sm:$0xff]
  %v6889 = vld [vmem:[#allocation3 + $0x16a] sm:$0xff]
  %v6890 = vld [vmem:[#allocation3 + $0x172] sm:$0xff]
  %v6891 = vld [vmem:[#allocation3 + $0x1b2] sm:$0xff]
  %v6892 = vld [vmem:[#allocation3 + $0x1ba] sm:$0xff]
  %v6893 = vld [vmem:[#allocation3 + $0x1ca] sm:$0xff]
  %v6894 = vld [vmem:[#allocation3 + $0x1d2] sm:$0xff]
  %v6895 = vld [vmem:[#allocation3 + $0x1e2] sm:$0xff]
  %v6896 = vld [vmem:[#allocation3 + $0x1ea] sm:$0xff]
  %v6897 = vld [vmem:[#allocation3 + $0x1fa] sm:$0xff]
  %v6898 = vld [vmem:[#allocation3 + $0x202] sm:$0xff]
  %v6899 = vld [vmem:[#allocation3 + $0x212] sm:$0xff]
  %v6900 = vld [vmem:[#allocation3 + $0x21a] sm:$0xff]
  %v6901 = vld [vmem:[#allocation3 + $0x22a] sm:$0xff]
  %v6902 = vld [vmem:[#allocation3 + $0x232] sm:$0xff]
  %v6903 = vld [vmem:[#allocation3 + $0x242] sm:$0xff]
  %v6904 = vld [vmem:[#allocation3 + $0x24a] sm:$0xff]
  %v6905 = vld [vmem:[#allocation3 + $0x25a] sm:$0xff]
  %v6906 = vld [vmem:[#allocation3 + $0x262] sm:$0xff]
  %v6907 = vld [vmem:[#allocation3 + $0x272] sm:$0xff]
  %v6908 = vld [vmem:[#allocation3 + $0x27a] sm:$0xff]
  %v6909 = vld [vmem:[#allocation3 + $0x28a] sm:$0xff]
  %v6910 = vld [vmem:[#allocation3 + $0x292] sm:$0xff]
  %v6911 = vld [vmem:[#allocation3 + $0x2a2] sm:$0xff]
  %v6912 = vld [vmem:[#allocation3 + $0x2aa] sm:$0xff]
  %v6913 = vld [vmem:[#allocation3 + $0x2ba] sm:$0xff]
  %v6914 = vld [vmem:[#allocation3 + $0x2c2] sm:$0xff]
  %v6915 = vld [vmem:[#allocation3 + $0x2d2] sm:$0xff]
  %v6916 = vld [vmem:[#allocation3 + $0x2da] sm:$0xff]
  %v6917 = vld [vmem:[#allocation3 + $0x2ea] sm:$0xff]
  %v6918 = vld [vmem:[#allocation3 + $0x2f2] sm:$0xff]
  %v6919 = vld [vmem:[#allocation3 + $0x302] sm:$0xff]
  %v6920 = vld [vmem:[#allocation3 + $0x30a] sm:$0xff]
  %v6921 = vld [vmem:[#allocation3 + $0x31a] sm:$0xff]
  %v6922 = vld [vmem:[#allocation3 + $0x322] sm:$0xff]
  %v6923 = vpack.c.bf16 %v6860, %v6859
  %v6924 = vpack.c.bf16 %v6862, %v6861
  %v6925 = vpack.c.bf16 %v6864, %v6863
  %v6926 = vpack.c.bf16 %v6866, %v6865
  %v6927 = vpack.c.bf16 %v6868, %v6867
  %v6928 = vpack.c.bf16 %v6870, %v6869
  %v6929 = vpack.c.bf16 %v6872, %v6871
  %v6930 = vpack.c.bf16 %v6874, %v6873
  %v6931 = vpack.c.bf16 %v6876, %v6875
  %v6932 = vpack.c.bf16 %v6878, %v6877
  %v6933 = vpack.c.bf16 %v6880, %v6879
  %v6934 = vpack.c.bf16 %v6882, %v6881
  %v6935 = vpack.c.bf16 %v6884, %v6883
  %v6936 = vpack.c.bf16 %v6886, %v6885
  %v6937 = vpack.c.bf16 %v6888, %v6887
  %v6938 = vpack.c.bf16 %v6890, %v6889
  %v6939 = vpack.c.bf16 %v6892, %v6891
  %v6940 = vpack.c.bf16 %v6894, %v6893
  %v6941 = vpack.c.bf16 %v6896, %v6895
  %v6942 = vpack.c.bf16 %v6898, %v6897
  %v6943 = vpack.c.bf16 %v6900, %v6899
  %v6944 = vpack.c.bf16 %v6902, %v6901
  %v6945 = vpack.c.bf16 %v6904, %v6903
  %v6946 = vpack.c.bf16 %v6906, %v6905
  %v6947 = vpack.c.bf16 %v6908, %v6907
  %v6948 = vpack.c.bf16 %v6910, %v6909
  %v6949 = vpack.c.bf16 %v6912, %v6911
  %v6950 = vpack.c.bf16 %v6914, %v6913
  %v6951 = vpack.c.bf16 %v6916, %v6915
  %v6952 = vpack.c.bf16 %v6918, %v6917
  %v6953 = vpack.c.bf16 %v6920, %v6919
  %v6954 = vpack.c.bf16 %v6922, %v6921
  %v6956 = vsel %vm5194, %v6923, 0
  %v6959 = vsel %vm5194, %v6924, 0
  %v6962 = vsel %vm5194, %v6925, 0
  %v6965 = vsel %vm5194, %v6926, 0
  %v6968 = vsel %vm5194, %v6927, 0
  %v6971 = vsel %vm5194, %v6928, 0
  %v6974 = vsel %vm5194, %v6929, 0
  %v6977 = vsel %vm5194, %v6930, 0
  %v6980 = vsel %vm5194, %v6931, 0
  %v6983 = vsel %vm5194, %v6932, 0
  %v6986 = vsel %vm5194, %v6933, 0
  %v6989 = vsel %vm5194, %v6934, 0
  %v6992 = vsel %vm5194, %v6935, 0
  %v6995 = vsel %vm5194, %v6936, 0
  %v6998 = vsel %vm5194, %v6937, 0
  %v7001 = vsel %vm5194, %v6938, 0
  %v7004 = vsel %vm5194, %v6939, 0
  %v7007 = vsel %vm5194, %v6940, 0
  %v7010 = vsel %vm5194, %v6941, 0
  %v7013 = vsel %vm5194, %v6942, 0
  %v7016 = vsel %vm5194, %v6943, 0
  %v7019 = vsel %vm5194, %v6944, 0
  %v7022 = vsel %vm5194, %v6945, 0
  %v7025 = vsel %vm5194, %v6946, 0
  %v7028 = vsel %vm5194, %v6947, 0
  %v7031 = vsel %vm5194, %v6948, 0
  %v7034 = vsel %vm5194, %v6949, 0
  %v7037 = vsel %vm5194, %v6950, 0
  %v7040 = vsel %vm5194, %v6951, 0
  %v7043 = vsel %vm5194, %v6952, 0
  %v7046 = vsel %vm5194, %v6953, 0
  %v7049 = vsel %vm5194, %v6954, 0
  %v7052 = vsel %vm6178, %v5880, 0
  %7054 = vmatprep.subr.bf16.mxu0 0
  %7055 = vmatpush1.bf16.msra.mxu0 %v7052
  %7056 = vmatprep.subr.bf16.mxu0 0
  %7057 = vmatpush1.bf16.msra.mxu0 0
  %7058 = vmatprep.subr.bf16.mxu0 0
  %7059 = vmatpush1.bf16.msra.mxu0 0
  %7060 = vmatprep.subr.bf16.mxu0 0
  %7061 = vmatpush1.bf16.msra.mxu0 0
  %7062 = vmatprep.subr.bf16.mxu0 0
  %7063 = vmatpush1.bf16.msra.mxu0 0
  %7064 = vmatprep.subr.bf16.mxu0 0
  %7065 = vmatpush1.bf16.msra.mxu0 0
  %7066 = vmatprep.subr.bf16.mxu0 0
  %7067 = vmatpush1.bf16.msra.mxu0 0
  %7068 = vmatprep.subr.bf16.mxu0 0
  %7069 = vmatpush1.bf16.msra.mxu0 0
  %7070 = vmatprep.subr.bf16.mxu0 0
  %7071 = vmatpush1.bf16.msra.mxu0 0
  %7072 = vmatprep.subr.bf16.mxu0 0
  %7073 = vmatpush1.bf16.msra.mxu0 0
  %7074 = vmatprep.subr.bf16.mxu0 0
  %7075 = vmatpush1.bf16.msra.mxu0 0
  %7076 = vmatprep.subr.bf16.mxu0 0
  %7077 = vmatpush1.bf16.msra.mxu0 0
  %7078 = vmatprep.subr.bf16.mxu0 0
  %7079 = vmatpush1.bf16.msra.mxu0 0
  %7080 = vmatprep.subr.bf16.mxu0 0
  %7081 = vmatpush1.bf16.msra.mxu0 0
  %7082 = vmatprep.subr.bf16.mxu0 0
  %7083 = vmatpush1.bf16.msra.mxu0 0
  %7084 = vmatprep.subr.bf16.mxu0 0
  %7085 = vmatpush1.bf16.msra.mxu0 0
  %7086 = vmatprep.mubr.bf16.mxu0 0
  %7087 = vmatmul.mubr.bf16.gmra.mrb[0].mxu0 %v6956
  %v7088 = vpop.f32.mrb[0].mxu0
  %v7089 = vadd.f32 0.0, %v7088
  %v7090 = vpop.f32.mrb[0].mxu0
  %v7091 = vpop.f32.mrb[0].mxu0
  %v7092 = vadd.f32 0.0, %v7091
  %v7093 = vpop.f32.mrb[0].mxu0
  %7094 = vmatprep.mubr.bf16.mxu0 0
  %7095 = vmatmul.mubr.bf16.gmra.mrb[0].mxu0 %v6959
  %v7096 = vpop.f32.mrb[0].mxu0
  %v7097 = vadd.f32 0.0, %v7096
  %v7098 = vpop.f32.mrb[0].mxu0
  %v7099 = vpop.f32.mrb[0].mxu0
  %v7100 = vadd.f32 0.0, %v7099
  %v7101 = vpop.f32.mrb[0].mxu0
  %7102 = vmatprep.mubr.bf16.mxu0 0
  %7103 = vmatmul.mubr.bf16.gmra.mrb[0].mxu0 %v6962
  %v7104 = vpop.f32.mrb[0].mxu0
  %v7105 = vadd.f32 0.0, %v7104
  %v7106 = vpop.f32.mrb[0].mxu0
  %v7107 = vpop.f32.mrb[0].mxu0
  %v7108 = vadd.f32 0.0, %v7107
  %v7109 = vpop.f32.mrb[0].mxu0
  %7110 = vmatprep.mubr.bf16.mxu0 0
  %7111 = vmatmul.mubr.bf16.gmra.mrb[0].mxu0 %v6965
  %v7112 = vpop.f32.mrb[0].mxu0
  %v7113 = vadd.f32 0.0, %v7112
  %v7114 = vpop.f32.mrb[0].mxu0
  %v7115 = vpop.f32.mrb[0].mxu0
  %v7116 = vadd.f32 0.0, %v7115
  %v7117 = vpop.f32.mrb[0].mxu0
  %7118 = vmatprep.mubr.bf16.mxu0 0
  %7119 = vmatmul.mubr.bf16.gmra.mrb[0].mxu0 %v6968
  %v7120 = vpop.f32.mrb[0].mxu0
  %v7121 = vadd.f32 0.0, %v7120
  %v7122 = vpop.f32.mrb[0].mxu0
  %v7123 = vpop.f32.mrb[0].mxu0
  %v7124 = vadd.f32 0.0, %v7123
  %v7125 = vpop.f32.mrb[0].mxu0
  %7126 = vmatprep.mubr.bf16.mxu0 0
  %7127 = vmatmul.mubr.bf16.gmra.mrb[0].mxu0 %v6971
  %v7128 = vpop.f32.mrb[0].mxu0
  %v7129 = vadd.f32 0.0, %v7128
  %v7130 = vpop.f32.mrb[0].mxu0
  %v7131 = vpop.f32.mrb[0].mxu0
  %v7132 = vadd.f32 0.0, %v7131
  %v7133 = vpop.f32.mrb[0].mxu0
  %7134 = vmatprep.mubr.bf16.mxu0 0
  %7135 = vmatmul.mubr.bf16.gmra.mrb[0].mxu0 %v6974
  %v7136 = vpop.f32.mrb[0].mxu0
  %v7137 = vadd.f32 0.0, %v7136
  %v7138 = vpop.f32.mrb[0].mxu0
  %v7139 = vpop.f32.mrb[0].mxu0
  %v7140 = vadd.f32 0.0, %v7139
  %v7141 = vpop.f32.mrb[0].mxu0
  %7142 = vmatprep.mubr.bf16.mxu0 0
  %7143 = vmatmul.mubr.bf16.gmra.mrb[0].mxu0 %v6977
  %v7144 = vpop.f32.mrb[0].mxu0
  %v7145 = vadd.f32 0.0, %v7144
  %v7146 = vpop.f32.mrb[0].mxu0
  %v7147 = vpop.f32.mrb[0].mxu0
  %v7148 = vadd.f32 0.0, %v7147
  %v7149 = vpop.f32.mrb[0].mxu0
  %7150 = vmatprep.mubr.bf16.mxu0 0
  %7151 = vmatmul.mubr.bf16.gmra.mrb[0].mxu0 %v6980
  %v7152 = vpop.f32.mrb[0].mxu0
  %v7153 = vadd.f32 0.0, %v7152
  %v7154 = vpop.f32.mrb[0].mxu0
  %v7155 = vpop.f32.mrb[0].mxu0
  %v7156 = vadd.f32 0.0, %v7155
  %v7157 = vpop.f32.mrb[0].mxu0
  %7158 = vmatprep.mubr.bf16.mxu0 0
  %7159 = vmatmul.mubr.bf16.gmra.mrb[0].mxu0 %v6983
  %v7160 = vpop.f32.mrb[0].mxu0
  %v7161 = vadd.f32 0.0, %v7160
  %v7162 = vpop.f32.mrb[0].mxu0
  %v7163 = vpop.f32.mrb[0].mxu0
  %v7164 = vadd.f32 0.0, %v7163
  %v7165 = vpop.f32.mrb[0].mxu0
  %7166 = vmatprep.mubr.bf16.mxu0 0
  %7167 = vmatmul.mubr.bf16.gmra.mrb[0].mxu0 %v6986
  %v7168 = vpop.f32.mrb[0].mxu0
  %v7169 = vadd.f32 0.0, %v7168
  %v7170 = vpop.f32.mrb[0].mxu0
  %v7171 = vpop.f32.mrb[0].mxu0
  %v7172 = vadd.f32 0.0, %v7171
  %v7173 = vpop.f32.mrb[0].mxu0
  %7174 = vmatprep.mubr.bf16.mxu0 0
  %7175 = vmatmul.mubr.bf16.gmra.mrb[0].mxu0 %v6989
  %v7176 = vpop.f32.mrb[0].mxu0
  %v7177 = vadd.f32 0.0, %v7176
  %v7178 = vpop.f32.mrb[0].mxu0
  %v7179 = vpop.f32.mrb[0].mxu0
  %v7180 = vadd.f32 0.0, %v7179
  %v7181 = vpop.f32.mrb[0].mxu0
  %7182 = vmatprep.mubr.bf16.mxu0 0
  %7183 = vmatmul.mubr.bf16.gmra.mrb[0].mxu0 %v6992
  %v7184 = vpop.f32.mrb[0].mxu0
  %v7185 = vadd.f32 0.0, %v7184
  %v7186 = vpop.f32.mrb[0].mxu0
  %v7187 = vpop.f32.mrb[0].mxu0
  %v7188 = vadd.f32 0.0, %v7187
  %v7189 = vpop.f32.mrb[0].mxu0
  %7190 = vmatprep.mubr.bf16.mxu0 0
  %7191 = vmatmul.mubr.bf16.gmra.mrb[0].mxu0 %v6995
  %v7192 = vpop.f32.mrb[0].mxu0
  %v7193 = vadd.f32 0.0, %v7192
  %v7194 = vpop.f32.mrb[0].mxu0
  %v7195 = vpop.f32.mrb[0].mxu0
  %v7196 = vadd.f32 0.0, %v7195
  %v7197 = vpop.f32.mrb[0].mxu0
  %7198 = vmatprep.mubr.bf16.mxu0 0
  %7199 = vmatmul.mubr.bf16.gmra.mrb[0].mxu0 %v6998
  %v7200 = vpop.f32.mrb[0].mxu0
  %v7201 = vadd.f32 0.0, %v7200
  %v7202 = vpop.f32.mrb[0].mxu0
  %v7203 = vpop.f32.mrb[0].mxu0
  %v7204 = vadd.f32 0.0, %v7203
  %v7205 = vpop.f32.mrb[0].mxu0
  %7206 = vmatprep.mubr.bf16.mxu0 0
  %7207 = vmatmul.mubr.bf16.gmra.mrb[0].mxu0 %v7001
  %v7208 = vpop.f32.mrb[0].mxu0
  %v7209 = vadd.f32 0.0, %v7208
  %v7210 = vpop.f32.mrb[0].mxu0
  %v7211 = vpop.f32.mrb[0].mxu0
  %v7212 = vadd.f32 0.0, %v7211
  %v7213 = vpop.f32.mrb[0].mxu0
  %7214 = vmatprep.mubr.bf16.mxu0 0
  %7215 = vmatmul.mubr.bf16.gmra.mrb[0].mxu0 %v7004
  %v7216 = vpop.f32.mrb[0].mxu0
  %v7217 = vadd.f32 0.0, %v7216
  %v7218 = vpop.f32.mrb[0].mxu0
  %v7219 = vpop.f32.mrb[0].mxu0
  %v7220 = vadd.f32 0.0, %v7219
  %v7221 = vpop.f32.mrb[0].mxu0
  %7222 = vmatprep.mubr.bf16.mxu0 0
  %7223 = vmatmul.mubr.bf16.gmra.mrb[0].mxu0 %v7007
  %v7224 = vpop.f32.mrb[0].mxu0
  %v7225 = vadd.f32 0.0, %v7224
  %v7226 = vpop.f32.mrb[0].mxu0
  %v7227 = vpop.f32.mrb[0].mxu0
  %v7228 = vadd.f32 0.0, %v7227
  %v7229 = vpop.f32.mrb[0].mxu0
  %7230 = vmatprep.mubr.bf16.mxu0 0
  %7231 = vmatmul.mubr.bf16.gmra.mrb[0].mxu0 %v7010
  %v7232 = vpop.f32.mrb[0].mxu0
  %v7233 = vadd.f32 0.0, %v7232
  %v7234 = vpop.f32.mrb[0].mxu0
  %v7235 = vpop.f32.mrb[0].mxu0
  %v7236 = vadd.f32 0.0, %v7235
  %v7237 = vpop.f32.mrb[0].mxu0
  %7238 = vmatprep.mubr.bf16.mxu0 0
  %7239 = vmatmul.mubr.bf16.gmra.mrb[0].mxu0 %v7013
  %v7240 = vpop.f32.mrb[0].mxu0
  %v7241 = vadd.f32 0.0, %v7240
  %v7242 = vpop.f32.mrb[0].mxu0
  %v7243 = vpop.f32.mrb[0].mxu0
  %v7244 = vadd.f32 0.0, %v7243
  %v7245 = vpop.f32.mrb[0].mxu0
  %7246 = vmatprep.mubr.bf16.mxu0 0
  %7247 = vmatmul.mubr.bf16.gmra.mrb[0].mxu0 %v7016
  %v7248 = vpop.f32.mrb[0].mxu0
  %v7249 = vadd.f32 0.0, %v7248
  %v7250 = vpop.f32.mrb[0].mxu0
  %v7251 = vpop.f32.mrb[0].mxu0
  %v7252 = vadd.f32 0.0, %v7251
  %v7253 = vpop.f32.mrb[0].mxu0
  %7254 = vmatprep.mubr.bf16.mxu0 0
  %7255 = vmatmul.mubr.bf16.gmra.mrb[0].mxu0 %v7019
  %v7256 = vpop.f32.mrb[0].mxu0
  %v7257 = vadd.f32 0.0, %v7256
  %v7258 = vpop.f32.mrb[0].mxu0
  %v7259 = vpop.f32.mrb[0].mxu0
  %v7260 = vadd.f32 0.0, %v7259
  %v7261 = vpop.f32.mrb[0].mxu0
  %7262 = vmatprep.mubr.bf16.mxu0 0
  %7263 = vmatmul.mubr.bf16.gmra.mrb[0].mxu0 %v7022
  %v7264 = vpop.f32.mrb[0].mxu0
  %v7265 = vadd.f32 0.0, %v7264
  %v7266 = vpop.f32.mrb[0].mxu0
  %v7267 = vpop.f32.mrb[0].mxu0
  %v7268 = vadd.f32 0.0, %v7267
  %v7269 = vpop.f32.mrb[0].mxu0
  %7270 = vmatprep.mubr.bf16.mxu0 0
  %7271 = vmatmul.mubr.bf16.gmra.mrb[0].mxu0 %v7025
  %v7272 = vpop.f32.mrb[0].mxu0
  %v7273 = vadd.f32 0.0, %v7272
  %v7274 = vpop.f32.mrb[0].mxu0
  %v7275 = vpop.f32.mrb[0].mxu0
  %v7276 = vadd.f32 0.0, %v7275
  %v7277 = vpop.f32.mrb[0].mxu0
  %7278 = vmatprep.mubr.bf16.mxu0 0
  %7279 = vmatmul.mubr.bf16.gmra.mrb[0].mxu0 %v7028
  %v7280 = vpop.f32.mrb[0].mxu0
  %v7281 = vadd.f32 0.0, %v7280
  %v7282 = vpop.f32.mrb[0].mxu0
  %v7283 = vpop.f32.mrb[0].mxu0
  %v7284 = vadd.f32 0.0, %v7283
  %v7285 = vpop.f32.mrb[0].mxu0
  %7286 = vmatprep.mubr.bf16.mxu0 0
  %7287 = vmatmul.mubr.bf16.gmra.mrb[0].mxu0 %v7031
  %v7288 = vpop.f32.mrb[0].mxu0
  %v7289 = vadd.f32 0.0, %v7288
  %v7290 = vpop.f32.mrb[0].mxu0
  %v7291 = vpop.f32.mrb[0].mxu0
  %v7292 = vadd.f32 0.0, %v7291
  %v7293 = vpop.f32.mrb[0].mxu0
  %7294 = vmatprep.mubr.bf16.mxu0 0
  %7295 = vmatmul.mubr.bf16.gmra.mrb[0].mxu0 %v7034
  %v7296 = vpop.f32.mrb[0].mxu0
  %v7297 = vadd.f32 0.0, %v7296
  %v7298 = vpop.f32.mrb[0].mxu0
  %v7299 = vpop.f32.mrb[0].mxu0
  %v7300 = vadd.f32 0.0, %v7299
  %v7301 = vpop.f32.mrb[0].mxu0
  %7302 = vmatprep.mubr.bf16.mxu0 0
  %7303 = vmatmul.mubr.bf16.gmra.mrb[0].mxu0 %v7037
  %v7304 = vpop.f32.mrb[0].mxu0
  %v7305 = vadd.f32 0.0, %v7304
  %v7306 = vpop.f32.mrb[0].mxu0
  %v7307 = vpop.f32.mrb[0].mxu0
  %v7308 = vadd.f32 0.0, %v7307
  %v7309 = vpop.f32.mrb[0].mxu0
  %7310 = vmatprep.mubr.bf16.mxu0 0
  %7311 = vmatmul.mubr.bf16.gmra.mrb[0].mxu0 %v7040
  %v7312 = vpop.f32.mrb[0].mxu0
  %v7313 = vadd.f32 0.0, %v7312
  %v7314 = vpop.f32.mrb[0].mxu0
  %v7315 = vpop.f32.mrb[0].mxu0
  %v7316 = vadd.f32 0.0, %v7315
  %v7317 = vpop.f32.mrb[0].mxu0
  %7318 = vmatprep.mubr.bf16.mxu0 0
  %7319 = vmatmul.mubr.bf16.gmra.mrb[0].mxu0 %v7043
  %v7320 = vpop.f32.mrb[0].mxu0
  %v7321 = vadd.f32 0.0, %v7320
  %v7322 = vpop.f32.mrb[0].mxu0
  %v7323 = vpop.f32.mrb[0].mxu0
  %v7324 = vadd.f32 0.0, %v7323
  %v7325 = vpop.f32.mrb[0].mxu0
  %7326 = vmatprep.mubr.bf16.mxu0 0
  %7327 = vmatmul.mubr.bf16.gmra.mrb[0].mxu0 %v7046
  %v7328 = vpop.f32.mrb[0].mxu0
  %v7329 = vadd.f32 0.0, %v7328
  %v7330 = vpop.f32.mrb[0].mxu0
  %v7331 = vpop.f32.mrb[0].mxu0
  %v7332 = vadd.f32 0.0, %v7331
  %v7333 = vpop.f32.mrb[0].mxu0
  %7334 = vmatprep.mubr.bf16.mxu0 0
  %7335 = vmatmul.mubr.bf16.gmra.mrb[0].mxu0 %v7049
  %v7336 = vpop.f32.mrb[0].mxu0
  %v7337 = vadd.f32 0.0, %v7336
  %v7338 = vpop.f32.mrb[0].mxu0
  %v7339 = vpop.f32.mrb[0].mxu0
  %v7340 = vadd.f32 0.0, %v7339
  %v7341 = vpop.f32.mrb[0].mxu0
  %7342 = vdwg.mxu0
  %v7343 = vadd.f32 %v6605, %v7089
  %v7344 = vadd.f32 %v6608, %v7092
  %v7345 = vadd.f32 %v6613, %v7097
  %v7346 = vadd.f32 %v6616, %v7100
  %v7347 = vadd.f32 %v6621, %v7105
  %v7348 = vadd.f32 %v6624, %v7108
  %v7349 = vadd.f32 %v6629, %v7113
  %v7350 = vadd.f32 %v6632, %v7116
  %v7351 = vadd.f32 %v6637, %v7121
  %v7352 = vadd.f32 %v6640, %v7124
  %v7353 = vadd.f32 %v6645, %v7129
  %v7354 = vadd.f32 %v6648, %v7132
  %v7355 = vadd.f32 %v6653, %v7137
  %v7356 = vadd.f32 %v6656, %v7140
  %v7357 = vadd.f32 %v6661, %v7145
  %v7358 = vadd.f32 %v6664, %v7148
  %v7359 = vadd.f32 %v6669, %v7153
  %v7360 = vadd.f32 %v6672, %v7156
  %v7361 = vadd.f32 %v6677, %v7161
  %v7362 = vadd.f32 %v6680, %v7164
  %v7363 = vadd.f32 %v6685, %v7169
  %v7364 = vadd.f32 %v6688, %v7172
  %v7365 = vadd.f32 %v6693, %v7177
  %v7366 = vadd.f32 %v6696, %v7180
  %v7367 = vadd.f32 %v6701, %v7185
  %v7368 = vadd.f32 %v6704, %v7188
  %v7369 = vadd.f32 %v6709, %v7193
  %v7370 = vadd.f32 %v6712, %v7196
  %v7371 = vadd.f32 %v6717, %v7201
  %v7372 = vadd.f32 %v6720, %v7204
  %v7373 = vadd.f32 %v6725, %v7209
  %v7374 = vadd.f32 %v6728, %v7212
  %v7375 = vadd.f32 %v6733, %v7217
  %v7376 = vadd.f32 %v6736, %v7220
  %v7377 = vadd.f32 %v6741, %v7225
  %v7378 = vadd.f32 %v6744, %v7228
  %v7379 = vadd.f32 %v6749, %v7233
  %v7380 = vadd.f32 %v6752, %v7236
  %v7381 = vadd.f32 %v6757, %v7241
  %v7382 = vadd.f32 %v6760, %v7244
  %v7383 = vadd.f32 %v6765, %v7249
  %v7384 = vadd.f32 %v6768, %v7252
  %v7385 = vadd.f32 %v6773, %v7257
  %v7386 = vadd.f32 %v6776, %v7260
  %v7387 = vadd.f32 %v6781, %v7265
  %v7388 = vadd.f32 %v6784, %v7268
  %v7389 = vadd.f32 %v6789, %v7273
  %v7390 = vadd.f32 %v6792, %v7276
  %v7391 = vadd.f32 %v6797, %v7281
  %v7392 = vadd.f32 %v6800, %v7284
  %v7393 = vadd.f32 %v6805, %v7289
  %v7394 = vadd.f32 %v6808, %v7292
  %v7395 = vadd.f32 %v6813, %v7297
  %v7396 = vadd.f32 %v6816, %v7300
  %v7397 = vadd.f32 %v6821, %v7305
  %v7398 = vadd.f32 %v6824, %v7308
  %v7399 = vadd.f32 %v6829, %v7313
  %v7400 = vadd.f32 %v6832, %v7316
  %v7401 = vadd.f32 %v6837, %v7321
  %v7402 = vadd.f32 %v6840, %v7324
  %v7403 = vadd.f32 %v6845, %v7329
  %v7404 = vadd.f32 %v6848, %v7332
  %v7405 = vadd.f32 %v6853, %v7337
  %v7406 = vadd.f32 %v6856, %v7340
  %v7407 = vld [vmem:[%s5748] sm:$0xff]
  %v7408 = vld [vmem:[%s5748 + $0x8] sm:$0xff]
  %v7409 = vld [vmem:[%s5748 + $0x18] sm:$0xff]
  %v7410 = vld [vmem:[%s5748 + $0x20] sm:$0xff]
  %v7411 = vld [vmem:[%s5748 + $0x30] sm:$0xff]
  %v7412 = vld [vmem:[%s5748 + $0x38] sm:$0xff]
  %v7413 = vld [vmem:[%s5748 + $0x48] sm:$0xff]
  %v7414 = vld [vmem:[%s5748 + $0x50] sm:$0xff]
  %v7415 = vld [vmem:[%s5748 + $0x60] sm:$0xff]
  %v7416 = vld [vmem:[%s5748 + $0x68] sm:$0xff]
  %v7417 = vld [vmem:[%s5748 + $0x78] sm:$0xff]
  %v7418 = vld [vmem:[%s5748 + $0x80] sm:$0xff]
  %v7419 = vld [vmem:[%s5748 + $0x90] sm:$0xff]
  %v7420 = vld [vmem:[%s5748 + $0x98] sm:$0xff]
  %v7421 = vld [vmem:[%s5748 + $0xa8] sm:$0xff]
  %v7422 = vld [vmem:[%s5748 + $0xb0] sm:$0xff]
  %v7423 = vld [vmem:[%s5748 + $0xc0] sm:$0xff]
  %v7424 = vld [vmem:[%s5748 + $0xc8] sm:$0xff]
  %v7425 = vld [vmem:[%s5748 + $0xd8] sm:$0xff]
  %v7426 = vld [vmem:[%s5748 + $0xe0] sm:$0xff]
  %v7427 = vld [vmem:[%s5748 + $0xf0] sm:$0xff]
  %v7428 = vld [vmem:[%s5748 + $0xf8] sm:$0xff]
  %v7429 = vld [vmem:[%s5748 + $0x108] sm:$0xff]
  %v7430 = vld [vmem:[%s5748 + $0x110] sm:$0xff]
  %v7431 = vld [vmem:[%s5748 + $0x120] sm:$0xff]
  %v7432 = vld [vmem:[%s5748 + $0x128] sm:$0xff]
  %v7433 = vld [vmem:[%s5748 + $0x138] sm:$0xff]
  %v7434 = vld [vmem:[%s5748 + $0x140] sm:$0xff]
  %v7435 = vld [vmem:[%s5748 + $0x150] sm:$0xff]
  %v7436 = vld [vmem:[%s5748 + $0x158] sm:$0xff]
  %v7437 = vld [vmem:[%s5748 + $0x168] sm:$0xff]
  %v7438 = vld [vmem:[%s5748 + $0x170] sm:$0xff]
  %v7439 = vld [vmem:[%s5748 + $0x1b0] sm:$0xff]
  %v7440 = vld [vmem:[%s5748 + $0x1b8] sm:$0xff]
  %v7441 = vld [vmem:[%s5748 + $0x1c8] sm:$0xff]
  %v7442 = vld [vmem:[%s5748 + $0x1d0] sm:$0xff]
  %v7443 = vld [vmem:[%s5748 + $0x1e0] sm:$0xff]
  %v7444 = vld [vmem:[%s5748 + $0x1e8] sm:$0xff]
  %v7445 = vld [vmem:[%s5748 + $0x1f8] sm:$0xff]
  %v7446 = vld [vmem:[%s5748 + $0x200] sm:$0xff]
  %v7447 = vld [vmem:[%s5748 + $0x210] sm:$0xff]
  %v7448 = vld [vmem:[%s5748 + $0x218] sm:$0xff]
  %v7449 = vld [vmem:[%s5748 + $0x228] sm:$0xff]
  %v7450 = vld [vmem:[%s5748 + $0x230] sm:$0xff]
  %v7451 = vld [vmem:[%s5748 + $0x240] sm:$0xff]
  %v7452 = vld [vmem:[%s5748 + $0x248] sm:$0xff]
  %v7453 = vld [vmem:[%s5748 + $0x258] sm:$0xff]
  %v7454 = vld [vmem:[%s5748 + $0x260] sm:$0xff]
  %v7455 = vld [vmem:[%s5748 + $0x270] sm:$0xff]
  %v7456 = vld [vmem:[%s5748 + $0x278] sm:$0xff]
  %v7457 = vld [vmem:[%s5748 + $0x288] sm:$0xff]
  %v7458 = vld [vmem:[%s5748 + $0x290] sm:$0xff]
  %v7459 = vld [vmem:[%s5748 + $0x2a0] sm:$0xff]
  %v7460 = vld [vmem:[%s5748 + $0x2a8] sm:$0xff]
  %v7461 = vld [vmem:[%s5748 + $0x2b8] sm:$0xff]
  %v7462 = vld [vmem:[%s5748 + $0x2c0] sm:$0xff]
  %v7463 = vld [vmem:[%s5748 + $0x2d0] sm:$0xff]
  %v7464 = vld [vmem:[%s5748 + $0x2d8] sm:$0xff]
  %v7465 = vld [vmem:[%s5748 + $0x2e8] sm:$0xff]
  %v7466 = vld [vmem:[%s5748 + $0x2f0] sm:$0xff]
  %v7467 = vld [vmem:[%s5748 + $0x300] sm:$0xff]
  %v7468 = vld [vmem:[%s5748 + $0x308] sm:$0xff]
  %v7469 = vld [vmem:[%s5748 + $0x318] sm:$0xff]
  %v7470 = vld [vmem:[%s5748 + $0x320] sm:$0xff]
  %v7471 = vpack.c.bf16 %v7408, %v7407
  %v7472 = vpack.c.bf16 %v7410, %v7409
  %v7473 = vpack.c.bf16 %v7412, %v7411
  %v7474 = vpack.c.bf16 %v7414, %v7413
  %v7475 = vpack.c.bf16 %v7416, %v7415
  %v7476 = vpack.c.bf16 %v7418, %v7417
  %v7477 = vpack.c.bf16 %v7420, %v7419
  %v7478 = vpack.c.bf16 %v7422, %v7421
  %v7479 = vpack.c.bf16 %v7424, %v7423
  %v7480 = vpack.c.bf16 %v7426, %v7425
  %v7481 = vpack.c.bf16 %v7428, %v7427
  %v7482 = vpack.c.bf16 %v7430, %v7429
  %v7483 = vpack.c.bf16 %v7432, %v7431
  %v7484 = vpack.c.bf16 %v7434, %v7433
  %v7485 = vpack.c.bf16 %v7436, %v7435
  %v7486 = vpack.c.bf16 %v7438, %v7437
  %v7487 = vpack.c.bf16 %v7440, %v7439
  %v7488 = vpack.c.bf16 %v7442, %v7441
  %v7489 = vpack.c.bf16 %v7444, %v7443
  %v7490 = vpack.c.bf16 %v7446, %v7445
  %v7491 = vpack.c.bf16 %v7448, %v7447
  %v7492 = vpack.c.bf16 %v7450, %v7449
  %v7493 = vpack.c.bf16 %v7452, %v7451
  %v7494 = vpack.c.bf16 %v7454, %v7453
  %v7495 = vpack.c.bf16 %v7456, %v7455
  %v7496 = vpack.c.bf16 %v7458, %v7457
  %v7497 = vpack.c.bf16 %v7460, %v7459
  %v7498 = vpack.c.bf16 %v7462, %v7461
  %v7499 = vpack.c.bf16 %v7464, %v7463
  %v7500 = vpack.c.bf16 %v7466, %v7465
  %v7501 = vpack.c.bf16 %v7468, %v7467
  %v7502 = vpack.c.bf16 %v7470, %v7469
  %v7504 = vsel %vm5194, %v7471, 0
  %v7507 = vsel %vm5194, %v7472, 0
  %v7510 = vsel %vm5194, %v7473, 0
  %v7513 = vsel %vm5194, %v7474, 0
  %v7516 = vsel %vm5194, %v7475, 0
  %v7519 = vsel %vm5194, %v7476, 0
  %v7522 = vsel %vm5194, %v7477, 0
  %v7525 = vsel %vm5194, %v7478, 0
  %v7528 = vsel %vm5194, %v7479, 0
  %v7531 = vsel %vm5194, %v7480, 0
  %v7534 = vsel %vm5194, %v7481, 0
  %v7537 = vsel %vm5194, %v7482, 0
  %v7540 = vsel %vm5194, %v7483, 0
  %v7543 = vsel %vm5194, %v7484, 0
  %v7546 = vsel %vm5194, %v7485, 0
  %v7549 = vsel %vm5194, %v7486, 0
  %v7552 = vsel %vm5194, %v7487, 0
  %v7555 = vsel %vm5194, %v7488, 0
  %v7558 = vsel %vm5194, %v7489, 0
  %v7561 = vsel %vm5194, %v7490, 0
  %v7564 = vsel %vm5194, %v7491, 0
  %v7567 = vsel %vm5194, %v7492, 0
  %v7570 = vsel %vm5194, %v7493, 0
  %v7573 = vsel %vm5194, %v7494, 0
  %v7576 = vsel %vm5194, %v7495, 0
  %v7579 = vsel %vm5194, %v7496, 0
  %v7582 = vsel %vm5194, %v7497, 0
  %v7585 = vsel %vm5194, %v7498, 0
  %v7588 = vsel %vm5194, %v7499, 0
  %v7591 = vsel %vm5194, %v7500, 0
  %v7594 = vsel %vm5194, %v7501, 0
  %v7597 = vsel %vm5194, %v7502, 0
  %v7600 = vsel %vm6178, %v5881, 0
  %7602 = vmatprep.subr.bf16.mxu0 0
  %7603 = vmatpush1.bf16.msra.mxu0 %v7600
  %7604 = vmatprep.subr.bf16.mxu0 0
  %7605 = vmatpush1.bf16.msra.mxu0 0
  %7606 = vmatprep.subr.bf16.mxu0 0
  %7607 = vmatpush1.bf16.msra.mxu0 0
  %7608 = vmatprep.subr.bf16.mxu0 0
  %7609 = vmatpush1.bf16.msra.mxu0 0
  %7610 = vmatprep.subr.bf16.mxu0 0
  %7611 = vmatpush1.bf16.msra.mxu0 0
  %7612 = vmatprep.subr.bf16.mxu0 0
  %7613 = vmatpush1.bf16.msra.mxu0 0
  %7614 = vmatprep.subr.bf16.mxu0 0
  %7615 = vmatpush1.bf16.msra.mxu0 0
  %7616 = vmatprep.subr.bf16.mxu0 0
  %7617 = vmatpush1.bf16.msra.mxu0 0
  %7618 = vmatprep.subr.bf16.mxu0 0
  %7619 = vmatpush1.bf16.msra.mxu0 0
  %7620 = vmatprep.subr.bf16.mxu0 0
  %7621 = vmatpush1.bf16.msra.mxu0 0
  %7622 = vmatprep.subr.bf16.mxu0 0
  %7623 = vmatpush1.bf16.msra.mxu0 0
  %7624 = vmatprep.subr.bf16.mxu0 0
  %7625 = vmatpush1.bf16.msra.mxu0 0
  %7626 = vmatprep.subr.bf16.mxu0 0
  %7627 = vmatpush1.bf16.msra.mxu0 0
  %7628 = vmatprep.subr.bf16.mxu0 0
  %7629 = vmatpush1.bf16.msra.mxu0 0
  %7630 = vmatprep.subr.bf16.mxu0 0
  %7631 = vmatpush1.bf16.msra.mxu0 0
  %7632 = vmatprep.subr.bf16.mxu0 0
  %7633 = vmatpush1.bf16.msra.mxu0 0
  %7634 = vmatprep.mubr.bf16.mxu0 0
  %7635 = vmatmul.mubr.bf16.gmra.mrb[0].mxu0 %v7504
  %v7636 = vpop.f32.mrb[0].mxu0
  %v7637 = vadd.f32 0.0, %v7636
  %v7638 = vpop.f32.mrb[0].mxu0
  %v7639 = vpop.f32.mrb[0].mxu0
  %v7640 = vadd.f32 0.0, %v7639
  %v7641 = vpop.f32.mrb[0].mxu0
  %7642 = vmatprep.mubr.bf16.mxu0 0
  %7643 = vmatmul.mubr.bf16.gmra.mrb[0].mxu0 %v7507
  %v7644 = vpop.f32.mrb[0].mxu0
  %v7645 = vadd.f32 0.0, %v7644
  %v7646 = vpop.f32.mrb[0].mxu0
  %v7647 = vpop.f32.mrb[0].mxu0
  %v7648 = vadd.f32 0.0, %v7647
  %v7649 = vpop.f32.mrb[0].mxu0
  %7650 = vmatprep.mubr.bf16.mxu0 0
  %7651 = vmatmul.mubr.bf16.gmra.mrb[0].mxu0 %v7510
  %v7652 = vpop.f32.mrb[0].mxu0
  %v7653 = vadd.f32 0.0, %v7652
  %v7654 = vpop.f32.mrb[0].mxu0
  %v7655 = vpop.f32.mrb[0].mxu0
  %v7656 = vadd.f32 0.0, %v7655
  %v7657 = vpop.f32.mrb[0].mxu0
  %7658 = vmatprep.mubr.bf16.mxu0 0
  %7659 = vmatmul.mubr.bf16.gmra.mrb[0].mxu0 %v7513
  %v7660 = vpop.f32.mrb[0].mxu0
  %v7661 = vadd.f32 0.0, %v7660
  %v7662 = vpop.f32.mrb[0].mxu0
  %v7663 = vpop.f32.mrb[0].mxu0
  %v7664 = vadd.f32 0.0, %v7663
  %v7665 = vpop.f32.mrb[0].mxu0
  %7666 = vmatprep.mubr.bf16.mxu0 0
  %7667 = vmatmul.mubr.bf16.gmra.mrb[0].mxu0 %v7516
  %v7668 = vpop.f32.mrb[0].mxu0
  %v7669 = vadd.f32 0.0, %v7668
  %v7670 = vpop.f32.mrb[0].mxu0
  %v7671 = vpop.f32.mrb[0].mxu0
  %v7672 = vadd.f32 0.0, %v7671
  %v7673 = vpop.f32.mrb[0].mxu0
  %7674 = vmatprep.mubr.bf16.mxu0 0
  %7675 = vmatmul.mubr.bf16.gmra.mrb[0].mxu0 %v7519
  %v7676 = vpop.f32.mrb[0].mxu0
  %v7677 = vadd.f32 0.0, %v7676
  %v7678 = vpop.f32.mrb[0].mxu0
  %v7679 = vpop.f32.mrb[0].mxu0
  %v7680 = vadd.f32 0.0, %v7679
  %v7681 = vpop.f32.mrb[0].mxu0
  %7682 = vmatprep.mubr.bf16.mxu0 0
  %7683 = vmatmul.mubr.bf16.gmra.mrb[0].mxu0 %v7522
  %v7684 = vpop.f32.mrb[0].mxu0
  %v7685 = vadd.f32 0.0, %v7684
  %v7686 = vpop.f32.mrb[0].mxu0
  %v7687 = vpop.f32.mrb[0].mxu0
  %v7688 = vadd.f32 0.0, %v7687
  %v7689 = vpop.f32.mrb[0].mxu0
  %7690 = vmatprep.mubr.bf16.mxu0 0
  %7691 = vmatmul.mubr.bf16.gmra.mrb[0].mxu0 %v7525
  %v7692 = vpop.f32.mrb[0].mxu0
  %v7693 = vadd.f32 0.0, %v7692
  %v7694 = vpop.f32.mrb[0].mxu0
  %v7695 = vpop.f32.mrb[0].mxu0
  %v7696 = vadd.f32 0.0, %v7695
  %v7697 = vpop.f32.mrb[0].mxu0
  %7698 = vmatprep.mubr.bf16.mxu0 0
  %7699 = vmatmul.mubr.bf16.gmra.mrb[0].mxu0 %v7528
  %v7700 = vpop.f32.mrb[0].mxu0
  %v7701 = vadd.f32 0.0, %v7700
  %v7702 = vpop.f32.mrb[0].mxu0
  %v7703 = vpop.f32.mrb[0].mxu0
  %v7704 = vadd.f32 0.0, %v7703
  %v7705 = vpop.f32.mrb[0].mxu0
  %7706 = vmatprep.mubr.bf16.mxu0 0
  %7707 = vmatmul.mubr.bf16.gmra.mrb[0].mxu0 %v7531
  %v7708 = vpop.f32.mrb[0].mxu0
  %v7709 = vadd.f32 0.0, %v7708
  %v7710 = vpop.f32.mrb[0].mxu0
  %v7711 = vpop.f32.mrb[0].mxu0
  %v7712 = vadd.f32 0.0, %v7711
  %v7713 = vpop.f32.mrb[0].mxu0
  %7714 = vmatprep.mubr.bf16.mxu0 0
  %7715 = vmatmul.mubr.bf16.gmra.mrb[0].mxu0 %v7534
  %v7716 = vpop.f32.mrb[0].mxu0
  %v7717 = vadd.f32 0.0, %v7716
  %v7718 = vpop.f32.mrb[0].mxu0
  %v7719 = vpop.f32.mrb[0].mxu0
  %v7720 = vadd.f32 0.0, %v7719
  %v7721 = vpop.f32.mrb[0].mxu0
  %7722 = vmatprep.mubr.bf16.mxu0 0
  %7723 = vmatmul.mubr.bf16.gmra.mrb[0].mxu0 %v7537
  %v7724 = vpop.f32.mrb[0].mxu0
  %v7725 = vadd.f32 0.0, %v7724
  %v7726 = vpop.f32.mrb[0].mxu0
  %v7727 = vpop.f32.mrb[0].mxu0
  %v7728 = vadd.f32 0.0, %v7727
  %v7729 = vpop.f32.mrb[0].mxu0
  %7730 = vmatprep.mubr.bf16.mxu0 0
  %7731 = vmatmul.mubr.bf16.gmra.mrb[0].mxu0 %v7540
  %v7732 = vpop.f32.mrb[0].mxu0
  %v7733 = vadd.f32 0.0, %v7732
  %v7734 = vpop.f32.mrb[0].mxu0
  %v7735 = vpop.f32.mrb[0].mxu0
  %v7736 = vadd.f32 0.0, %v7735
  %v7737 = vpop.f32.mrb[0].mxu0
  %7738 = vmatprep.mubr.bf16.mxu0 0
  %7739 = vmatmul.mubr.bf16.gmra.mrb[0].mxu0 %v7543
  %v7740 = vpop.f32.mrb[0].mxu0
  %v7741 = vadd.f32 0.0, %v7740
  %v7742 = vpop.f32.mrb[0].mxu0
  %v7743 = vpop.f32.mrb[0].mxu0
  %v7744 = vadd.f32 0.0, %v7743
  %v7745 = vpop.f32.mrb[0].mxu0
  %7746 = vmatprep.mubr.bf16.mxu0 0
  %7747 = vmatmul.mubr.bf16.gmra.mrb[0].mxu0 %v7546
  %v7748 = vpop.f32.mrb[0].mxu0
  %v7749 = vadd.f32 0.0, %v7748
  %v7750 = vpop.f32.mrb[0].mxu0
  %v7751 = vpop.f32.mrb[0].mxu0
  %v7752 = vadd.f32 0.0, %v7751
  %v7753 = vpop.f32.mrb[0].mxu0
  %7754 = vmatprep.mubr.bf16.mxu0 0
  %7755 = vmatmul.mubr.bf16.gmra.mrb[0].mxu0 %v7549
  %v7756 = vpop.f32.mrb[0].mxu0
  %v7757 = vadd.f32 0.0, %v7756
  %v7758 = vpop.f32.mrb[0].mxu0
  %v7759 = vpop.f32.mrb[0].mxu0
  %v7760 = vadd.f32 0.0, %v7759
  %v7761 = vpop.f32.mrb[0].mxu0
  %7762 = vmatprep.mubr.bf16.mxu0 0
  %7763 = vmatmul.mubr.bf16.gmra.mrb[0].mxu0 %v7552
  %v7764 = vpop.f32.mrb[0].mxu0
  %v7765 = vadd.f32 0.0, %v7764
  %v7766 = vpop.f32.mrb[0].mxu0
  %v7767 = vpop.f32.mrb[0].mxu0
  %v7768 = vadd.f32 0.0, %v7767
  %v7769 = vpop.f32.mrb[0].mxu0
  %7770 = vmatprep.mubr.bf16.mxu0 0
  %7771 = vmatmul.mubr.bf16.gmra.mrb[0].mxu0 %v7555
  %v7772 = vpop.f32.mrb[0].mxu0
  %v7773 = vadd.f32 0.0, %v7772
  %v7774 = vpop.f32.mrb[0].mxu0
  %v7775 = vpop.f32.mrb[0].mxu0
  %v7776 = vadd.f32 0.0, %v7775
  %v7777 = vpop.f32.mrb[0].mxu0
  %7778 = vmatprep.mubr.bf16.mxu0 0
  %7779 = vmatmul.mubr.bf16.gmra.mrb[0].mxu0 %v7558
  %v7780 = vpop.f32.mrb[0].mxu0
  %v7781 = vadd.f32 0.0, %v7780
  %v7782 = vpop.f32.mrb[0].mxu0
  %v7783 = vpop.f32.mrb[0].mxu0
  %v7784 = vadd.f32 0.0, %v7783
  %v7785 = vpop.f32.mrb[0].mxu0
  %7786 = vmatprep.mubr.bf16.mxu0 0
  %7787 = vmatmul.mubr.bf16.gmra.mrb[0].mxu0 %v7561
  %v7788 = vpop.f32.mrb[0].mxu0
  %v7789 = vadd.f32 0.0, %v7788
  %v7790 = vpop.f32.mrb[0].mxu0
  %v7791 = vpop.f32.mrb[0].mxu0
  %v7792 = vadd.f32 0.0, %v7791
  %v7793 = vpop.f32.mrb[0].mxu0
  %7794 = vmatprep.mubr.bf16.mxu0 0
  %7795 = vmatmul.mubr.bf16.gmra.mrb[0].mxu0 %v7564
  %v7796 = vpop.f32.mrb[0].mxu0
  %v7797 = vadd.f32 0.0, %v7796
  %v7798 = vpop.f32.mrb[0].mxu0
  %v7799 = vpop.f32.mrb[0].mxu0
  %v7800 = vadd.f32 0.0, %v7799
  %v7801 = vpop.f32.mrb[0].mxu0
  %7802 = vmatprep.mubr.bf16.mxu0 0
  %7803 = vmatmul.mubr.bf16.gmra.mrb[0].mxu0 %v7567
  %v7804 = vpop.f32.mrb[0].mxu0
  %v7805 = vadd.f32 0.0, %v7804
  %v7806 = vpop.f32.mrb[0].mxu0
  %v7807 = vpop.f32.mrb[0].mxu0
  %v7808 = vadd.f32 0.0, %v7807
  %v7809 = vpop.f32.mrb[0].mxu0
  %7810 = vmatprep.mubr.bf16.mxu0 0
  %7811 = vmatmul.mubr.bf16.gmra.mrb[0].mxu0 %v7570
  %v7812 = vpop.f32.mrb[0].mxu0
  %v7813 = vadd.f32 0.0, %v7812
  %v7814 = vpop.f32.mrb[0].mxu0
  %v7815 = vpop.f32.mrb[0].mxu0
  %v7816 = vadd.f32 0.0, %v7815
  %v7817 = vpop.f32.mrb[0].mxu0
  %7818 = vmatprep.mubr.bf16.mxu0 0
  %7819 = vmatmul.mubr.bf16.gmra.mrb[0].mxu0 %v7573
  %v7820 = vpop.f32.mrb[0].mxu0
  %v7821 = vadd.f32 0.0, %v7820
  %v7822 = vpop.f32.mrb[0].mxu0
  %v7823 = vpop.f32.mrb[0].mxu0
  %v7824 = vadd.f32 0.0, %v7823
  %v7825 = vpop.f32.mrb[0].mxu0
  %7826 = vmatprep.mubr.bf16.mxu0 0
  %7827 = vmatmul.mubr.bf16.gmra.mrb[0].mxu0 %v7576
  %v7828 = vpop.f32.mrb[0].mxu0
  %v7829 = vadd.f32 0.0, %v7828
  %v7830 = vpop.f32.mrb[0].mxu0
  %v7831 = vpop.f32.mrb[0].mxu0
  %v7832 = vadd.f32 0.0, %v7831
  %v7833 = vpop.f32.mrb[0].mxu0
  %7834 = vmatprep.mubr.bf16.mxu0 0
  %7835 = vmatmul.mubr.bf16.gmra.mrb[0].mxu0 %v7579
  %v7836 = vpop.f32.mrb[0].mxu0
  %v7837 = vadd.f32 0.0, %v7836
  %v7838 = vpop.f32.mrb[0].mxu0
  %v7839 = vpop.f32.mrb[0].mxu0
  %v7840 = vadd.f32 0.0, %v7839
  %v7841 = vpop.f32.mrb[0].mxu0
  %7842 = vmatprep.mubr.bf16.mxu0 0
  %7843 = vmatmul.mubr.bf16.gmra.mrb[0].mxu0 %v7582
  %v7844 = vpop.f32.mrb[0].mxu0
  %v7845 = vadd.f32 0.0, %v7844
  %v7846 = vpop.f32.mrb[0].mxu0
  %v7847 = vpop.f32.mrb[0].mxu0
  %v7848 = vadd.f32 0.0, %v7847
  %v7849 = vpop.f32.mrb[0].mxu0
  %7850 = vmatprep.mubr.bf16.mxu0 0
  %7851 = vmatmul.mubr.bf16.gmra.mrb[0].mxu0 %v7585
  %v7852 = vpop.f32.mrb[0].mxu0
  %v7853 = vadd.f32 0.0, %v7852
  %v7854 = vpop.f32.mrb[0].mxu0
  %v7855 = vpop.f32.mrb[0].mxu0
  %v7856 = vadd.f32 0.0, %v7855
  %v7857 = vpop.f32.mrb[0].mxu0
  %7858 = vmatprep.mubr.bf16.mxu0 0
  %7859 = vmatmul.mubr.bf16.gmra.mrb[0].mxu0 %v7588
  %v7860 = vpop.f32.mrb[0].mxu0
  %v7861 = vadd.f32 0.0, %v7860
  %v7862 = vpop.f32.mrb[0].mxu0
  %v7863 = vpop.f32.mrb[0].mxu0
  %v7864 = vadd.f32 0.0, %v7863
  %v7865 = vpop.f32.mrb[0].mxu0
  %7866 = vmatprep.mubr.bf16.mxu0 0
  %7867 = vmatmul.mubr.bf16.gmra.mrb[0].mxu0 %v7591
  %v7868 = vpop.f32.mrb[0].mxu0
  %v7869 = vadd.f32 0.0, %v7868
  %v7870 = vpop.f32.mrb[0].mxu0
  %v7871 = vpop.f32.mrb[0].mxu0
  %v7872 = vadd.f32 0.0, %v7871
  %v7873 = vpop.f32.mrb[0].mxu0
  %7874 = vmatprep.mubr.bf16.mxu0 0
  %7875 = vmatmul.mubr.bf16.gmra.mrb[0].mxu0 %v7594
  %v7876 = vpop.f32.mrb[0].mxu0
  %v7877 = vadd.f32 0.0, %v7876
  %v7878 = vpop.f32.mrb[0].mxu0
  %v7879 = vpop.f32.mrb[0].mxu0
  %v7880 = vadd.f32 0.0, %v7879
  %v7881 = vpop.f32.mrb[0].mxu0
  %7882 = vmatprep.mubr.bf16.mxu0 0
  %7883 = vmatmul.mubr.bf16.gmra.mrb[0].mxu0 %v7597
  %v7884 = vpop.f32.mrb[0].mxu0
  %v7885 = vadd.f32 0.0, %v7884
  %v7886 = vpop.f32.mrb[0].mxu0
  %v7887 = vpop.f32.mrb[0].mxu0
  %v7888 = vadd.f32 0.0, %v7887
  %v7889 = vpop.f32.mrb[0].mxu0
  %7890 = vdwg.mxu0
  %v7891 = vadd.f32 %v7343, %v7637
  %v7892 = vadd.f32 %v7344, %v7640
  %v7893 = vadd.f32 %v7345, %v7645
  %v7894 = vadd.f32 %v7346, %v7648
  %v7895 = vadd.f32 %v7347, %v7653
  %v7896 = vadd.f32 %v7348, %v7656
  %v7897 = vadd.f32 %v7349, %v7661
  %v7898 = vadd.f32 %v7350, %v7664
  %v7899 = vadd.f32 %v7351, %v7669
  %v7900 = vadd.f32 %v7352, %v7672
  %v7901 = vadd.f32 %v7353, %v7677
  %v7902 = vadd.f32 %v7354, %v7680
  %v7903 = vadd.f32 %v7355, %v7685
  %v7904 = vadd.f32 %v7356, %v7688
  %v7905 = vadd.f32 %v7357, %v7693
  %v7906 = vadd.f32 %v7358, %v7696
  %v7907 = vadd.f32 %v7359, %v7701
  %v7908 = vadd.f32 %v7360, %v7704
  %v7909 = vadd.f32 %v7361, %v7709
  %v7910 = vadd.f32 %v7362, %v7712
  %v7911 = vadd.f32 %v7363, %v7717
  %v7912 = vadd.f32 %v7364, %v7720
  %v7913 = vadd.f32 %v7365, %v7725
  %v7914 = vadd.f32 %v7366, %v7728
  %v7915 = vadd.f32 %v7367, %v7733
  %v7916 = vadd.f32 %v7368, %v7736
  %v7917 = vadd.f32 %v7369, %v7741
  %v7918 = vadd.f32 %v7370, %v7744
  %v7919 = vadd.f32 %v7371, %v7749
  %v7920 = vadd.f32 %v7372, %v7752
  %v7921 = vadd.f32 %v7373, %v7757
  %v7922 = vadd.f32 %v7374, %v7760
  %v7923 = vadd.f32 %v7375, %v7765
  %v7924 = vadd.f32 %v7376, %v7768
  %v7925 = vadd.f32 %v7377, %v7773
  %v7926 = vadd.f32 %v7378, %v7776
  %v7927 = vadd.f32 %v7379, %v7781
  %v7928 = vadd.f32 %v7380, %v7784
  %v7929 = vadd.f32 %v7381, %v7789
  %v7930 = vadd.f32 %v7382, %v7792
  %v7931 = vadd.f32 %v7383, %v7797
  %v7932 = vadd.f32 %v7384, %v7800
  %v7933 = vadd.f32 %v7385, %v7805
  %v7934 = vadd.f32 %v7386, %v7808
  %v7935 = vadd.f32 %v7387, %v7813
  %v7936 = vadd.f32 %v7388, %v7816
  %v7937 = vadd.f32 %v7389, %v7821
  %v7938 = vadd.f32 %v7390, %v7824
  %v7939 = vadd.f32 %v7391, %v7829
  %v7940 = vadd.f32 %v7392, %v7832
  %v7941 = vadd.f32 %v7393, %v7837
  %v7942 = vadd.f32 %v7394, %v7840
  %v7943 = vadd.f32 %v7395, %v7845
  %v7944 = vadd.f32 %v7396, %v7848
  %v7945 = vadd.f32 %v7397, %v7853
  %v7946 = vadd.f32 %v7398, %v7856
  %v7947 = vadd.f32 %v7399, %v7861
  %v7948 = vadd.f32 %v7400, %v7864
  %v7949 = vadd.f32 %v7401, %v7869
  %v7950 = vadd.f32 %v7402, %v7872
  %v7951 = vadd.f32 %v7403, %v7877
  %v7952 = vadd.f32 %v7404, %v7880
  %v7953 = vadd.f32 %v7405, %v7885
  %v7954 = vadd.f32 %v7406, %v7888
  %v7955 = vld [vmem:[%s5748 + $0x1] sm:$0xff]
  %v7956 = vld [vmem:[%s5748 + $0x9] sm:$0xff]
  %v7957 = vld [vmem:[%s5748 + $0x19] sm:$0xff]
  %v7958 = vld [vmem:[%s5748 + $0x21] sm:$0xff]
  %v7959 = vld [vmem:[%s5748 + $0x31] sm:$0xff]
  %v7960 = vld [vmem:[%s5748 + $0x39] sm:$0xff]
  %v7961 = vld [vmem:[%s5748 + $0x49] sm:$0xff]
  %v7962 = vld [vmem:[%s5748 + $0x51] sm:$0xff]
  %v7963 = vld [vmem:[%s5748 + $0x61] sm:$0xff]
  %v7964 = vld [vmem:[%s5748 + $0x69] sm:$0xff]
  %v7965 = vld [vmem:[%s5748 + $0x79] sm:$0xff]
  %v7966 = vld [vmem:[%s5748 + $0x81] sm:$0xff]
  %v7967 = vld [vmem:[%s5748 + $0x91] sm:$0xff]
  %v7968 = vld [vmem:[%s5748 + $0x99] sm:$0xff]
  %v7969 = vld [vmem:[%s5748 + $0xa9] sm:$0xff]
  %v7970 = vld [vmem:[%s5748 + $0xb1] sm:$0xff]
  %v7971 = vld [vmem:[%s5748 + $0xc1] sm:$0xff]
  %v7972 = vld [vmem:[%s5748 + $0xc9] sm:$0xff]
  %v7973 = vld [vmem:[%s5748 + $0xd9] sm:$0xff]
  %v7974 = vld [vmem:[%s5748 + $0xe1] sm:$0xff]
  %v7975 = vld [vmem:[%s5748 + $0xf1] sm:$0xff]
  %v7976 = vld [vmem:[%s5748 + $0xf9] sm:$0xff]
  %v7977 = vld [vmem:[%s5748 + $0x109] sm:$0xff]
  %v7978 = vld [vmem:[%s5748 + $0x111] sm:$0xff]
  %v7979 = vld [vmem:[%s5748 + $0x121] sm:$0xff]
  %v7980 = vld [vmem:[%s5748 + $0x129] sm:$0xff]
  %v7981 = vld [vmem:[%s5748 + $0x139] sm:$0xff]
  %v7982 = vld [vmem:[%s5748 + $0x141] sm:$0xff]
  %v7983 = vld [vmem:[%s5748 + $0x151] sm:$0xff]
  %v7984 = vld [vmem:[%s5748 + $0x159] sm:$0xff]
  %v7985 = vld [vmem:[%s5748 + $0x169] sm:$0xff]
  %v7986 = vld [vmem:[%s5748 + $0x171] sm:$0xff]
  %v7987 = vld [vmem:[%s5748 + $0x1b1] sm:$0xff]
  %v7988 = vld [vmem:[%s5748 + $0x1b9] sm:$0xff]
  %v7989 = vld [vmem:[%s5748 + $0x1c9] sm:$0xff]
  %v7990 = vld [vmem:[%s5748 + $0x1d1] sm:$0xff]
  %v7991 = vld [vmem:[%s5748 + $0x1e1] sm:$0xff]
  %v7992 = vld [vmem:[%s5748 + $0x1e9] sm:$0xff]
  %v7993 = vld [vmem:[%s5748 + $0x1f9] sm:$0xff]
  %v7994 = vld [vmem:[%s5748 + $0x201] sm:$0xff]
  %v7995 = vld [vmem:[%s5748 + $0x211] sm:$0xff]
  %v7996 = vld [vmem:[%s5748 + $0x219] sm:$0xff]
  %v7997 = vld [vmem:[%s5748 + $0x229] sm:$0xff]
  %v7998 = vld [vmem:[%s5748 + $0x231] sm:$0xff]
  %v7999 = vld [vmem:[%s5748 + $0x241] sm:$0xff]
  %v8000 = vld [vmem:[%s5748 + $0x249] sm:$0xff]
  %v8001 = vld [vmem:[%s5748 + $0x259] sm:$0xff]
  %v8002 = vld [vmem:[%s5748 + $0x261] sm:$0xff]
  %v8003 = vld [vmem:[%s5748 + $0x271] sm:$0xff]
  %v8004 = vld [vmem:[%s5748 + $0x279] sm:$0xff]
  %v8005 = vld [vmem:[%s5748 + $0x289] sm:$0xff]
  %v8006 = vld [vmem:[%s5748 + $0x291] sm:$0xff]
  %v8007 = vld [vmem:[%s5748 + $0x2a1] sm:$0xff]
  %v8008 = vld [vmem:[%s5748 + $0x2a9] sm:$0xff]
  %v8009 = vld [vmem:[%s5748 + $0x2b9] sm:$0xff]
  %v8010 = vld [vmem:[%s5748 + $0x2c1] sm:$0xff]
  %v8011 = vld [vmem:[%s5748 + $0x2d1] sm:$0xff]
  %v8012 = vld [vmem:[%s5748 + $0x2d9] sm:$0xff]
  %v8013 = vld [vmem:[%s5748 + $0x2e9] sm:$0xff]
  %v8014 = vld [vmem:[%s5748 + $0x2f1] sm:$0xff]
  %v8015 = vld [vmem:[%s5748 + $0x301] sm:$0xff]
  %v8016 = vld [vmem:[%s5748 + $0x309] sm:$0xff]
  %v8017 = vld [vmem:[%s5748 + $0x319] sm:$0xff]
  %v8018 = vld [vmem:[%s5748 + $0x321] sm:$0xff]
  %v8019 = vpack.c.bf16 %v7956, %v7955
  %v8020 = vpack.c.bf16 %v7958, %v7957
  %v8021 = vpack.c.bf16 %v7960, %v7959
  %v8022 = vpack.c.bf16 %v7962, %v7961
  %v8023 = vpack.c.bf16 %v7964, %v7963
  %v8024 = vpack.c.bf16 %v7966, %v7965
  %v8025 = vpack.c.bf16 %v7968, %v7967
  %v8026 = vpack.c.bf16 %v7970, %v7969
  %v8027 = vpack.c.bf16 %v7972, %v7971
  %v8028 = vpack.c.bf16 %v7974, %v7973
  %v8029 = vpack.c.bf16 %v7976, %v7975
  %v8030 = vpack.c.bf16 %v7978, %v7977
  %v8031 = vpack.c.bf16 %v7980, %v7979
  %v8032 = vpack.c.bf16 %v7982, %v7981
  %v8033 = vpack.c.bf16 %v7984, %v7983
  %v8034 = vpack.c.bf16 %v7986, %v7985
  %v8035 = vpack.c.bf16 %v7988, %v7987
  %v8036 = vpack.c.bf16 %v7990, %v7989
  %v8037 = vpack.c.bf16 %v7992, %v7991
  %v8038 = vpack.c.bf16 %v7994, %v7993
  %v8039 = vpack.c.bf16 %v7996, %v7995
  %v8040 = vpack.c.bf16 %v7998, %v7997
  %v8041 = vpack.c.bf16 %v8000, %v7999
  %v8042 = vpack.c.bf16 %v8002, %v8001
  %v8043 = vpack.c.bf16 %v8004, %v8003
  %v8044 = vpack.c.bf16 %v8006, %v8005
  %v8045 = vpack.c.bf16 %v8008, %v8007
  %v8046 = vpack.c.bf16 %v8010, %v8009
  %v8047 = vpack.c.bf16 %v8012, %v8011
  %v8048 = vpack.c.bf16 %v8014, %v8013
  %v8049 = vpack.c.bf16 %v8016, %v8015
  %v8050 = vpack.c.bf16 %v8018, %v8017
  %v8052 = vsel %vm5194, %v8019, 0
  %v8055 = vsel %vm5194, %v8020, 0
  %v8058 = vsel %vm5194, %v8021, 0
  %v8061 = vsel %vm5194, %v8022, 0
  %v8064 = vsel %vm5194, %v8023, 0
  %v8067 = vsel %vm5194, %v8024, 0
  %v8070 = vsel %vm5194, %v8025, 0
  %v8073 = vsel %vm5194, %v8026, 0
  %v8076 = vsel %vm5194, %v8027, 0
  %v8079 = vsel %vm5194, %v8028, 0
  %v8082 = vsel %vm5194, %v8029, 0
  %v8085 = vsel %vm5194, %v8030, 0
  %v8088 = vsel %vm5194, %v8031, 0
  %v8091 = vsel %vm5194, %v8032, 0
  %v8094 = vsel %vm5194, %v8033, 0
  %v8097 = vsel %vm5194, %v8034, 0
  %v8100 = vsel %vm5194, %v8035, 0
  %v8103 = vsel %vm5194, %v8036, 0
  %v8106 = vsel %vm5194, %v8037, 0
  %v8109 = vsel %vm5194, %v8038, 0
  %v8112 = vsel %vm5194, %v8039, 0
  %v8115 = vsel %vm5194, %v8040, 0
  %v8118 = vsel %vm5194, %v8041, 0
  %v8121 = vsel %vm5194, %v8042, 0
  %v8124 = vsel %vm5194, %v8043, 0
  %v8127 = vsel %vm5194, %v8044, 0
  %v8130 = vsel %vm5194, %v8045, 0
  %v8133 = vsel %vm5194, %v8046, 0
  %v8136 = vsel %vm5194, %v8047, 0
  %v8139 = vsel %vm5194, %v8048, 0
  %v8142 = vsel %vm5194, %v8049, 0
  %v8145 = vsel %vm5194, %v8050, 0
  %v8148 = vsel %vm6178, %v5882, 0
  %8150 = vmatprep.subr.bf16.mxu0 0
  %8151 = vmatpush1.bf16.msra.mxu0 %v8148
  %8152 = vmatprep.subr.bf16.mxu0 0
  %8153 = vmatpush1.bf16.msra.mxu0 0
  %8154 = vmatprep.subr.bf16.mxu0 0
  %8155 = vmatpush1.bf16.msra.mxu0 0
  %8156 = vmatprep.subr.bf16.mxu0 0
  %8157 = vmatpush1.bf16.msra.mxu0 0
  %8158 = vmatprep.subr.bf16.mxu0 0
  %8159 = vmatpush1.bf16.msra.mxu0 0
  %8160 = vmatprep.subr.bf16.mxu0 0
  %8161 = vmatpush1.bf16.msra.mxu0 0
  %8162 = vmatprep.subr.bf16.mxu0 0
  %8163 = vmatpush1.bf16.msra.mxu0 0
  %8164 = vmatprep.subr.bf16.mxu0 0
  %8165 = vmatpush1.bf16.msra.mxu0 0
  %8166 = vmatprep.subr.bf16.mxu0 0
  %8167 = vmatpush1.bf16.msra.mxu0 0
  %8168 = vmatprep.subr.bf16.mxu0 0
  %8169 = vmatpush1.bf16.msra.mxu0 0
  %8170 = vmatprep.subr.bf16.mxu0 0
  %8171 = vmatpush1.bf16.msra.mxu0 0
  %8172 = vmatprep.subr.bf16.mxu0 0
  %8173 = vmatpush1.bf16.msra.mxu0 0
  %8174 = vmatprep.subr.bf16.mxu0 0
  %8175 = vmatpush1.bf16.msra.mxu0 0
  %8176 = vmatprep.subr.bf16.mxu0 0
  %8177 = vmatpush1.bf16.msra.mxu0 0
  %8178 = vmatprep.subr.bf16.mxu0 0
  %8179 = vmatpush1.bf16.msra.mxu0 0
  %8180 = vmatprep.subr.bf16.mxu0 0
  %8181 = vmatpush1.bf16.msra.mxu0 0
  %8182 = vmatprep.mubr.bf16.mxu0 0
  %8183 = vmatmul.mubr.bf16.gmra.mrb[0].mxu0 %v8052
  %v8184 = vpop.f32.mrb[0].mxu0
  %v8185 = vadd.f32 0.0, %v8184
  %v8186 = vpop.f32.mrb[0].mxu0
  %v8187 = vpop.f32.mrb[0].mxu0
  %v8188 = vadd.f32 0.0, %v8187
  %v8189 = vpop.f32.mrb[0].mxu0
  %8190 = vmatprep.mubr.bf16.mxu0 0
  %8191 = vmatmul.mubr.bf16.gmra.mrb[0].mxu0 %v8055
  %v8192 = vpop.f32.mrb[0].mxu0
  %v8193 = vadd.f32 0.0, %v8192
  %v8194 = vpop.f32.mrb[0].mxu0
  %v8195 = vpop.f32.mrb[0].mxu0
  %v8196 = vadd.f32 0.0, %v8195
  %v8197 = vpop.f32.mrb[0].mxu0
  %8198 = vmatprep.mubr.bf16.mxu0 0
  %8199 = vmatmul.mubr.bf16.gmra.mrb[0].mxu0 %v8058
  %v8200 = vpop.f32.mrb[0].mxu0
  %v8201 = vadd.f32 0.0, %v8200
  %v8202 = vpop.f32.mrb[0].mxu0
  %v8203 = vpop.f32.mrb[0].mxu0
  %v8204 = vadd.f32 0.0, %v8203
  %v8205 = vpop.f32.mrb[0].mxu0
  %8206 = vmatprep.mubr.bf16.mxu0 0
  %8207 = vmatmul.mubr.bf16.gmra.mrb[0].mxu0 %v8061
  %v8208 = vpop.f32.mrb[0].mxu0
  %v8209 = vadd.f32 0.0, %v8208
  %v8210 = vpop.f32.mrb[0].mxu0
  %v8211 = vpop.f32.mrb[0].mxu0
  %v8212 = vadd.f32 0.0, %v8211
  %v8213 = vpop.f32.mrb[0].mxu0
  %8214 = vmatprep.mubr.bf16.mxu0 0
  %8215 = vmatmul.mubr.bf16.gmra.mrb[0].mxu0 %v8064
  %v8216 = vpop.f32.mrb[0].mxu0
  %v8217 = vadd.f32 0.0, %v8216
  %v8218 = vpop.f32.mrb[0].mxu0
  %v8219 = vpop.f32.mrb[0].mxu0
  %v8220 = vadd.f32 0.0, %v8219
  %v8221 = vpop.f32.mrb[0].mxu0
  %8222 = vmatprep.mubr.bf16.mxu0 0
  %8223 = vmatmul.mubr.bf16.gmra.mrb[0].mxu0 %v8067
  %v8224 = vpop.f32.mrb[0].mxu0
  %v8225 = vadd.f32 0.0, %v8224
  %v8226 = vpop.f32.mrb[0].mxu0
  %v8227 = vpop.f32.mrb[0].mxu0
  %v8228 = vadd.f32 0.0, %v8227
  %v8229 = vpop.f32.mrb[0].mxu0
  %8230 = vmatprep.mubr.bf16.mxu0 0
  %8231 = vmatmul.mubr.bf16.gmra.mrb[0].mxu0 %v8070
  %v8232 = vpop.f32.mrb[0].mxu0
  %v8233 = vadd.f32 0.0, %v8232
  %v8234 = vpop.f32.mrb[0].mxu0
  %v8235 = vpop.f32.mrb[0].mxu0
  %v8236 = vadd.f32 0.0, %v8235
  %v8237 = vpop.f32.mrb[0].mxu0
  %8238 = vmatprep.mubr.bf16.mxu0 0
  %8239 = vmatmul.mubr.bf16.gmra.mrb[0].mxu0 %v8073
  %v8240 = vpop.f32.mrb[0].mxu0
  %v8241 = vadd.f32 0.0, %v8240
  %v8242 = vpop.f32.mrb[0].mxu0
  %v8243 = vpop.f32.mrb[0].mxu0
  %v8244 = vadd.f32 0.0, %v8243
  %v8245 = vpop.f32.mrb[0].mxu0
  %8246 = vmatprep.mubr.bf16.mxu0 0
  %8247 = vmatmul.mubr.bf16.gmra.mrb[0].mxu0 %v8076
  %v8248 = vpop.f32.mrb[0].mxu0
  %v8249 = vadd.f32 0.0, %v8248
  %v8250 = vpop.f32.mrb[0].mxu0
  %v8251 = vpop.f32.mrb[0].mxu0
  %v8252 = vadd.f32 0.0, %v8251
  %v8253 = vpop.f32.mrb[0].mxu0
  %8254 = vmatprep.mubr.bf16.mxu0 0
  %8255 = vmatmul.mubr.bf16.gmra.mrb[0].mxu0 %v8079
  %v8256 = vpop.f32.mrb[0].mxu0
  %v8257 = vadd.f32 0.0, %v8256
  %v8258 = vpop.f32.mrb[0].mxu0
  %v8259 = vpop.f32.mrb[0].mxu0
  %v8260 = vadd.f32 0.0, %v8259
  %v8261 = vpop.f32.mrb[0].mxu0
  %8262 = vmatprep.mubr.bf16.mxu0 0
  %8263 = vmatmul.mubr.bf16.gmra.mrb[0].mxu0 %v8082
  %v8264 = vpop.f32.mrb[0].mxu0
  %v8265 = vadd.f32 0.0, %v8264
  %v8266 = vpop.f32.mrb[0].mxu0
  %v8267 = vpop.f32.mrb[0].mxu0
  %v8268 = vadd.f32 0.0, %v8267
  %v8269 = vpop.f32.mrb[0].mxu0
  %8270 = vmatprep.mubr.bf16.mxu0 0
  %8271 = vmatmul.mubr.bf16.gmra.mrb[0].mxu0 %v8085
  %v8272 = vpop.f32.mrb[0].mxu0
  %v8273 = vadd.f32 0.0, %v8272
  %v8274 = vpop.f32.mrb[0].mxu0
  %v8275 = vpop.f32.mrb[0].mxu0
  %v8276 = vadd.f32 0.0, %v8275
  %v8277 = vpop.f32.mrb[0].mxu0
  %8278 = vmatprep.mubr.bf16.mxu0 0
  %8279 = vmatmul.mubr.bf16.gmra.mrb[0].mxu0 %v8088
  %v8280 = vpop.f32.mrb[0].mxu0
  %v8281 = vadd.f32 0.0, %v8280
  %v8282 = vpop.f32.mrb[0].mxu0
  %v8283 = vpop.f32.mrb[0].mxu0
  %v8284 = vadd.f32 0.0, %v8283
  %v8285 = vpop.f32.mrb[0].mxu0
  %8286 = vmatprep.mubr.bf16.mxu0 0
  %8287 = vmatmul.mubr.bf16.gmra.mrb[0].mxu0 %v8091
  %v8288 = vpop.f32.mrb[0].mxu0
  %v8289 = vadd.f32 0.0, %v8288
  %v8290 = vpop.f32.mrb[0].mxu0
  %v8291 = vpop.f32.mrb[0].mxu0
  %v8292 = vadd.f32 0.0, %v8291
  %v8293 = vpop.f32.mrb[0].mxu0
  %8294 = vmatprep.mubr.bf16.mxu0 0
  %8295 = vmatmul.mubr.bf16.gmra.mrb[0].mxu0 %v8094
  %v8296 = vpop.f32.mrb[0].mxu0
  %v8297 = vadd.f32 0.0, %v8296
  %v8298 = vpop.f32.mrb[0].mxu0
  %v8299 = vpop.f32.mrb[0].mxu0
  %v8300 = vadd.f32 0.0, %v8299
  %v8301 = vpop.f32.mrb[0].mxu0
  %8302 = vmatprep.mubr.bf16.mxu0 0
  %8303 = vmatmul.mubr.bf16.gmra.mrb[0].mxu0 %v8097
  %v8304 = vpop.f32.mrb[0].mxu0
  %v8305 = vadd.f32 0.0, %v8304
  %v8306 = vpop.f32.mrb[0].mxu0
  %v8307 = vpop.f32.mrb[0].mxu0
  %v8308 = vadd.f32 0.0, %v8307
  %v8309 = vpop.f32.mrb[0].mxu0
  %8310 = vmatprep.mubr.bf16.mxu0 0
  %8311 = vmatmul.mubr.bf16.gmra.mrb[0].mxu0 %v8100
  %v8312 = vpop.f32.mrb[0].mxu0
  %v8313 = vadd.f32 0.0, %v8312
  %v8314 = vpop.f32.mrb[0].mxu0
  %v8315 = vpop.f32.mrb[0].mxu0
  %v8316 = vadd.f32 0.0, %v8315
  %v8317 = vpop.f32.mrb[0].mxu0
  %8318 = vmatprep.mubr.bf16.mxu0 0
  %8319 = vmatmul.mubr.bf16.gmra.mrb[0].mxu0 %v8103
  %v8320 = vpop.f32.mrb[0].mxu0
  %v8321 = vadd.f32 0.0, %v8320
  %v8322 = vpop.f32.mrb[0].mxu0
  %v8323 = vpop.f32.mrb[0].mxu0
  %v8324 = vadd.f32 0.0, %v8323
  %v8325 = vpop.f32.mrb[0].mxu0
  %8326 = vmatprep.mubr.bf16.mxu0 0
  %8327 = vmatmul.mubr.bf16.gmra.mrb[0].mxu0 %v8106
  %v8328 = vpop.f32.mrb[0].mxu0
  %v8329 = vadd.f32 0.0, %v8328
  %v8330 = vpop.f32.mrb[0].mxu0
  %v8331 = vpop.f32.mrb[0].mxu0
  %v8332 = vadd.f32 0.0, %v8331
  %v8333 = vpop.f32.mrb[0].mxu0
  %8334 = vmatprep.mubr.bf16.mxu0 0
  %8335 = vmatmul.mubr.bf16.gmra.mrb[0].mxu0 %v8109
  %v8336 = vpop.f32.mrb[0].mxu0
  %v8337 = vadd.f32 0.0, %v8336
  %v8338 = vpop.f32.mrb[0].mxu0
  %v8339 = vpop.f32.mrb[0].mxu0
  %v8340 = vadd.f32 0.0, %v8339
  %v8341 = vpop.f32.mrb[0].mxu0
  %8342 = vmatprep.mubr.bf16.mxu0 0
  %8343 = vmatmul.mubr.bf16.gmra.mrb[0].mxu0 %v8112
  %v8344 = vpop.f32.mrb[0].mxu0
  %v8345 = vadd.f32 0.0, %v8344
  %v8346 = vpop.f32.mrb[0].mxu0
  %v8347 = vpop.f32.mrb[0].mxu0
  %v8348 = vadd.f32 0.0, %v8347
  %v8349 = vpop.f32.mrb[0].mxu0
  %8350 = vmatprep.mubr.bf16.mxu0 0
  %8351 = vmatmul.mubr.bf16.gmra.mrb[0].mxu0 %v8115
  %v8352 = vpop.f32.mrb[0].mxu0
  %v8353 = vadd.f32 0.0, %v8352
  %v8354 = vpop.f32.mrb[0].mxu0
  %v8355 = vpop.f32.mrb[0].mxu0
  %v8356 = vadd.f32 0.0, %v8355
  %v8357 = vpop.f32.mrb[0].mxu0
  %8358 = vmatprep.mubr.bf16.mxu0 0
  %8359 = vmatmul.mubr.bf16.gmra.mrb[0].mxu0 %v8118
  %v8360 = vpop.f32.mrb[0].mxu0
  %v8361 = vadd.f32 0.0, %v8360
  %v8362 = vpop.f32.mrb[0].mxu0
  %v8363 = vpop.f32.mrb[0].mxu0
  %v8364 = vadd.f32 0.0, %v8363
  %v8365 = vpop.f32.mrb[0].mxu0
  %8366 = vmatprep.mubr.bf16.mxu0 0
  %8367 = vmatmul.mubr.bf16.gmra.mrb[0].mxu0 %v8121
  %v8368 = vpop.f32.mrb[0].mxu0
  %v8369 = vadd.f32 0.0, %v8368
  %v8370 = vpop.f32.mrb[0].mxu0
  %v8371 = vpop.f32.mrb[0].mxu0
  %v8372 = vadd.f32 0.0, %v8371
  %v8373 = vpop.f32.mrb[0].mxu0
  %8374 = vmatprep.mubr.bf16.mxu0 0
  %8375 = vmatmul.mubr.bf16.gmra.mrb[0].mxu0 %v8124
  %v8376 = vpop.f32.mrb[0].mxu0
  %v8377 = vadd.f32 0.0, %v8376
  %v8378 = vpop.f32.mrb[0].mxu0
  %v8379 = vpop.f32.mrb[0].mxu0
  %v8380 = vadd.f32 0.0, %v8379
  %v8381 = vpop.f32.mrb[0].mxu0
  %8382 = vmatprep.mubr.bf16.mxu0 0
  %8383 = vmatmul.mubr.bf16.gmra.mrb[0].mxu0 %v8127
  %v8384 = vpop.f32.mrb[0].mxu0
  %v8385 = vadd.f32 0.0, %v8384
  %v8386 = vpop.f32.mrb[0].mxu0
  %v8387 = vpop.f32.mrb[0].mxu0
  %v8388 = vadd.f32 0.0, %v8387
  %v8389 = vpop.f32.mrb[0].mxu0
  %8390 = vmatprep.mubr.bf16.mxu0 0
  %8391 = vmatmul.mubr.bf16.gmra.mrb[0].mxu0 %v8130
  %v8392 = vpop.f32.mrb[0].mxu0
  %v8393 = vadd.f32 0.0, %v8392
  %v8394 = vpop.f32.mrb[0].mxu0
  %v8395 = vpop.f32.mrb[0].mxu0
  %v8396 = vadd.f32 0.0, %v8395
  %v8397 = vpop.f32.mrb[0].mxu0
  %8398 = vmatprep.mubr.bf16.mxu0 0
  %8399 = vmatmul.mubr.bf16.gmra.mrb[0].mxu0 %v8133
  %v8400 = vpop.f32.mrb[0].mxu0
  %v8401 = vadd.f32 0.0, %v8400
  %v8402 = vpop.f32.mrb[0].mxu0
  %v8403 = vpop.f32.mrb[0].mxu0
  %v8404 = vadd.f32 0.0, %v8403
  %v8405 = vpop.f32.mrb[0].mxu0
  %8406 = vmatprep.mubr.bf16.mxu0 0
  %8407 = vmatmul.mubr.bf16.gmra.mrb[0].mxu0 %v8136
  %v8408 = vpop.f32.mrb[0].mxu0
  %v8409 = vadd.f32 0.0, %v8408
  %v8410 = vpop.f32.mrb[0].mxu0
  %v8411 = vpop.f32.mrb[0].mxu0
  %v8412 = vadd.f32 0.0, %v8411
  %v8413 = vpop.f32.mrb[0].mxu0
  %8414 = vmatprep.mubr.bf16.mxu0 0
  %8415 = vmatmul.mubr.bf16.gmra.mrb[0].mxu0 %v8139
  %v8416 = vpop.f32.mrb[0].mxu0
  %v8417 = vadd.f32 0.0, %v8416
  %v8418 = vpop.f32.mrb[0].mxu0
  %v8419 = vpop.f32.mrb[0].mxu0
  %v8420 = vadd.f32 0.0, %v8419
  %v8421 = vpop.f32.mrb[0].mxu0
  %8422 = vmatprep.mubr.bf16.mxu0 0
  %8423 = vmatmul.mubr.bf16.gmra.mrb[0].mxu0 %v8142
  %v8424 = vpop.f32.mrb[0].mxu0
  %v8425 = vadd.f32 0.0, %v8424
  %v8426 = vpop.f32.mrb[0].mxu0
  %v8427 = vpop.f32.mrb[0].mxu0
  %v8428 = vadd.f32 0.0, %v8427
  %v8429 = vpop.f32.mrb[0].mxu0
  %8430 = vmatprep.mubr.bf16.mxu0 0
  %8431 = vmatmul.mubr.bf16.gmra.mrb[0].mxu0 %v8145
  %v8432 = vpop.f32.mrb[0].mxu0
  %v8433 = vadd.f32 0.0, %v8432
  %v8434 = vpop.f32.mrb[0].mxu0
  %v8435 = vpop.f32.mrb[0].mxu0
  %v8436 = vadd.f32 0.0, %v8435
  %v8437 = vpop.f32.mrb[0].mxu0
  %8438 = vdwg.mxu0
  %v8439 = vadd.f32 %v7891, %v8185
  %v8440 = vadd.f32 %v7892, %v8188
  %v8441 = vadd.f32 %v7893, %v8193
  %v8442 = vadd.f32 %v7894, %v8196
  %v8443 = vadd.f32 %v7895, %v8201
  %v8444 = vadd.f32 %v7896, %v8204
  %v8445 = vadd.f32 %v7897, %v8209
  %v8446 = vadd.f32 %v7898, %v8212
  %v8447 = vadd.f32 %v7899, %v8217
  %v8448 = vadd.f32 %v7900, %v8220
  %v8449 = vadd.f32 %v7901, %v8225
  %v8450 = vadd.f32 %v7902, %v8228
  %v8451 = vadd.f32 %v7903, %v8233
  %v8452 = vadd.f32 %v7904, %v8236
  %v8453 = vadd.f32 %v7905, %v8241
  %v8454 = vadd.f32 %v7906, %v8244
  %v8455 = vadd.f32 %v7907, %v8249
  %v8456 = vadd.f32 %v7908, %v8252
  %v8457 = vadd.f32 %v7909, %v8257
  %v8458 = vadd.f32 %v7910, %v8260
  %v8459 = vadd.f32 %v7911, %v8265
  %v8460 = vadd.f32 %v7912, %v8268
  %v8461 = vadd.f32 %v7913, %v8273
  %v8462 = vadd.f32 %v7914, %v8276
  %v8463 = vadd.f32 %v7915, %v8281
  %v8464 = vadd.f32 %v7916, %v8284
  %v8465 = vadd.f32 %v7917, %v8289
  %v8466 = vadd.f32 %v7918, %v8292
  %v8467 = vadd.f32 %v7919, %v8297
  %v8468 = vadd.f32 %v7920, %v8300
  %v8469 = vadd.f32 %v7921, %v8305
  %v8470 = vadd.f32 %v7922, %v8308
  %v8471 = vadd.f32 %v7923, %v8313
  %v8472 = vadd.f32 %v7924, %v8316
  %v8473 = vadd.f32 %v7925, %v8321
  %v8474 = vadd.f32 %v7926, %v8324
  %v8475 = vadd.f32 %v7927, %v8329
  %v8476 = vadd.f32 %v7928, %v8332
  %v8477 = vadd.f32 %v7929, %v8337
  %v8478 = vadd.f32 %v7930, %v8340
  %v8479 = vadd.f32 %v7931, %v8345
  %v8480 = vadd.f32 %v7932, %v8348
  %v8481 = vadd.f32 %v7933, %v8353
  %v8482 = vadd.f32 %v7934, %v8356
  %v8483 = vadd.f32 %v7935, %v8361
  %v8484 = vadd.f32 %v7936, %v8364
  %v8485 = vadd.f32 %v7937, %v8369
  %v8486 = vadd.f32 %v7938, %v8372
  %v8487 = vadd.f32 %v7939, %v8377
  %v8488 = vadd.f32 %v7940, %v8380
  %v8489 = vadd.f32 %v7941, %v8385
  %v8490 = vadd.f32 %v7942, %v8388
  %v8491 = vadd.f32 %v7943, %v8393
  %v8492 = vadd.f32 %v7944, %v8396
  %v8493 = vadd.f32 %v7945, %v8401
  %v8494 = vadd.f32 %v7946, %v8404
  %v8495 = vadd.f32 %v7947, %v8409
  %v8496 = vadd.f32 %v7948, %v8412
  %v8497 = vadd.f32 %v7949, %v8417
  %v8498 = vadd.f32 %v7950, %v8420
  %v8499 = vadd.f32 %v7951, %v8425
  %v8500 = vadd.f32 %v7952, %v8428
  %v8501 = vadd.f32 %v7953, %v8433
  %v8502 = vadd.f32 %v7954, %v8436
  %v8503 = vld [vmem:[%s5748 + $0x2] sm:$0xff]
  %v8504 = vld [vmem:[%s5748 + $0xa] sm:$0xff]
  %v8505 = vld [vmem:[%s5748 + $0x1a] sm:$0xff]
  %v8506 = vld [vmem:[%s5748 + $0x22] sm:$0xff]
  %v8507 = vld [vmem:[%s5748 + $0x32] sm:$0xff]
  %v8508 = vld [vmem:[%s5748 + $0x3a] sm:$0xff]
  %v8509 = vld [vmem:[%s5748 + $0x4a] sm:$0xff]
  %v8510 = vld [vmem:[%s5748 + $0x52] sm:$0xff]
  %v8511 = vld [vmem:[%s5748 + $0x62] sm:$0xff]
  %v8512 = vld [vmem:[%s5748 + $0x6a] sm:$0xff]
  %v8513 = vld [vmem:[%s5748 + $0x7a] sm:$0xff]
  %v8514 = vld [vmem:[%s5748 + $0x82] sm:$0xff]
  %v8515 = vld [vmem:[%s5748 + $0x92] sm:$0xff]
  %v8516 = vld [vmem:[%s5748 + $0x9a] sm:$0xff]
  %v8517 = vld [vmem:[%s5748 + $0xaa] sm:$0xff]
  %v8518 = vld [vmem:[%s5748 + $0xb2] sm:$0xff]
  %v8519 = vld [vmem:[%s5748 + $0xc2] sm:$0xff]
  %v8520 = vld [vmem:[%s5748 + $0xca] sm:$0xff]
  %v8521 = vld [vmem:[%s5748 + $0xda] sm:$0xff]
  %v8522 = vld [vmem:[%s5748 + $0xe2] sm:$0xff]
  %v8523 = vld [vmem:[%s5748 + $0xf2] sm:$0xff]
  %v8524 = vld [vmem:[%s5748 + $0xfa] sm:$0xff]
  %v8525 = vld [vmem:[%s5748 + $0x10a] sm:$0xff]
  %v8526 = vld [vmem:[%s5748 + $0x112] sm:$0xff]
  %v8527 = vld [vmem:[%s5748 + $0x122] sm:$0xff]
  %v8528 = vld [vmem:[%s5748 + $0x12a] sm:$0xff]
  %v8529 = vld [vmem:[%s5748 + $0x13a] sm:$0xff]
  %v8530 = vld [vmem:[%s5748 + $0x142] sm:$0xff]
  %v8531 = vld [vmem:[%s5748 + $0x152] sm:$0xff]
  %v8532 = vld [vmem:[%s5748 + $0x15a] sm:$0xff]
  %v8533 = vld [vmem:[%s5748 + $0x16a] sm:$0xff]
  %v8534 = vld [vmem:[%s5748 + $0x172] sm:$0xff]
  %v8535 = vld [vmem:[%s5748 + $0x1b2] sm:$0xff]
  %v8536 = vld [vmem:[%s5748 + $0x1ba] sm:$0xff]
  %v8537 = vld [vmem:[%s5748 + $0x1ca] sm:$0xff]
  %v8538 = vld [vmem:[%s5748 + $0x1d2] sm:$0xff]
  %v8539 = vld [vmem:[%s5748 + $0x1e2] sm:$0xff]
  %v8540 = vld [vmem:[%s5748 + $0x1ea] sm:$0xff]
  %v8541 = vld [vmem:[%s5748 + $0x1fa] sm:$0xff]
  %v8542 = vld [vmem:[%s5748 + $0x202] sm:$0xff]
  %v8543 = vld [vmem:[%s5748 + $0x212] sm:$0xff]
  %v8544 = vld [vmem:[%s5748 + $0x21a] sm:$0xff]
  %v8545 = vld [vmem:[%s5748 + $0x22a] sm:$0xff]
  %v8546 = vld [vmem:[%s5748 + $0x232] sm:$0xff]
  %v8547 = vld [vmem:[%s5748 + $0x242] sm:$0xff]
  %v8548 = vld [vmem:[%s5748 + $0x24a] sm:$0xff]
  %v8549 = vld [vmem:[%s5748 + $0x25a] sm:$0xff]
  %v8550 = vld [vmem:[%s5748 + $0x262] sm:$0xff]
  %v8551 = vld [vmem:[%s5748 + $0x272] sm:$0xff]
  %v8552 = vld [vmem:[%s5748 + $0x27a] sm:$0xff]
  %v8553 = vld [vmem:[%s5748 + $0x28a] sm:$0xff]
  %v8554 = vld [vmem:[%s5748 + $0x292] sm:$0xff]
  %v8555 = vld [vmem:[%s5748 + $0x2a2] sm:$0xff]
  %v8556 = vld [vmem:[%s5748 + $0x2aa] sm:$0xff]
  %v8557 = vld [vmem:[%s5748 + $0x2ba] sm:$0xff]
  %v8558 = vld [vmem:[%s5748 + $0x2c2] sm:$0xff]
  %v8559 = vld [vmem:[%s5748 + $0x2d2] sm:$0xff]
  %v8560 = vld [vmem:[%s5748 + $0x2da] sm:$0xff]
  %v8561 = vld [vmem:[%s5748 + $0x2ea] sm:$0xff]
  %v8562 = vld [vmem:[%s5748 + $0x2f2] sm:$0xff]
  %v8563 = vld [vmem:[%s5748 + $0x302] sm:$0xff]
  %v8564 = vld [vmem:[%s5748 + $0x30a] sm:$0xff]
  %v8565 = vld [vmem:[%s5748 + $0x31a] sm:$0xff]
  %v8566 = vld [vmem:[%s5748 + $0x322] sm:$0xff]
  %v8567 = vpack.c.bf16 %v8504, %v8503
  %v8568 = vpack.c.bf16 %v8506, %v8505
  %v8569 = vpack.c.bf16 %v8508, %v8507
  %v8570 = vpack.c.bf16 %v8510, %v8509
  %v8571 = vpack.c.bf16 %v8512, %v8511
  %v8572 = vpack.c.bf16 %v8514, %v8513
  %v8573 = vpack.c.bf16 %v8516, %v8515
  %v8574 = vpack.c.bf16 %v8518, %v8517
  %v8575 = vpack.c.bf16 %v8520, %v8519
  %v8576 = vpack.c.bf16 %v8522, %v8521
  %v8577 = vpack.c.bf16 %v8524, %v8523
  %v8578 = vpack.c.bf16 %v8526, %v8525
  %v8579 = vpack.c.bf16 %v8528, %v8527
  %v8580 = vpack.c.bf16 %v8530, %v8529
  %v8581 = vpack.c.bf16 %v8532, %v8531
  %v8582 = vpack.c.bf16 %v8534, %v8533
  %v8583 = vpack.c.bf16 %v8536, %v8535
  %v8584 = vpack.c.bf16 %v8538, %v8537
  %v8585 = vpack.c.bf16 %v8540, %v8539
  %v8586 = vpack.c.bf16 %v8542, %v8541
  %v8587 = vpack.c.bf16 %v8544, %v8543
  %v8588 = vpack.c.bf16 %v8546, %v8545
  %v8589 = vpack.c.bf16 %v8548, %v8547
  %v8590 = vpack.c.bf16 %v8550, %v8549
  %v8591 = vpack.c.bf16 %v8552, %v8551
  %v8592 = vpack.c.bf16 %v8554, %v8553
  %v8593 = vpack.c.bf16 %v8556, %v8555
  %v8594 = vpack.c.bf16 %v8558, %v8557
  %v8595 = vpack.c.bf16 %v8560, %v8559
  %v8596 = vpack.c.bf16 %v8562, %v8561
  %v8597 = vpack.c.bf16 %v8564, %v8563
  %v8598 = vpack.c.bf16 %v8566, %v8565
  %v8600 = vsel %vm5194, %v8567, 0
  %v8603 = vsel %vm5194, %v8568, 0
  %v8606 = vsel %vm5194, %v8569, 0
  %v8609 = vsel %vm5194, %v8570, 0
  %v8612 = vsel %vm5194, %v8571, 0
  %v8615 = vsel %vm5194, %v8572, 0
  %v8618 = vsel %vm5194, %v8573, 0
  %v8621 = vsel %vm5194, %v8574, 0
  %v8624 = vsel %vm5194, %v8575, 0
  %v8627 = vsel %vm5194, %v8576, 0
  %v8630 = vsel %vm5194, %v8577, 0
  %v8633 = vsel %vm5194, %v8578, 0
  %v8636 = vsel %vm5194, %v8579, 0
  %v8639 = vsel %vm5194, %v8580, 0
  %v8642 = vsel %vm5194, %v8581, 0
  %v8645 = vsel %vm5194, %v8582, 0
  %v8648 = vsel %vm5194, %v8583, 0
  %v8651 = vsel %vm5194, %v8584, 0
  %v8654 = vsel %vm5194, %v8585, 0
  %v8657 = vsel %vm5194, %v8586, 0
  %v8660 = vsel %vm5194, %v8587, 0
  %v8663 = vsel %vm5194, %v8588, 0
  %v8666 = vsel %vm5194, %v8589, 0
  %v8669 = vsel %vm5194, %v8590, 0
  %v8672 = vsel %vm5194, %v8591, 0
  %v8675 = vsel %vm5194, %v8592, 0
  %v8678 = vsel %vm5194, %v8593, 0
  %v8681 = vsel %vm5194, %v8594, 0
  %v8684 = vsel %vm5194, %v8595, 0
  %v8687 = vsel %vm5194, %v8596, 0
  %v8690 = vsel %vm5194, %v8597, 0
  %v8693 = vsel %vm5194, %v8598, 0
  %v8696 = vsel %vm6178, %v5883, 0
  %8698 = vmatprep.subr.bf16.mxu0 0
  %8699 = vmatpush1.bf16.msra.mxu0 %v8696
  %8700 = vmatprep.subr.bf16.mxu0 0
  %8701 = vmatpush1.bf16.msra.mxu0 0
  %8702 = vmatprep.subr.bf16.mxu0 0
  %8703 = vmatpush1.bf16.msra.mxu0 0
  %8704 = vmatprep.subr.bf16.mxu0 0
  %8705 = vmatpush1.bf16.msra.mxu0 0
  %8706 = vmatprep.subr.bf16.mxu0 0
  %8707 = vmatpush1.bf16.msra.mxu0 0
  %8708 = vmatprep.subr.bf16.mxu0 0
  %8709 = vmatpush1.bf16.msra.mxu0 0
  %8710 = vmatprep.subr.bf16.mxu0 0
  %8711 = vmatpush1.bf16.msra.mxu0 0
  %8712 = vmatprep.subr.bf16.mxu0 0
  %8713 = vmatpush1.bf16.msra.mxu0 0
  %8714 = vmatprep.subr.bf16.mxu0 0
  %8715 = vmatpush1.bf16.msra.mxu0 0
  %8716 = vmatprep.subr.bf16.mxu0 0
  %8717 = vmatpush1.bf16.msra.mxu0 0
  %8718 = vmatprep.subr.bf16.mxu0 0
  %8719 = vmatpush1.bf16.msra.mxu0 0
  %8720 = vmatprep.subr.bf16.mxu0 0
  %8721 = vmatpush1.bf16.msra.mxu0 0
  %8722 = vmatprep.subr.bf16.mxu0 0
  %8723 = vmatpush1.bf16.msra.mxu0 0
  %8724 = vmatprep.subr.bf16.mxu0 0
  %8725 = vmatpush1.bf16.msra.mxu0 0
  %8726 = vmatprep.subr.bf16.mxu0 0
  %8727 = vmatpush1.bf16.msra.mxu0 0
  %8728 = vmatprep.subr.bf16.mxu0 0
  %8729 = vmatpush1.bf16.msra.mxu0 0
  %8730 = vmatprep.mubr.bf16.mxu0 0
  %8731 = vmatmul.mubr.bf16.gmra.mrb[0].mxu0 %v8600
  %v8732 = vpop.f32.mrb[0].mxu0
  %v8733 = vadd.f32 0.0, %v8732
  %v8734 = vpop.f32.mrb[0].mxu0
  %v8735 = vpop.f32.mrb[0].mxu0
  %v8736 = vadd.f32 0.0, %v8735
  %v8737 = vpop.f32.mrb[0].mxu0
  %8738 = vmatprep.mubr.bf16.mxu0 0
  %8739 = vmatmul.mubr.bf16.gmra.mrb[0].mxu0 %v8603
  %v8740 = vpop.f32.mrb[0].mxu0
  %v8741 = vadd.f32 0.0, %v8740
  %v8742 = vpop.f32.mrb[0].mxu0
  %v8743 = vpop.f32.mrb[0].mxu0
  %v8744 = vadd.f32 0.0, %v8743
  %v8745 = vpop.f32.mrb[0].mxu0
  %8746 = vmatprep.mubr.bf16.mxu0 0
  %8747 = vmatmul.mubr.bf16.gmra.mrb[0].mxu0 %v8606
  %v8748 = vpop.f32.mrb[0].mxu0
  %v8749 = vadd.f32 0.0, %v8748
  %v8750 = vpop.f32.mrb[0].mxu0
  %v8751 = vpop.f32.mrb[0].mxu0
  %v8752 = vadd.f32 0.0, %v8751
  %v8753 = vpop.f32.mrb[0].mxu0
  %8754 = vmatprep.mubr.bf16.mxu0 0
  %8755 = vmatmul.mubr.bf16.gmra.mrb[0].mxu0 %v8609
  %v8756 = vpop.f32.mrb[0].mxu0
  %v8757 = vadd.f32 0.0, %v8756
  %v8758 = vpop.f32.mrb[0].mxu0
  %v8759 = vpop.f32.mrb[0].mxu0
  %v8760 = vadd.f32 0.0, %v8759
  %v8761 = vpop.f32.mrb[0].mxu0
  %8762 = vmatprep.mubr.bf16.mxu0 0
  %8763 = vmatmul.mubr.bf16.gmra.mrb[0].mxu0 %v8612
  %v8764 = vpop.f32.mrb[0].mxu0
  %v8765 = vadd.f32 0.0, %v8764
  %v8766 = vpop.f32.mrb[0].mxu0
  %v8767 = vpop.f32.mrb[0].mxu0
  %v8768 = vadd.f32 0.0, %v8767
  %v8769 = vpop.f32.mrb[0].mxu0
  %8770 = vmatprep.mubr.bf16.mxu0 0
  %8771 = vmatmul.mubr.bf16.gmra.mrb[0].mxu0 %v8615
  %v8772 = vpop.f32.mrb[0].mxu0
  %v8773 = vadd.f32 0.0, %v8772
  %v8774 = vpop.f32.mrb[0].mxu0
  %v8775 = vpop.f32.mrb[0].mxu0
  %v8776 = vadd.f32 0.0, %v8775
  %v8777 = vpop.f32.mrb[0].mxu0
  %8778 = vmatprep.mubr.bf16.mxu0 0
  %8779 = vmatmul.mubr.bf16.gmra.mrb[0].mxu0 %v8618
  %v8780 = vpop.f32.mrb[0].mxu0
  %v8781 = vadd.f32 0.0, %v8780
  %v8782 = vpop.f32.mrb[0].mxu0
  %v8783 = vpop.f32.mrb[0].mxu0
  %v8784 = vadd.f32 0.0, %v8783
  %v8785 = vpop.f32.mrb[0].mxu0
  %8786 = vmatprep.mubr.bf16.mxu0 0
  %8787 = vmatmul.mubr.bf16.gmra.mrb[0].mxu0 %v8621
  %v8788 = vpop.f32.mrb[0].mxu0
  %v8789 = vadd.f32 0.0, %v8788
  %v8790 = vpop.f32.mrb[0].mxu0
  %v8791 = vpop.f32.mrb[0].mxu0
  %v8792 = vadd.f32 0.0, %v8791
  %v8793 = vpop.f32.mrb[0].mxu0
  %8794 = vmatprep.mubr.bf16.mxu0 0
  %8795 = vmatmul.mubr.bf16.gmra.mrb[0].mxu0 %v8624
  %v8796 = vpop.f32.mrb[0].mxu0
  %v8797 = vadd.f32 0.0, %v8796
  %v8798 = vpop.f32.mrb[0].mxu0
  %v8799 = vpop.f32.mrb[0].mxu0
  %v8800 = vadd.f32 0.0, %v8799
  %v8801 = vpop.f32.mrb[0].mxu0
  %8802 = vmatprep.mubr.bf16.mxu0 0
  %8803 = vmatmul.mubr.bf16.gmra.mrb[0].mxu0 %v8627
  %v8804 = vpop.f32.mrb[0].mxu0
  %v8805 = vadd.f32 0.0, %v8804
  %v8806 = vpop.f32.mrb[0].mxu0
  %v8807 = vpop.f32.mrb[0].mxu0
  %v8808 = vadd.f32 0.0, %v8807
  %v8809 = vpop.f32.mrb[0].mxu0
  %8810 = vmatprep.mubr.bf16.mxu0 0
  %8811 = vmatmul.mubr.bf16.gmra.mrb[0].mxu0 %v8630
  %v8812 = vpop.f32.mrb[0].mxu0
  %v8813 = vadd.f32 0.0, %v8812
  %v8814 = vpop.f32.mrb[0].mxu0
  %v8815 = vpop.f32.mrb[0].mxu0
  %v8816 = vadd.f32 0.0, %v8815
  %v8817 = vpop.f32.mrb[0].mxu0
  %8818 = vmatprep.mubr.bf16.mxu0 0
  %8819 = vmatmul.mubr.bf16.gmra.mrb[0].mxu0 %v8633
  %v8820 = vpop.f32.mrb[0].mxu0
  %v8821 = vadd.f32 0.0, %v8820
  %v8822 = vpop.f32.mrb[0].mxu0
  %v8823 = vpop.f32.mrb[0].mxu0
  %v8824 = vadd.f32 0.0, %v8823
  %v8825 = vpop.f32.mrb[0].mxu0
  %8826 = vmatprep.mubr.bf16.mxu0 0
  %8827 = vmatmul.mubr.bf16.gmra.mrb[0].mxu0 %v8636
  %v8828 = vpop.f32.mrb[0].mxu0
  %v8829 = vadd.f32 0.0, %v8828
  %v8830 = vpop.f32.mrb[0].mxu0
  %v8831 = vpop.f32.mrb[0].mxu0
  %v8832 = vadd.f32 0.0, %v8831
  %v8833 = vpop.f32.mrb[0].mxu0
  %8834 = vmatprep.mubr.bf16.mxu0 0
  %8835 = vmatmul.mubr.bf16.gmra.mrb[0].mxu0 %v8639
  %v8836 = vpop.f32.mrb[0].mxu0
  %v8837 = vadd.f32 0.0, %v8836
  %v8838 = vpop.f32.mrb[0].mxu0
  %v8839 = vpop.f32.mrb[0].mxu0
  %v8840 = vadd.f32 0.0, %v8839
  %v8841 = vpop.f32.mrb[0].mxu0
  %8842 = vmatprep.mubr.bf16.mxu0 0
  %8843 = vmatmul.mubr.bf16.gmra.mrb[0].mxu0 %v8642
  %v8844 = vpop.f32.mrb[0].mxu0
  %v8845 = vadd.f32 0.0, %v8844
  %v8846 = vpop.f32.mrb[0].mxu0
  %v8847 = vpop.f32.mrb[0].mxu0
  %v8848 = vadd.f32 0.0, %v8847
  %v8849 = vpop.f32.mrb[0].mxu0
  %8850 = vmatprep.mubr.bf16.mxu0 0
  %8851 = vmatmul.mubr.bf16.gmra.mrb[0].mxu0 %v8645
  %v8852 = vpop.f32.mrb[0].mxu0
  %v8853 = vadd.f32 0.0, %v8852
  %v8854 = vpop.f32.mrb[0].mxu0
  %v8855 = vpop.f32.mrb[0].mxu0
  %v8856 = vadd.f32 0.0, %v8855
  %v8857 = vpop.f32.mrb[0].mxu0
  %8858 = vmatprep.mubr.bf16.mxu0 0
  %8859 = vmatmul.mubr.bf16.gmra.mrb[0].mxu0 %v8648
  %v8860 = vpop.f32.mrb[0].mxu0
  %v8861 = vadd.f32 0.0, %v8860
  %v8862 = vpop.f32.mrb[0].mxu0
  %v8863 = vpop.f32.mrb[0].mxu0
  %v8864 = vadd.f32 0.0, %v8863
  %v8865 = vpop.f32.mrb[0].mxu0
  %8866 = vmatprep.mubr.bf16.mxu0 0
  %8867 = vmatmul.mubr.bf16.gmra.mrb[0].mxu0 %v8651
  %v8868 = vpop.f32.mrb[0].mxu0
  %v8869 = vadd.f32 0.0, %v8868
  %v8870 = vpop.f32.mrb[0].mxu0
  %v8871 = vpop.f32.mrb[0].mxu0
  %v8872 = vadd.f32 0.0, %v8871
  %v8873 = vpop.f32.mrb[0].mxu0
  %8874 = vmatprep.mubr.bf16.mxu0 0
  %8875 = vmatmul.mubr.bf16.gmra.mrb[0].mxu0 %v8654
  %v8876 = vpop.f32.mrb[0].mxu0
  %v8877 = vadd.f32 0.0, %v8876
  %v8878 = vpop.f32.mrb[0].mxu0
  %v8879 = vpop.f32.mrb[0].mxu0
  %v8880 = vadd.f32 0.0, %v8879
  %v8881 = vpop.f32.mrb[0].mxu0
  %8882 = vmatprep.mubr.bf16.mxu0 0
  %8883 = vmatmul.mubr.bf16.gmra.mrb[0].mxu0 %v8657
  %v8884 = vpop.f32.mrb[0].mxu0
  %v8885 = vadd.f32 0.0, %v8884
  %v8886 = vpop.f32.mrb[0].mxu0
  %v8887 = vpop.f32.mrb[0].mxu0
  %v8888 = vadd.f32 0.0, %v8887
  %v8889 = vpop.f32.mrb[0].mxu0
  %8890 = vmatprep.mubr.bf16.mxu0 0
  %8891 = vmatmul.mubr.bf16.gmra.mrb[0].mxu0 %v8660
  %v8892 = vpop.f32.mrb[0].mxu0
  %v8893 = vadd.f32 0.0, %v8892
  %v8894 = vpop.f32.mrb[0].mxu0
  %v8895 = vpop.f32.mrb[0].mxu0
  %v8896 = vadd.f32 0.0, %v8895
  %v8897 = vpop.f32.mrb[0].mxu0
  %8898 = vmatprep.mubr.bf16.mxu0 0
  %8899 = vmatmul.mubr.bf16.gmra.mrb[0].mxu0 %v8663
  %v8900 = vpop.f32.mrb[0].mxu0
  %v8901 = vadd.f32 0.0, %v8900
  %v8902 = vpop.f32.mrb[0].mxu0
  %v8903 = vpop.f32.mrb[0].mxu0
  %v8904 = vadd.f32 0.0, %v8903
  %v8905 = vpop.f32.mrb[0].mxu0
  %8906 = vmatprep.mubr.bf16.mxu0 0
  %8907 = vmatmul.mubr.bf16.gmra.mrb[0].mxu0 %v8666
  %v8908 = vpop.f32.mrb[0].mxu0
  %v8909 = vadd.f32 0.0, %v8908
  %v8910 = vpop.f32.mrb[0].mxu0
  %v8911 = vpop.f32.mrb[0].mxu0
  %v8912 = vadd.f32 0.0, %v8911
  %v8913 = vpop.f32.mrb[0].mxu0
  %8914 = vmatprep.mubr.bf16.mxu0 0
  %8915 = vmatmul.mubr.bf16.gmra.mrb[0].mxu0 %v8669
  %v8916 = vpop.f32.mrb[0].mxu0
  %v8917 = vadd.f32 0.0, %v8916
  %v8918 = vpop.f32.mrb[0].mxu0
  %v8919 = vpop.f32.mrb[0].mxu0
  %v8920 = vadd.f32 0.0, %v8919
  %v8921 = vpop.f32.mrb[0].mxu0
  %8922 = vmatprep.mubr.bf16.mxu0 0
  %8923 = vmatmul.mubr.bf16.gmra.mrb[0].mxu0 %v8672
  %v8924 = vpop.f32.mrb[0].mxu0
  %v8925 = vadd.f32 0.0, %v8924
  %v8926 = vpop.f32.mrb[0].mxu0
  %v8927 = vpop.f32.mrb[0].mxu0
  %v8928 = vadd.f32 0.0, %v8927
  %v8929 = vpop.f32.mrb[0].mxu0
  %8930 = vmatprep.mubr.bf16.mxu0 0
  %8931 = vmatmul.mubr.bf16.gmra.mrb[0].mxu0 %v8675
  %v8932 = vpop.f32.mrb[0].mxu0
  %v8933 = vadd.f32 0.0, %v8932
  %v8934 = vpop.f32.mrb[0].mxu0
  %v8935 = vpop.f32.mrb[0].mxu0
  %v8936 = vadd.f32 0.0, %v8935
  %v8937 = vpop.f32.mrb[0].mxu0
  %8938 = vmatprep.mubr.bf16.mxu0 0
  %8939 = vmatmul.mubr.bf16.gmra.mrb[0].mxu0 %v8678
  %v8940 = vpop.f32.mrb[0].mxu0
  %v8941 = vadd.f32 0.0, %v8940
  %v8942 = vpop.f32.mrb[0].mxu0
  %v8943 = vpop.f32.mrb[0].mxu0
  %v8944 = vadd.f32 0.0, %v8943
  %v8945 = vpop.f32.mrb[0].mxu0
  %8946 = vmatprep.mubr.bf16.mxu0 0
  %8947 = vmatmul.mubr.bf16.gmra.mrb[0].mxu0 %v8681
  %v8948 = vpop.f32.mrb[0].mxu0
  %v8949 = vadd.f32 0.0, %v8948
  %v8950 = vpop.f32.mrb[0].mxu0
  %v8951 = vpop.f32.mrb[0].mxu0
  %v8952 = vadd.f32 0.0, %v8951
  %v8953 = vpop.f32.mrb[0].mxu0
  %8954 = vmatprep.mubr.bf16.mxu0 0
  %8955 = vmatmul.mubr.bf16.gmra.mrb[0].mxu0 %v8684
  %v8956 = vpop.f32.mrb[0].mxu0
  %v8957 = vadd.f32 0.0, %v8956
  %v8958 = vpop.f32.mrb[0].mxu0
  %v8959 = vpop.f32.mrb[0].mxu0
  %v8960 = vadd.f32 0.0, %v8959
  %v8961 = vpop.f32.mrb[0].mxu0
  %8962 = vmatprep.mubr.bf16.mxu0 0
  %8963 = vmatmul.mubr.bf16.gmra.mrb[0].mxu0 %v8687
  %v8964 = vpop.f32.mrb[0].mxu0
  %v8965 = vadd.f32 0.0, %v8964
  %v8966 = vpop.f32.mrb[0].mxu0
  %v8967 = vpop.f32.mrb[0].mxu0
  %v8968 = vadd.f32 0.0, %v8967
  %v8969 = vpop.f32.mrb[0].mxu0
  %8970 = vmatprep.mubr.bf16.mxu0 0
  %8971 = vmatmul.mubr.bf16.gmra.mrb[0].mxu0 %v8690
  %v8972 = vpop.f32.mrb[0].mxu0
  %v8973 = vadd.f32 0.0, %v8972
  %v8974 = vpop.f32.mrb[0].mxu0
  %v8975 = vpop.f32.mrb[0].mxu0
  %v8976 = vadd.f32 0.0, %v8975
  %v8977 = vpop.f32.mrb[0].mxu0
  %8978 = vmatprep.mubr.bf16.mxu0 0
  %8979 = vmatmul.mubr.bf16.gmra.mrb[0].mxu0 %v8693
  %v8980 = vpop.f32.mrb[0].mxu0
  %v8981 = vadd.f32 0.0, %v8980
  %v8982 = vpop.f32.mrb[0].mxu0
  %v8983 = vpop.f32.mrb[0].mxu0
  %v8984 = vadd.f32 0.0, %v8983
  %v8985 = vpop.f32.mrb[0].mxu0
  %8986 = vdwg.mxu0
  %v8987 = vadd.f32 %v8439, %v8733
  %v8988 = vadd.f32 %v8440, %v8736
  %v8989 = vadd.f32 %v8441, %v8741
  %v8990 = vadd.f32 %v8442, %v8744
  %v8991 = vadd.f32 %v8443, %v8749
  %v8992 = vadd.f32 %v8444, %v8752
  %v8993 = vadd.f32 %v8445, %v8757
  %v8994 = vadd.f32 %v8446, %v8760
  %v8995 = vadd.f32 %v8447, %v8765
  %v8996 = vadd.f32 %v8448, %v8768
  %v8997 = vadd.f32 %v8449, %v8773
  %v8998 = vadd.f32 %v8450, %v8776
  %v8999 = vadd.f32 %v8451, %v8781
  %v9000 = vadd.f32 %v8452, %v8784
  %v9001 = vadd.f32 %v8453, %v8789
  %v9002 = vadd.f32 %v8454, %v8792
  %v9003 = vadd.f32 %v8455, %v8797
  %v9004 = vadd.f32 %v8456, %v8800
  %v9005 = vadd.f32 %v8457, %v8805
  %v9006 = vadd.f32 %v8458, %v8808
  %v9007 = vadd.f32 %v8459, %v8813
  %v9008 = vadd.f32 %v8460, %v8816
  %v9009 = vadd.f32 %v8461, %v8821
  %v9010 = vadd.f32 %v8462, %v8824
  %v9011 = vadd.f32 %v8463, %v8829
  %v9012 = vadd.f32 %v8464, %v8832
  %v9013 = vadd.f32 %v8465, %v8837
  %v9014 = vadd.f32 %v8466, %v8840
  %v9015 = vadd.f32 %v8467, %v8845
  %v9016 = vadd.f32 %v8468, %v8848
  %v9017 = vadd.f32 %v8469, %v8853
  %v9018 = vadd.f32 %v8470, %v8856
  %v9019 = vadd.f32 %v8471, %v8861
  %v9020 = vadd.f32 %v8472, %v8864
  %v9021 = vadd.f32 %v8473, %v8869
  %v9022 = vadd.f32 %v8474, %v8872
  %v9023 = vadd.f32 %v8475, %v8877
  %v9024 = vadd.f32 %v8476, %v8880
  %v9025 = vadd.f32 %v8477, %v8885
  %v9026 = vadd.f32 %v8478, %v8888
  %v9027 = vadd.f32 %v8479, %v8893
  %v9028 = vadd.f32 %v8480, %v8896
  %v9029 = vadd.f32 %v8481, %v8901
  %v9030 = vadd.f32 %v8482, %v8904
  %v9031 = vadd.f32 %v8483, %v8909
  %v9032 = vadd.f32 %v8484, %v8912
  %v9033 = vadd.f32 %v8485, %v8917
  %v9034 = vadd.f32 %v8486, %v8920
  %v9035 = vadd.f32 %v8487, %v8925
  %v9036 = vadd.f32 %v8488, %v8928
  %v9037 = vadd.f32 %v8489, %v8933
  %v9038 = vadd.f32 %v8490, %v8936
  %v9039 = vadd.f32 %v8491, %v8941
  %v9040 = vadd.f32 %v8492, %v8944
  %v9041 = vadd.f32 %v8493, %v8949
  %v9042 = vadd.f32 %v8494, %v8952
  %v9043 = vadd.f32 %v8495, %v8957
  %v9044 = vadd.f32 %v8496, %v8960
  %v9045 = vadd.f32 %v8497, %v8965
  %v9046 = vadd.f32 %v8498, %v8968
  %v9047 = vadd.f32 %v8499, %v8973
  %v9048 = vadd.f32 %v8500, %v8976
  %v9049 = vadd.f32 %v8501, %v8981
  %v9050 = vadd.f32 %v8502, %v8984
  %s9051 = scalar_lea.vmem [#allocation3], 48
  %v9052 = vld [vmem:[%s9051] sm:$0xff]
  %v9053 = vld [vmem:[%s9051 + $0x8] sm:$0xff]
  %v9054 = vld [vmem:[%s9051 + $0x18] sm:$0xff]
  %v9055 = vld [vmem:[%s9051 + $0x20] sm:$0xff]
  %v9056 = vld [vmem:[%s9051 + $0x30] sm:$0xff]
  %v9057 = vld [vmem:[%s9051 + $0x38] sm:$0xff]
  %v9058 = vld [vmem:[%s9051 + $0x48] sm:$0xff]
  %v9059 = vld [vmem:[%s9051 + $0x50] sm:$0xff]
  %v9060 = vld [vmem:[%s9051 + $0x60] sm:$0xff]
  %v9061 = vld [vmem:[%s9051 + $0x68] sm:$0xff]
  %v9062 = vld [vmem:[%s9051 + $0x78] sm:$0xff]
  %v9063 = vld [vmem:[%s9051 + $0x80] sm:$0xff]
  %v9064 = vld [vmem:[%s9051 + $0x90] sm:$0xff]
  %v9065 = vld [vmem:[%s9051 + $0x98] sm:$0xff]
  %v9066 = vld [vmem:[%s9051 + $0xa8] sm:$0xff]
  %v9067 = vld [vmem:[%s9051 + $0xb0] sm:$0xff]
  %v9068 = vld [vmem:[%s9051 + $0xc0] sm:$0xff]
  %v9069 = vld [vmem:[%s9051 + $0xc8] sm:$0xff]
  %v9070 = vld [vmem:[%s9051 + $0xd8] sm:$0xff]
  %v9071 = vld [vmem:[%s9051 + $0xe0] sm:$0xff]
  %v9072 = vld [vmem:[%s9051 + $0xf0] sm:$0xff]
  %v9073 = vld [vmem:[%s9051 + $0xf8] sm:$0xff]
  %v9074 = vld [vmem:[%s9051 + $0x108] sm:$0xff]
  %v9075 = vld [vmem:[%s9051 + $0x110] sm:$0xff]
  %v9076 = vld [vmem:[%s9051 + $0x120] sm:$0xff]
  %v9077 = vld [vmem:[%s9051 + $0x128] sm:$0xff]
  %v9078 = vld [vmem:[%s9051 + $0x138] sm:$0xff]
  %v9079 = vld [vmem:[%s9051 + $0x140] sm:$0xff]
  %v9080 = vld [vmem:[%s9051 + $0x150] sm:$0xff]
  %v9081 = vld [vmem:[%s9051 + $0x158] sm:$0xff]
  %v9082 = vld [vmem:[%s9051 + $0x168] sm:$0xff]
  %v9083 = vld [vmem:[%s9051 + $0x170] sm:$0xff]
  %v9084 = vld [vmem:[%s9051 + $0x1b0] sm:$0xff]
  %v9085 = vld [vmem:[%s9051 + $0x1b8] sm:$0xff]
  %v9086 = vld [vmem:[%s9051 + $0x1c8] sm:$0xff]
  %v9087 = vld [vmem:[%s9051 + $0x1d0] sm:$0xff]
  %v9088 = vld [vmem:[%s9051 + $0x1e0] sm:$0xff]
  %v9089 = vld [vmem:[%s9051 + $0x1e8] sm:$0xff]
  %v9090 = vld [vmem:[%s9051 + $0x1f8] sm:$0xff]
  %v9091 = vld [vmem:[%s9051 + $0x200] sm:$0xff]
  %v9092 = vld [vmem:[%s9051 + $0x210] sm:$0xff]
  %v9093 = vld [vmem:[%s9051 + $0x218] sm:$0xff]
  %v9094 = vld [vmem:[%s9051 + $0x228] sm:$0xff]
  %v9095 = vld [vmem:[%s9051 + $0x230] sm:$0xff]
  %v9096 = vld [vmem:[%s9051 + $0x240] sm:$0xff]
  %v9097 = vld [vmem:[%s9051 + $0x248] sm:$0xff]
  %v9098 = vld [vmem:[%s9051 + $0x258] sm:$0xff]
  %v9099 = vld [vmem:[%s9051 + $0x260] sm:$0xff]
  %v9100 = vld [vmem:[%s9051 + $0x270] sm:$0xff]
  %v9101 = vld [vmem:[%s9051 + $0x278] sm:$0xff]
  %v9102 = vld [vmem:[%s9051 + $0x288] sm:$0xff]
  %v9103 = vld [vmem:[%s9051 + $0x290] sm:$0xff]
  %v9104 = vld [vmem:[%s9051 + $0x2a0] sm:$0xff]
  %v9105 = vld [vmem:[%s9051 + $0x2a8] sm:$0xff]
  %v9106 = vld [vmem:[%s9051 + $0x2b8] sm:$0xff]
  %v9107 = vld [vmem:[%s9051 + $0x2c0] sm:$0xff]
  %v9108 = vld [vmem:[%s9051 + $0x2d0] sm:$0xff]
  %v9109 = vld [vmem:[%s9051 + $0x2d8] sm:$0xff]
  %v9110 = vld [vmem:[%s9051 + $0x2e8] sm:$0xff]
  %v9111 = vld [vmem:[%s9051 + $0x2f0] sm:$0xff]
  %v9112 = vld [vmem:[%s9051 + $0x300] sm:$0xff]
  %v9113 = vld [vmem:[%s9051 + $0x308] sm:$0xff]
  %v9114 = vld [vmem:[%s9051 + $0x318] sm:$0xff]
  %v9115 = vld [vmem:[%s9051 + $0x320] sm:$0xff]
  %v9116 = vpack.c.bf16 %v9053, %v9052
  %v9117 = vpack.c.bf16 %v9055, %v9054
  %v9118 = vpack.c.bf16 %v9057, %v9056
  %v9119 = vpack.c.bf16 %v9059, %v9058
  %v9120 = vpack.c.bf16 %v9061, %v9060
  %v9121 = vpack.c.bf16 %v9063, %v9062
  %v9122 = vpack.c.bf16 %v9065, %v9064
  %v9123 = vpack.c.bf16 %v9067, %v9066
  %v9124 = vpack.c.bf16 %v9069, %v9068
  %v9125 = vpack.c.bf16 %v9071, %v9070
  %v9126 = vpack.c.bf16 %v9073, %v9072
  %v9127 = vpack.c.bf16 %v9075, %v9074
  %v9128 = vpack.c.bf16 %v9077, %v9076
  %v9129 = vpack.c.bf16 %v9079, %v9078
  %v9130 = vpack.c.bf16 %v9081, %v9080
  %v9131 = vpack.c.bf16 %v9083, %v9082
  %v9132 = vpack.c.bf16 %v9085, %v9084
  %v9133 = vpack.c.bf16 %v9087, %v9086
  %v9134 = vpack.c.bf16 %v9089, %v9088
  %v9135 = vpack.c.bf16 %v9091, %v9090
  %v9136 = vpack.c.bf16 %v9093, %v9092
  %v9137 = vpack.c.bf16 %v9095, %v9094
  %v9138 = vpack.c.bf16 %v9097, %v9096
  %v9139 = vpack.c.bf16 %v9099, %v9098
  %v9140 = vpack.c.bf16 %v9101, %v9100
  %v9141 = vpack.c.bf16 %v9103, %v9102
  %v9142 = vpack.c.bf16 %v9105, %v9104
  %v9143 = vpack.c.bf16 %v9107, %v9106
  %v9144 = vpack.c.bf16 %v9109, %v9108
  %v9145 = vpack.c.bf16 %v9111, %v9110
  %v9146 = vpack.c.bf16 %v9113, %v9112
  %v9147 = vpack.c.bf16 %v9115, %v9114
  %v9149 = vsel %vm5194, %v9116, 0
  %v9152 = vsel %vm5194, %v9117, 0
  %v9155 = vsel %vm5194, %v9118, 0
  %v9158 = vsel %vm5194, %v9119, 0
  %v9161 = vsel %vm5194, %v9120, 0
  %v9164 = vsel %vm5194, %v9121, 0
  %v9167 = vsel %vm5194, %v9122, 0
  %v9170 = vsel %vm5194, %v9123, 0
  %v9173 = vsel %vm5194, %v9124, 0
  %v9176 = vsel %vm5194, %v9125, 0
  %v9179 = vsel %vm5194, %v9126, 0
  %v9182 = vsel %vm5194, %v9127, 0
  %v9185 = vsel %vm5194, %v9128, 0
  %v9188 = vsel %vm5194, %v9129, 0
  %v9191 = vsel %vm5194, %v9130, 0
  %v9194 = vsel %vm5194, %v9131, 0
  %v9197 = vsel %vm5194, %v9132, 0
  %v9200 = vsel %vm5194, %v9133, 0
  %v9203 = vsel %vm5194, %v9134, 0
  %v9206 = vsel %vm5194, %v9135, 0
  %v9209 = vsel %vm5194, %v9136, 0
  %v9212 = vsel %vm5194, %v9137, 0
  %v9215 = vsel %vm5194, %v9138, 0
  %v9218 = vsel %vm5194, %v9139, 0
  %v9221 = vsel %vm5194, %v9140, 0
  %v9224 = vsel %vm5194, %v9141, 0
  %v9227 = vsel %vm5194, %v9142, 0
  %v9230 = vsel %vm5194, %v9143, 0
  %v9233 = vsel %vm5194, %v9144, 0
  %v9236 = vsel %vm5194, %v9145, 0
  %v9239 = vsel %vm5194, %v9146, 0
  %v9242 = vsel %vm5194, %v9147, 0
  %v9245 = vsel %vm6178, %v5884, 0
  %9247 = vmatprep.subr.bf16.mxu0 0
  %9248 = vmatpush1.bf16.msra.mxu0 %v9245
  %9249 = vmatprep.subr.bf16.mxu0 0
  %9250 = vmatpush1.bf16.msra.mxu0 0
  %9251 = vmatprep.subr.bf16.mxu0 0
  %9252 = vmatpush1.bf16.msra.mxu0 0
  %9253 = vmatprep.subr.bf16.mxu0 0
  %9254 = vmatpush1.bf16.msra.mxu0 0
  %9255 = vmatprep.subr.bf16.mxu0 0
  %9256 = vmatpush1.bf16.msra.mxu0 0
  %9257 = vmatprep.subr.bf16.mxu0 0
  %9258 = vmatpush1.bf16.msra.mxu0 0
  %9259 = vmatprep.subr.bf16.mxu0 0
  %9260 = vmatpush1.bf16.msra.mxu0 0
  %9261 = vmatprep.subr.bf16.mxu0 0
  %9262 = vmatpush1.bf16.msra.mxu0 0
  %9263 = vmatprep.subr.bf16.mxu0 0
  %9264 = vmatpush1.bf16.msra.mxu0 0
  %9265 = vmatprep.subr.bf16.mxu0 0
  %9266 = vmatpush1.bf16.msra.mxu0 0
  %9267 = vmatprep.subr.bf16.mxu0 0
  %9268 = vmatpush1.bf16.msra.mxu0 0
  %9269 = vmatprep.subr.bf16.mxu0 0
  %9270 = vmatpush1.bf16.msra.mxu0 0
  %9271 = vmatprep.subr.bf16.mxu0 0
  %9272 = vmatpush1.bf16.msra.mxu0 0
  %9273 = vmatprep.subr.bf16.mxu0 0
  %9274 = vmatpush1.bf16.msra.mxu0 0
  %9275 = vmatprep.subr.bf16.mxu0 0
  %9276 = vmatpush1.bf16.msra.mxu0 0
  %9277 = vmatprep.subr.bf16.mxu0 0
  %9278 = vmatpush1.bf16.msra.mxu0 0
  %9279 = vmatprep.mubr.bf16.mxu0 0
  %9280 = vmatmul.mubr.bf16.gmra.mrb[0].mxu0 %v9149
  %v9281 = vpop.f32.mrb[0].mxu0
  %v9282 = vadd.f32 0.0, %v9281
  %v9283 = vpop.f32.mrb[0].mxu0
  %v9284 = vpop.f32.mrb[0].mxu0
  %v9285 = vadd.f32 0.0, %v9284
  %v9286 = vpop.f32.mrb[0].mxu0
  %9287 = vmatprep.mubr.bf16.mxu0 0
  %9288 = vmatmul.mubr.bf16.gmra.mrb[0].mxu0 %v9152
  %v9289 = vpop.f32.mrb[0].mxu0
  %v9290 = vadd.f32 0.0, %v9289
  %v9291 = vpop.f32.mrb[0].mxu0
  %v9292 = vpop.f32.mrb[0].mxu0
  %v9293 = vadd.f32 0.0, %v9292
  %v9294 = vpop.f32.mrb[0].mxu0
  %9295 = vmatprep.mubr.bf16.mxu0 0
  %9296 = vmatmul.mubr.bf16.gmra.mrb[0].mxu0 %v9155
  %v9297 = vpop.f32.mrb[0].mxu0
  %v9298 = vadd.f32 0.0, %v9297
  %v9299 = vpop.f32.mrb[0].mxu0
  %v9300 = vpop.f32.mrb[0].mxu0
  %v9301 = vadd.f32 0.0, %v9300
  %v9302 = vpop.f32.mrb[0].mxu0
  %9303 = vmatprep.mubr.bf16.mxu0 0
  %9304 = vmatmul.mubr.bf16.gmra.mrb[0].mxu0 %v9158
  %v9305 = vpop.f32.mrb[0].mxu0
  %v9306 = vadd.f32 0.0, %v9305
  %v9307 = vpop.f32.mrb[0].mxu0
  %v9308 = vpop.f32.mrb[0].mxu0
  %v9309 = vadd.f32 0.0, %v9308
  %v9310 = vpop.f32.mrb[0].mxu0
  %9311 = vmatprep.mubr.bf16.mxu0 0
  %9312 = vmatmul.mubr.bf16.gmra.mrb[0].mxu0 %v9161
  %v9313 = vpop.f32.mrb[0].mxu0
  %v9314 = vadd.f32 0.0, %v9313
  %v9315 = vpop.f32.mrb[0].mxu0
  %v9316 = vpop.f32.mrb[0].mxu0
  %v9317 = vadd.f32 0.0, %v9316
  %v9318 = vpop.f32.mrb[0].mxu0
  %9319 = vmatprep.mubr.bf16.mxu0 0
  %9320 = vmatmul.mubr.bf16.gmra.mrb[0].mxu0 %v9164
  %v9321 = vpop.f32.mrb[0].mxu0
  %v9322 = vadd.f32 0.0, %v9321
  %v9323 = vpop.f32.mrb[0].mxu0
  %v9324 = vpop.f32.mrb[0].mxu0
  %v9325 = vadd.f32 0.0, %v9324
  %v9326 = vpop.f32.mrb[0].mxu0
  %9327 = vmatprep.mubr.bf16.mxu0 0
  %9328 = vmatmul.mubr.bf16.gmra.mrb[0].mxu0 %v9167
  %v9329 = vpop.f32.mrb[0].mxu0
  %v9330 = vadd.f32 0.0, %v9329
  %v9331 = vpop.f32.mrb[0].mxu0
  %v9332 = vpop.f32.mrb[0].mxu0
  %v9333 = vadd.f32 0.0, %v9332
  %v9334 = vpop.f32.mrb[0].mxu0
  %9335 = vmatprep.mubr.bf16.mxu0 0
  %9336 = vmatmul.mubr.bf16.gmra.mrb[0].mxu0 %v9170
  %v9337 = vpop.f32.mrb[0].mxu0
  %v9338 = vadd.f32 0.0, %v9337
  %v9339 = vpop.f32.mrb[0].mxu0
  %v9340 = vpop.f32.mrb[0].mxu0
  %v9341 = vadd.f32 0.0, %v9340
  %v9342 = vpop.f32.mrb[0].mxu0
  %9343 = vmatprep.mubr.bf16.mxu0 0
  %9344 = vmatmul.mubr.bf16.gmra.mrb[0].mxu0 %v9173
  %v9345 = vpop.f32.mrb[0].mxu0
  %v9346 = vadd.f32 0.0, %v9345
  %v9347 = vpop.f32.mrb[0].mxu0
  %v9348 = vpop.f32.mrb[0].mxu0
  %v9349 = vadd.f32 0.0, %v9348
  %v9350 = vpop.f32.mrb[0].mxu0
  %9351 = vmatprep.mubr.bf16.mxu0 0
  %9352 = vmatmul.mubr.bf16.gmra.mrb[0].mxu0 %v9176
  %v9353 = vpop.f32.mrb[0].mxu0
  %v9354 = vadd.f32 0.0, %v9353
  %v9355 = vpop.f32.mrb[0].mxu0
  %v9356 = vpop.f32.mrb[0].mxu0
  %v9357 = vadd.f32 0.0, %v9356
  %v9358 = vpop.f32.mrb[0].mxu0
  %9359 = vmatprep.mubr.bf16.mxu0 0
  %9360 = vmatmul.mubr.bf16.gmra.mrb[0].mxu0 %v9179
  %v9361 = vpop.f32.mrb[0].mxu0
  %v9362 = vadd.f32 0.0, %v9361
  %v9363 = vpop.f32.mrb[0].mxu0
  %v9364 = vpop.f32.mrb[0].mxu0
  %v9365 = vadd.f32 0.0, %v9364
  %v9366 = vpop.f32.mrb[0].mxu0
  %9367 = vmatprep.mubr.bf16.mxu0 0
  %9368 = vmatmul.mubr.bf16.gmra.mrb[0].mxu0 %v9182
  %v9369 = vpop.f32.mrb[0].mxu0
  %v9370 = vadd.f32 0.0, %v9369
  %v9371 = vpop.f32.mrb[0].mxu0
  %v9372 = vpop.f32.mrb[0].mxu0
  %v9373 = vadd.f32 0.0, %v9372
  %v9374 = vpop.f32.mrb[0].mxu0
  %9375 = vmatprep.mubr.bf16.mxu0 0
  %9376 = vmatmul.mubr.bf16.gmra.mrb[0].mxu0 %v9185
  %v9377 = vpop.f32.mrb[0].mxu0
  %v9378 = vadd.f32 0.0, %v9377
  %v9379 = vpop.f32.mrb[0].mxu0
  %v9380 = vpop.f32.mrb[0].mxu0
  %v9381 = vadd.f32 0.0, %v9380
  %v9382 = vpop.f32.mrb[0].mxu0
  %9383 = vmatprep.mubr.bf16.mxu0 0
  %9384 = vmatmul.mubr.bf16.gmra.mrb[0].mxu0 %v9188
  %v9385 = vpop.f32.mrb[0].mxu0
  %v9386 = vadd.f32 0.0, %v9385
  %v9387 = vpop.f32.mrb[0].mxu0
  %v9388 = vpop.f32.mrb[0].mxu0
  %v9389 = vadd.f32 0.0, %v9388
  %v9390 = vpop.f32.mrb[0].mxu0
  %9391 = vmatprep.mubr.bf16.mxu0 0
  %9392 = vmatmul.mubr.bf16.gmra.mrb[0].mxu0 %v9191
  %v9393 = vpop.f32.mrb[0].mxu0
  %v9394 = vadd.f32 0.0, %v9393
  %v9395 = vpop.f32.mrb[0].mxu0
  %v9396 = vpop.f32.mrb[0].mxu0
  %v9397 = vadd.f32 0.0, %v9396
  %v9398 = vpop.f32.mrb[0].mxu0
  %9399 = vmatprep.mubr.bf16.mxu0 0
  %9400 = vmatmul.mubr.bf16.gmra.mrb[0].mxu0 %v9194
  %v9401 = vpop.f32.mrb[0].mxu0
  %v9402 = vadd.f32 0.0, %v9401
  %v9403 = vpop.f32.mrb[0].mxu0
  %v9404 = vpop.f32.mrb[0].mxu0
  %v9405 = vadd.f32 0.0, %v9404
  %v9406 = vpop.f32.mrb[0].mxu0
  %9407 = vmatprep.mubr.bf16.mxu0 0
  %9408 = vmatmul.mubr.bf16.gmra.mrb[0].mxu0 %v9197
  %v9409 = vpop.f32.mrb[0].mxu0
  %v9410 = vadd.f32 0.0, %v9409
  %v9411 = vpop.f32.mrb[0].mxu0
  %v9412 = vpop.f32.mrb[0].mxu0
  %v9413 = vadd.f32 0.0, %v9412
  %v9414 = vpop.f32.mrb[0].mxu0
  %9415 = vmatprep.mubr.bf16.mxu0 0
  %9416 = vmatmul.mubr.bf16.gmra.mrb[0].mxu0 %v9200
  %v9417 = vpop.f32.mrb[0].mxu0
  %v9418 = vadd.f32 0.0, %v9417
  %v9419 = vpop.f32.mrb[0].mxu0
  %v9420 = vpop.f32.mrb[0].mxu0
  %v9421 = vadd.f32 0.0, %v9420
  %v9422 = vpop.f32.mrb[0].mxu0
  %9423 = vmatprep.mubr.bf16.mxu0 0
  %9424 = vmatmul.mubr.bf16.gmra.mrb[0].mxu0 %v9203
  %v9425 = vpop.f32.mrb[0].mxu0
  %v9426 = vadd.f32 0.0, %v9425
  %v9427 = vpop.f32.mrb[0].mxu0
  %v9428 = vpop.f32.mrb[0].mxu0
  %v9429 = vadd.f32 0.0, %v9428
  %v9430 = vpop.f32.mrb[0].mxu0
  %9431 = vmatprep.mubr.bf16.mxu0 0
  %9432 = vmatmul.mubr.bf16.gmra.mrb[0].mxu0 %v9206
  %v9433 = vpop.f32.mrb[0].mxu0
  %v9434 = vadd.f32 0.0, %v9433
  %v9435 = vpop.f32.mrb[0].mxu0
  %v9436 = vpop.f32.mrb[0].mxu0
  %v9437 = vadd.f32 0.0, %v9436
  %v9438 = vpop.f32.mrb[0].mxu0
  %9439 = vmatprep.mubr.bf16.mxu0 0
  %9440 = vmatmul.mubr.bf16.gmra.mrb[0].mxu0 %v9209
  %v9441 = vpop.f32.mrb[0].mxu0
  %v9442 = vadd.f32 0.0, %v9441
  %v9443 = vpop.f32.mrb[0].mxu0
  %v9444 = vpop.f32.mrb[0].mxu0
  %v9445 = vadd.f32 0.0, %v9444
  %v9446 = vpop.f32.mrb[0].mxu0
  %9447 = vmatprep.mubr.bf16.mxu0 0
  %9448 = vmatmul.mubr.bf16.gmra.mrb[0].mxu0 %v9212
  %v9449 = vpop.f32.mrb[0].mxu0
  %v9450 = vadd.f32 0.0, %v9449
  %v9451 = vpop.f32.mrb[0].mxu0
  %v9452 = vpop.f32.mrb[0].mxu0
  %v9453 = vadd.f32 0.0, %v9452
  %v9454 = vpop.f32.mrb[0].mxu0
  %9455 = vmatprep.mubr.bf16.mxu0 0
  %9456 = vmatmul.mubr.bf16.gmra.mrb[0].mxu0 %v9215
  %v9457 = vpop.f32.mrb[0].mxu0
  %v9458 = vadd.f32 0.0, %v9457
  %v9459 = vpop.f32.mrb[0].mxu0
  %v9460 = vpop.f32.mrb[0].mxu0
  %v9461 = vadd.f32 0.0, %v9460
  %v9462 = vpop.f32.mrb[0].mxu0
  %9463 = vmatprep.mubr.bf16.mxu0 0
  %9464 = vmatmul.mubr.bf16.gmra.mrb[0].mxu0 %v9218
  %v9465 = vpop.f32.mrb[0].mxu0
  %v9466 = vadd.f32 0.0, %v9465
  %v9467 = vpop.f32.mrb[0].mxu0
  %v9468 = vpop.f32.mrb[0].mxu0
  %v9469 = vadd.f32 0.0, %v9468
  %v9470 = vpop.f32.mrb[0].mxu0
  %9471 = vmatprep.mubr.bf16.mxu0 0
  %9472 = vmatmul.mubr.bf16.gmra.mrb[0].mxu0 %v9221
  %v9473 = vpop.f32.mrb[0].mxu0
  %v9474 = vadd.f32 0.0, %v9473
  %v9475 = vpop.f32.mrb[0].mxu0
  %v9476 = vpop.f32.mrb[0].mxu0
  %v9477 = vadd.f32 0.0, %v9476
  %v9478 = vpop.f32.mrb[0].mxu0
  %9479 = vmatprep.mubr.bf16.mxu0 0
  %9480 = vmatmul.mubr.bf16.gmra.mrb[0].mxu0 %v9224
  %v9481 = vpop.f32.mrb[0].mxu0
  %v9482 = vadd.f32 0.0, %v9481
  %v9483 = vpop.f32.mrb[0].mxu0
  %v9484 = vpop.f32.mrb[0].mxu0
  %v9485 = vadd.f32 0.0, %v9484
  %v9486 = vpop.f32.mrb[0].mxu0
  %9487 = vmatprep.mubr.bf16.mxu0 0
  %9488 = vmatmul.mubr.bf16.gmra.mrb[0].mxu0 %v9227
  %v9489 = vpop.f32.mrb[0].mxu0
  %v9490 = vadd.f32 0.0, %v9489
  %v9491 = vpop.f32.mrb[0].mxu0
  %v9492 = vpop.f32.mrb[0].mxu0
  %v9493 = vadd.f32 0.0, %v9492
  %v9494 = vpop.f32.mrb[0].mxu0
  %9495 = vmatprep.mubr.bf16.mxu0 0
  %9496 = vmatmul.mubr.bf16.gmra.mrb[0].mxu0 %v9230
  %v9497 = vpop.f32.mrb[0].mxu0
  %v9498 = vadd.f32 0.0, %v9497
  %v9499 = vpop.f32.mrb[0].mxu0
  %v9500 = vpop.f32.mrb[0].mxu0
  %v9501 = vadd.f32 0.0, %v9500
  %v9502 = vpop.f32.mrb[0].mxu0
  %9503 = vmatprep.mubr.bf16.mxu0 0
  %9504 = vmatmul.mubr.bf16.gmra.mrb[0].mxu0 %v9233
  %v9505 = vpop.f32.mrb[0].mxu0
  %v9506 = vadd.f32 0.0, %v9505
  %v9507 = vpop.f32.mrb[0].mxu0
  %v9508 = vpop.f32.mrb[0].mxu0
  %v9509 = vadd.f32 0.0, %v9508
  %v9510 = vpop.f32.mrb[0].mxu0
  %9511 = vmatprep.mubr.bf16.mxu0 0
  %9512 = vmatmul.mubr.bf16.gmra.mrb[0].mxu0 %v9236
  %v9513 = vpop.f32.mrb[0].mxu0
  %v9514 = vadd.f32 0.0, %v9513
  %v9515 = vpop.f32.mrb[0].mxu0
  %v9516 = vpop.f32.mrb[0].mxu0
  %v9517 = vadd.f32 0.0, %v9516
  %v9518 = vpop.f32.mrb[0].mxu0
  %9519 = vmatprep.mubr.bf16.mxu0 0
  %9520 = vmatmul.mubr.bf16.gmra.mrb[0].mxu0 %v9239
  %v9521 = vpop.f32.mrb[0].mxu0
  %v9522 = vadd.f32 0.0, %v9521
  %v9523 = vpop.f32.mrb[0].mxu0
  %v9524 = vpop.f32.mrb[0].mxu0
  %v9525 = vadd.f32 0.0, %v9524
  %v9526 = vpop.f32.mrb[0].mxu0
  %9527 = vmatprep.mubr.bf16.mxu0 0
  %9528 = vmatmul.mubr.bf16.gmra.mrb[0].mxu0 %v9242
  %v9529 = vpop.f32.mrb[0].mxu0
  %v9530 = vadd.f32 0.0, %v9529
  %v9531 = vpop.f32.mrb[0].mxu0
  %v9532 = vpop.f32.mrb[0].mxu0
  %v9533 = vadd.f32 0.0, %v9532
  %v9534 = vpop.f32.mrb[0].mxu0
  %9535 = vdwg.mxu0
  %v9536 = vadd.f32 %v8987, %v9282
  %v9537 = vadd.f32 %v8988, %v9285
  %v9538 = vadd.f32 %v8989, %v9290
  %v9539 = vadd.f32 %v8990, %v9293
  %v9540 = vadd.f32 %v8991, %v9298
  %v9541 = vadd.f32 %v8992, %v9301
  %v9542 = vadd.f32 %v8993, %v9306
  %v9543 = vadd.f32 %v8994, %v9309
  %v9544 = vadd.f32 %v8995, %v9314
  %v9545 = vadd.f32 %v8996, %v9317
  %v9546 = vadd.f32 %v8997, %v9322
  %v9547 = vadd.f32 %v8998, %v9325
  %v9548 = vadd.f32 %v8999, %v9330
  %v9549 = vadd.f32 %v9000, %v9333
  %v9550 = vadd.f32 %v9001, %v9338
  %v9551 = vadd.f32 %v9002, %v9341
  %v9552 = vadd.f32 %v9003, %v9346
  %v9553 = vadd.f32 %v9004, %v9349
  %v9554 = vadd.f32 %v9005, %v9354
  %v9555 = vadd.f32 %v9006, %v9357
  %v9556 = vadd.f32 %v9007, %v9362
  %v9557 = vadd.f32 %v9008, %v9365
  %v9558 = vadd.f32 %v9009, %v9370
  %v9559 = vadd.f32 %v9010, %v9373
  %v9560 = vadd.f32 %v9011, %v9378
  %v9561 = vadd.f32 %v9012, %v9381
  %v9562 = vadd.f32 %v9013, %v9386
  %v9563 = vadd.f32 %v9014, %v9389
  %v9564 = vadd.f32 %v9015, %v9394
  %v9565 = vadd.f32 %v9016, %v9397
  %v9566 = vadd.f32 %v9017, %v9402
  %v9567 = vadd.f32 %v9018, %v9405
  %v9568 = vadd.f32 %v9019, %v9410
  %v9569 = vadd.f32 %v9020, %v9413
  %v9570 = vadd.f32 %v9021, %v9418
  %v9571 = vadd.f32 %v9022, %v9421
  %v9572 = vadd.f32 %v9023, %v9426
  %v9573 = vadd.f32 %v9024, %v9429
  %v9574 = vadd.f32 %v9025, %v9434
  %v9575 = vadd.f32 %v9026, %v9437
  %v9576 = vadd.f32 %v9027, %v9442
  %v9577 = vadd.f32 %v9028, %v9445
  %v9578 = vadd.f32 %v9029, %v9450
  %v9579 = vadd.f32 %v9030, %v9453
  %v9580 = vadd.f32 %v9031, %v9458
  %v9581 = vadd.f32 %v9032, %v9461
  %v9582 = vadd.f32 %v9033, %v9466
  %v9583 = vadd.f32 %v9034, %v9469
  %v9584 = vadd.f32 %v9035, %v9474
  %v9585 = vadd.f32 %v9036, %v9477
  %v9586 = vadd.f32 %v9037, %v9482
  %v9587 = vadd.f32 %v9038, %v9485
  %v9588 = vadd.f32 %v9039, %v9490
  %v9589 = vadd.f32 %v9040, %v9493
  %v9590 = vadd.f32 %v9041, %v9498
  %v9591 = vadd.f32 %v9042, %v9501
  %v9592 = vadd.f32 %v9043, %v9506
  %v9593 = vadd.f32 %v9044, %v9509
  %v9594 = vadd.f32 %v9045, %v9514
  %v9595 = vadd.f32 %v9046, %v9517
  %v9596 = vadd.f32 %v9047, %v9522
  %v9597 = vadd.f32 %v9048, %v9525
  %v9598 = vadd.f32 %v9049, %v9530
  %v9599 = vadd.f32 %v9050, %v9533
  %v9600 = vld [vmem:[%s9051 + $0x1] sm:$0xff]
  %v9601 = vld [vmem:[%s9051 + $0x9] sm:$0xff]
  %v9602 = vld [vmem:[%s9051 + $0x19] sm:$0xff]
  %v9603 = vld [vmem:[%s9051 + $0x21] sm:$0xff]
  %v9604 = vld [vmem:[%s9051 + $0x31] sm:$0xff]
  %v9605 = vld [vmem:[%s9051 + $0x39] sm:$0xff]
  %v9606 = vld [vmem:[%s9051 + $0x49] sm:$0xff]
  %v9607 = vld [vmem:[%s9051 + $0x51] sm:$0xff]
  %v9608 = vld [vmem:[%s9051 + $0x61] sm:$0xff]
  %v9609 = vld [vmem:[%s9051 + $0x69] sm:$0xff]
  %v9610 = vld [vmem:[%s9051 + $0x79] sm:$0xff]
  %v9611 = vld [vmem:[%s9051 + $0x81] sm:$0xff]
  %v9612 = vld [vmem:[%s9051 + $0x91] sm:$0xff]
  %v9613 = vld [vmem:[%s9051 + $0x99] sm:$0xff]
  %v9614 = vld [vmem:[%s9051 + $0xa9] sm:$0xff]
  %v9615 = vld [vmem:[%s9051 + $0xb1] sm:$0xff]
  %v9616 = vld [vmem:[%s9051 + $0xc1] sm:$0xff]
  %v9617 = vld [vmem:[%s9051 + $0xc9] sm:$0xff]
  %v9618 = vld [vmem:[%s9051 + $0xd9] sm:$0xff]
  %v9619 = vld [vmem:[%s9051 + $0xe1] sm:$0xff]
  %v9620 = vld [vmem:[%s9051 + $0xf1] sm:$0xff]
  %v9621 = vld [vmem:[%s9051 + $0xf9] sm:$0xff]
  %v9622 = vld [vmem:[%s9051 + $0x109] sm:$0xff]
  %v9623 = vld [vmem:[%s9051 + $0x111] sm:$0xff]
  %v9624 = vld [vmem:[%s9051 + $0x121] sm:$0xff]
  %v9625 = vld [vmem:[%s9051 + $0x129] sm:$0xff]
  %v9626 = vld [vmem:[%s9051 + $0x139] sm:$0xff]
  %v9627 = vld [vmem:[%s9051 + $0x141] sm:$0xff]
  %v9628 = vld [vmem:[%s9051 + $0x151] sm:$0xff]
  %v9629 = vld [vmem:[%s9051 + $0x159] sm:$0xff]
  %v9630 = vld [vmem:[%s9051 + $0x169] sm:$0xff]
  %v9631 = vld [vmem:[%s9051 + $0x171] sm:$0xff]
  %v9632 = vld [vmem:[%s9051 + $0x1b1] sm:$0xff]
  %v9633 = vld [vmem:[%s9051 + $0x1b9] sm:$0xff]
  %v9634 = vld [vmem:[%s9051 + $0x1c9] sm:$0xff]
  %v9635 = vld [vmem:[%s9051 + $0x1d1] sm:$0xff]
  %v9636 = vld [vmem:[%s9051 + $0x1e1] sm:$0xff]
  %v9637 = vld [vmem:[%s9051 + $0x1e9] sm:$0xff]
  %v9638 = vld [vmem:[%s9051 + $0x1f9] sm:$0xff]
  %v9639 = vld [vmem:[%s9051 + $0x201] sm:$0xff]
  %v9640 = vld [vmem:[%s9051 + $0x211] sm:$0xff]
  %v9641 = vld [vmem:[%s9051 + $0x219] sm:$0xff]
  %v9642 = vld [vmem:[%s9051 + $0x229] sm:$0xff]
  %v9643 = vld [vmem:[%s9051 + $0x231] sm:$0xff]
  %v9644 = vld [vmem:[%s9051 + $0x241] sm:$0xff]
  %v9645 = vld [vmem:[%s9051 + $0x249] sm:$0xff]
  %v9646 = vld [vmem:[%s9051 + $0x259] sm:$0xff]
  %v9647 = vld [vmem:[%s9051 + $0x261] sm:$0xff]
  %v9648 = vld [vmem:[%s9051 + $0x271] sm:$0xff]
  %v9649 = vld [vmem:[%s9051 + $0x279] sm:$0xff]
  %v9650 = vld [vmem:[%s9051 + $0x289] sm:$0xff]
  %v9651 = vld [vmem:[%s9051 + $0x291] sm:$0xff]
  %v9652 = vld [vmem:[%s9051 + $0x2a1] sm:$0xff]
  %v9653 = vld [vmem:[%s9051 + $0x2a9] sm:$0xff]
  %v9654 = vld [vmem:[%s9051 + $0x2b9] sm:$0xff]
  %v9655 = vld [vmem:[%s9051 + $0x2c1] sm:$0xff]
  %v9656 = vld [vmem:[%s9051 + $0x2d1] sm:$0xff]
  %v9657 = vld [vmem:[%s9051 + $0x2d9] sm:$0xff]
  %v9658 = vld [vmem:[%s9051 + $0x2e9] sm:$0xff]
  %v9659 = vld [vmem:[%s9051 + $0x2f1] sm:$0xff]
  %v9660 = vld [vmem:[%s9051 + $0x301] sm:$0xff]
  %v9661 = vld [vmem:[%s9051 + $0x309] sm:$0xff]
  %v9662 = vld [vmem:[%s9051 + $0x319] sm:$0xff]
  %v9663 = vld [vmem:[%s9051 + $0x321] sm:$0xff]
  %v9664 = vpack.c.bf16 %v9601, %v9600
  %v9665 = vpack.c.bf16 %v9603, %v9602
  %v9666 = vpack.c.bf16 %v9605, %v9604
  %v9667 = vpack.c.bf16 %v9607, %v9606
  %v9668 = vpack.c.bf16 %v9609, %v9608
  %v9669 = vpack.c.bf16 %v9611, %v9610
  %v9670 = vpack.c.bf16 %v9613, %v9612
  %v9671 = vpack.c.bf16 %v9615, %v9614
  %v9672 = vpack.c.bf16 %v9617, %v9616
  %v9673 = vpack.c.bf16 %v9619, %v9618
  %v9674 = vpack.c.bf16 %v9621, %v9620
  %v9675 = vpack.c.bf16 %v9623, %v9622
  %v9676 = vpack.c.bf16 %v9625, %v9624
  %v9677 = vpack.c.bf16 %v9627, %v9626
  %v9678 = vpack.c.bf16 %v9629, %v9628
  %v9679 = vpack.c.bf16 %v9631, %v9630
  %v9680 = vpack.c.bf16 %v9633, %v9632
  %v9681 = vpack.c.bf16 %v9635, %v9634
  %v9682 = vpack.c.bf16 %v9637, %v9636
  %v9683 = vpack.c.bf16 %v9639, %v9638
  %v9684 = vpack.c.bf16 %v9641, %v9640
  %v9685 = vpack.c.bf16 %v9643, %v9642
  %v9686 = vpack.c.bf16 %v9645, %v9644
  %v9687 = vpack.c.bf16 %v9647, %v9646
  %v9688 = vpack.c.bf16 %v9649, %v9648
  %v9689 = vpack.c.bf16 %v9651, %v9650
  %v9690 = vpack.c.bf16 %v9653, %v9652
  %v9691 = vpack.c.bf16 %v9655, %v9654
  %v9692 = vpack.c.bf16 %v9657, %v9656
  %v9693 = vpack.c.bf16 %v9659, %v9658
  %v9694 = vpack.c.bf16 %v9661, %v9660
  %v9695 = vpack.c.bf16 %v9663, %v9662
  %v9697 = vsel %vm5194, %v9664, 0
  %v9700 = vsel %vm5194, %v9665, 0
  %v9703 = vsel %vm5194, %v9666, 0
  %v9706 = vsel %vm5194, %v9667, 0
  %v9709 = vsel %vm5194, %v9668, 0
  %v9712 = vsel %vm5194, %v9669, 0
  %v9715 = vsel %vm5194, %v9670, 0
  %v9718 = vsel %vm5194, %v9671, 0
  %v9721 = vsel %vm5194, %v9672, 0
  %v9724 = vsel %vm5194, %v9673, 0
  %v9727 = vsel %vm5194, %v9674, 0
  %v9730 = vsel %vm5194, %v9675, 0
  %v9733 = vsel %vm5194, %v9676, 0
  %v9736 = vsel %vm5194, %v9677, 0
  %v9739 = vsel %vm5194, %v9678, 0
  %v9742 = vsel %vm5194, %v9679, 0
  %v9745 = vsel %vm5194, %v9680, 0
  %v9748 = vsel %vm5194, %v9681, 0
  %v9751 = vsel %vm5194, %v9682, 0
  %v9754 = vsel %vm5194, %v9683, 0
  %v9757 = vsel %vm5194, %v9684, 0
  %v9760 = vsel %vm5194, %v9685, 0
  %v9763 = vsel %vm5194, %v9686, 0
  %v9766 = vsel %vm5194, %v9687, 0
  %v9769 = vsel %vm5194, %v9688, 0
  %v9772 = vsel %vm5194, %v9689, 0
  %v9775 = vsel %vm5194, %v9690, 0
  %v9778 = vsel %vm5194, %v9691, 0
  %v9781 = vsel %vm5194, %v9692, 0
  %v9784 = vsel %vm5194, %v9693, 0
  %v9787 = vsel %vm5194, %v9694, 0
  %v9790 = vsel %vm5194, %v9695, 0
  %v9793 = vsel %vm6178, %v5885, 0
  %9795 = vmatprep.subr.bf16.mxu0 0
  %9796 = vmatpush1.bf16.msra.mxu0 %v9793
  %9797 = vmatprep.subr.bf16.mxu0 0
  %9798 = vmatpush1.bf16.msra.mxu0 0
  %9799 = vmatprep.subr.bf16.mxu0 0
  %9800 = vmatpush1.bf16.msra.mxu0 0
  %9801 = vmatprep.subr.bf16.mxu0 0
  %9802 = vmatpush1.bf16.msra.mxu0 0
  %9803 = vmatprep.subr.bf16.mxu0 0
  %9804 = vmatpush1.bf16.msra.mxu0 0
  %9805 = vmatprep.subr.bf16.mxu0 0
  %9806 = vmatpush1.bf16.msra.mxu0 0
  %9807 = vmatprep.subr.bf16.mxu0 0
  %9808 = vmatpush1.bf16.msra.mxu0 0
  %9809 = vmatprep.subr.bf16.mxu0 0
  %9810 = vmatpush1.bf16.msra.mxu0 0
  %9811 = vmatprep.subr.bf16.mxu0 0
  %9812 = vmatpush1.bf16.msra.mxu0 0
  %9813 = vmatprep.subr.bf16.mxu0 0
  %9814 = vmatpush1.bf16.msra.mxu0 0
  %9815 = vmatprep.subr.bf16.mxu0 0
  %9816 = vmatpush1.bf16.msra.mxu0 0
  %9817 = vmatprep.subr.bf16.mxu0 0
  %9818 = vmatpush1.bf16.msra.mxu0 0
  %9819 = vmatprep.subr.bf16.mxu0 0
  %9820 = vmatpush1.bf16.msra.mxu0 0
  %9821 = vmatprep.subr.bf16.mxu0 0
  %9822 = vmatpush1.bf16.msra.mxu0 0
  %9823 = vmatprep.subr.bf16.mxu0 0
  %9824 = vmatpush1.bf16.msra.mxu0 0
  %9825 = vmatprep.subr.bf16.mxu0 0
  %9826 = vmatpush1.bf16.msra.mxu0 0
  %9827 = vmatprep.mubr.bf16.mxu0 0
  %9828 = vmatmul.mubr.bf16.gmra.mrb[0].mxu0 %v9697
  %v9829 = vpop.f32.mrb[0].mxu0
  %v9830 = vadd.f32 0.0, %v9829
  %v9831 = vpop.f32.mrb[0].mxu0
  %v9832 = vpop.f32.mrb[0].mxu0
  %v9833 = vadd.f32 0.0, %v9832
  %v9834 = vpop.f32.mrb[0].mxu0
  %9835 = vmatprep.mubr.bf16.mxu0 0
  %9836 = vmatmul.mubr.bf16.gmra.mrb[0].mxu0 %v9700
  %v9837 = vpop.f32.mrb[0].mxu0
  %v9838 = vadd.f32 0.0, %v9837
  %v9839 = vpop.f32.mrb[0].mxu0
  %v9840 = vpop.f32.mrb[0].mxu0
  %v9841 = vadd.f32 0.0, %v9840
  %v9842 = vpop.f32.mrb[0].mxu0
  %9843 = vmatprep.mubr.bf16.mxu0 0
  %9844 = vmatmul.mubr.bf16.gmra.mrb[0].mxu0 %v9703
  %v9845 = vpop.f32.mrb[0].mxu0
  %v9846 = vadd.f32 0.0, %v9845
  %v9847 = vpop.f32.mrb[0].mxu0
  %v9848 = vpop.f32.mrb[0].mxu0
  %v9849 = vadd.f32 0.0, %v9848
  %v9850 = vpop.f32.mrb[0].mxu0
  %9851 = vmatprep.mubr.bf16.mxu0 0
  %9852 = vmatmul.mubr.bf16.gmra.mrb[0].mxu0 %v9706
  %v9853 = vpop.f32.mrb[0].mxu0
  %v9854 = vadd.f32 0.0, %v9853
  %v9855 = vpop.f32.mrb[0].mxu0
  %v9856 = vpop.f32.mrb[0].mxu0
  %v9857 = vadd.f32 0.0, %v9856
  %v9858 = vpop.f32.mrb[0].mxu0
  %9859 = vmatprep.mubr.bf16.mxu0 0
  %9860 = vmatmul.mubr.bf16.gmra.mrb[0].mxu0 %v9709
  %v9861 = vpop.f32.mrb[0].mxu0
  %v9862 = vadd.f32 0.0, %v9861
  %v9863 = vpop.f32.mrb[0].mxu0
  %v9864 = vpop.f32.mrb[0].mxu0
  %v9865 = vadd.f32 0.0, %v9864
  %v9866 = vpop.f32.mrb[0].mxu0
  %9867 = vmatprep.mubr.bf16.mxu0 0
  %9868 = vmatmul.mubr.bf16.gmra.mrb[0].mxu0 %v9712
  %v9869 = vpop.f32.mrb[0].mxu0
  %v9870 = vadd.f32 0.0, %v9869
  %v9871 = vpop.f32.mrb[0].mxu0
  %v9872 = vpop.f32.mrb[0].mxu0
  %v9873 = vadd.f32 0.0, %v9872
  %v9874 = vpop.f32.mrb[0].mxu0
  %9875 = vmatprep.mubr.bf16.mxu0 0
  %9876 = vmatmul.mubr.bf16.gmra.mrb[0].mxu0 %v9715
  %v9877 = vpop.f32.mrb[0].mxu0
  %v9878 = vadd.f32 0.0, %v9877
  %v9879 = vpop.f32.mrb[0].mxu0
  %v9880 = vpop.f32.mrb[0].mxu0
  %v9881 = vadd.f32 0.0, %v9880
  %v9882 = vpop.f32.mrb[0].mxu0
  %9883 = vmatprep.mubr.bf16.mxu0 0
  %9884 = vmatmul.mubr.bf16.gmra.mrb[0].mxu0 %v9718
  %v9885 = vpop.f32.mrb[0].mxu0
  %v9886 = vadd.f32 0.0, %v9885
  %v9887 = vpop.f32.mrb[0].mxu0
  %v9888 = vpop.f32.mrb[0].mxu0
  %v9889 = vadd.f32 0.0, %v9888
  %v9890 = vpop.f32.mrb[0].mxu0
  %9891 = vmatprep.mubr.bf16.mxu0 0
  %9892 = vmatmul.mubr.bf16.gmra.mrb[0].mxu0 %v9721
  %v9893 = vpop.f32.mrb[0].mxu0
  %v9894 = vadd.f32 0.0, %v9893
  %v9895 = vpop.f32.mrb[0].mxu0
  %v9896 = vpop.f32.mrb[0].mxu0
  %v9897 = vadd.f32 0.0, %v9896
  %v9898 = vpop.f32.mrb[0].mxu0
  %9899 = vmatprep.mubr.bf16.mxu0 0
  %9900 = vmatmul.mubr.bf16.gmra.mrb[0].mxu0 %v9724
  %v9901 = vpop.f32.mrb[0].mxu0
  %v9902 = vadd.f32 0.0, %v9901
  %v9903 = vpop.f32.mrb[0].mxu0
  %v9904 = vpop.f32.mrb[0].mxu0
  %v9905 = vadd.f32 0.0, %v9904
  %v9906 = vpop.f32.mrb[0].mxu0
  %9907 = vmatprep.mubr.bf16.mxu0 0
  %9908 = vmatmul.mubr.bf16.gmra.mrb[0].mxu0 %v9727
  %v9909 = vpop.f32.mrb[0].mxu0
  %v9910 = vadd.f32 0.0, %v9909
  %v9911 = vpop.f32.mrb[0].mxu0
  %v9912 = vpop.f32.mrb[0].mxu0
  %v9913 = vadd.f32 0.0, %v9912
  %v9914 = vpop.f32.mrb[0].mxu0
  %9915 = vmatprep.mubr.bf16.mxu0 0
  %9916 = vmatmul.mubr.bf16.gmra.mrb[0].mxu0 %v9730
  %v9917 = vpop.f32.mrb[0].mxu0
  %v9918 = vadd.f32 0.0, %v9917
  %v9919 = vpop.f32.mrb[0].mxu0
  %v9920 = vpop.f32.mrb[0].mxu0
  %v9921 = vadd.f32 0.0, %v9920
  %v9922 = vpop.f32.mrb[0].mxu0
  %9923 = vmatprep.mubr.bf16.mxu0 0
  %9924 = vmatmul.mubr.bf16.gmra.mrb[0].mxu0 %v9733
  %v9925 = vpop.f32.mrb[0].mxu0
  %v9926 = vadd.f32 0.0, %v9925
  %v9927 = vpop.f32.mrb[0].mxu0
  %v9928 = vpop.f32.mrb[0].mxu0
  %v9929 = vadd.f32 0.0, %v9928
  %v9930 = vpop.f32.mrb[0].mxu0
  %9931 = vmatprep.mubr.bf16.mxu0 0
  %9932 = vmatmul.mubr.bf16.gmra.mrb[0].mxu0 %v9736
  %v9933 = vpop.f32.mrb[0].mxu0
  %v9934 = vadd.f32 0.0, %v9933
  %v9935 = vpop.f32.mrb[0].mxu0
  %v9936 = vpop.f32.mrb[0].mxu0
  %v9937 = vadd.f32 0.0, %v9936
  %v9938 = vpop.f32.mrb[0].mxu0
  %9939 = vmatprep.mubr.bf16.mxu0 0
  %9940 = vmatmul.mubr.bf16.gmra.mrb[0].mxu0 %v9739
  %v9941 = vpop.f32.mrb[0].mxu0
  %v9942 = vadd.f32 0.0, %v9941
  %v9943 = vpop.f32.mrb[0].mxu0
  %v9944 = vpop.f32.mrb[0].mxu0
  %v9945 = vadd.f32 0.0, %v9944
  %v9946 = vpop.f32.mrb[0].mxu0
  %9947 = vmatprep.mubr.bf16.mxu0 0
  %9948 = vmatmul.mubr.bf16.gmra.mrb[0].mxu0 %v9742
  %v9949 = vpop.f32.mrb[0].mxu0
  %v9950 = vadd.f32 0.0, %v9949
  %v9951 = vpop.f32.mrb[0].mxu0
  %v9952 = vpop.f32.mrb[0].mxu0
  %v9953 = vadd.f32 0.0, %v9952
  %v9954 = vpop.f32.mrb[0].mxu0
  %9955 = vmatprep.mubr.bf16.mxu0 0
  %9956 = vmatmul.mubr.bf16.gmra.mrb[0].mxu0 %v9745
  %v9957 = vpop.f32.mrb[0].mxu0
  %v9958 = vadd.f32 0.0, %v9957
  %v9959 = vpop.f32.mrb[0].mxu0
  %v9960 = vpop.f32.mrb[0].mxu0
  %v9961 = vadd.f32 0.0, %v9960
  %v9962 = vpop.f32.mrb[0].mxu0
  %9963 = vmatprep.mubr.bf16.mxu0 0
  %9964 = vmatmul.mubr.bf16.gmra.mrb[0].mxu0 %v9748
  %v9965 = vpop.f32.mrb[0].mxu0
  %v9966 = vadd.f32 0.0, %v9965
  %v9967 = vpop.f32.mrb[0].mxu0
  %v9968 = vpop.f32.mrb[0].mxu0
  %v9969 = vadd.f32 0.0, %v9968
  %v9970 = vpop.f32.mrb[0].mxu0
  %9971 = vmatprep.mubr.bf16.mxu0 0
  %9972 = vmatmul.mubr.bf16.gmra.mrb[0].mxu0 %v9751
  %v9973 = vpop.f32.mrb[0].mxu0
  %v9974 = vadd.f32 0.0, %v9973
  %v9975 = vpop.f32.mrb[0].mxu0
  %v9976 = vpop.f32.mrb[0].mxu0
  %v9977 = vadd.f32 0.0, %v9976
  %v9978 = vpop.f32.mrb[0].mxu0
  %9979 = vmatprep.mubr.bf16.mxu0 0
  %9980 = vmatmul.mubr.bf16.gmra.mrb[0].mxu0 %v9754
  %v9981 = vpop.f32.mrb[0].mxu0
  %v9982 = vadd.f32 0.0, %v9981
  %v9983 = vpop.f32.mrb[0].mxu0
  %v9984 = vpop.f32.mrb[0].mxu0
  %v9985 = vadd.f32 0.0, %v9984
  %v9986 = vpop.f32.mrb[0].mxu0
  %9987 = vmatprep.mubr.bf16.mxu0 0
  %9988 = vmatmul.mubr.bf16.gmra.mrb[0].mxu0 %v9757
  %v9989 = vpop.f32.mrb[0].mxu0
  %v9990 = vadd.f32 0.0, %v9989
  %v9991 = vpop.f32.mrb[0].mxu0
  %v9992 = vpop.f32.mrb[0].mxu0
  %v9993 = vadd.f32 0.0, %v9992
  %v9994 = vpop.f32.mrb[0].mxu0
  %9995 = vmatprep.mubr.bf16.mxu0 0
  %9996 = vmatmul.mubr.bf16.gmra.mrb[0].mxu0 %v9760
  %v9997 = vpop.f32.mrb[0].mxu0
  %v9998 = vadd.f32 0.0, %v9997
  %v9999 = vpop.f32.mrb[0].mxu0
  %v10000 = vpop.f32.mrb[0].mxu0
  %v10001 = vadd.f32 0.0, %v10000
  %v10002 = vpop.f32.mrb[0].mxu0
  %10003 = vmatprep.mubr.bf16.mxu0 0
  %10004 = vmatmul.mubr.bf16.gmra.mrb[0].mxu0 %v9763
  %v10005 = vpop.f32.mrb[0].mxu0
  %v10006 = vadd.f32 0.0, %v10005
  %v10007 = vpop.f32.mrb[0].mxu0
  %v10008 = vpop.f32.mrb[0].mxu0
  %v10009 = vadd.f32 0.0, %v10008
  %v10010 = vpop.f32.mrb[0].mxu0
  %10011 = vmatprep.mubr.bf16.mxu0 0
  %10012 = vmatmul.mubr.bf16.gmra.mrb[0].mxu0 %v9766
  %v10013 = vpop.f32.mrb[0].mxu0
  %v10014 = vadd.f32 0.0, %v10013
  %v10015 = vpop.f32.mrb[0].mxu0
  %v10016 = vpop.f32.mrb[0].mxu0
  %v10017 = vadd.f32 0.0, %v10016
  %v10018 = vpop.f32.mrb[0].mxu0
  %10019 = vmatprep.mubr.bf16.mxu0 0
  %10020 = vmatmul.mubr.bf16.gmra.mrb[0].mxu0 %v9769
  %v10021 = vpop.f32.mrb[0].mxu0
  %v10022 = vadd.f32 0.0, %v10021
  %v10023 = vpop.f32.mrb[0].mxu0
  %v10024 = vpop.f32.mrb[0].mxu0
  %v10025 = vadd.f32 0.0, %v10024
  %v10026 = vpop.f32.mrb[0].mxu0
  %10027 = vmatprep.mubr.bf16.mxu0 0
  %10028 = vmatmul.mubr.bf16.gmra.mrb[0].mxu0 %v9772
  %v10029 = vpop.f32.mrb[0].mxu0
  %v10030 = vadd.f32 0.0, %v10029
  %v10031 = vpop.f32.mrb[0].mxu0
  %v10032 = vpop.f32.mrb[0].mxu0
  %v10033 = vadd.f32 0.0, %v10032
  %v10034 = vpop.f32.mrb[0].mxu0
  %10035 = vmatprep.mubr.bf16.mxu0 0
  %10036 = vmatmul.mubr.bf16.gmra.mrb[0].mxu0 %v9775
  %v10037 = vpop.f32.mrb[0].mxu0
  %v10038 = vadd.f32 0.0, %v10037
  %v10039 = vpop.f32.mrb[0].mxu0
  %v10040 = vpop.f32.mrb[0].mxu0
  %v10041 = vadd.f32 0.0, %v10040
  %v10042 = vpop.f32.mrb[0].mxu0
  %10043 = vmatprep.mubr.bf16.mxu0 0
  %10044 = vmatmul.mubr.bf16.gmra.mrb[0].mxu0 %v9778
  %v10045 = vpop.f32.mrb[0].mxu0
  %v10046 = vadd.f32 0.0, %v10045
  %v10047 = vpop.f32.mrb[0].mxu0
  %v10048 = vpop.f32.mrb[0].mxu0
  %v10049 = vadd.f32 0.0, %v10048
  %v10050 = vpop.f32.mrb[0].mxu0
  %10051 = vmatprep.mubr.bf16.mxu0 0
  %10052 = vmatmul.mubr.bf16.gmra.mrb[0].mxu0 %v9781
  %v10053 = vpop.f32.mrb[0].mxu0
  %v10054 = vadd.f32 0.0, %v10053
  %v10055 = vpop.f32.mrb[0].mxu0
  %v10056 = vpop.f32.mrb[0].mxu0
  %v10057 = vadd.f32 0.0, %v10056
  %v10058 = vpop.f32.mrb[0].mxu0
  %10059 = vmatprep.mubr.bf16.mxu0 0
  %10060 = vmatmul.mubr.bf16.gmra.mrb[0].mxu0 %v9784
  %v10061 = vpop.f32.mrb[0].mxu0
  %v10062 = vadd.f32 0.0, %v10061
  %v10063 = vpop.f32.mrb[0].mxu0
  %v10064 = vpop.f32.mrb[0].mxu0
  %v10065 = vadd.f32 0.0, %v10064
  %v10066 = vpop.f32.mrb[0].mxu0
  %10067 = vmatprep.mubr.bf16.mxu0 0
  %10068 = vmatmul.mubr.bf16.gmra.mrb[0].mxu0 %v9787
  %v10069 = vpop.f32.mrb[0].mxu0
  %v10070 = vadd.f32 0.0, %v10069
  %v10071 = vpop.f32.mrb[0].mxu0
  %v10072 = vpop.f32.mrb[0].mxu0
  %v10073 = vadd.f32 0.0, %v10072
  %v10074 = vpop.f32.mrb[0].mxu0
  %10075 = vmatprep.mubr.bf16.mxu0 0
  %10076 = vmatmul.mubr.bf16.gmra.mrb[0].mxu0 %v9790
  %v10077 = vpop.f32.mrb[0].mxu0
  %v10078 = vadd.f32 0.0, %v10077
  %v10079 = vpop.f32.mrb[0].mxu0
  %v10080 = vpop.f32.mrb[0].mxu0
  %v10081 = vadd.f32 0.0, %v10080
  %v10082 = vpop.f32.mrb[0].mxu0
  %10083 = vdwg.mxu0
  %v10084 = vadd.f32 %v9536, %v9830
  %v10085 = vadd.f32 %v9537, %v9833
  %v10086 = vadd.f32 %v9538, %v9838
  %v10087 = vadd.f32 %v9539, %v9841
  %v10088 = vadd.f32 %v9540, %v9846
  %v10089 = vadd.f32 %v9541, %v9849
  %v10090 = vadd.f32 %v9542, %v9854
  %v10091 = vadd.f32 %v9543, %v9857
  %v10092 = vadd.f32 %v9544, %v9862
  %v10093 = vadd.f32 %v9545, %v9865
  %v10094 = vadd.f32 %v9546, %v9870
  %v10095 = vadd.f32 %v9547, %v9873
  %v10096 = vadd.f32 %v9548, %v9878
  %v10097 = vadd.f32 %v9549, %v9881
  %v10098 = vadd.f32 %v9550, %v9886
  %v10099 = vadd.f32 %v9551, %v9889
  %v10100 = vadd.f32 %v9552, %v9894
  %v10101 = vadd.f32 %v9553, %v9897
  %v10102 = vadd.f32 %v9554, %v9902
  %v10103 = vadd.f32 %v9555, %v9905
  %v10104 = vadd.f32 %v9556, %v9910
  %v10105 = vadd.f32 %v9557, %v9913
  %v10106 = vadd.f32 %v9558, %v9918
  %v10107 = vadd.f32 %v9559, %v9921
  %v10108 = vadd.f32 %v9560, %v9926
  %v10109 = vadd.f32 %v9561, %v9929
  %v10110 = vadd.f32 %v9562, %v9934
  %v10111 = vadd.f32 %v9563, %v9937
  %v10112 = vadd.f32 %v9564, %v9942
  %v10113 = vadd.f32 %v9565, %v9945
  %v10114 = vadd.f32 %v9566, %v9950
  %v10115 = vadd.f32 %v9567, %v9953
  %v10116 = vadd.f32 %v9568, %v9958
  %v10117 = vadd.f32 %v9569, %v9961
  %v10118 = vadd.f32 %v9570, %v9966
  %v10119 = vadd.f32 %v9571, %v9969
  %v10120 = vadd.f32 %v9572, %v9974
  %v10121 = vadd.f32 %v9573, %v9977
  %v10122 = vadd.f32 %v9574, %v9982
  %v10123 = vadd.f32 %v9575, %v9985
  %v10124 = vadd.f32 %v9576, %v9990
  %v10125 = vadd.f32 %v9577, %v9993
  %v10126 = vadd.f32 %v9578, %v9998
  %v10127 = vadd.f32 %v9579, %v10001
  %v10128 = vadd.f32 %v9580, %v10006
  %v10129 = vadd.f32 %v9581, %v10009
  %v10130 = vadd.f32 %v9582, %v10014
  %v10131 = vadd.f32 %v9583, %v10017
  %v10132 = vadd.f32 %v9584, %v10022
  %v10133 = vadd.f32 %v9585, %v10025
  %v10134 = vadd.f32 %v9586, %v10030
  %v10135 = vadd.f32 %v9587, %v10033
  %v10136 = vadd.f32 %v9588, %v10038
  %v10137 = vadd.f32 %v9589, %v10041
  %v10138 = vadd.f32 %v9590, %v10046
  %v10139 = vadd.f32 %v9591, %v10049
  %v10140 = vadd.f32 %v9592, %v10054
  %v10141 = vadd.f32 %v9593, %v10057
  %v10142 = vadd.f32 %v9594, %v10062
  %v10143 = vadd.f32 %v9595, %v10065
  %v10144 = vadd.f32 %v9596, %v10070
  %v10145 = vadd.f32 %v9597, %v10073
  %v10146 = vadd.f32 %v9598, %v10078
  %v10147 = vadd.f32 %v9599, %v10081
  %v10148 = vld [vmem:[%s9051 + $0x2] sm:$0xff]
  %v10149 = vld [vmem:[%s9051 + $0xa] sm:$0xff]
  %v10150 = vld [vmem:[%s9051 + $0x1a] sm:$0xff]
  %v10151 = vld [vmem:[%s9051 + $0x22] sm:$0xff]
  %v10152 = vld [vmem:[%s9051 + $0x32] sm:$0xff]
  %v10153 = vld [vmem:[%s9051 + $0x3a] sm:$0xff]
  %v10154 = vld [vmem:[%s9051 + $0x4a] sm:$0xff]
  %v10155 = vld [vmem:[%s9051 + $0x52] sm:$0xff]
  %v10156 = vld [vmem:[%s9051 + $0x62] sm:$0xff]
  %v10157 = vld [vmem:[%s9051 + $0x6a] sm:$0xff]
  %v10158 = vld [vmem:[%s9051 + $0x7a] sm:$0xff]
  %v10159 = vld [vmem:[%s9051 + $0x82] sm:$0xff]
  %v10160 = vld [vmem:[%s9051 + $0x92] sm:$0xff]
  %v10161 = vld [vmem:[%s9051 + $0x9a] sm:$0xff]
  %v10162 = vld [vmem:[%s9051 + $0xaa] sm:$0xff]
  %v10163 = vld [vmem:[%s9051 + $0xb2] sm:$0xff]
  %v10164 = vld [vmem:[%s9051 + $0xc2] sm:$0xff]
  %v10165 = vld [vmem:[%s9051 + $0xca] sm:$0xff]
  %v10166 = vld [vmem:[%s9051 + $0xda] sm:$0xff]
  %v10167 = vld [vmem:[%s9051 + $0xe2] sm:$0xff]
  %v10168 = vld [vmem:[%s9051 + $0xf2] sm:$0xff]
  %v10169 = vld [vmem:[%s9051 + $0xfa] sm:$0xff]
  %v10170 = vld [vmem:[%s9051 + $0x10a] sm:$0xff]
  %v10171 = vld [vmem:[%s9051 + $0x112] sm:$0xff]
  %v10172 = vld [vmem:[%s9051 + $0x122] sm:$0xff]
  %v10173 = vld [vmem:[%s9051 + $0x12a] sm:$0xff]
  %v10174 = vld [vmem:[%s9051 + $0x13a] sm:$0xff]
  %v10175 = vld [vmem:[%s9051 + $0x142] sm:$0xff]
  %v10176 = vld [vmem:[%s9051 + $0x152] sm:$0xff]
  %v10177 = vld [vmem:[%s9051 + $0x15a] sm:$0xff]
  %v10178 = vld [vmem:[%s9051 + $0x16a] sm:$0xff]
  %v10179 = vld [vmem:[%s9051 + $0x172] sm:$0xff]
  %v10180 = vld [vmem:[%s9051 + $0x1b2] sm:$0xff]
  %v10181 = vld [vmem:[%s9051 + $0x1ba] sm:$0xff]
  %v10182 = vld [vmem:[%s9051 + $0x1ca] sm:$0xff]
  %v10183 = vld [vmem:[%s9051 + $0x1d2] sm:$0xff]
  %v10184 = vld [vmem:[%s9051 + $0x1e2] sm:$0xff]
  %v10185 = vld [vmem:[%s9051 + $0x1ea] sm:$0xff]
  %v10186 = vld [vmem:[%s9051 + $0x1fa] sm:$0xff]
  %v10187 = vld [vmem:[%s9051 + $0x202] sm:$0xff]
  %v10188 = vld [vmem:[%s9051 + $0x212] sm:$0xff]
  %v10189 = vld [vmem:[%s9051 + $0x21a] sm:$0xff]
  %v10190 = vld [vmem:[%s9051 + $0x22a] sm:$0xff]
  %v10191 = vld [vmem:[%s9051 + $0x232] sm:$0xff]
  %v10192 = vld [vmem:[%s9051 + $0x242] sm:$0xff]
  %v10193 = vld [vmem:[%s9051 + $0x24a] sm:$0xff]
  %v10194 = vld [vmem:[%s9051 + $0x25a] sm:$0xff]
  %v10195 = vld [vmem:[%s9051 + $0x262] sm:$0xff]
  %v10196 = vld [vmem:[%s9051 + $0x272] sm:$0xff]
  %v10197 = vld [vmem:[%s9051 + $0x27a] sm:$0xff]
  %v10198 = vld [vmem:[%s9051 + $0x28a] sm:$0xff]
  %v10199 = vld [vmem:[%s9051 + $0x292] sm:$0xff]
  %v10200 = vld [vmem:[%s9051 + $0x2a2] sm:$0xff]
  %v10201 = vld [vmem:[%s9051 + $0x2aa] sm:$0xff]
  %v10202 = vld [vmem:[%s9051 + $0x2ba] sm:$0xff]
  %v10203 = vld [vmem:[%s9051 + $0x2c2] sm:$0xff]
  %v10204 = vld [vmem:[%s9051 + $0x2d2] sm:$0xff]
  %v10205 = vld [vmem:[%s9051 + $0x2da] sm:$0xff]
  %v10206 = vld [vmem:[%s9051 + $0x2ea] sm:$0xff]
  %v10207 = vld [vmem:[%s9051 + $0x2f2] sm:$0xff]
  %v10208 = vld [vmem:[%s9051 + $0x302] sm:$0xff]
  %v10209 = vld [vmem:[%s9051 + $0x30a] sm:$0xff]
  %v10210 = vld [vmem:[%s9051 + $0x31a] sm:$0xff]
  %v10211 = vld [vmem:[%s9051 + $0x322] sm:$0xff]
  %v10212 = vpack.c.bf16 %v10149, %v10148
  %v10213 = vpack.c.bf16 %v10151, %v10150
  %v10214 = vpack.c.bf16 %v10153, %v10152
  %v10215 = vpack.c.bf16 %v10155, %v10154
  %v10216 = vpack.c.bf16 %v10157, %v10156
  %v10217 = vpack.c.bf16 %v10159, %v10158
  %v10218 = vpack.c.bf16 %v10161, %v10160
  %v10219 = vpack.c.bf16 %v10163, %v10162
  %v10220 = vpack.c.bf16 %v10165, %v10164
  %v10221 = vpack.c.bf16 %v10167, %v10166
  %v10222 = vpack.c.bf16 %v10169, %v10168
  %v10223 = vpack.c.bf16 %v10171, %v10170
  %v10224 = vpack.c.bf16 %v10173, %v10172
  %v10225 = vpack.c.bf16 %v10175, %v10174
  %v10226 = vpack.c.bf16 %v10177, %v10176
  %v10227 = vpack.c.bf16 %v10179, %v10178
  %v10228 = vpack.c.bf16 %v10181, %v10180
  %v10229 = vpack.c.bf16 %v10183, %v10182
  %v10230 = vpack.c.bf16 %v10185, %v10184
  %v10231 = vpack.c.bf16 %v10187, %v10186
  %v10232 = vpack.c.bf16 %v10189, %v10188
  %v10233 = vpack.c.bf16 %v10191, %v10190
  %v10234 = vpack.c.bf16 %v10193, %v10192
  %v10235 = vpack.c.bf16 %v10195, %v10194
  %v10236 = vpack.c.bf16 %v10197, %v10196
  %v10237 = vpack.c.bf16 %v10199, %v10198
  %v10238 = vpack.c.bf16 %v10201, %v10200
  %v10239 = vpack.c.bf16 %v10203, %v10202
  %v10240 = vpack.c.bf16 %v10205, %v10204
  %v10241 = vpack.c.bf16 %v10207, %v10206
  %v10242 = vpack.c.bf16 %v10209, %v10208
  %v10243 = vpack.c.bf16 %v10211, %v10210
  %v10245 = vsel %vm5194, %v10212, 0
  %v10248 = vsel %vm5194, %v10213, 0
  %v10251 = vsel %vm5194, %v10214, 0
  %v10254 = vsel %vm5194, %v10215, 0
  %v10257 = vsel %vm5194, %v10216, 0
  %v10260 = vsel %vm5194, %v10217, 0
  %v10263 = vsel %vm5194, %v10218, 0
  %v10266 = vsel %vm5194, %v10219, 0
  %v10269 = vsel %vm5194, %v10220, 0
  %v10272 = vsel %vm5194, %v10221, 0
  %v10275 = vsel %vm5194, %v10222, 0
  %v10278 = vsel %vm5194, %v10223, 0
  %v10281 = vsel %vm5194, %v10224, 0
  %v10284 = vsel %vm5194, %v10225, 0
  %v10287 = vsel %vm5194, %v10226, 0
  %v10290 = vsel %vm5194, %v10227, 0
  %v10293 = vsel %vm5194, %v10228, 0
  %v10296 = vsel %vm5194, %v10229, 0
  %v10299 = vsel %vm5194, %v10230, 0
  %v10302 = vsel %vm5194, %v10231, 0
  %v10305 = vsel %vm5194, %v10232, 0
  %v10308 = vsel %vm5194, %v10233, 0
  %v10311 = vsel %vm5194, %v10234, 0
  %v10314 = vsel %vm5194, %v10235, 0
  %v10317 = vsel %vm5194, %v10236, 0
  %v10320 = vsel %vm5194, %v10237, 0
  %v10323 = vsel %vm5194, %v10238, 0
  %v10326 = vsel %vm5194, %v10239, 0
  %v10329 = vsel %vm5194, %v10240, 0
  %v10332 = vsel %vm5194, %v10241, 0
  %v10335 = vsel %vm5194, %v10242, 0
  %v10338 = vsel %vm5194, %v10243, 0
  %v10341 = vsel %vm6178, %v5886, 0
  %10343 = vmatprep.subr.bf16.mxu0 0
  %10344 = vmatpush1.bf16.msra.mxu0 %v10341
  %10345 = vmatprep.subr.bf16.mxu0 0
  %10346 = vmatpush1.bf16.msra.mxu0 0
  %10347 = vmatprep.subr.bf16.mxu0 0
  %10348 = vmatpush1.bf16.msra.mxu0 0
  %10349 = vmatprep.subr.bf16.mxu0 0
  %10350 = vmatpush1.bf16.msra.mxu0 0
  %10351 = vmatprep.subr.bf16.mxu0 0
  %10352 = vmatpush1.bf16.msra.mxu0 0
  %10353 = vmatprep.subr.bf16.mxu0 0
  %10354 = vmatpush1.bf16.msra.mxu0 0
  %10355 = vmatprep.subr.bf16.mxu0 0
  %10356 = vmatpush1.bf16.msra.mxu0 0
  %10357 = vmatprep.subr.bf16.mxu0 0
  %10358 = vmatpush1.bf16.msra.mxu0 0
  %10359 = vmatprep.subr.bf16.mxu0 0
  %10360 = vmatpush1.bf16.msra.mxu0 0
  %10361 = vmatprep.subr.bf16.mxu0 0
  %10362 = vmatpush1.bf16.msra.mxu0 0
  %10363 = vmatprep.subr.bf16.mxu0 0
  %10364 = vmatpush1.bf16.msra.mxu0 0
  %10365 = vmatprep.subr.bf16.mxu0 0
  %10366 = vmatpush1.bf16.msra.mxu0 0
  %10367 = vmatprep.subr.bf16.mxu0 0
  %10368 = vmatpush1.bf16.msra.mxu0 0
  %10369 = vmatprep.subr.bf16.mxu0 0
  %10370 = vmatpush1.bf16.msra.mxu0 0
  %10371 = vmatprep.subr.bf16.mxu0 0
  %10372 = vmatpush1.bf16.msra.mxu0 0
  %10373 = vmatprep.subr.bf16.mxu0 0
  %10374 = vmatpush1.bf16.msra.mxu0 0
  %10375 = vmatprep.mubr.bf16.mxu0 0
  %10376 = vmatmul.mubr.bf16.gmra.mrb[0].mxu0 %v10245
  %v10377 = vpop.f32.mrb[0].mxu0
  %v10378 = vadd.f32 0.0, %v10377
  %v10379 = vpop.f32.mrb[0].mxu0
  %v10380 = vpop.f32.mrb[0].mxu0
  %v10381 = vadd.f32 0.0, %v10380
  %v10382 = vpop.f32.mrb[0].mxu0
  %10383 = vmatprep.mubr.bf16.mxu0 0
  %10384 = vmatmul.mubr.bf16.gmra.mrb[0].mxu0 %v10248
  %v10385 = vpop.f32.mrb[0].mxu0
  %v10386 = vadd.f32 0.0, %v10385
  %v10387 = vpop.f32.mrb[0].mxu0
  %v10388 = vpop.f32.mrb[0].mxu0
  %v10389 = vadd.f32 0.0, %v10388
  %v10390 = vpop.f32.mrb[0].mxu0
  %10391 = vmatprep.mubr.bf16.mxu0 0
  %10392 = vmatmul.mubr.bf16.gmra.mrb[0].mxu0 %v10251
  %v10393 = vpop.f32.mrb[0].mxu0
  %v10394 = vadd.f32 0.0, %v10393
  %v10395 = vpop.f32.mrb[0].mxu0
  %v10396 = vpop.f32.mrb[0].mxu0
  %v10397 = vadd.f32 0.0, %v10396
  %v10398 = vpop.f32.mrb[0].mxu0
  %10399 = vmatprep.mubr.bf16.mxu0 0
  %10400 = vmatmul.mubr.bf16.gmra.mrb[0].mxu0 %v10254
  %v10401 = vpop.f32.mrb[0].mxu0
  %v10402 = vadd.f32 0.0, %v10401
  %v10403 = vpop.f32.mrb[0].mxu0
  %v10404 = vpop.f32.mrb[0].mxu0
  %v10405 = vadd.f32 0.0, %v10404
  %v10406 = vpop.f32.mrb[0].mxu0
  %10407 = vmatprep.mubr.bf16.mxu0 0
  %10408 = vmatmul.mubr.bf16.gmra.mrb[0].mxu0 %v10257
  %v10409 = vpop.f32.mrb[0].mxu0
  %v10410 = vadd.f32 0.0, %v10409
  %v10411 = vpop.f32.mrb[0].mxu0
  %v10412 = vpop.f32.mrb[0].mxu0
  %v10413 = vadd.f32 0.0, %v10412
  %v10414 = vpop.f32.mrb[0].mxu0
  %10415 = vmatprep.mubr.bf16.mxu0 0
  %10416 = vmatmul.mubr.bf16.gmra.mrb[0].mxu0 %v10260
  %v10417 = vpop.f32.mrb[0].mxu0
  %v10418 = vadd.f32 0.0, %v10417
  %v10419 = vpop.f32.mrb[0].mxu0
  %v10420 = vpop.f32.mrb[0].mxu0
  %v10421 = vadd.f32 0.0, %v10420
  %v10422 = vpop.f32.mrb[0].mxu0
  %10423 = vmatprep.mubr.bf16.mxu0 0
  %10424 = vmatmul.mubr.bf16.gmra.mrb[0].mxu0 %v10263
  %v10425 = vpop.f32.mrb[0].mxu0
  %v10426 = vadd.f32 0.0, %v10425
  %v10427 = vpop.f32.mrb[0].mxu0
  %v10428 = vpop.f32.mrb[0].mxu0
  %v10429 = vadd.f32 0.0, %v10428
  %v10430 = vpop.f32.mrb[0].mxu0
  %10431 = vmatprep.mubr.bf16.mxu0 0
  %10432 = vmatmul.mubr.bf16.gmra.mrb[0].mxu0 %v10266
  %v10433 = vpop.f32.mrb[0].mxu0
  %v10434 = vadd.f32 0.0, %v10433
  %v10435 = vpop.f32.mrb[0].mxu0
  %v10436 = vpop.f32.mrb[0].mxu0
  %v10437 = vadd.f32 0.0, %v10436
  %v10438 = vpop.f32.mrb[0].mxu0
  %10439 = vmatprep.mubr.bf16.mxu0 0
  %10440 = vmatmul.mubr.bf16.gmra.mrb[0].mxu0 %v10269
  %v10441 = vpop.f32.mrb[0].mxu0
  %v10442 = vadd.f32 0.0, %v10441
  %v10443 = vpop.f32.mrb[0].mxu0
  %v10444 = vpop.f32.mrb[0].mxu0
  %v10445 = vadd.f32 0.0, %v10444
  %v10446 = vpop.f32.mrb[0].mxu0
  %10447 = vmatprep.mubr.bf16.mxu0 0
  %10448 = vmatmul.mubr.bf16.gmra.mrb[0].mxu0 %v10272
  %v10449 = vpop.f32.mrb[0].mxu0
  %v10450 = vadd.f32 0.0, %v10449
  %v10451 = vpop.f32.mrb[0].mxu0
  %v10452 = vpop.f32.mrb[0].mxu0
  %v10453 = vadd.f32 0.0, %v10452
  %v10454 = vpop.f32.mrb[0].mxu0
  %10455 = vmatprep.mubr.bf16.mxu0 0
  %10456 = vmatmul.mubr.bf16.gmra.mrb[0].mxu0 %v10275
  %v10457 = vpop.f32.mrb[0].mxu0
  %v10458 = vadd.f32 0.0, %v10457
  %v10459 = vpop.f32.mrb[0].mxu0
  %v10460 = vpop.f32.mrb[0].mxu0
  %v10461 = vadd.f32 0.0, %v10460
  %v10462 = vpop.f32.mrb[0].mxu0
  %10463 = vmatprep.mubr.bf16.mxu0 0
  %10464 = vmatmul.mubr.bf16.gmra.mrb[0].mxu0 %v10278
  %v10465 = vpop.f32.mrb[0].mxu0
  %v10466 = vadd.f32 0.0, %v10465
  %v10467 = vpop.f32.mrb[0].mxu0
  %v10468 = vpop.f32.mrb[0].mxu0
  %v10469 = vadd.f32 0.0, %v10468
  %v10470 = vpop.f32.mrb[0].mxu0
  %10471 = vmatprep.mubr.bf16.mxu0 0
  %10472 = vmatmul.mubr.bf16.gmra.mrb[0].mxu0 %v10281
  %v10473 = vpop.f32.mrb[0].mxu0
  %v10474 = vadd.f32 0.0, %v10473
  %v10475 = vpop.f32.mrb[0].mxu0
  %v10476 = vpop.f32.mrb[0].mxu0
  %v10477 = vadd.f32 0.0, %v10476
  %v10478 = vpop.f32.mrb[0].mxu0
  %10479 = vmatprep.mubr.bf16.mxu0 0
  %10480 = vmatmul.mubr.bf16.gmra.mrb[0].mxu0 %v10284
  %v10481 = vpop.f32.mrb[0].mxu0
  %v10482 = vadd.f32 0.0, %v10481
  %v10483 = vpop.f32.mrb[0].mxu0
  %v10484 = vpop.f32.mrb[0].mxu0
  %v10485 = vadd.f32 0.0, %v10484
  %v10486 = vpop.f32.mrb[0].mxu0
  %10487 = vmatprep.mubr.bf16.mxu0 0
  %10488 = vmatmul.mubr.bf16.gmra.mrb[0].mxu0 %v10287
  %v10489 = vpop.f32.mrb[0].mxu0
  %v10490 = vadd.f32 0.0, %v10489
  %v10491 = vpop.f32.mrb[0].mxu0
  %v10492 = vpop.f32.mrb[0].mxu0
  %v10493 = vadd.f32 0.0, %v10492
  %v10494 = vpop.f32.mrb[0].mxu0
  %10495 = vmatprep.mubr.bf16.mxu0 0
  %10496 = vmatmul.mubr.bf16.gmra.mrb[0].mxu0 %v10290
  %v10497 = vpop.f32.mrb[0].mxu0
  %v10498 = vadd.f32 0.0, %v10497
  %v10499 = vpop.f32.mrb[0].mxu0
  %v10500 = vpop.f32.mrb[0].mxu0
  %v10501 = vadd.f32 0.0, %v10500
  %v10502 = vpop.f32.mrb[0].mxu0
  %10503 = vmatprep.mubr.bf16.mxu0 0
  %10504 = vmatmul.mubr.bf16.gmra.mrb[0].mxu0 %v10293
  %v10505 = vpop.f32.mrb[0].mxu0
  %v10506 = vadd.f32 0.0, %v10505
  %v10507 = vpop.f32.mrb[0].mxu0
  %v10508 = vpop.f32.mrb[0].mxu0
  %v10509 = vadd.f32 0.0, %v10508
  %v10510 = vpop.f32.mrb[0].mxu0
  %10511 = vmatprep.mubr.bf16.mxu0 0
  %10512 = vmatmul.mubr.bf16.gmra.mrb[0].mxu0 %v10296
  %v10513 = vpop.f32.mrb[0].mxu0
  %v10514 = vadd.f32 0.0, %v10513
  %v10515 = vpop.f32.mrb[0].mxu0
  %v10516 = vpop.f32.mrb[0].mxu0
  %v10517 = vadd.f32 0.0, %v10516
  %v10518 = vpop.f32.mrb[0].mxu0
  %10519 = vmatprep.mubr.bf16.mxu0 0
  %10520 = vmatmul.mubr.bf16.gmra.mrb[0].mxu0 %v10299
  %v10521 = vpop.f32.mrb[0].mxu0
  %v10522 = vadd.f32 0.0, %v10521
  %v10523 = vpop.f32.mrb[0].mxu0
  %v10524 = vpop.f32.mrb[0].mxu0
  %v10525 = vadd.f32 0.0, %v10524
  %v10526 = vpop.f32.mrb[0].mxu0
  %10527 = vmatprep.mubr.bf16.mxu0 0
  %10528 = vmatmul.mubr.bf16.gmra.mrb[0].mxu0 %v10302
  %v10529 = vpop.f32.mrb[0].mxu0
  %v10530 = vadd.f32 0.0, %v10529
  %v10531 = vpop.f32.mrb[0].mxu0
  %v10532 = vpop.f32.mrb[0].mxu0
  %v10533 = vadd.f32 0.0, %v10532
  %v10534 = vpop.f32.mrb[0].mxu0
  %10535 = vmatprep.mubr.bf16.mxu0 0
  %10536 = vmatmul.mubr.bf16.gmra.mrb[0].mxu0 %v10305
  %v10537 = vpop.f32.mrb[0].mxu0
  %v10538 = vadd.f32 0.0, %v10537
  %v10539 = vpop.f32.mrb[0].mxu0
  %v10540 = vpop.f32.mrb[0].mxu0
  %v10541 = vadd.f32 0.0, %v10540
  %v10542 = vpop.f32.mrb[0].mxu0
  %10543 = vmatprep.mubr.bf16.mxu0 0
  %10544 = vmatmul.mubr.bf16.gmra.mrb[0].mxu0 %v10308
  %v10545 = vpop.f32.mrb[0].mxu0
  %v10546 = vadd.f32 0.0, %v10545
  %v10547 = vpop.f32.mrb[0].mxu0
  %v10548 = vpop.f32.mrb[0].mxu0
  %v10549 = vadd.f32 0.0, %v10548
  %v10550 = vpop.f32.mrb[0].mxu0
  %10551 = vmatprep.mubr.bf16.mxu0 0
  %10552 = vmatmul.mubr.bf16.gmra.mrb[0].mxu0 %v10311
  %v10553 = vpop.f32.mrb[0].mxu0
  %v10554 = vadd.f32 0.0, %v10553
  %v10555 = vpop.f32.mrb[0].mxu0
  %v10556 = vpop.f32.mrb[0].mxu0
  %v10557 = vadd.f32 0.0, %v10556
  %v10558 = vpop.f32.mrb[0].mxu0
  %10559 = vmatprep.mubr.bf16.mxu0 0
  %10560 = vmatmul.mubr.bf16.gmra.mrb[0].mxu0 %v10314
  %v10561 = vpop.f32.mrb[0].mxu0
  %v10562 = vadd.f32 0.0, %v10561
  %v10563 = vpop.f32.mrb[0].mxu0
  %v10564 = vpop.f32.mrb[0].mxu0
  %v10565 = vadd.f32 0.0, %v10564
  %v10566 = vpop.f32.mrb[0].mxu0
  %10567 = vmatprep.mubr.bf16.mxu0 0
  %10568 = vmatmul.mubr.bf16.gmra.mrb[0].mxu0 %v10317
  %v10569 = vpop.f32.mrb[0].mxu0
  %v10570 = vadd.f32 0.0, %v10569
  %v10571 = vpop.f32.mrb[0].mxu0
  %v10572 = vpop.f32.mrb[0].mxu0
  %v10573 = vadd.f32 0.0, %v10572
  %v10574 = vpop.f32.mrb[0].mxu0
  %10575 = vmatprep.mubr.bf16.mxu0 0
  %10576 = vmatmul.mubr.bf16.gmra.mrb[0].mxu0 %v10320
  %v10577 = vpop.f32.mrb[0].mxu0
  %v10578 = vadd.f32 0.0, %v10577
  %v10579 = vpop.f32.mrb[0].mxu0
  %v10580 = vpop.f32.mrb[0].mxu0
  %v10581 = vadd.f32 0.0, %v10580
  %v10582 = vpop.f32.mrb[0].mxu0
  %10583 = vmatprep.mubr.bf16.mxu0 0
  %10584 = vmatmul.mubr.bf16.gmra.mrb[0].mxu0 %v10323
  %v10585 = vpop.f32.mrb[0].mxu0
  %v10586 = vadd.f32 0.0, %v10585
  %v10587 = vpop.f32.mrb[0].mxu0
  %v10588 = vpop.f32.mrb[0].mxu0
  %v10589 = vadd.f32 0.0, %v10588
  %v10590 = vpop.f32.mrb[0].mxu0
  %10591 = vmatprep.mubr.bf16.mxu0 0
  %10592 = vmatmul.mubr.bf16.gmra.mrb[0].mxu0 %v10326
  %v10593 = vpop.f32.mrb[0].mxu0
  %v10594 = vadd.f32 0.0, %v10593
  %v10595 = vpop.f32.mrb[0].mxu0
  %v10596 = vpop.f32.mrb[0].mxu0
  %v10597 = vadd.f32 0.0, %v10596
  %v10598 = vpop.f32.mrb[0].mxu0
  %10599 = vmatprep.mubr.bf16.mxu0 0
  %10600 = vmatmul.mubr.bf16.gmra.mrb[0].mxu0 %v10329
  %v10601 = vpop.f32.mrb[0].mxu0
  %v10602 = vadd.f32 0.0, %v10601
  %v10603 = vpop.f32.mrb[0].mxu0
  %v10604 = vpop.f32.mrb[0].mxu0
  %v10605 = vadd.f32 0.0, %v10604
  %v10606 = vpop.f32.mrb[0].mxu0
  %10607 = vmatprep.mubr.bf16.mxu0 0
  %10608 = vmatmul.mubr.bf16.gmra.mrb[0].mxu0 %v10332
  %v10609 = vpop.f32.mrb[0].mxu0
  %v10610 = vadd.f32 0.0, %v10609
  %v10611 = vpop.f32.mrb[0].mxu0
  %v10612 = vpop.f32.mrb[0].mxu0
  %v10613 = vadd.f32 0.0, %v10612
  %v10614 = vpop.f32.mrb[0].mxu0
  %10615 = vmatprep.mubr.bf16.mxu0 0
  %10616 = vmatmul.mubr.bf16.gmra.mrb[0].mxu0 %v10335
  %v10617 = vpop.f32.mrb[0].mxu0
  %v10618 = vadd.f32 0.0, %v10617
  %v10619 = vpop.f32.mrb[0].mxu0
  %v10620 = vpop.f32.mrb[0].mxu0
  %v10621 = vadd.f32 0.0, %v10620
  %v10622 = vpop.f32.mrb[0].mxu0
  %10623 = vmatprep.mubr.bf16.mxu0 0
  %10624 = vmatmul.mubr.bf16.gmra.mrb[0].mxu0 %v10338
  %v10625 = vpop.f32.mrb[0].mxu0
  %v10626 = vadd.f32 0.0, %v10625
  %v10627 = vpop.f32.mrb[0].mxu0
  %v10628 = vpop.f32.mrb[0].mxu0
  %v10629 = vadd.f32 0.0, %v10628
  %v10630 = vpop.f32.mrb[0].mxu0
  %10631 = vdwg.mxu0
  %v10632 = vadd.f32 %v10084, %v10378
  %v10633 = vadd.f32 %v10085, %v10381
  %v10634 = vadd.f32 %v10086, %v10386
  %v10635 = vadd.f32 %v10087, %v10389
  %v10636 = vadd.f32 %v10088, %v10394
  %v10637 = vadd.f32 %v10089, %v10397
  %v10638 = vadd.f32 %v10090, %v10402
  %v10639 = vadd.f32 %v10091, %v10405
  %v10640 = vadd.f32 %v10092, %v10410
  %v10641 = vadd.f32 %v10093, %v10413
  %v10642 = vadd.f32 %v10094, %v10418
  %v10643 = vadd.f32 %v10095, %v10421
  %v10644 = vadd.f32 %v10096, %v10426
  %v10645 = vadd.f32 %v10097, %v10429
  %v10646 = vadd.f32 %v10098, %v10434
  %v10647 = vadd.f32 %v10099, %v10437
  %v10648 = vadd.f32 %v10100, %v10442
  %v10649 = vadd.f32 %v10101, %v10445
  %v10650 = vadd.f32 %v10102, %v10450
  %v10651 = vadd.f32 %v10103, %v10453
  %v10652 = vadd.f32 %v10104, %v10458
  %v10653 = vadd.f32 %v10105, %v10461
  %v10654 = vadd.f32 %v10106, %v10466
  %v10655 = vadd.f32 %v10107, %v10469
  %v10656 = vadd.f32 %v10108, %v10474
  %v10657 = vadd.f32 %v10109, %v10477
  %v10658 = vadd.f32 %v10110, %v10482
  %v10659 = vadd.f32 %v10111, %v10485
  %v10660 = vadd.f32 %v10112, %v10490
  %v10661 = vadd.f32 %v10113, %v10493
  %v10662 = vadd.f32 %v10114, %v10498
  %v10663 = vadd.f32 %v10115, %v10501
  %v10664 = vadd.f32 %v10116, %v10506
  %v10665 = vadd.f32 %v10117, %v10509
  %v10666 = vadd.f32 %v10118, %v10514
  %v10667 = vadd.f32 %v10119, %v10517
  %v10668 = vadd.f32 %v10120, %v10522
  %v10669 = vadd.f32 %v10121, %v10525
  %v10670 = vadd.f32 %v10122, %v10530
  %v10671 = vadd.f32 %v10123, %v10533
  %v10672 = vadd.f32 %v10124, %v10538
  %v10673 = vadd.f32 %v10125, %v10541
  %v10674 = vadd.f32 %v10126, %v10546
  %v10675 = vadd.f32 %v10127, %v10549
  %v10676 = vadd.f32 %v10128, %v10554
  %v10677 = vadd.f32 %v10129, %v10557
  %v10678 = vadd.f32 %v10130, %v10562
  %v10679 = vadd.f32 %v10131, %v10565
  %v10680 = vadd.f32 %v10132, %v10570
  %v10681 = vadd.f32 %v10133, %v10573
  %v10682 = vadd.f32 %v10134, %v10578
  %v10683 = vadd.f32 %v10135, %v10581
  %v10684 = vadd.f32 %v10136, %v10586
  %v10685 = vadd.f32 %v10137, %v10589
  %v10686 = vadd.f32 %v10138, %v10594
  %v10687 = vadd.f32 %v10139, %v10597
  %v10688 = vadd.f32 %v10140, %v10602
  %v10689 = vadd.f32 %v10141, %v10605
  %v10690 = vadd.f32 %v10142, %v10610
  %v10691 = vadd.f32 %v10143, %v10613
  %v10692 = vadd.f32 %v10144, %v10618
  %v10693 = vadd.f32 %v10145, %v10621
  %v10694 = vadd.f32 %v10146, %v10626
  %v10695 = vadd.f32 %v10147, %v10629
  %v10697 = vlaneseq
  %v10698 = vshrl.u32 %v10697, 7
  %v10699 = vsub.s32 0, %v10698
  %v10700 = vrot.slane %v5887, %v10699
  %v10702 = vadd.f32 %v10632, %v10700
  %v10703 = vadd.f32 %v10633, %v10700
  %v10704 = vadd.f32 %v10634, %v10700
  %v10705 = vadd.f32 %v10635, %v10700
  %v10706 = vadd.f32 %v10636, %v10700
  %v10707 = vadd.f32 %v10637, %v10700
  %v10708 = vadd.f32 %v10638, %v10700
  %v10709 = vadd.f32 %v10639, %v10700
  %v10710 = vadd.f32 %v10640, %v10700
  %v10711 = vadd.f32 %v10641, %v10700
  %v10712 = vadd.f32 %v10642, %v10700
  %v10713 = vadd.f32 %v10643, %v10700
  %v10714 = vadd.f32 %v10644, %v10700
  %v10715 = vadd.f32 %v10645, %v10700
  %v10716 = vadd.f32 %v10646, %v10700
  %v10717 = vadd.f32 %v10647, %v10700
  %v10718 = vadd.f32 %v10648, %v10700
  %v10719 = vadd.f32 %v10649, %v10700
  %v10720 = vadd.f32 %v10650, %v10700
  %v10721 = vadd.f32 %v10651, %v10700
  %v10722 = vadd.f32 %v10652, %v10700
  %v10723 = vadd.f32 %v10653, %v10700
  %v10724 = vadd.f32 %v10654, %v10700
  %v10725 = vadd.f32 %v10655, %v10700
  %v10726 = vadd.f32 %v10656, %v10700
  %v10727 = vadd.f32 %v10657, %v10700
  %v10728 = vadd.f32 %v10658, %v10700
  %v10729 = vadd.f32 %v10659, %v10700
  %v10730 = vadd.f32 %v10660, %v10700
  %v10731 = vadd.f32 %v10661, %v10700
  %v10732 = vadd.f32 %v10662, %v10700
  %v10733 = vadd.f32 %v10663, %v10700
  %v10734 = vadd.f32 %v10664, %v10700
  %v10735 = vadd.f32 %v10665, %v10700
  %v10736 = vadd.f32 %v10666, %v10700
  %v10737 = vadd.f32 %v10667, %v10700
  %v10738 = vadd.f32 %v10668, %v10700
  %v10739 = vadd.f32 %v10669, %v10700
  %v10740 = vadd.f32 %v10670, %v10700
  %v10741 = vadd.f32 %v10671, %v10700
  %v10742 = vadd.f32 %v10672, %v10700
  %v10743 = vadd.f32 %v10673, %v10700
  %v10744 = vadd.f32 %v10674, %v10700
  %v10745 = vadd.f32 %v10675, %v10700
  %v10746 = vadd.f32 %v10676, %v10700
  %v10747 = vadd.f32 %v10677, %v10700
  %v10748 = vadd.f32 %v10678, %v10700
  %v10749 = vadd.f32 %v10679, %v10700
  %v10750 = vadd.f32 %v10680, %v10700
  %v10751 = vadd.f32 %v10681, %v10700
  %v10752 = vadd.f32 %v10682, %v10700
  %v10753 = vadd.f32 %v10683, %v10700
  %v10754 = vadd.f32 %v10684, %v10700
  %v10755 = vadd.f32 %v10685, %v10700
  %v10756 = vadd.f32 %v10686, %v10700
  %v10757 = vadd.f32 %v10687, %v10700
  %v10758 = vadd.f32 %v10688, %v10700
  %v10759 = vadd.f32 %v10689, %v10700
  %v10760 = vadd.f32 %v10690, %v10700
  %v10761 = vadd.f32 %v10691, %v10700
  %v10762 = vadd.f32 %v10692, %v10700
  %v10763 = vadd.f32 %v10693, %v10700
  %v10764 = vadd.f32 %v10694, %v10700
  %v10765 = vadd.f32 %v10695, %v10700
  %v10766 = vmax.f32 %v10702, 0.0
  %v10767 = vmax.f32 %v10703, 0.0
  %v10768 = vmax.f32 %v10704, 0.0
  %v10769 = vmax.f32 %v10705, 0.0
  %v10770 = vmax.f32 %v10706, 0.0
  %v10771 = vmax.f32 %v10707, 0.0
  %v10772 = vmax.f32 %v10708, 0.0
  %v10773 = vmax.f32 %v10709, 0.0
  %v10774 = vmax.f32 %v10710, 0.0
  %v10775 = vmax.f32 %v10711, 0.0
  %v10776 = vmax.f32 %v10712, 0.0
  %v10777 = vmax.f32 %v10713, 0.0
  %v10778 = vmax.f32 %v10714, 0.0
  %v10779 = vmax.f32 %v10715, 0.0
  %v10780 = vmax.f32 %v10716, 0.0
  %v10781 = vmax.f32 %v10717, 0.0
  %v10782 = vmax.f32 %v10718, 0.0
  %v10783 = vmax.f32 %v10719, 0.0
  %v10784 = vmax.f32 %v10720, 0.0
  %v10785 = vmax.f32 %v10721, 0.0
  %v10786 = vmax.f32 %v10722, 0.0
  %v10787 = vmax.f32 %v10723, 0.0
  %v10788 = vmax.f32 %v10724, 0.0
  %v10789 = vmax.f32 %v10725, 0.0
  %v10790 = vmax.f32 %v10726, 0.0
  %v10791 = vmax.f32 %v10727, 0.0
  %v10792 = vmax.f32 %v10728, 0.0
  %v10793 = vmax.f32 %v10729, 0.0
  %v10794 = vmax.f32 %v10730, 0.0
  %v10795 = vmax.f32 %v10731, 0.0
  %v10796 = vmax.f32 %v10732, 0.0
  %v10797 = vmax.f32 %v10733, 0.0
  %v10798 = vmax.f32 %v10734, 0.0
  %v10799 = vmax.f32 %v10735, 0.0
  %v10800 = vmax.f32 %v10736, 0.0
  %v10801 = vmax.f32 %v10737, 0.0
  %v10802 = vmax.f32 %v10738, 0.0
  %v10803 = vmax.f32 %v10739, 0.0
  %v10804 = vmax.f32 %v10740, 0.0
  %v10805 = vmax.f32 %v10741, 0.0
  %v10806 = vmax.f32 %v10742, 0.0
  %v10807 = vmax.f32 %v10743, 0.0
  %v10808 = vmax.f32 %v10744, 0.0
  %v10809 = vmax.f32 %v10745, 0.0
  %v10810 = vmax.f32 %v10746, 0.0
  %v10811 = vmax.f32 %v10747, 0.0
  %v10812 = vmax.f32 %v10748, 0.0
  %v10813 = vmax.f32 %v10749, 0.0
  %v10814 = vmax.f32 %v10750, 0.0
  %v10815 = vmax.f32 %v10751, 0.0
  %v10816 = vmax.f32 %v10752, 0.0
  %v10817 = vmax.f32 %v10753, 0.0
  %v10818 = vmax.f32 %v10754, 0.0
  %v10819 = vmax.f32 %v10755, 0.0
  %v10820 = vmax.f32 %v10756, 0.0
  %v10821 = vmax.f32 %v10757, 0.0
  %v10822 = vmax.f32 %v10758, 0.0
  %v10823 = vmax.f32 %v10759, 0.0
  %v10824 = vmax.f32 %v10760, 0.0
  %v10825 = vmax.f32 %v10761, 0.0
  %v10826 = vmax.f32 %v10762, 0.0
  %v10827 = vmax.f32 %v10763, 0.0
  %v10828 = vmax.f32 %v10764, 0.0
  %v10829 = vmax.f32 %v10765, 0.0
  %v10830 = vadd.f32 %v10766, %v10767
  %v10831 = vadd.f32 %v10830, %v10768
  %v10832 = vadd.f32 %v10831, %v10769
  %v10833 = vadd.f32 %v10832, %v10770
  %v10834 = vadd.f32 %v10833, %v10771
  %v10835 = vadd.f32 %v10834, %v10772
  %v10836 = vadd.f32 %v10835, %v10773
  %v10837 = vadd.f32 %v10836, %v10774
  %v10838 = vadd.f32 %v10837, %v10775
  %v10839 = vadd.f32 %v10838, %v10776
  %v10840 = vadd.f32 %v10839, %v10777
  %v10841 = vadd.f32 %v10840, %v10778
  %v10842 = vadd.f32 %v10841, %v10779
  %v10843 = vadd.f32 %v10842, %v10780
  %v10844 = vadd.f32 %v10843, %v10781
  %v10845 = vadd.f32 %v10844, %v10782
  %v10846 = vadd.f32 %v10845, %v10783
  %v10847 = vadd.f32 %v10846, %v10784
  %v10848 = vadd.f32 %v10847, %v10785
  %v10849 = vadd.f32 %v10848, %v10786
  %v10850 = vadd.f32 %v10849, %v10787
  %v10851 = vadd.f32 %v10850, %v10788
  %v10852 = vadd.f32 %v10851, %v10789
  %v10853 = vadd.f32 %v10852, %v10790
  %v10854 = vadd.f32 %v10853, %v10791
  %v10855 = vadd.f32 %v10854, %v10792
  %v10856 = vadd.f32 %v10855, %v10793
  %v10857 = vadd.f32 %v10856, %v10794
  %v10858 = vadd.f32 %v10857, %v10795
  %v10859 = vadd.f32 %v10858, %v10796
  %v10860 = vadd.f32 %v10859, %v10797
  %v10861 = vadd.f32 %v10860, %v10798
  %v10862 = vadd.f32 %v10861, %v10799
  %v10863 = vadd.f32 %v10862, %v10800
  %v10864 = vadd.f32 %v10863, %v10801
  %v10865 = vadd.f32 %v10864, %v10802
  %v10866 = vadd.f32 %v10865, %v10803
  %v10867 = vadd.f32 %v10866, %v10804
  %v10868 = vadd.f32 %v10867, %v10805
  %v10869 = vadd.f32 %v10868, %v10806
  %v10870 = vadd.f32 %v10869, %v10807
  %v10871 = vadd.f32 %v10870, %v10808
  %v10872 = vadd.f32 %v10871, %v10809
  %v10873 = vadd.f32 %v10872, %v10810
  %v10874 = vadd.f32 %v10873, %v10811
  %v10875 = vadd.f32 %v10874, %v10812
  %v10876 = vadd.f32 %v10875, %v10813
  %v10877 = vadd.f32 %v10876, %v10814
  %v10878 = vadd.f32 %v10877, %v10815
  %v10879 = vadd.f32 %v10878, %v10816
  %v10880 = vadd.f32 %v10879, %v10817
  %v10881 = vadd.f32 %v10880, %v10818
  %v10882 = vadd.f32 %v10881, %v10819
  %v10883 = vadd.f32 %v10882, %v10820
  %v10884 = vadd.f32 %v10883, %v10821
  %v10885 = vadd.f32 %v10884, %v10822
  %v10886 = vadd.f32 %v10885, %v10823
  %v10887 = vadd.f32 %v10886, %v10824
  %v10888 = vadd.f32 %v10887, %v10825
  %v10889 = vadd.f32 %v10888, %v10826
  %v10890 = vadd.f32 %v10889, %v10827
  %v10891 = vadd.f32 %v10890, %v10828
  %v10892 = vadd.f32 %v10891, %v10829
  %v10893 = vrot.slane %v10892, 4
  %v10894 = vadd.f32 %v10892, %v10893
  %v10895 = vrot.slane %v10894, 2
  %v10896 = vadd.f32 %v10894, %v10895
  %v10897 = vrot.slane %v10896, 1
  %v10898 = vadd.f32 %v10896, %v10897
  %v10899 = vmul.f32 %v10898, 0.001953125
  %v10900 = vsub.f32 %v10766, %v10899
  %v10901 = vsub.f32 %v10767, %v10899
  %v10902 = vsub.f32 %v10768, %v10899
  %v10903 = vsub.f32 %v10769, %v10899
  %v10904 = vsub.f32 %v10770, %v10899
  %v10905 = vsub.f32 %v10771, %v10899
  %v10906 = vsub.f32 %v10772, %v10899
  %v10907 = vsub.f32 %v10773, %v10899
  %v10908 = vsub.f32 %v10774, %v10899
  %v10909 = vsub.f32 %v10775, %v10899
  %v10910 = vsub.f32 %v10776, %v10899
  %v10911 = vsub.f32 %v10777, %v10899
  %v10912 = vsub.f32 %v10778, %v10899
  %v10913 = vsub.f32 %v10779, %v10899
  %v10914 = vsub.f32 %v10780, %v10899
  %v10915 = vsub.f32 %v10781, %v10899
  %v10916 = vsub.f32 %v10782, %v10899
  %v10917 = vsub.f32 %v10783, %v10899
  %v10918 = vsub.f32 %v10784, %v10899
  %v10919 = vsub.f32 %v10785, %v10899
  %v10920 = vsub.f32 %v10786, %v10899
  %v10921 = vsub.f32 %v10787, %v10899
  %v10922 = vsub.f32 %v10788, %v10899
  %v10923 = vsub.f32 %v10789, %v10899
  %v10924 = vsub.f32 %v10790, %v10899
  %v10925 = vsub.f32 %v10791, %v10899
  %v10926 = vsub.f32 %v10792, %v10899
  %v10927 = vsub.f32 %v10793, %v10899
  %v10928 = vsub.f32 %v10794, %v10899
  %v10929 = vsub.f32 %v10795, %v10899
  %v10930 = vsub.f32 %v10796, %v10899
  %v10931 = vsub.f32 %v10797, %v10899
  %v10932 = vsub.f32 %v10798, %v10899
  %v10933 = vsub.f32 %v10799, %v10899
  %v10934 = vsub.f32 %v10800, %v10899
  %v10935 = vsub.f32 %v10801, %v10899
  %v10936 = vsub.f32 %v10802, %v10899
  %v10937 = vsub.f32 %v10803, %v10899
  %v10938 = vsub.f32 %v10804, %v10899
  %v10939 = vsub.f32 %v10805, %v10899
  %v10940 = vsub.f32 %v10806, %v10899
  %v10941 = vsub.f32 %v10807, %v10899
  %v10942 = vsub.f32 %v10808, %v10899
  %v10943 = vsub.f32 %v10809, %v10899
  %v10944 = vsub.f32 %v10810, %v10899
  %v10945 = vsub.f32 %v10811, %v10899
  %v10946 = vsub.f32 %v10812, %v10899
  %v10947 = vsub.f32 %v10813, %v10899
  %v10948 = vsub.f32 %v10814, %v10899
  %v10949 = vsub.f32 %v10815, %v10899
  %v10950 = vsub.f32 %v10816, %v10899
  %v10951 = vsub.f32 %v10817, %v10899
  %v10952 = vsub.f32 %v10818, %v10899
  %v10953 = vsub.f32 %v10819, %v10899
  %v10954 = vsub.f32 %v10820, %v10899
  %v10955 = vsub.f32 %v10821, %v10899
  %v10956 = vsub.f32 %v10822, %v10899
  %v10957 = vsub.f32 %v10823, %v10899
  %v10958 = vsub.f32 %v10824, %v10899
  %v10959 = vsub.f32 %v10825, %v10899
  %v10960 = vsub.f32 %v10826, %v10899
  %v10961 = vsub.f32 %v10827, %v10899
  %v10962 = vsub.f32 %v10828, %v10899
  %v10963 = vsub.f32 %v10829, %v10899
  %v10964 = vmul.f32 %v10900, %v10900
  %v10965 = vmul.f32 %v10901, %v10901
  %v10966 = vmul.f32 %v10902, %v10902
  %v10967 = vmul.f32 %v10903, %v10903
  %v10968 = vmul.f32 %v10904, %v10904
  %v10969 = vmul.f32 %v10905, %v10905
  %v10970 = vmul.f32 %v10906, %v10906
  %v10971 = vmul.f32 %v10907, %v10907
  %v10972 = vmul.f32 %v10908, %v10908
  %v10973 = vmul.f32 %v10909, %v10909
  %v10974 = vmul.f32 %v10910, %v10910
  %v10975 = vmul.f32 %v10911, %v10911
  %v10976 = vmul.f32 %v10912, %v10912
  %v10977 = vmul.f32 %v10913, %v10913
  %v10978 = vmul.f32 %v10914, %v10914
  %v10979 = vmul.f32 %v10915, %v10915
  %v10980 = vmul.f32 %v10916, %v10916
  %v10981 = vmul.f32 %v10917, %v10917
  %v10982 = vmul.f32 %v10918, %v10918
  %v10983 = vmul.f32 %v10919, %v10919
  %v10984 = vmul.f32 %v10920, %v10920
  %v10985 = vmul.f32 %v10921, %v10921
  %v10986 = vmul.f32 %v10922, %v10922
  %v10987 = vmul.f32 %v10923, %v10923
  %v10988 = vmul.f32 %v10924, %v10924
  %v10989 = vmul.f32 %v10925, %v10925
  %v10990 = vmul.f32 %v10926, %v10926
  %v10991 = vmul.f32 %v10927, %v10927
  %v10992 = vmul.f32 %v10928, %v10928
  %v10993 = vmul.f32 %v10929, %v10929
  %v10994 = vmul.f32 %v10930, %v10930
  %v10995 = vmul.f32 %v10931, %v10931
  %v10996 = vmul.f32 %v10932, %v10932
  %v10997 = vmul.f32 %v10933, %v10933
  %v10998 = vmul.f32 %v10934, %v10934
  %v10999 = vmul.f32 %v10935, %v10935
  %v11000 = vmul.f32 %v10936, %v10936
  %v11001 = vmul.f32 %v10937, %v10937
  %v11002 = vmul.f32 %v10938, %v10938
  %v11003 = vmul.f32 %v10939, %v10939
  %v11004 = vmul.f32 %v10940, %v10940
  %v11005 = vmul.f32 %v10941, %v10941
  %v11006 = vmul.f32 %v10942, %v10942
  %v11007 = vmul.f32 %v10943, %v10943
  %v11008 = vmul.f32 %v10944, %v10944
  %v11009 = vmul.f32 %v10945, %v10945
  %v11010 = vmul.f32 %v10946, %v10946
  %v11011 = vmul.f32 %v10947, %v10947
  %v11012 = vmul.f32 %v10948, %v10948
  %v11013 = vmul.f32 %v10949, %v10949
  %v11014 = vmul.f32 %v10950, %v10950
  %v11015 = vmul.f32 %v10951, %v10951
  %v11016 = vmul.f32 %v10952, %v10952
  %v11017 = vmul.f32 %v10953, %v10953
  %v11018 = vmul.f32 %v10954, %v10954
  %v11019 = vmul.f32 %v10955, %v10955
  %v11020 = vmul.f32 %v10956, %v10956
  %v11021 = vmul.f32 %v10957, %v10957
  %v11022 = vmul.f32 %v10958, %v10958
  %v11023 = vmul.f32 %v10959, %v10959
  %v11024 = vmul.f32 %v10960, %v10960
  %v11025 = vmul.f32 %v10961, %v10961
  %v11026 = vmul.f32 %v10962, %v10962
  %v11027 = vmul.f32 %v10963, %v10963
  %v11028 = vadd.f32 %v10964, %v10965
  %v11029 = vadd.f32 %v11028, %v10966
  %v11030 = vadd.f32 %v11029, %v10967
  %v11031 = vadd.f32 %v11030, %v10968
  %v11032 = vadd.f32 %v11031, %v10969
  %v11033 = vadd.f32 %v11032, %v10970
  %v11034 = vadd.f32 %v11033, %v10971
  %v11035 = vadd.f32 %v11034, %v10972
  %v11036 = vadd.f32 %v11035, %v10973
  %v11037 = vadd.f32 %v11036, %v10974
  %v11038 = vadd.f32 %v11037, %v10975
  %v11039 = vadd.f32 %v11038, %v10976
  %v11040 = vadd.f32 %v11039, %v10977
  %v11041 = vadd.f32 %v11040, %v10978
  %v11042 = vadd.f32 %v11041, %v10979
  %v11043 = vadd.f32 %v11042, %v10980
  %v11044 = vadd.f32 %v11043, %v10981
  %v11045 = vadd.f32 %v11044, %v10982
  %v11046 = vadd.f32 %v11045, %v10983
  %v11047 = vadd.f32 %v11046, %v10984
  %v11048 = vadd.f32 %v11047, %v10985
  %v11049 = vadd.f32 %v11048, %v10986
  %v11050 = vadd.f32 %v11049, %v10987
  %v11051 = vadd.f32 %v11050, %v10988
  %v11052 = vadd.f32 %v11051, %v10989
  %v11053 = vadd.f32 %v11052, %v10990
  %v11054 = vadd.f32 %v11053, %v10991
  %v11055 = vadd.f32 %v11054, %v10992
  %v11056 = vadd.f32 %v11055, %v10993
  %v11057 = vadd.f32 %v11056, %v10994
  %v11058 = vadd.f32 %v11057, %v10995
  %v11059 = vadd.f32 %v11058, %v10996
  %v11060 = vadd.f32 %v11059, %v10997
  %v11061 = vadd.f32 %v11060, %v10998
  %v11062 = vadd.f32 %v11061, %v10999
  %v11063 = vadd.f32 %v11062, %v11000
  %v11064 = vadd.f32 %v11063, %v11001
  %v11065 = vadd.f32 %v11064, %v11002
  %v11066 = vadd.f32 %v11065, %v11003
  %v11067 = vadd.f32 %v11066, %v11004
  %v11068 = vadd.f32 %v11067, %v11005
  %v11069 = vadd.f32 %v11068, %v11006
  %v11070 = vadd.f32 %v11069, %v11007
  %v11071 = vadd.f32 %v11070, %v11008
  %v11072 = vadd.f32 %v11071, %v11009
  %v11073 = vadd.f32 %v11072, %v11010
  %v11074 = vadd.f32 %v11073, %v11011
  %v11075 = vadd.f32 %v11074, %v11012
  %v11076 = vadd.f32 %v11075, %v11013
  %v11077 = vadd.f32 %v11076, %v11014
  %v11078 = vadd.f32 %v11077, %v11015
  %v11079 = vadd.f32 %v11078, %v11016
  %v11080 = vadd.f32 %v11079, %v11017
  %v11081 = vadd.f32 %v11080, %v11018
  %v11082 = vadd.f32 %v11081, %v11019
  %v11083 = vadd.f32 %v11082, %v11020
  %v11084 = vadd.f32 %v11083, %v11021
  %v11085 = vadd.f32 %v11084, %v11022
  %v11086 = vadd.f32 %v11085, %v11023
  %v11087 = vadd.f32 %v11086, %v11024
  %v11088 = vadd.f32 %v11087, %v11025
  %v11089 = vadd.f32 %v11088, %v11026
  %v11090 = vadd.f32 %v11089, %v11027
  %v11091 = vrot.slane %v11090, 4
  %v11092 = vadd.f32 %v11090, %v11091
  %v11093 = vrot.slane %v11092, 2
  %v11094 = vadd.f32 %v11092, %v11093
  %v11095 = vrot.slane %v11094, 1
  %v11096 = vadd.f32 %v11094, %v11095
  %v11097 = vmul.f32 %v11096, 0.001953125
  %v11098 = vadd.f32 %v11097, 1e-05
  %v11099 = vrsqrt.pop %v11098
  %v11100 = vmul.f32 %v5888, %v11099
  %v11102 = vlaneseq
  %v11103 = vshrl.u32 %v11102, 7
  %v11104 = vsub.s32 0, %v11103
  %v11105 = vrot.slane %v11100, %v11104
  %v11107 = vmul.f32 %v10900, %v11105
  %v11108 = vmul.f32 %v10901, %v11105
  %v11109 = vmul.f32 %v10902, %v11105
  %v11110 = vmul.f32 %v10903, %v11105
  %v11111 = vmul.f32 %v10904, %v11105
  %v11112 = vmul.f32 %v10905, %v11105
  %v11113 = vmul.f32 %v10906, %v11105
  %v11114 = vmul.f32 %v10907, %v11105
  %v11115 = vmul.f32 %v10908, %v11105
  %v11116 = vmul.f32 %v10909, %v11105
  %v11117 = vmul.f32 %v10910, %v11105
  %v11118 = vmul.f32 %v10911, %v11105
  %v11119 = vmul.f32 %v10912, %v11105
  %v11120 = vmul.f32 %v10913, %v11105
  %v11121 = vmul.f32 %v10914, %v11105
  %v11122 = vmul.f32 %v10915, %v11105
  %v11123 = vmul.f32 %v10916, %v11105
  %v11124 = vmul.f32 %v10917, %v11105
  %v11125 = vmul.f32 %v10918, %v11105
  %v11126 = vmul.f32 %v10919, %v11105
  %v11127 = vmul.f32 %v10920, %v11105
  %v11128 = vmul.f32 %v10921, %v11105
  %v11129 = vmul.f32 %v10922, %v11105
  %v11130 = vmul.f32 %v10923, %v11105
  %v11131 = vmul.f32 %v10924, %v11105
  %v11132 = vmul.f32 %v10925, %v11105
  %v11133 = vmul.f32 %v10926, %v11105
  %v11134 = vmul.f32 %v10927, %v11105
  %v11135 = vmul.f32 %v10928, %v11105
  %v11136 = vmul.f32 %v10929, %v11105
  %v11137 = vmul.f32 %v10930, %v11105
  %v11138 = vmul.f32 %v10931, %v11105
  %v11139 = vmul.f32 %v10932, %v11105
  %v11140 = vmul.f32 %v10933, %v11105
  %v11141 = vmul.f32 %v10934, %v11105
  %v11142 = vmul.f32 %v10935, %v11105
  %v11143 = vmul.f32 %v10936, %v11105
  %v11144 = vmul.f32 %v10937, %v11105
  %v11145 = vmul.f32 %v10938, %v11105
  %v11146 = vmul.f32 %v10939, %v11105
  %v11147 = vmul.f32 %v10940, %v11105
  %v11148 = vmul.f32 %v10941, %v11105
  %v11149 = vmul.f32 %v10942, %v11105
  %v11150 = vmul.f32 %v10943, %v11105
  %v11151 = vmul.f32 %v10944, %v11105
  %v11152 = vmul.f32 %v10945, %v11105
  %v11153 = vmul.f32 %v10946, %v11105
  %v11154 = vmul.f32 %v10947, %v11105
  %v11155 = vmul.f32 %v10948, %v11105
  %v11156 = vmul.f32 %v10949, %v11105
  %v11157 = vmul.f32 %v10950, %v11105
  %v11158 = vmul.f32 %v10951, %v11105
  %v11159 = vmul.f32 %v10952, %v11105
  %v11160 = vmul.f32 %v10953, %v11105
  %v11161 = vmul.f32 %v10954, %v11105
  %v11162 = vmul.f32 %v10955, %v11105
  %v11163 = vmul.f32 %v10956, %v11105
  %v11164 = vmul.f32 %v10957, %v11105
  %v11165 = vmul.f32 %v10958, %v11105
  %v11166 = vmul.f32 %v10959, %v11105
  %v11167 = vmul.f32 %v10960, %v11105
  %v11168 = vmul.f32 %v10961, %v11105
  %v11169 = vmul.f32 %v10962, %v11105
  %v11170 = vmul.f32 %v10963, %v11105
  %v11172 = vlaneseq
  %v11173 = vshrl.u32 %v11172, 7
  %v11174 = vsub.s32 0, %v11173
  %v11175 = vrot.slane %v5889, %v11174
  %v11177 = vadd.f32 %v11107, %v11175
  %v11178 = vadd.f32 %v11108, %v11175
  %v11179 = vadd.f32 %v11109, %v11175
  %v11180 = vadd.f32 %v11110, %v11175
  %v11181 = vadd.f32 %v11111, %v11175
  %v11182 = vadd.f32 %v11112, %v11175
  %v11183 = vadd.f32 %v11113, %v11175
  %v11184 = vadd.f32 %v11114, %v11175
  %v11185 = vadd.f32 %v11115, %v11175
  %v11186 = vadd.f32 %v11116, %v11175
  %v11187 = vadd.f32 %v11117, %v11175
  %v11188 = vadd.f32 %v11118, %v11175
  %v11189 = vadd.f32 %v11119, %v11175
  %v11190 = vadd.f32 %v11120, %v11175
  %v11191 = vadd.f32 %v11121, %v11175
  %v11192 = vadd.f32 %v11122, %v11175
  %v11193 = vadd.f32 %v11123, %v11175
  %v11194 = vadd.f32 %v11124, %v11175
  %v11195 = vadd.f32 %v11125, %v11175
  %v11196 = vadd.f32 %v11126, %v11175
  %v11197 = vadd.f32 %v11127, %v11175
  %v11198 = vadd.f32 %v11128, %v11175
  %v11199 = vadd.f32 %v11129, %v11175
  %v11200 = vadd.f32 %v11130, %v11175
  %v11201 = vadd.f32 %v11131, %v11175
  %v11202 = vadd.f32 %v11132, %v11175
  %v11203 = vadd.f32 %v11133, %v11175
  %v11204 = vadd.f32 %v11134, %v11175
  %v11205 = vadd.f32 %v11135, %v11175
  %v11206 = vadd.f32 %v11136, %v11175
  %v11207 = vadd.f32 %v11137, %v11175
  %v11208 = vadd.f32 %v11138, %v11175
  %v11209 = vadd.f32 %v11139, %v11175
  %v11210 = vadd.f32 %v11140, %v11175
  %v11211 = vadd.f32 %v11141, %v11175
  %v11212 = vadd.f32 %v11142, %v11175
  %v11213 = vadd.f32 %v11143, %v11175
  %v11214 = vadd.f32 %v11144, %v11175
  %v11215 = vadd.f32 %v11145, %v11175
  %v11216 = vadd.f32 %v11146, %v11175
  %v11217 = vadd.f32 %v11147, %v11175
  %v11218 = vadd.f32 %v11148, %v11175
  %v11219 = vadd.f32 %v11149, %v11175
  %v11220 = vadd.f32 %v11150, %v11175
  %v11221 = vadd.f32 %v11151, %v11175
  %v11222 = vadd.f32 %v11152, %v11175
  %v11223 = vadd.f32 %v11153, %v11175
  %v11224 = vadd.f32 %v11154, %v11175
  %v11225 = vadd.f32 %v11155, %v11175
  %v11226 = vadd.f32 %v11156, %v11175
  %v11227 = vadd.f32 %v11157, %v11175
  %v11228 = vadd.f32 %v11158, %v11175
  %v11229 = vadd.f32 %v11159, %v11175
  %v11230 = vadd.f32 %v11160, %v11175
  %v11231 = vadd.f32 %v11161, %v11175
  %v11232 = vadd.f32 %v11162, %v11175
  %v11233 = vadd.f32 %v11163, %v11175
  %v11234 = vadd.f32 %v11164, %v11175
  %v11235 = vadd.f32 %v11165, %v11175
  %v11236 = vadd.f32 %v11166, %v11175
  %v11237 = vadd.f32 %v11167, %v11175
  %v11238 = vadd.f32 %v11168, %v11175
  %v11239 = vadd.f32 %v11169, %v11175
  %v11240 = vadd.f32 %v11170, %v11175
  %11241 = vst [vmem:[%s9] sm:$0xff] %v11177
  %11242 = vst [vmem:[%s9 + $0x8] sm:$0xff] %v11178
  %11243 = vst [vmem:[%s9 + $0x10] sm:$0xff] %v11179
  %11244 = vst [vmem:[%s9 + $0x18] sm:$0xff] %v11180
  %11245 = vst [vmem:[%s9 + $0x20] sm:$0xff] %v11181
  %11246 = vst [vmem:[%s9 + $0x28] sm:$0xff] %v11182
  %11247 = vst [vmem:[%s9 + $0x30] sm:$0xff] %v11183
  %11248 = vst [vmem:[%s9 + $0x38] sm:$0xff] %v11184
  %11249 = vst [vmem:[%s9 + $0x40] sm:$0xff] %v11185
  %11250 = vst [vmem:[%s9 + $0x48] sm:$0xff] %v11186
  %11251 = vst [vmem:[%s9 + $0x50] sm:$0xff] %v11187
  %11252 = vst [vmem:[%s9 + $0x58] sm:$0xff] %v11188
  %11253 = vst [vmem:[%s9 + $0x60] sm:$0xff] %v11189
  %11254 = vst [vmem:[%s9 + $0x68] sm:$0xff] %v11190
  %11255 = vst [vmem:[%s9 + $0x70] sm:$0xff] %v11191
  %11256 = vst [vmem:[%s9 + $0x78] sm:$0xff] %v11192
  %11257 = vst [vmem:[%s9 + $0x80] sm:$0xff] %v11193
  %11258 = vst [vmem:[%s9 + $0x88] sm:$0xff] %v11194
  %11259 = vst [vmem:[%s9 + $0x90] sm:$0xff] %v11195
  %11260 = vst [vmem:[%s9 + $0x98] sm:$0xff] %v11196
  %11261 = vst [vmem:[%s9 + $0xa0] sm:$0xff] %v11197
  %11262 = vst [vmem:[%s9 + $0xa8] sm:$0xff] %v11198
  %11263 = vst [vmem:[%s9 + $0xb0] sm:$0xff] %v11199
  %11264 = vst [vmem:[%s9 + $0xb8] sm:$0xff] %v11200
  %11265 = vst [vmem:[%s9 + $0xc0] sm:$0xff] %v11201
  %11266 = vst [vmem:[%s9 + $0xc8] sm:$0xff] %v11202
  %11267 = vst [vmem:[%s9 + $0xd0] sm:$0xff] %v11203
  %11268 = vst [vmem:[%s9 + $0xd8] sm:$0xff] %v11204
  %11269 = vst [vmem:[%s9 + $0xe0] sm:$0xff] %v11205
  %11270 = vst [vmem:[%s9 + $0xe8] sm:$0xff] %v11206
  %11271 = vst [vmem:[%s9 + $0xf0] sm:$0xff] %v11207
  %11272 = vst [vmem:[%s9 + $0xf8] sm:$0xff] %v11208
  %11273 = vst [vmem:[%s9 + $0x100] sm:$0xff] %v11209
  %11274 = vst [vmem:[%s9 + $0x108] sm:$0xff] %v11210
  %11275 = vst [vmem:[%s9 + $0x110] sm:$0xff] %v11211
  %11276 = vst [vmem:[%s9 + $0x118] sm:$0xff] %v11212
  %11277 = vst [vmem:[%s9 + $0x120] sm:$0xff] %v11213
  %11278 = vst [vmem:[%s9 + $0x128] sm:$0xff] %v11214
  %11279 = vst [vmem:[%s9 + $0x130] sm:$0xff] %v11215
  %11280 = vst [vmem:[%s9 + $0x138] sm:$0xff] %v11216
  %11281 = vst [vmem:[%s9 + $0x140] sm:$0xff] %v11217
  %11282 = vst [vmem:[%s9 + $0x148] sm:$0xff] %v11218
  %11283 = vst [vmem:[%s9 + $0x150] sm:$0xff] %v11219
  %11284 = vst [vmem:[%s9 + $0x158] sm:$0xff] %v11220
  %11285 = vst [vmem:[%s9 + $0x160] sm:$0xff] %v11221
  %11286 = vst [vmem:[%s9 + $0x168] sm:$0xff] %v11222
  %11287 = vst [vmem:[%s9 + $0x170] sm:$0xff] %v11223
  %11288 = vst [vmem:[%s9 + $0x178] sm:$0xff] %v11224
  %11289 = vst [vmem:[%s9 + $0x180] sm:$0xff] %v11225
  %11290 = vst [vmem:[%s9 + $0x188] sm:$0xff] %v11226
  %11291 = vst [vmem:[%s9 + $0x190] sm:$0xff] %v11227
  %11292 = vst [vmem:[%s9 + $0x198] sm:$0xff] %v11228
  %11293 = vst [vmem:[%s9 + $0x1a0] sm:$0xff] %v11229
  %11294 = vst [vmem:[%s9 + $0x1a8] sm:$0xff] %v11230
  %11295 = vst [vmem:[%s9 + $0x1b0] sm:$0xff] %v11231
  %11296 = vst [vmem:[%s9 + $0x1b8] sm:$0xff] %v11232
  %11297 = vst [vmem:[%s9 + $0x1c0] sm:$0xff] %v11233
  %11298 = vst [vmem:[%s9 + $0x1c8] sm:$0xff] %v11234
  %11299 = vst [vmem:[%s9 + $0x1d0] sm:$0xff] %v11235
  %11300 = vst [vmem:[%s9 + $0x1d8] sm:$0xff] %v11236
  %11301 = vst [vmem:[%s9 + $0x1e0] sm:$0xff] %v11237
  %11302 = vst [vmem:[%s9 + $0x1e8] sm:$0xff] %v11238
  %11303 = vst [vmem:[%s9 + $0x1f0] sm:$0xff] %v11239
  %11304 = vst [vmem:[%s9 + $0x1f8] sm:$0xff] %v11240
  // Predicated region
  $region38: #{double_conv_forward.1} parent=0 // pred_check
    _
  $region39: #{double_conv_forward.1} parent=0 // pred_check_branch
    %11306 = sbr.rel (0) target = $region41
  $region40: #{double_conv_forward.1} parent=0 // pred_region
    _
  $region41: #{double_conv_forward.1} parent=0 // pred_fallthru
    _
  // Predicated region
  $region42: #{double_conv_forward.1} parent=0 // pred_check
    _
  $region43: #{double_conv_forward.1} parent=0 // pred_check_branch
    %11308 = sbr.rel (0) target = $region45
  $region44: #{double_conv_forward.1} parent=0 // pred_region
    _
  $region45: #{double_conv_forward.1} parent=0 // pred_fallthru
    _

</llo_original>
